<compile_context>
chip_gen: v6e
topology: v6e:2x2x1
jax: 0.10.0
libtpu: 0.0.40
codegen_flags: <defaults>
</compile_context>

<pallas_src>
import functools

import jax
import jax.numpy as jnp
from jax.experimental import pallas as pl
from jax.experimental.pallas import tpu as pltpu

BN_EPS = 1e-5
LANE = 128            # lane width / output-channel padding
KPAD = 16             # contraction-dim rounding (bf16 sublane packing)
TILE_M = 1024         # M tile for the two-pass fallback path
LAYERS = (32, 64, 128)
NUM_CLASSES = 6
FUSE_MAXPOOL = True

_WHOLE = pl.BlockSpec(memory_space=pltpu.MemorySpace.VMEM)


def _round_up(x, m):
    return (x + m - 1) // m * m


@functools.lru_cache(maxsize=None)
def _vmem_budget_bytes():
    """~60% of physical VMEM: gate for the fully fused (gridless) conv path."""
    try:
        cap = int(pltpu.get_tpu_info().vmem_capacity_bytes)
    except Exception:
        cap = 0
    if cap <= 0:
        cap = 64 * 1024 * 1024          # conservative (v7x-sized) default
    return cap * 3 // 5


def _cparams(**kw):
    return pltpu.CompilerParams(vmem_limit_bytes=_vmem_budget_bytes(), **kw)


# -----------------------------------------------------------------------------
# Pallas kernels
# -----------------------------------------------------------------------------
def _make_fused_conv_kernel(m_rows, relu_cols, c_pad, add_res):
    """matmul + BatchNorm(batch stats) + ReLU on the first `relu_cols` lanes + residual."""
    inv_m = 1.0 / float(m_rows)

    def kernel(*refs):
        if add_res:
            p_ref, w_ref, g_ref, b_ref, r_ref, o_ref = refs
        else:
            p_ref, w_ref, g_ref, b_ref, o_ref = refs
        y = jnp.dot(p_ref[...], w_ref[...], preferred_element_type=jnp.float32)
        mean = jnp.sum(y, axis=0, keepdims=True) * inv_m
        d = y - mean
        var = jnp.sum(d * d, axis=0, keepdims=True) * inv_m     # centered variance
        y = d * (g_ref[...] * jax.lax.rsqrt(var + BN_EPS)) + b_ref[...]
        if relu_cols >= c_pad:
            y = jnp.maximum(y, 0.0)
        elif relu_cols > 0:
            lane = jax.lax.broadcasted_iota(jnp.int32, y.shape, 1)
            y = jnp.where(lane < relu_cols, jnp.maximum(y, 0.0), y)
        if add_res:
            y = y + r_ref[...].astype(jnp.float32)
        o_ref[...] = y.astype(o_ref.dtype)

    return kernel


def _make_stem_kernel(n, ho, wo, c_pad, ho_out, wo_out, wpad):
    """Fused stem: matmul + BN(batch stats) + ReLU + MaxPool2d(3, stride=2, padding=1)."""
    inv_m = 1.0 / float(n * ho * wo)

    def kernel(p_ref, w_ref, g_ref, b_ref, o_ref, pool_ref):
        y = jnp.dot(p_ref[...], w_ref[...], preferred_element_type=jnp.float32)
        mean = jnp.sum(y, axis=0, keepdims=True) * inv_m
        d = y - mean
        var = jnp.sum(d * d, axis=0, keepdims=True) * inv_m
        y = d * (g_ref[...] * jax.lax.rsqrt(var + BN_EPS)) + b_ref[...]
        y = jnp.maximum(y, 0.0)   # ReLU -> values >= 0, so zero padding == -inf padding

        # W-direction pool: stage rows into a zero-left-padded VMEM scratch and take the
        # three stride-2 column taps (cols 2c-1 / 2c / 2c+1) as strided reads.
        pool_ref[...] = jnp.zeros_like(pool_ref)
        pool_ref[:, wpad:wpad + wo, :] = y.reshape(n * ho, wo, c_pad)
        t0 = pool_ref[:, pl.ds(wpad - 1, wo_out, 2), :]
        t1 = pool_ref[:, pl.ds(wpad, wo_out, 2), :]
        t2 = pool_ref[:, pl.ds(wpad + 1, wo_out, 2), :]
        wmax = jnp.maximum(jnp.maximum(t0, t1), t2).reshape(n, ho, wo_out, c_pad)

        # H-direction pool: static row slices (pad rows dropped; values are >= 0).
        rows = []
        for r in range(ho_out):
            lo, hi = max(2 * r - 1, 0), min(2 * r + 2, ho)
            acc = wmax[:, lo, :, :]
            for rr in range(lo + 1, hi):
                acc = jnp.maximum(acc, wmax[:, rr, :, :])
            rows.append(acc)
        o_ref[...] = jnp.stack(rows, axis=1).astype(o_ref.dtype)

    return kernel


def _matmul_stats_kernel(p_ref, w_ref, y_ref, stat_ref):
    """Fallback pass 1: tiled matmul + per-tile channel (sum, sumsq)."""
    y = jnp.dot(p_ref[...], w_ref[...], preferred_element_type=jnp.float32)
    y_ref[...] = y
    stat_ref[0:1, :] = jnp.sum(y, axis=0, keepdims=True)
    stat_ref[1:2, :] = jnp.sum(y * y, axis=0, keepdims=True)
    # Rows 2..7 of each (8, C) stats block are intentionally left unwritten; the XLA
    # fold below only consumes rows 0-1.


def _make_bn_act_kernel(relu_cols, c_pad, add_res):
    """Fallback pass 2: folded BN scale/shift + partial ReLU + optional residual."""

    def kernel(*refs):
        if add_res:
            y_ref, sc_ref, sh_ref, r_ref, o_ref = refs
        else:
            y_ref, sc_ref, sh_ref, o_ref = refs
        y = y_ref[...] * sc_ref[...] + sh_ref[...]
        if relu_cols >= c_pad:
            y = jnp.maximum(y, 0.0)
        elif relu_cols > 0:
            lane = jax.lax.broadcasted_iota(jnp.int32, y.shape, 1)
            y = jnp.where(lane < relu_cols, jnp.maximum(y, 0.0), y)
        if add_res:
            y = y + r_ref[...].astype(jnp.float32)
        o_ref[...] = y.astype(o_ref.dtype)

    return kernel


def _make_maxpool_kernel(ho_out):
    """Standalone MaxPool (fallback path only); 3 stride-2 W taps are pre-sliced in XLA."""

    def kernel(a0_ref, a1_ref, a2_ref, o_ref):
        w = jnp.maximum(jnp.maximum(a0_ref[...], a1_ref[...]), a2_ref[...])
        rows = []
        for i in range(ho_out):
            rows.append(jnp.maximum(jnp.maximum(w[:, 2 * i], w[:, 2 * i + 1]),
                                    w[:, 2 * i + 2]))
        o_ref[...] = jnp.stack(rows, axis=1)

    return kernel


def _head_kernel(z_ref, w_ref, b_ref, o_ref):
    """Global average pool over spatial (axis 1) + Linear (bf16 MXU, f32 accumulation)."""
    feat = jnp.mean(z_ref[...].astype(jnp.float32), axis=1)
    o_ref[...] = jnp.dot(feat.astype(jnp.bfloat16), w_ref[...],
                         preferred_element_type=jnp.float32) + b_ref[...]


# -----------------------------------------------------------------------------
# JAX glue + pallas_call wrappers
# -----------------------------------------------------------------------------
def _im2col(x, c_in_real, kh, kw, stride, pad, k_pad):
    """NHWC -> bf16 patches (N*Ho*Wo, k_pad), using only the first c_in_real channels.

    TODO(synk): build the kh*kw taps in-kernel from a VMEM-resident tile (halo DMA)
    instead of materializing patches in HBM via XLA.
    """
    x = x[..., :c_in_real].astype(jnp.bfloat16)
    n, h, w, c = x.shape
    if pad:
        x = jnp.pad(x, ((0, 0), (pad, pad), (pad, pad), (0, 0)))
    ho = (h + 2 * pad - kh) // stride + 1
    wo = (w + 2 * pad - kw) // stride + 1
    cols = []
    for i in range(kh):
        for j in range(kw):
            cols.append(x[:, i:i + ho * stride:stride, j:j + wo * stride:stride, :])
    patches = jnp.concatenate(cols, axis=-1).reshape(n * ho * wo, kh * kw * c)
    if patches.shape[1] < k_pad:
        patches = jnp.pad(patches, ((0, 0), (0, k_pad - patches.shape[1])))
    return patches, (n, ho, wo)


def conv_bn(x, w, gamma, beta, *, kh, kw, stride, pad, relu_cols, c_in_real,
            residual=None):
    """im2col conv (no bias) + BatchNorm(batch stats) + ReLU on the first `relu_cols`
    lanes + optional residual add.  Returns NHWC bf16 with w.shape[1] channels."""
    k_pad, c_pad = w.shape
    patches, (n, ho, wo) = _im2col(x, c_in_real, kh, kw, stride, pad, k_pad)
    m = patches.shape[0]
    add_res = residual is not None
    res2 = None
    if add_res:
        assert residual.shape == (n, ho, wo, c_pad)
        res2 = residual.reshape(m, c_pad)

    # ---------------- fused single-kernel path (VMEM-byte gated) ----------------
    fused_bytes = (patches.size * 2 + w.size * 2 + 4 * m * c_pad * 4
                   + (m * c_pad * 2 if add_res else 0))
    if fused_bytes <= _vmem_budget_bytes():
        ops = [patches, w, gamma, beta] + ([res2] if add_res else [])
        out = pl.pallas_call(
            _make_fused_conv_kernel(m, relu_cols, c_pad, add_res),
            out_shape=jax.ShapeDtypeStruct((m, c_pad), jnp.bfloat16),
            in_specs=[_WHOLE] * len(ops),
            out_specs=_WHOLE,
            compiler_params=_cparams(),
            cost_estimate=pl.CostEstimate(
                flops=2 * m * k_pad * c_pad, transcendentals=0,
                bytes_accessed=patches.size * 2 + w.size * 2 + m * c_pad * 2),
        )(*ops)
        return out.reshape(n, ho, wo, c_pad)

    # ---------------- tiled two-pass fallback (very large M only) ----------------
    m_pad = _round_up(m, TILE_M)
    num_tiles = m_pad // TILE_M
    if m_pad > m:
        patches = jnp.pad(patches, ((0, m_pad - m), (0, 0)))
        if add_res:
            res2 = jnp.pad(res2, ((0, m_pad - m), (0, 0)))

    y, stats = pl.pallas_call(
        _matmul_stats_kernel,
        grid=(num_tiles,),
        out_shape=(jax.ShapeDtypeStruct((m_pad, c_pad), jnp.float32),
                   jax.ShapeDtypeStruct((num_tiles * 8, c_pad), jnp.float32)),
        in_specs=[pl.BlockSpec((TILE_M, k_pad), lambda i: (i, 0)),
                  pl.BlockSpec((k_pad, c_pad), lambda i: (0, 0))],
        out_specs=(pl.BlockSpec((TILE_M, c_pad), lambda i: (i, 0)),
                   pl.BlockSpec((8, c_pad), lambda i: (i, 0))),
        compiler_params=_cparams(dimension_semantics=("parallel",)),
        cost_estimate=pl.CostEstimate(
            flops=2 * m_pad * k_pad * c_pad, transcendentals=0,
            bytes_accessed=m_pad * k_pad * 2 + k_pad * c_pad * 2 + m_pad * c_pad * 4),
    )(patches, w)

    # Tiny (C,)-sized cross-tile fold.  Zero-padded rows contribute 0 to both sums
    # (no bias add in pass 1), so no analytic correction is needed.
    stats = stats.reshape(num_tiles, 8, c_pad)
    mean = jnp.sum(stats[:, 0, :], axis=0) / m
    # NOTE: E[y^2]-E[y]^2 form; the fused path above uses centered variance instead.
    var = jnp.maximum(jnp.sum(stats[:, 1, :], axis=0) / m - mean * mean, 0.0)
    scale = (gamma[0] * jax.lax.rsqrt(var + BN_EPS)).reshape(1, c_pad)
    shift = (beta[0] - mean * scale[0]).reshape(1, c_pad)

    in_specs = [pl.BlockSpec((TILE_M, c_pad), lambda i: (i, 0)),
                pl.BlockSpec((1, c_pad), lambda i: (0, 0)),
                pl.BlockSpec((1, c_pad), lambda i: (0, 0))]
    ops = [y, scale, shift]
    if add_res:
        in_specs.append(pl.BlockSpec((TILE_M, c_pad), lambda i: (i, 0)))
        ops.append(res2)
    out = pl.pallas_call(
        _make_bn_act_kernel(relu_cols, c_pad, add_res),
        grid=(num_tiles,),
        out_shape=jax.ShapeDtypeStruct((m_pad, c_pad), jnp.bfloat16),
        in_specs=in_specs,
        out_specs=pl.BlockSpec((TILE_M, c_pad), lambda i: (i, 0)),
        compiler_params=_cparams(dimension_semantics=("parallel",)),
    )(*ops)
    return out[:m].reshape(n, ho, wo, c_pad)


def maxpool_3x3_s2_p1(x):
    """Standalone MaxPool2d(3, 2, 1) for the non-fused fallback path (input >= 0)."""
    n, h, w, c = x.shape
    ho = (h - 1) // 2 + 1
    wo = (w - 1) // 2 + 1
    xp = jnp.pad(x, ((0, 0), (1, 1), (1, 1), (0, 0)))
    taps = [xp[:, :, j:j + 2 * wo:2, :] for j in range(3)]
    return pl.pallas_call(
        _make_maxpool_kernel(ho),
        grid=(n,),
        out_shape=jax.ShapeDtypeStruct((n, ho, wo, c), x.dtype),
        in_specs=[pl.BlockSpec((1, h + 2, wo, c), lambda i: (i, 0, 0, 0))] * 3,
        out_specs=pl.BlockSpec((1, ho, wo, c), lambda i: (i, 0, 0, 0)),
        compiler_params=_cparams(dimension_semantics=("parallel",)),
    )(*taps)


def stem_conv_bn_relu_pool(x, w, gamma, beta):
    """7x7/s2/p3 conv + BN(batch stats) + ReLU + MaxPool(3,2,1), fused into one kernel."""
    k_pad, c_pad = w.shape
    c_in_real = x.shape[-1]
    patches, (n, ho, wo) = _im2col(x, c_in_real, 7, 7, 2, 3, k_pad)
    m = patches.shape[0]
    ho_out = (ho - 1) // 2 + 1
    wo_out = (wo - 1) // 2 + 1
    wpad = 8                                   # zero-pad columns (sublane aligned)
    scr_w = wpad + max(wo, 2 * wo_out)

    fused_bytes = (patches.size * 2 + w.size * 2 + 4 * m * c_pad * 4
                   + n * ho * scr_w * c_pad * 4 + n * ho_out * wo_out * c_pad * 2)
    if FUSE_MAXPOOL and fused_bytes <= _vmem_budget_bytes():
        return pl.pallas_call(
            _make_stem_kernel(n, ho, wo, c_pad, ho_out, wo_out, wpad),
            out_shape=jax.ShapeDtypeStruct((n, ho_out, wo_out, c_pad), jnp.bfloat16),
            in_specs=[_WHOLE] * 4,
            out_specs=_WHOLE,
            scratch_shapes=[pltpu.VMEM((n * ho, scr_w, c_pad), jnp.float32)],
            compiler_params=_cparams(),
            cost_estimate=pl.CostEstimate(
                flops=2 * m * k_pad * c_pad, transcendentals=0,
                bytes_accessed=(patches.size * 2 + w.size * 2
                                + n * ho_out * wo_out * c_pad * 2)),
        )(patches, w, gamma, beta)

    # Fallback for very large images: tiled conv then standalone pooling kernel.
    y = conv_bn(x, w, gamma, beta, kh=7, kw=7, stride=2, pad=3,
                relu_cols=c_pad, c_in_real=c_in_real)
    return maxpool_3x3_s2_p1(y)


def classifier_head(z, w, b, num_classes=NUM_CLASSES):
    """z: (N, H, W, C_pad) bf16 -> mean over (H, W) -> Linear -> first 6 logits."""
    n, h, wd, c = z.shape
    out = pl.pallas_call(
        _head_kernel,
        out_shape=jax.ShapeDtypeStruct((n, w.shape[1]), jnp.float32),
        in_specs=[_WHOLE] * 3,
        out_specs=_WHOLE,
        compiler_params=_cparams(),
    )(z.reshape(n, h * wd, c), w, b)
    return out[:, :num_classes]


# -----------------------------------------------------------------------------
# Parameters (deterministic synthetic init, torch-equivalent shapes, packed for MXU)
# -----------------------------------------------------------------------------
def pack_conv(w_hwio, c_out_pad):
    """HWIO conv weight -> (round_up(kh*kw*cin, 16), c_out_pad) bf16 im2col matrix."""
    kh, kw, cin, cout = w_hwio.shape
    k = kh * kw * cin
    w2 = jnp.zeros((_round_up(k, KPAD), c_out_pad), jnp.float32)
    w2 = w2.at[:k, :cout].set(w_hwio.reshape(k, cout))
    return w2.astype(jnp.bfloat16)


def pack_block_conv1_ds(w1_hwio, wd_hwio, c_out_pad):
    """conv1 (3x3,s2) and the 1x1,s2 downsample packed into one (K, 2*c_out_pad) matrix:
    the 1x1 weight occupies the centre-tap K rows of the 3x3 im2col layout."""
    kh, kw, cin, cout = w1_hwio.shape
    k = kh * kw * cin
    w = jnp.zeros((_round_up(k, KPAD), 2 * c_out_pad), jnp.float32)
    w = w.at[:k, :cout].set(w1_hwio.reshape(k, cout))
    ctr = (kh // 2) * kw + (kw // 2)
    w = w.at[ctr * cin:(ctr + 1) * cin, c_out_pad:c_out_pad + cout].set(
        wd_hwio.reshape(cin, cout))
    return w.astype(jnp.bfloat16)


def init_params(key, layers=LAYERS, n_input_channels=3):
    keys = iter(jax.random.split(key, 64))

    def nrm(shape, scale=0.1):
        return scale * jax.random.normal(next(keys), shape, dtype=jnp.float32)

    def gvec(c_real):     # BN gamma, padded lanes = 1
        return jnp.ones((1, LANE), jnp.float32).at[0, :c_real].set(1.0 + nrm((c_real,), 0.05))

    def bvec(c_real):     # BN beta, padded lanes = 0
        return jnp.zeros((1, LANE), jnp.float32).at[0, :c_real].set(nrm((c_real,), 0.05))

    params = {
        "stem": {  # Conv2d(3, 32, 7, s=2, p=3, bias=False) + BatchNorm2d(32)
            "w": pack_conv(nrm((7, 7, n_input_channels, 32)), LANE),
            "gamma": gvec(32),
            "beta": bvec(32),
        },
        "blocks": [],
    }
    c = 32
    for l in layers:
        params["blocks"].append({
            # conv1(3x3,s2,bias=False)+BN+ReLU  and  downsample Conv(1x1,s2)+BN share one
            # 256-wide matmul.  The downsample conv bias is omitted: a per-channel constant
            # added before training-mode (batch statistics) BatchNorm cancels exactly.
            "w1d": pack_block_conv1_ds(nrm((3, 3, c, l)), nrm((1, 1, c, l)), LANE),
            "g1d": jnp.concatenate([gvec(l), gvec(l)], axis=1),
            "b1d": jnp.concatenate([bvec(l), bvec(l)], axis=1),
            # conv2: Conv2d(l, l, 3, p=1, bias=False) + BN
            "w2": pack_conv(nrm((3, 3, l, l)), LANE),
            "g2": gvec(l),
            "b2": bvec(l),
        })
        c = l
    # Linear(c, 6): (C_pad, 128) bf16 weight with the real block in [:c, :6].
    params["cls_w"] = (jnp.zeros((_round_up(c, LANE), LANE), jnp.float32)
                       .at[:c, :NUM_CLASSES].set(nrm((c, NUM_CLASSES)))).astype(jnp.bfloat16)
    params["cls_b"] = (jnp.zeros((1, LANE), jnp.float32)
                       .at[0, :NUM_CLASSES].set(nrm((NUM_CLASSES,), 0.05)))
    return params


# -----------------------------------------------------------------------------
# Forward pass (mirrors CNNClassifier.forward; block config is static Python)
# -----------------------------------------------------------------------------
@jax.jit
def cnn_classifier_forward(params, x_nchw):
    x = jnp.transpose(x_nchw, (0, 2, 3, 1)).astype(jnp.float32)   # NCHW -> NHWC

    st = params["stem"]
    x = stem_conv_bn_relu_pool(x, st["w"], st["gamma"], st["beta"])

    c_in = 32
    for bi, c_out in enumerate(LAYERS):
        bp = params["blocks"][bi]
        # conv1 (3x3,s2) + the 1x1,s2 downsample: one im2col, one 256-wide matmul;
        # ReLU applies to the conv1 half only (the downsample half is the identity path).
        fused = conv_bn(x, bp["w1d"], bp["g1d"], bp["b1d"],
                        kh=3, kw=3, stride=2, pad=1, relu_cols=LANE, c_in_real=c_in)
        h = fused[..., :LANE]
        identity = fused[..., LANE:]
        # Block.forward = net(x) + identity; net ends in ReLU (no ReLU after the add).
        x = conv_bn(h, bp["w2"], bp["g2"], bp["b2"],
                    kh=3, kw=3, stride=1, pad=1, relu_cols=LANE, c_in_real=c_out,
                    residual=identity)
        c_in = c_out

    # z.mean(dim=[2, 3]) then Linear(c, 6)
    return classifier_head(x, params["cls_w"], params["cls_b"])


# -----------------------------------------------------------------------------
if __name__ == "__main__":
    key = jax.random.PRNGKey(0)
    pkey, xkey = jax.random.split(key)
    params = init_params(pkey)

    # Small NCHW input (batch=2, 3 channels, 64x64).  The stem sees M=2048 rows and,
    # with the VMEM-byte gate, takes the single fused conv+BN+ReLU+maxpool kernel.
    x = jax.random.normal(xkey, (2, 3, 64, 64), dtype=jnp.float32)

    logits = cnn_classifier_forward(params, x)
    logits = jax.block_until_ready(logits)
    assert logits.shape == (2, NUM_CLASSES), logits.shape
    assert bool(jnp.all(jnp.isfinite(logits)))
    print("KERNEL_OK")
</pallas_src>

<mosaic_0001>
module attributes {stable_mosaic.version = 11 : i64} {
  func.func @kernel(%arg0: memref<2048x160xbf16, #tpu.memory_space<vmem>>, %arg1: memref<160x128xbf16, #tpu.memory_space<vmem>>, %arg2: memref<1x128xf32, #tpu.memory_space<vmem>>, %arg3: memref<1x128xf32, #tpu.memory_space<vmem>>, %arg4: memref<2x16x16x128xbf16, #tpu.memory_space<vmem>>, %arg5: memref<64x40x128xf32, #tpu.memory_space<vmem>>) attributes {dimension_semantics = [], scalar_prefetch = 0 : i64, scratch_operands = 1 : i64, tpu.core_type = #tpu.core_type<tc>} {
    %c0 = arith.constant 0 : index
    %c0_0 = arith.constant 0 : index
    %0 = vector.load %arg0[%c0, %c0_0] : memref<2048x160xbf16, #tpu.memory_space<vmem>>, vector<2048x160xbf16>
    %c0_1 = arith.constant 0 : index
    %c0_2 = arith.constant 0 : index
    %1 = vector.load %arg1[%c0_1, %c0_2] : memref<160x128xbf16, #tpu.memory_space<vmem>>, vector<160x128xbf16>
    %cst = arith.constant dense<0.000000e+00> : vector<2048x128xf32>
    %2 = tpu.matmul %0, %1, %cst {dimension_numbers = #tpu.dot_dimension_numbers<[1], [0], [0], [1], [0, 0, 1, 1], [], []>} : vector<2048x160xbf16>, vector<160x128xbf16>, vector<2048x128xf32> -> vector<2048x128xf32>
    %cst_3 = arith.constant dense<0.000000e+00> : vector<128xf32>
    %3 = vector.multi_reduction <add>, %2, %cst_3 [0] : vector<2048x128xf32> to vector<128xf32>
    %4 = vector.shape_cast %3 : vector<128xf32> to vector<1x128xf32>
    %cst_4 = arith.constant 4.8828125E-4 : f32
    %5 = vector.broadcast %cst_4 : f32 to vector<1x128xf32>
    %6 = arith.mulf %4, %5 : vector<1x128xf32>
    %7 = vector.broadcast %6 : vector<1x128xf32> to vector<2048x128xf32>
    %8 = arith.subf %2, %7 : vector<2048x128xf32>
    %9 = arith.mulf %8, %8 : vector<2048x128xf32>
    %cst_5 = arith.constant dense<0.000000e+00> : vector<128xf32>
    %10 = vector.multi_reduction <add>, %9, %cst_5 [0] : vector<2048x128xf32> to vector<128xf32>
    %11 = vector.shape_cast %10 : vector<128xf32> to vector<1x128xf32>
    %cst_6 = arith.constant 4.8828125E-4 : f32
    %12 = vector.broadcast %cst_6 : f32 to vector<1x128xf32>
    %13 = arith.mulf %11, %12 : vector<1x128xf32>
    %c0_7 = arith.constant 0 : index
    %c0_8 = arith.constant 0 : index
    %14 = vector.load %arg2[%c0_7, %c0_8] : memref<1x128xf32, #tpu.memory_space<vmem>>, vector<1x128xf32>
    %cst_9 = arith.constant 9.99999974E-6 : f32
    %15 = vector.broadcast %cst_9 : f32 to vector<1x128xf32>
    %16 = arith.addf %13, %15 : vector<1x128xf32>
    %17 = math.rsqrt %16 : vector<1x128xf32>
    %18 = arith.mulf %14, %17 : vector<1x128xf32>
    %19 = vector.broadcast %18 : vector<1x128xf32> to vector<2048x128xf32>
    %20 = arith.mulf %8, %19 : vector<2048x128xf32>
    %c0_10 = arith.constant 0 : index
    %c0_11 = arith.constant 0 : index
    %21 = vector.load %arg3[%c0_10, %c0_11] : memref<1x128xf32, #tpu.memory_space<vmem>>, vector<1x128xf32>
    %22 = vector.broadcast %21 : vector<1x128xf32> to vector<2048x128xf32>
    %23 = arith.addf %20, %22 : vector<2048x128xf32>
    %cst_12 = arith.constant 0.000000e+00 : f32
    %24 = vector.broadcast %cst_12 : f32 to vector<2048x128xf32>
    %25 = arith.maximumf %23, %24 : vector<2048x128xf32>
    %cst_13 = arith.constant 0.000000e+00 : f32
    %26 = vector.broadcast %cst_13 : f32 to vector<64x40x128xf32>
    %c0_14 = arith.constant 0 : index
    %c0_15 = arith.constant 0 : index
    %c0_16 = arith.constant 0 : index
    %27 = vector.load %arg5[%c0_14, %c0_15, %c0_16] : memref<64x40x128xf32, #tpu.memory_space<vmem>>, vector<64x40x128xf32>
    tpu.vector_store %arg5[%c0_14, %c0_15, %c0_16], %26 {strides = array<i32>} : memref<64x40x128xf32, #tpu.memory_space<vmem>>, vector<64x40x128xf32>,
    %28 = vector.shape_cast %25 : vector<2048x128xf32> to vector<64x32x128xf32>
    %c0_17 = arith.constant 0 : index
    %c8 = arith.constant 8 : index
    %c0_18 = arith.constant 0 : index
    %29 = vector.load %arg5[%c0_17, %c8, %c0_18] : memref<64x40x128xf32, #tpu.memory_space<vmem>>, vector<64x32x128xf32>
    tpu.vector_store %arg5[%c0_17, %c8, %c0_18], %28 {strides = array<i32>} : memref<64x40x128xf32, #tpu.memory_space<vmem>>, vector<64x32x128xf32>,
    %c0_19 = arith.constant 0 : index
    %c7 = arith.constant 7 : index
    %c0_20 = arith.constant 0 : index
    %30 = tpu.strided_load %arg5[%c0_19, %c7, %c0_20] {strides = array<i32: 1, 2, 1>} : memref<64x40x128xf32, #tpu.memory_space<vmem>>, vector<64x16x128xf32>
    %c0_21 = arith.constant 0 : index
    %c8_22 = arith.constant 8 : index
    %c0_23 = arith.constant 0 : index
    %31 = tpu.strided_load %arg5[%c0_21, %c8_22, %c0_23] {strides = array<i32: 1, 2, 1>} : memref<64x40x128xf32, #tpu.memory_space<vmem>>, vector<64x16x128xf32>
    %c0_24 = arith.constant 0 : index
    %c9 = arith.constant 9 : index
    %c0_25 = arith.constant 0 : index
    %32 = tpu.strided_load %arg5[%c0_24, %c9, %c0_25] {strides = array<i32: 1, 2, 1>} : memref<64x40x128xf32, #tpu.memory_space<vmem>>, vector<64x16x128xf32>
    %33 = arith.maximumf %30, %31 : vector<64x16x128xf32>
    %34 = arith.maximumf %33, %32 : vector<64x16x128xf32>
    %35 = vector.shape_cast %34 : vector<64x16x128xf32> to vector<2x32x16x128xf32>
    %36 = vector.extract_strided_slice %35 {offsets = [0, 0, 0, 0], sizes = [2, 1, 16, 128], strides = [1, 1, 1, 1]} : vector<2x32x16x128xf32> to vector<2x1x16x128xf32>
    %37 = vector.shape_cast %36 : vector<2x1x16x128xf32> to vector<2x16x128xf32>
    %38 = vector.extract_strided_slice %35 {offsets = [0, 1, 0, 0], sizes = [2, 1, 16, 128], strides = [1, 1, 1, 1]} : vector<2x32x16x128xf32> to vector<2x1x16x128xf32>
    %39 = vector.shape_cast %38 : vector<2x1x16x128xf32> to vector<2x16x128xf32>
    %40 = arith.maximumf %37, %39 : vector<2x16x128xf32>
    %41 = vector.extract_strided_slice %35 {offsets = [0, 1, 0, 0], sizes = [2, 1, 16, 128], strides = [1, 1, 1, 1]} : vector<2x32x16x128xf32> to vector<2x1x16x128xf32>
    %42 = vector.shape_cast %41 : vector<2x1x16x128xf32> to vector<2x16x128xf32>
    %43 = vector.extract_strided_slice %35 {offsets = [0, 2, 0, 0], sizes = [2, 1, 16, 128], strides = [1, 1, 1, 1]} : vector<2x32x16x128xf32> to vector<2x1x16x128xf32>
    %44 = vector.shape_cast %43 : vector<2x1x16x128xf32> to vector<2x16x128xf32>
    %45 = arith.maximumf %42, %44 : vector<2x16x128xf32>
    %46 = vector.extract_strided_slice %35 {offsets = [0, 3, 0, 0], sizes = [2, 1, 16, 128], strides = [1, 1, 1, 1]} : vector<2x32x16x128xf32> to vector<2x1x16x128xf32>
    %47 = vector.shape_cast %46 : vector<2x1x16x128xf32> to vector<2x16x128xf32>
    %48 = arith.maximumf %45, %47 : vector<2x16x128xf32>
    %49 = vector.extract_strided_slice %35 {offsets = [0, 3, 0, 0], sizes = [2, 1, 16, 128], strides = [1, 1, 1, 1]} : vector<2x32x16x128xf32> to vector<2x1x16x128xf32>
    %50 = vector.shape_cast %49 : vector<2x1x16x128xf32> to vector<2x16x128xf32>
    %51 = vector.extract_strided_slice %35 {offsets = [0, 4, 0, 0], sizes = [2, 1, 16, 128], strides = [1, 1, 1, 1]} : vector<2x32x16x128xf32> to vector<2x1x16x128xf32>
    %52 = vector.shape_cast %51 : vector<2x1x16x128xf32> to vector<2x16x128xf32>
    %53 = arith.maximumf %50, %52 : vector<2x16x128xf32>
    %54 = vector.extract_strided_slice %35 {offsets = [0, 5, 0, 0], sizes = [2, 1, 16, 128], strides = [1, 1, 1, 1]} : vector<2x32x16x128xf32> to vector<2x1x16x128xf32>
    %55 = vector.shape_cast %54 : vector<2x1x16x128xf32> to vector<2x16x128xf32>
    %56 = arith.maximumf %53, %55 : vector<2x16x128xf32>
    %57 = vector.extract_strided_slice %35 {offsets = [0, 5, 0, 0], sizes = [2, 1, 16, 128], strides = [1, 1, 1, 1]} : vector<2x32x16x128xf32> to vector<2x1x16x128xf32>
    %58 = vector.shape_cast %57 : vector<2x1x16x128xf32> to vector<2x16x128xf32>
    %59 = vector.extract_strided_slice %35 {offsets = [0, 6, 0, 0], sizes = [2, 1, 16, 128], strides = [1, 1, 1, 1]} : vector<2x32x16x128xf32> to vector<2x1x16x128xf32>
    %60 = vector.shape_cast %59 : vector<2x1x16x128xf32> to vector<2x16x128xf32>
    %61 = arith.maximumf %58, %60 : vector<2x16x128xf32>
    %62 = vector.extract_strided_slice %35 {offsets = [0, 7, 0, 0], sizes = [2, 1, 16, 128], strides = [1, 1, 1, 1]} : vector<2x32x16x128xf32> to vector<2x1x16x128xf32>
    %63 = vector.shape_cast %62 : vector<2x1x16x128xf32> to vector<2x16x128xf32>
    %64 = arith.maximumf %61, %63 : vector<2x16x128xf32>
    %65 = vector.extract_strided_slice %35 {offsets = [0, 7, 0, 0], sizes = [2, 1, 16, 128], strides = [1, 1, 1, 1]} : vector<2x32x16x128xf32> to vector<2x1x16x128xf32>
    %66 = vector.shape_cast %65 : vector<2x1x16x128xf32> to vector<2x16x128xf32>
    %67 = vector.extract_strided_slice %35 {offsets = [0, 8, 0, 0], sizes = [2, 1, 16, 128], strides = [1, 1, 1, 1]} : vector<2x32x16x128xf32> to vector<2x1x16x128xf32>
    %68 = vector.shape_cast %67 : vector<2x1x16x128xf32> to vector<2x16x128xf32>
    %69 = arith.maximumf %66, %68 : vector<2x16x128xf32>
    %70 = vector.extract_strided_slice %35 {offsets = [0, 9, 0, 0], sizes = [2, 1, 16, 128], strides = [1, 1, 1, 1]} : vector<2x32x16x128xf32> to vector<2x1x16x128xf32>
    %71 = vector.shape_cast %70 : vector<2x1x16x128xf32> to vector<2x16x128xf32>
    %72 = arith.maximumf %69, %71 : vector<2x16x128xf32>
    %73 = vector.extract_strided_slice %35 {offsets = [0, 9, 0, 0], sizes = [2, 1, 16, 128], strides = [1, 1, 1, 1]} : vector<2x32x16x128xf32> to vector<2x1x16x128xf32>
    %74 = vector.shape_cast %73 : vector<2x1x16x128xf32> to vector<2x16x128xf32>
    %75 = vector.extract_strided_slice %35 {offsets = [0, 10, 0, 0], sizes = [2, 1, 16, 128], strides = [1, 1, 1, 1]} : vector<2x32x16x128xf32> to vector<2x1x16x128xf32>
    %76 = vector.shape_cast %75 : vector<2x1x16x128xf32> to vector<2x16x128xf32>
    %77 = arith.maximumf %74, %76 : vector<2x16x128xf32>
    %78 = vector.extract_strided_slice %35 {offsets = [0, 11, 0, 0], sizes = [2, 1, 16, 128], strides = [1, 1, 1, 1]} : vector<2x32x16x128xf32> to vector<2x1x16x128xf32>
    %79 = vector.shape_cast %78 : vector<2x1x16x128xf32> to vector<2x16x128xf32>
    %80 = arith.maximumf %77, %79 : vector<2x16x128xf32>
    %81 = vector.extract_strided_slice %35 {offsets = [0, 11, 0, 0], sizes = [2, 1, 16, 128], strides = [1, 1, 1, 1]} : vector<2x32x16x128xf32> to vector<2x1x16x128xf32>
    %82 = vector.shape_cast %81 : vector<2x1x16x128xf32> to vector<2x16x128xf32>
    %83 = vector.extract_strided_slice %35 {offsets = [0, 12, 0, 0], sizes = [2, 1, 16, 128], strides = [1, 1, 1, 1]} : vector<2x32x16x128xf32> to vector<2x1x16x128xf32>
    %84 = vector.shape_cast %83 : vector<2x1x16x128xf32> to vector<2x16x128xf32>
    %85 = arith.maximumf %82, %84 : vector<2x16x128xf32>
    %86 = vector.extract_strided_slice %35 {offsets = [0, 13, 0, 0], sizes = [2, 1, 16, 128], strides = [1, 1, 1, 1]} : vector<2x32x16x128xf32> to vector<2x1x16x128xf32>
    %87 = vector.shape_cast %86 : vector<2x1x16x128xf32> to vector<2x16x128xf32>
    %88 = arith.maximumf %85, %87 : vector<2x16x128xf32>
    %89 = vector.extract_strided_slice %35 {offsets = [0, 13, 0, 0], sizes = [2, 1, 16, 128], strides = [1, 1, 1, 1]} : vector<2x32x16x128xf32> to vector<2x1x16x128xf32>
    %90 = vector.shape_cast %89 : vector<2x1x16x128xf32> to vector<2x16x128xf32>
    %91 = vector.extract_strided_slice %35 {offsets = [0, 14, 0, 0], sizes = [2, 1, 16, 128], strides = [1, 1, 1, 1]} : vector<2x32x16x128xf32> to vector<2x1x16x128xf32>
    %92 = vector.shape_cast %91 : vector<2x1x16x128xf32> to vector<2x16x128xf32>
    %93 = arith.maximumf %90, %92 : vector<2x16x128xf32>
    %94 = vector.extract_strided_slice %35 {offsets = [0, 15, 0, 0], sizes = [2, 1, 16, 128], strides = [1, 1, 1, 1]} : vector<2x32x16x128xf32> to vector<2x1x16x128xf32>
    %95 = vector.shape_cast %94 : vector<2x1x16x128xf32> to vector<2x16x128xf32>
    %96 = arith.maximumf %93, %95 : vector<2x16x128xf32>
    %97 = vector.extract_strided_slice %35 {offsets = [0, 15, 0, 0], sizes = [2, 1, 16, 128], strides = [1, 1, 1, 1]} : vector<2x32x16x128xf32> to vector<2x1x16x128xf32>
    %98 = vector.shape_cast %97 : vector<2x1x16x128xf32> to vector<2x16x128xf32>
    %99 = vector.extract_strided_slice %35 {offsets = [0, 16, 0, 0], sizes = [2, 1, 16, 128], strides = [1, 1, 1, 1]} : vector<2x32x16x128xf32> to vector<2x1x16x128xf32>
    %100 = vector.shape_cast %99 : vector<2x1x16x128xf32> to vector<2x16x128xf32>
    %101 = arith.maximumf %98, %100 : vector<2x16x128xf32>
    %102 = vector.extract_strided_slice %35 {offsets = [0, 17, 0, 0], sizes = [2, 1, 16, 128], strides = [1, 1, 1, 1]} : vector<2x32x16x128xf32> to vector<2x1x16x128xf32>
    %103 = vector.shape_cast %102 : vector<2x1x16x128xf32> to vector<2x16x128xf32>
    %104 = arith.maximumf %101, %103 : vector<2x16x128xf32>
    %105 = vector.extract_strided_slice %35 {offsets = [0, 17, 0, 0], sizes = [2, 1, 16, 128], strides = [1, 1, 1, 1]} : vector<2x32x16x128xf32> to vector<2x1x16x128xf32>
    %106 = vector.shape_cast %105 : vector<2x1x16x128xf32> to vector<2x16x128xf32>
    %107 = vector.extract_strided_slice %35 {offsets = [0, 18, 0, 0], sizes = [2, 1, 16, 128], strides = [1, 1, 1, 1]} : vector<2x32x16x128xf32> to vector<2x1x16x128xf32>
    %108 = vector.shape_cast %107 : vector<2x1x16x128xf32> to vector<2x16x128xf32>
    %109 = arith.maximumf %106, %108 : vector<2x16x128xf32>
    %110 = vector.extract_strided_slice %35 {offsets = [0, 19, 0, 0], sizes = [2, 1, 16, 128], strides = [1, 1, 1, 1]} : vector<2x32x16x128xf32> to vector<2x1x16x128xf32>
    %111 = vector.shape_cast %110 : vector<2x1x16x128xf32> to vector<2x16x128xf32>
    %112 = arith.maximumf %109, %111 : vector<2x16x128xf32>
    %113 = vector.extract_strided_slice %35 {offsets = [0, 19, 0, 0], sizes = [2, 1, 16, 128], strides = [1, 1, 1, 1]} : vector<2x32x16x128xf32> to vector<2x1x16x128xf32>
    %114 = vector.shape_cast %113 : vector<2x1x16x128xf32> to vector<2x16x128xf32>
    %115 = vector.extract_strided_slice %35 {offsets = [0, 20, 0, 0], sizes = [2, 1, 16, 128], strides = [1, 1, 1, 1]} : vector<2x32x16x128xf32> to vector<2x1x16x128xf32>
    %116 = vector.shape_cast %115 : vector<2x1x16x128xf32> to vector<2x16x128xf32>
    %117 = arith.maximumf %114, %116 : vector<2x16x128xf32>
    %118 = vector.extract_strided_slice %35 {offsets = [0, 21, 0, 0], sizes = [2, 1, 16, 128], strides = [1, 1, 1, 1]} : vector<2x32x16x128xf32> to vector<2x1x16x128xf32>
    %119 = vector.shape_cast %118 : vector<2x1x16x128xf32> to vector<2x16x128xf32>
    %120 = arith.maximumf %117, %119 : vector<2x16x128xf32>
    %121 = vector.extract_strided_slice %35 {offsets = [0, 21, 0, 0], sizes = [2, 1, 16, 128], strides = [1, 1, 1, 1]} : vector<2x32x16x128xf32> to vector<2x1x16x128xf32>
    %122 = vector.shape_cast %121 : vector<2x1x16x128xf32> to vector<2x16x128xf32>
    %123 = vector.extract_strided_slice %35 {offsets = [0, 22, 0, 0], sizes = [2, 1, 16, 128], strides = [1, 1, 1, 1]} : vector<2x32x16x128xf32> to vector<2x1x16x128xf32>
    %124 = vector.shape_cast %123 : vector<2x1x16x128xf32> to vector<2x16x128xf32>
    %125 = arith.maximumf %122, %124 : vector<2x16x128xf32>
    %126 = vector.extract_strided_slice %35 {offsets = [0, 23, 0, 0], sizes = [2, 1, 16, 128], strides = [1, 1, 1, 1]} : vector<2x32x16x128xf32> to vector<2x1x16x128xf32>
    %127 = vector.shape_cast %126 : vector<2x1x16x128xf32> to vector<2x16x128xf32>
    %128 = arith.maximumf %125, %127 : vector<2x16x128xf32>
    %129 = vector.extract_strided_slice %35 {offsets = [0, 23, 0, 0], sizes = [2, 1, 16, 128], strides = [1, 1, 1, 1]} : vector<2x32x16x128xf32> to vector<2x1x16x128xf32>
    %130 = vector.shape_cast %129 : vector<2x1x16x128xf32> to vector<2x16x128xf32>
    %131 = vector.extract_strided_slice %35 {offsets = [0, 24, 0, 0], sizes = [2, 1, 16, 128], strides = [1, 1, 1, 1]} : vector<2x32x16x128xf32> to vector<2x1x16x128xf32>
    %132 = vector.shape_cast %131 : vector<2x1x16x128xf32> to vector<2x16x128xf32>
    %133 = arith.maximumf %130, %132 : vector<2x16x128xf32>
    %134 = vector.extract_strided_slice %35 {offsets = [0, 25, 0, 0], sizes = [2, 1, 16, 128], strides = [1, 1, 1, 1]} : vector<2x32x16x128xf32> to vector<2x1x16x128xf32>
    %135 = vector.shape_cast %134 : vector<2x1x16x128xf32> to vector<2x16x128xf32>
    %136 = arith.maximumf %133, %135 : vector<2x16x128xf32>
    %137 = vector.extract_strided_slice %35 {offsets = [0, 25, 0, 0], sizes = [2, 1, 16, 128], strides = [1, 1, 1, 1]} : vector<2x32x16x128xf32> to vector<2x1x16x128xf32>
    %138 = vector.shape_cast %137 : vector<2x1x16x128xf32> to vector<2x16x128xf32>
    %139 = vector.extract_strided_slice %35 {offsets = [0, 26, 0, 0], sizes = [2, 1, 16, 128], strides = [1, 1, 1, 1]} : vector<2x32x16x128xf32> to vector<2x1x16x128xf32>
    %140 = vector.shape_cast %139 : vector<2x1x16x128xf32> to vector<2x16x128xf32>
    %141 = arith.maximumf %138, %140 : vector<2x16x128xf32>
    %142 = vector.extract_strided_slice %35 {offsets = [0, 27, 0, 0], sizes = [2, 1, 16, 128], strides = [1, 1, 1, 1]} : vector<2x32x16x128xf32> to vector<2x1x16x128xf32>
    %143 = vector.shape_cast %142 : vector<2x1x16x128xf32> to vector<2x16x128xf32>
    %144 = arith.maximumf %141, %143 : vector<2x16x128xf32>
    %145 = vector.extract_strided_slice %35 {offsets = [0, 27, 0, 0], sizes = [2, 1, 16, 128], strides = [1, 1, 1, 1]} : vector<2x32x16x128xf32> to vector<2x1x16x128xf32>
    %146 = vector.shape_cast %145 : vector<2x1x16x128xf32> to vector<2x16x128xf32>
    %147 = vector.extract_strided_slice %35 {offsets = [0, 28, 0, 0], sizes = [2, 1, 16, 128], strides = [1, 1, 1, 1]} : vector<2x32x16x128xf32> to vector<2x1x16x128xf32>
    %148 = vector.shape_cast %147 : vector<2x1x16x128xf32> to vector<2x16x128xf32>
    %149 = arith.maximumf %146, %148 : vector<2x16x128xf32>
    %150 = vector.extract_strided_slice %35 {offsets = [0, 29, 0, 0], sizes = [2, 1, 16, 128], strides = [1, 1, 1, 1]} : vector<2x32x16x128xf32> to vector<2x1x16x128xf32>
    %151 = vector.shape_cast %150 : vector<2x1x16x128xf32> to vector<2x16x128xf32>
    %152 = arith.maximumf %149, %151 : vector<2x16x128xf32>
    %153 = vector.extract_strided_slice %35 {offsets = [0, 29, 0, 0], sizes = [2, 1, 16, 128], strides = [1, 1, 1, 1]} : vector<2x32x16x128xf32> to vector<2x1x16x128xf32>
    %154 = vector.shape_cast %153 : vector<2x1x16x128xf32> to vector<2x16x128xf32>
    %155 = vector.extract_strided_slice %35 {offsets = [0, 30, 0, 0], sizes = [2, 1, 16, 128], strides = [1, 1, 1, 1]} : vector<2x32x16x128xf32> to vector<2x1x16x128xf32>
    %156 = vector.shape_cast %155 : vector<2x1x16x128xf32> to vector<2x16x128xf32>
    %157 = arith.maximumf %154, %156 : vector<2x16x128xf32>
    %158 = vector.extract_strided_slice %35 {offsets = [0, 31, 0, 0], sizes = [2, 1, 16, 128], strides = [1, 1, 1, 1]} : vector<2x32x16x128xf32> to vector<2x1x16x128xf32>
    %159 = vector.shape_cast %158 : vector<2x1x16x128xf32> to vector<2x16x128xf32>
    %160 = arith.maximumf %157, %159 : vector<2x16x128xf32>
    %161 = vector.shape_cast %40 : vector<2x16x128xf32> to vector<2x1x16x128xf32>
    %162 = vector.shape_cast %48 : vector<2x16x128xf32> to vector<2x1x16x128xf32>
    %163 = vector.shape_cast %56 : vector<2x16x128xf32> to vector<2x1x16x128xf32>
    %164 = vector.shape_cast %64 : vector<2x16x128xf32> to vector<2x1x16x128xf32>
    %165 = vector.shape_cast %72 : vector<2x16x128xf32> to vector<2x1x16x128xf32>
    %166 = vector.shape_cast %80 : vector<2x16x128xf32> to vector<2x1x16x128xf32>
    %167 = vector.shape_cast %88 : vector<2x16x128xf32> to vector<2x1x16x128xf32>
    %168 = vector.shape_cast %96 : vector<2x16x128xf32> to vector<2x1x16x128xf32>
    %169 = vector.shape_cast %104 : vector<2x16x128xf32> to vector<2x1x16x128xf32>
    %170 = vector.shape_cast %112 : vector<2x16x128xf32> to vector<2x1x16x128xf32>
    %171 = vector.shape_cast %120 : vector<2x16x128xf32> to vector<2x1x16x128xf32>
    %172 = vector.shape_cast %128 : vector<2x16x128xf32> to vector<2x1x16x128xf32>
    %173 = vector.shape_cast %136 : vector<2x16x128xf32> to vector<2x1x16x128xf32>
    %174 = vector.shape_cast %144 : vector<2x16x128xf32> to vector<2x1x16x128xf32>
    %175 = vector.shape_cast %152 : vector<2x16x128xf32> to vector<2x1x16x128xf32>
    %176 = vector.shape_cast %160 : vector<2x16x128xf32> to vector<2x1x16x128xf32>
    %177 = tpu.concatenate %161, %162, %163, %164, %165, %166, %167, %168, %169, %170, %171, %172, %173, %174, %175, %176 in 1 : vector<2x1x16x128xf32>, vector<2x1x16x128xf32>, vector<2x1x16x128xf32>, vector<2x1x16x128xf32>, vector<2x1x16x128xf32>, vector<2x1x16x128xf32>, vector<2x1x16x128xf32>, vector<2x1x16x128xf32>, vector<2x1x16x128xf32>, vector<2x1x16x128xf32>, vector<2x1x16x128xf32>, vector<2x1x16x128xf32>, vector<2x1x16x128xf32>, vector<2x1x16x128xf32>, vector<2x1x16x128xf32>, vector<2x1x16x128xf32> -> vector<2x16x16x128xf32>
    %178 = arith.truncf %177 : vector<2x16x16x128xf32> to vector<2x16x16x128xbf16>
    %c0_26 = arith.constant 0 : index
    %c0_27 = arith.constant 0 : index
    %c0_28 = arith.constant 0 : index
    %c0_29 = arith.constant 0 : index
    %179 = vector.load %arg4[%c0_26, %c0_27, %c0_28, %c0_29] : memref<2x16x16x128xbf16, #tpu.memory_space<vmem>>, vector<2x16x16x128xbf16>
    tpu.vector_store %arg4[%c0_26, %c0_27, %c0_28, %c0_29], %178 {strides = array<i32>} : memref<2x16x16x128xbf16, #tpu.memory_space<vmem>>, vector<2x16x16x128xbf16>,
    return
  }
}

module attributes {stable_mosaic.version = 11 : i64} {
  func.func @kernel(%arg0: memref<128x288xbf16, #tpu.memory_space<vmem>>, %arg1: memref<288x256xbf16, #tpu.memory_space<vmem>>, %arg2: memref<1x256xf32, #tpu.memory_space<vmem>>, %arg3: memref<1x256xf32, #tpu.memory_space<vmem>>, %arg4: memref<128x256xbf16, #tpu.memory_space<vmem>>) attributes {dimension_semantics = [], scalar_prefetch = 0 : i64, scratch_operands = 0 : i64, tpu.core_type = #tpu.core_type<tc>} {
    %c0 = arith.constant 0 : index
    %c0_0 = arith.constant 0 : index
    %0 = vector.load %arg0[%c0, %c0_0] : memref<128x288xbf16, #tpu.memory_space<vmem>>, vector<128x288xbf16>
    %c0_1 = arith.constant 0 : index
    %c0_2 = arith.constant 0 : index
    %1 = vector.load %arg1[%c0_1, %c0_2] : memref<288x256xbf16, #tpu.memory_space<vmem>>, vector<288x256xbf16>
    %cst = arith.constant dense<0.000000e+00> : vector<128x256xf32>
    %2 = tpu.matmul %0, %1, %cst {dimension_numbers = #tpu.dot_dimension_numbers<[1], [0], [0], [1], [0, 0, 1, 1], [], []>} : vector<128x288xbf16>, vector<288x256xbf16>, vector<128x256xf32> -> vector<128x256xf32>
    %cst_3 = arith.constant dense<0.000000e+00> : vector<256xf32>
    %3 = vector.multi_reduction <add>, %2, %cst_3 [0] : vector<128x256xf32> to vector<256xf32>
    %4 = vector.shape_cast %3 : vector<256xf32> to vector<1x256xf32>
    %cst_4 = arith.constant 7.812500e-03 : f32
    %5 = vector.broadcast %cst_4 : f32 to vector<1x256xf32>
    %6 = arith.mulf %4, %5 : vector<1x256xf32>
    %7 = vector.broadcast %6 : vector<1x256xf32> to vector<128x256xf32>
    %8 = arith.subf %2, %7 : vector<128x256xf32>
    %9 = arith.mulf %8, %8 : vector<128x256xf32>
    %cst_5 = arith.constant dense<0.000000e+00> : vector<256xf32>
    %10 = vector.multi_reduction <add>, %9, %cst_5 [0] : vector<128x256xf32> to vector<256xf32>
    %11 = vector.shape_cast %10 : vector<256xf32> to vector<1x256xf32>
    %cst_6 = arith.constant 7.812500e-03 : f32
    %12 = vector.broadcast %cst_6 : f32 to vector<1x256xf32>
    %13 = arith.mulf %11, %12 : vector<1x256xf32>
    %c0_7 = arith.constant 0 : index
    %c0_8 = arith.constant 0 : index
    %14 = vector.load %arg2[%c0_7, %c0_8] : memref<1x256xf32, #tpu.memory_space<vmem>>, vector<1x256xf32>
    %cst_9 = arith.constant 9.99999974E-6 : f32
    %15 = vector.broadcast %cst_9 : f32 to vector<1x256xf32>
    %16 = arith.addf %13, %15 : vector<1x256xf32>
    %17 = math.rsqrt %16 : vector<1x256xf32>
    %18 = arith.mulf %14, %17 : vector<1x256xf32>
    %19 = vector.broadcast %18 : vector<1x256xf32> to vector<128x256xf32>
    %20 = arith.mulf %8, %19 : vector<128x256xf32>
    %c0_10 = arith.constant 0 : index
    %c0_11 = arith.constant 0 : index
    %21 = vector.load %arg3[%c0_10, %c0_11] : memref<1x256xf32, #tpu.memory_space<vmem>>, vector<1x256xf32>
    %22 = vector.broadcast %21 : vector<1x256xf32> to vector<128x256xf32>
    %23 = arith.addf %20, %22 : vector<128x256xf32>
    %24 = tpu.iota {dimensions = array<i32: 1>} : vector<128x256xi32>
    %c128_i32 = arith.constant 128 : i32
    %25 = vector.broadcast %c128_i32 : i32 to vector<128x256xi32>
    %26 = arith.cmpi slt, %24, %25 : vector<128x256xi32>
    %cst_12 = arith.constant 0.000000e+00 : f32
    %27 = vector.broadcast %cst_12 : f32 to vector<128x256xf32>
    %28 = arith.maximumf %23, %27 : vector<128x256xf32>
    %29 = arith.select %26, %28, %23 : vector<128x256xi1>, vector<128x256xf32>
    %30 = arith.truncf %29 : vector<128x256xf32> to vector<128x256xbf16>
    %c0_13 = arith.constant 0 : index
    %c0_14 = arith.constant 0 : index
    %31 = vector.load %arg4[%c0_13, %c0_14] : memref<128x256xbf16, #tpu.memory_space<vmem>>, vector<128x256xbf16>
    tpu.vector_store %arg4[%c0_13, %c0_14], %30 {strides = array<i32>} : memref<128x256xbf16, #tpu.memory_space<vmem>>, vector<128x256xbf16>,
    return
  }
}

module attributes {stable_mosaic.version = 11 : i64} {
  func.func @kernel(%arg0: memref<128x288xbf16, #tpu.memory_space<vmem>>, %arg1: memref<288x128xbf16, #tpu.memory_space<vmem>>, %arg2: memref<1x128xf32, #tpu.memory_space<vmem>>, %arg3: memref<1x128xf32, #tpu.memory_space<vmem>>, %arg4: memref<128x128xbf16, #tpu.memory_space<vmem>>, %arg5: memref<128x128xbf16, #tpu.memory_space<vmem>>) attributes {dimension_semantics = [], scalar_prefetch = 0 : i64, scratch_operands = 0 : i64, tpu.core_type = #tpu.core_type<tc>} {
    %c0 = arith.constant 0 : index
    %c0_0 = arith.constant 0 : index
    %0 = vector.load %arg0[%c0, %c0_0] : memref<128x288xbf16, #tpu.memory_space<vmem>>, vector<128x288xbf16>
    %c0_1 = arith.constant 0 : index
    %c0_2 = arith.constant 0 : index
    %1 = vector.load %arg1[%c0_1, %c0_2] : memref<288x128xbf16, #tpu.memory_space<vmem>>, vector<288x128xbf16>
    %cst = arith.constant dense<0.000000e+00> : vector<128x128xf32>
    %2 = tpu.matmul %0, %1, %cst {dimension_numbers = #tpu.dot_dimension_numbers<[1], [0], [0], [1], [0, 0, 1, 1], [], []>} : vector<128x288xbf16>, vector<288x128xbf16>, vector<128x128xf32> -> vector<128x128xf32>
    %cst_3 = arith.constant dense<0.000000e+00> : vector<128xf32>
    %3 = vector.multi_reduction <add>, %2, %cst_3 [0] : vector<128x128xf32> to vector<128xf32>
    %4 = vector.shape_cast %3 : vector<128xf32> to vector<1x128xf32>
    %cst_4 = arith.constant 7.812500e-03 : f32
    %5 = vector.broadcast %cst_4 : f32 to vector<1x128xf32>
    %6 = arith.mulf %4, %5 : vector<1x128xf32>
    %7 = vector.broadcast %6 : vector<1x128xf32> to vector<128x128xf32>
    %8 = arith.subf %2, %7 : vector<128x128xf32>
    %9 = arith.mulf %8, %8 : vector<128x128xf32>
    %cst_5 = arith.constant dense<0.000000e+00> : vector<128xf32>
    %10 = vector.multi_reduction <add>, %9, %cst_5 [0] : vector<128x128xf32> to vector<128xf32>
    %11 = vector.shape_cast %10 : vector<128xf32> to vector<1x128xf32>
    %cst_6 = arith.constant 7.812500e-03 : f32
    %12 = vector.broadcast %cst_6 : f32 to vector<1x128xf32>
    %13 = arith.mulf %11, %12 : vector<1x128xf32>
    %c0_7 = arith.constant 0 : index
    %c0_8 = arith.constant 0 : index
    %14 = vector.load %arg2[%c0_7, %c0_8] : memref<1x128xf32, #tpu.memory_space<vmem>>, vector<1x128xf32>
    %cst_9 = arith.constant 9.99999974E-6 : f32
    %15 = vector.broadcast %cst_9 : f32 to vector<1x128xf32>
    %16 = arith.addf %13, %15 : vector<1x128xf32>
    %17 = math.rsqrt %16 : vector<1x128xf32>
    %18 = arith.mulf %14, %17 : vector<1x128xf32>
    %19 = vector.broadcast %18 : vector<1x128xf32> to vector<128x128xf32>
    %20 = arith.mulf %8, %19 : vector<128x128xf32>
    %c0_10 = arith.constant 0 : index
    %c0_11 = arith.constant 0 : index
    %21 = vector.load %arg3[%c0_10, %c0_11] : memref<1x128xf32, #tpu.memory_space<vmem>>, vector<1x128xf32>
    %22 = vector.broadcast %21 : vector<1x128xf32> to vector<128x128xf32>
    %23 = arith.addf %20, %22 : vector<128x128xf32>
    %cst_12 = arith.constant 0.000000e+00 : f32
    %24 = vector.broadcast %cst_12 : f32 to vector<128x128xf32>
    %25 = arith.maximumf %23, %24 : vector<128x128xf32>
    %c0_13 = arith.constant 0 : index
    %c0_14 = arith.constant 0 : index
    %26 = vector.load %arg4[%c0_13, %c0_14] : memref<128x128xbf16, #tpu.memory_space<vmem>>, vector<128x128xbf16>
    %27 = arith.extf %26 : vector<128x128xbf16> to vector<128x128xf32>
    %28 = arith.addf %25, %27 : vector<128x128xf32>
    %29 = arith.truncf %28 : vector<128x128xf32> to vector<128x128xbf16>
    %c0_15 = arith.constant 0 : index
    %c0_16 = arith.constant 0 : index
    %30 = vector.load %arg5[%c0_15, %c0_16] : memref<128x128xbf16, #tpu.memory_space<vmem>>, vector<128x128xbf16>
    tpu.vector_store %arg5[%c0_15, %c0_16], %29 {strides = array<i32>} : memref<128x128xbf16, #tpu.memory_space<vmem>>, vector<128x128xbf16>,
    return
  }
}

module attributes {stable_mosaic.version = 11 : i64} {
  func.func @kernel(%arg0: memref<32x288xbf16, #tpu.memory_space<vmem>>, %arg1: memref<288x256xbf16, #tpu.memory_space<vmem>>, %arg2: memref<1x256xf32, #tpu.memory_space<vmem>>, %arg3: memref<1x256xf32, #tpu.memory_space<vmem>>, %arg4: memref<32x256xbf16, #tpu.memory_space<vmem>>) attributes {dimension_semantics = [], scalar_prefetch = 0 : i64, scratch_operands = 0 : i64, tpu.core_type = #tpu.core_type<tc>} {
    %c0 = arith.constant 0 : index
    %c0_0 = arith.constant 0 : index
    %0 = vector.load %arg0[%c0, %c0_0] : memref<32x288xbf16, #tpu.memory_space<vmem>>, vector<32x288xbf16>
    %c0_1 = arith.constant 0 : index
    %c0_2 = arith.constant 0 : index
    %1 = vector.load %arg1[%c0_1, %c0_2] : memref<288x256xbf16, #tpu.memory_space<vmem>>, vector<288x256xbf16>
    %cst = arith.constant dense<0.000000e+00> : vector<32x256xf32>
    %2 = tpu.matmul %0, %1, %cst {dimension_numbers = #tpu.dot_dimension_numbers<[1], [0], [0], [1], [0, 0, 1, 1], [], []>} : vector<32x288xbf16>, vector<288x256xbf16>, vector<32x256xf32> -> vector<32x256xf32>
    %cst_3 = arith.constant dense<0.000000e+00> : vector<256xf32>
    %3 = vector.multi_reduction <add>, %2, %cst_3 [0] : vector<32x256xf32> to vector<256xf32>
    %4 = vector.shape_cast %3 : vector<256xf32> to vector<1x256xf32>
    %cst_4 = arith.constant 3.125000e-02 : f32
    %5 = vector.broadcast %cst_4 : f32 to vector<1x256xf32>
    %6 = arith.mulf %4, %5 : vector<1x256xf32>
    %7 = vector.broadcast %6 : vector<1x256xf32> to vector<32x256xf32>
    %8 = arith.subf %2, %7 : vector<32x256xf32>
    %9 = arith.mulf %8, %8 : vector<32x256xf32>
    %cst_5 = arith.constant dense<0.000000e+00> : vector<256xf32>
    %10 = vector.multi_reduction <add>, %9, %cst_5 [0] : vector<32x256xf32> to vector<256xf32>
    %11 = vector.shape_cast %10 : vector<256xf32> to vector<1x256xf32>
    %cst_6 = arith.constant 3.125000e-02 : f32
    %12 = vector.broadcast %cst_6 : f32 to vector<1x256xf32>
    %13 = arith.mulf %11, %12 : vector<1x256xf32>
    %c0_7 = arith.constant 0 : index
    %c0_8 = arith.constant 0 : index
    %14 = vector.load %arg2[%c0_7, %c0_8] : memref<1x256xf32, #tpu.memory_space<vmem>>, vector<1x256xf32>
    %cst_9 = arith.constant 9.99999974E-6 : f32
    %15 = vector.broadcast %cst_9 : f32 to vector<1x256xf32>
    %16 = arith.addf %13, %15 : vector<1x256xf32>
    %17 = math.rsqrt %16 : vector<1x256xf32>
    %18 = arith.mulf %14, %17 : vector<1x256xf32>
    %19 = vector.broadcast %18 : vector<1x256xf32> to vector<32x256xf32>
    %20 = arith.mulf %8, %19 : vector<32x256xf32>
    %c0_10 = arith.constant 0 : index
    %c0_11 = arith.constant 0 : index
    %21 = vector.load %arg3[%c0_10, %c0_11] : memref<1x256xf32, #tpu.memory_space<vmem>>, vector<1x256xf32>
    %22 = vector.broadcast %21 : vector<1x256xf32> to vector<32x256xf32>
    %23 = arith.addf %20, %22 : vector<32x256xf32>
    %24 = tpu.iota {dimensions = array<i32: 1>} : vector<32x256xi32>
    %c128_i32 = arith.constant 128 : i32
    %25 = vector.broadcast %c128_i32 : i32 to vector<32x256xi32>
    %26 = arith.cmpi slt, %24, %25 : vector<32x256xi32>
    %cst_12 = arith.constant 0.000000e+00 : f32
    %27 = vector.broadcast %cst_12 : f32 to vector<32x256xf32>
    %28 = arith.maximumf %23, %27 : vector<32x256xf32>
    %29 = arith.select %26, %28, %23 : vector<32x256xi1>, vector<32x256xf32>
    %30 = arith.truncf %29 : vector<32x256xf32> to vector<32x256xbf16>
    %c0_13 = arith.constant 0 : index
    %c0_14 = arith.constant 0 : index
    %31 = vector.load %arg4[%c0_13, %c0_14] : memref<32x256xbf16, #tpu.memory_space<vmem>>, vector<32x256xbf16>
    tpu.vector_store %arg4[%c0_13, %c0_14], %30 {strides = array<i32>} : memref<32x256xbf16, #tpu.memory_space<vmem>>, vector<32x256xbf16>,
    return
  }
}

module attributes {stable_mosaic.version = 11 : i64} {
  func.func @kernel(%arg0: memref<32x576xbf16, #tpu.memory_space<vmem>>, %arg1: memref<576x128xbf16, #tpu.memory_space<vmem>>, %arg2: memref<1x128xf32, #tpu.memory_space<vmem>>, %arg3: memref<1x128xf32, #tpu.memory_space<vmem>>, %arg4: memref<32x128xbf16, #tpu.memory_space<vmem>>, %arg5: memref<32x128xbf16, #tpu.memory_space<vmem>>) attributes {dimension_semantics = [], scalar_prefetch = 0 : i64, scratch_operands = 0 : i64, tpu.core_type = #tpu.core_type<tc>} {
    %c0 = arith.constant 0 : index
    %c0_0 = arith.constant 0 : index
    %0 = vector.load %arg0[%c0, %c0_0] : memref<32x576xbf16, #tpu.memory_space<vmem>>, vector<32x576xbf16>
    %c0_1 = arith.constant 0 : index
    %c0_2 = arith.constant 0 : index
    %1 = vector.load %arg1[%c0_1, %c0_2] : memref<576x128xbf16, #tpu.memory_space<vmem>>, vector<576x128xbf16>
    %cst = arith.constant dense<0.000000e+00> : vector<32x128xf32>
    %2 = tpu.matmul %0, %1, %cst {dimension_numbers = #tpu.dot_dimension_numbers<[1], [0], [0], [1], [0, 0, 1, 1], [], []>} : vector<32x576xbf16>, vector<576x128xbf16>, vector<32x128xf32> -> vector<32x128xf32>
    %cst_3 = arith.constant dense<0.000000e+00> : vector<128xf32>
    %3 = vector.multi_reduction <add>, %2, %cst_3 [0] : vector<32x128xf32> to vector<128xf32>
    %4 = vector.shape_cast %3 : vector<128xf32> to vector<1x128xf32>
    %cst_4 = arith.constant 3.125000e-02 : f32
    %5 = vector.broadcast %cst_4 : f32 to vector<1x128xf32>
    %6 = arith.mulf %4, %5 : vector<1x128xf32>
    %7 = vector.broadcast %6 : vector<1x128xf32> to vector<32x128xf32>
    %8 = arith.subf %2, %7 : vector<32x128xf32>
    %9 = arith.mulf %8, %8 : vector<32x128xf32>
    %cst_5 = arith.constant dense<0.000000e+00> : vector<128xf32>
    %10 = vector.multi_reduction <add>, %9, %cst_5 [0] : vector<32x128xf32> to vector<128xf32>
    %11 = vector.shape_cast %10 : vector<128xf32> to vector<1x128xf32>
    %cst_6 = arith.constant 3.125000e-02 : f32
    %12 = vector.broadcast %cst_6 : f32 to vector<1x128xf32>
    %13 = arith.mulf %11, %12 : vector<1x128xf32>
    %c0_7 = arith.constant 0 : index
    %c0_8 = arith.constant 0 : index
    %14 = vector.load %arg2[%c0_7, %c0_8] : memref<1x128xf32, #tpu.memory_space<vmem>>, vector<1x128xf32>
    %cst_9 = arith.constant 9.99999974E-6 : f32
    %15 = vector.broadcast %cst_9 : f32 to vector<1x128xf32>
    %16 = arith.addf %13, %15 : vector<1x128xf32>
    %17 = math.rsqrt %16 : vector<1x128xf32>
    %18 = arith.mulf %14, %17 : vector<1x128xf32>
    %19 = vector.broadcast %18 : vector<1x128xf32> to vector<32x128xf32>
    %20 = arith.mulf %8, %19 : vector<32x128xf32>
    %c0_10 = arith.constant 0 : index
    %c0_11 = arith.constant 0 : index
    %21 = vector.load %arg3[%c0_10, %c0_11] : memref<1x128xf32, #tpu.memory_space<vmem>>, vector<1x128xf32>
    %22 = vector.broadcast %21 : vector<1x128xf32> to vector<32x128xf32>
    %23 = arith.addf %20, %22 : vector<32x128xf32>
    %cst_12 = arith.constant 0.000000e+00 : f32
    %24 = vector.broadcast %cst_12 : f32 to vector<32x128xf32>
    %25 = arith.maximumf %23, %24 : vector<32x128xf32>
    %c0_13 = arith.constant 0 : index
    %c0_14 = arith.constant 0 : index
    %26 = vector.load %arg4[%c0_13, %c0_14] : memref<32x128xbf16, #tpu.memory_space<vmem>>, vector<32x128xbf16>
    %27 = arith.extf %26 : vector<32x128xbf16> to vector<32x128xf32>
    %28 = arith.addf %25, %27 : vector<32x128xf32>
    %29 = arith.truncf %28 : vector<32x128xf32> to vector<32x128xbf16>
    %c0_15 = arith.constant 0 : index
    %c0_16 = arith.constant 0 : index
    %30 = vector.load %arg5[%c0_15, %c0_16] : memref<32x128xbf16, #tpu.memory_space<vmem>>, vector<32x128xbf16>
    tpu.vector_store %arg5[%c0_15, %c0_16], %29 {strides = array<i32>} : memref<32x128xbf16, #tpu.memory_space<vmem>>, vector<32x128xbf16>,
    return
  }
}

module attributes {stable_mosaic.version = 11 : i64} {
  func.func @kernel(%arg0: memref<8x576xbf16, #tpu.memory_space<vmem>>, %arg1: memref<576x256xbf16, #tpu.memory_space<vmem>>, %arg2: memref<1x256xf32, #tpu.memory_space<vmem>>, %arg3: memref<1x256xf32, #tpu.memory_space<vmem>>, %arg4: memref<8x256xbf16, #tpu.memory_space<vmem>>) attributes {dimension_semantics = [], scalar_prefetch = 0 : i64, scratch_operands = 0 : i64, tpu.core_type = #tpu.core_type<tc>} {
    %c0 = arith.constant 0 : index
    %c0_0 = arith.constant 0 : index
    %0 = vector.load %arg0[%c0, %c0_0] : memref<8x576xbf16, #tpu.memory_space<vmem>>, vector<8x576xbf16>
    %c0_1 = arith.constant 0 : index
    %c0_2 = arith.constant 0 : index
    %1 = vector.load %arg1[%c0_1, %c0_2] : memref<576x256xbf16, #tpu.memory_space<vmem>>, vector<576x256xbf16>
    %cst = arith.constant dense<0.000000e+00> : vector<8x256xf32>
    %2 = tpu.matmul %0, %1, %cst {dimension_numbers = #tpu.dot_dimension_numbers<[1], [0], [0], [1], [0, 0, 1, 1], [], []>} : vector<8x576xbf16>, vector<576x256xbf16>, vector<8x256xf32> -> vector<8x256xf32>
    %cst_3 = arith.constant dense<0.000000e+00> : vector<256xf32>
    %3 = vector.multi_reduction <add>, %2, %cst_3 [0] : vector<8x256xf32> to vector<256xf32>
    %4 = vector.shape_cast %3 : vector<256xf32> to vector<1x256xf32>
    %cst_4 = arith.constant 1.250000e-01 : f32
    %5 = vector.broadcast %cst_4 : f32 to vector<1x256xf32>
    %6 = arith.mulf %4, %5 : vector<1x256xf32>
    %7 = vector.broadcast %6 : vector<1x256xf32> to vector<8x256xf32>
    %8 = arith.subf %2, %7 : vector<8x256xf32>
    %9 = arith.mulf %8, %8 : vector<8x256xf32>
    %cst_5 = arith.constant dense<0.000000e+00> : vector<256xf32>
    %10 = vector.multi_reduction <add>, %9, %cst_5 [0] : vector<8x256xf32> to vector<256xf32>
    %11 = vector.shape_cast %10 : vector<256xf32> to vector<1x256xf32>
    %cst_6 = arith.constant 1.250000e-01 : f32
    %12 = vector.broadcast %cst_6 : f32 to vector<1x256xf32>
    %13 = arith.mulf %11, %12 : vector<1x256xf32>
    %c0_7 = arith.constant 0 : index
    %c0_8 = arith.constant 0 : index
    %14 = vector.load %arg2[%c0_7, %c0_8] : memref<1x256xf32, #tpu.memory_space<vmem>>, vector<1x256xf32>
    %cst_9 = arith.constant 9.99999974E-6 : f32
    %15 = vector.broadcast %cst_9 : f32 to vector<1x256xf32>
    %16 = arith.addf %13, %15 : vector<1x256xf32>
    %17 = math.rsqrt %16 : vector<1x256xf32>
    %18 = arith.mulf %14, %17 : vector<1x256xf32>
    %19 = vector.broadcast %18 : vector<1x256xf32> to vector<8x256xf32>
    %20 = arith.mulf %8, %19 : vector<8x256xf32>
    %c0_10 = arith.constant 0 : index
    %c0_11 = arith.constant 0 : index
    %21 = vector.load %arg3[%c0_10, %c0_11] : memref<1x256xf32, #tpu.memory_space<vmem>>, vector<1x256xf32>
    %22 = vector.broadcast %21 : vector<1x256xf32> to vector<8x256xf32>
    %23 = arith.addf %20, %22 : vector<8x256xf32>
    %24 = tpu.iota {dimensions = array<i32: 1>} : vector<8x256xi32>
    %c128_i32 = arith.constant 128 : i32
    %25 = vector.broadcast %c128_i32 : i32 to vector<8x256xi32>
    %26 = arith.cmpi slt, %24, %25 : vector<8x256xi32>
    %cst_12 = arith.constant 0.000000e+00 : f32
    %27 = vector.broadcast %cst_12 : f32 to vector<8x256xf32>
    %28 = arith.maximumf %23, %27 : vector<8x256xf32>
    %29 = arith.select %26, %28, %23 : vector<8x256xi1>, vector<8x256xf32>
    %30 = arith.truncf %29 : vector<8x256xf32> to vector<8x256xbf16>
    %c0_13 = arith.constant 0 : index
    %c0_14 = arith.constant 0 : index
    %31 = vector.load %arg4[%c0_13, %c0_14] : memref<8x256xbf16, #tpu.memory_space<vmem>>, vector<8x256xbf16>
    tpu.vector_store %arg4[%c0_13, %c0_14], %30 {strides = array<i32>} : memref<8x256xbf16, #tpu.memory_space<vmem>>, vector<8x256xbf16>,
    return
  }
}

module attributes {stable_mosaic.version = 11 : i64} {
  func.func @_head_kernel(%arg0: memref<2x4x128xbf16, #tpu.memory_space<vmem>>, %arg1: memref<128x128xbf16, #tpu.memory_space<vmem>>, %arg2: memref<1x128xf32, #tpu.memory_space<vmem>>, %arg3: memref<2x128xf32, #tpu.memory_space<vmem>>) attributes {dimension_semantics = [], scalar_prefetch = 0 : i64, scratch_operands = 0 : i64, tpu.core_type = #tpu.core_type<tc>} {
    %c0 = arith.constant 0 : index
    %c0_0 = arith.constant 0 : index
    %c0_1 = arith.constant 0 : index
    %0 = vector.load %arg0[%c0, %c0_0, %c0_1] : memref<2x4x128xbf16, #tpu.memory_space<vmem>>, vector<2x4x128xbf16>
    %1 = arith.extf %0 : vector<2x4x128xbf16> to vector<2x4x128xf32>
    %cst = arith.constant dense<0.000000e+00> : vector<2x128xf32>
    %2 = vector.multi_reduction <add>, %1, %cst [1] : vector<2x4x128xf32> to vector<2x128xf32>
    %cst_2 = arith.constant 4.000000e+00 : f32
    %3 = vector.broadcast %cst_2 : f32 to vector<2x128xf32>
    %4 = arith.divf %2, %3 : vector<2x128xf32>
    %5 = arith.truncf %4 : vector<2x128xf32> to vector<2x128xbf16>
    %c0_3 = arith.constant 0 : index
    %c0_4 = arith.constant 0 : index
    %6 = vector.load %arg1[%c0_3, %c0_4] : memref<128x128xbf16, #tpu.memory_space<vmem>>, vector<128x128xbf16>
    %cst_5 = arith.constant dense<0.000000e+00> : vector<2x128xf32>
    %7 = tpu.matmul %5, %6, %cst_5 {dimension_numbers = #tpu.dot_dimension_numbers<[1], [0], [0], [1], [0, 0, 1, 1], [], []>} : vector<2x128xbf16>, vector<128x128xbf16>, vector<2x128xf32> -> vector<2x128xf32>
    %c0_6 = arith.constant 0 : index
    %c0_7 = arith.constant 0 : index
    %8 = vector.load %arg2[%c0_6, %c0_7] : memref<1x128xf32, #tpu.memory_space<vmem>>, vector<1x128xf32>
    %9 = vector.broadcast %8 : vector<1x128xf32> to vector<2x128xf32>
    %10 = arith.addf %7, %9 : vector<2x128xf32>
    %c0_8 = arith.constant 0 : index
    %c0_9 = arith.constant 0 : index
    %11 = vector.load %arg3[%c0_8, %c0_9] : memref<2x128xf32, #tpu.memory_space<vmem>>, vector<2x128xf32>
    tpu.vector_store %arg3[%c0_8, %c0_9], %10 {strides = array<i32>} : memref<2x128xf32, #tpu.memory_space<vmem>>, vector<2x128xf32>,
    return
  }
}

module attributes {stable_mosaic.version = 11 : i64} {
  func.func @kernel(%arg0: memref<8x1152xbf16, #tpu.memory_space<vmem>>, %arg1: memref<1152x128xbf16, #tpu.memory_space<vmem>>, %arg2: memref<1x128xf32, #tpu.memory_space<vmem>>, %arg3: memref<1x128xf32, #tpu.memory_space<vmem>>, %arg4: memref<8x128xbf16, #tpu.memory_space<vmem>>, %arg5: memref<8x128xbf16, #tpu.memory_space<vmem>>) attributes {dimension_semantics = [], scalar_prefetch = 0 : i64, scratch_operands = 0 : i64, tpu.core_type = #tpu.core_type<tc>} {
    %c0 = arith.constant 0 : index
    %c0_0 = arith.constant 0 : index
    %0 = vector.load %arg0[%c0, %c0_0] : memref<8x1152xbf16, #tpu.memory_space<vmem>>, vector<8x1152xbf16>
    %c0_1 = arith.constant 0 : index
    %c0_2 = arith.constant 0 : index
    %1 = vector.load %arg1[%c0_1, %c0_2] : memref<1152x128xbf16, #tpu.memory_space<vmem>>, vector<1152x128xbf16>
    %cst = arith.constant dense<0.000000e+00> : vector<8x128xf32>
    %2 = tpu.matmul %0, %1, %cst {dimension_numbers = #tpu.dot_dimension_numbers<[1], [0], [0], [1], [0, 0, 1, 1], [], []>} : vector<8x1152xbf16>, vector<1152x128xbf16>, vector<8x128xf32> -> vector<8x128xf32>
    %cst_3 = arith.constant dense<0.000000e+00> : vector<128xf32>
    %3 = vector.multi_reduction <add>, %2, %cst_3 [0] : vector<8x128xf32> to vector<128xf32>
    %4 = vector.shape_cast %3 : vector<128xf32> to vector<1x128xf32>
    %cst_4 = arith.constant 1.250000e-01 : f32
    %5 = vector.broadcast %cst_4 : f32 to vector<1x128xf32>
    %6 = arith.mulf %4, %5 : vector<1x128xf32>
    %7 = vector.broadcast %6 : vector<1x128xf32> to vector<8x128xf32>
    %8 = arith.subf %2, %7 : vector<8x128xf32>
    %9 = arith.mulf %8, %8 : vector<8x128xf32>
    %cst_5 = arith.constant dense<0.000000e+00> : vector<128xf32>
    %10 = vector.multi_reduction <add>, %9, %cst_5 [0] : vector<8x128xf32> to vector<128xf32>
    %11 = vector.shape_cast %10 : vector<128xf32> to vector<1x128xf32>
    %cst_6 = arith.constant 1.250000e-01 : f32
    %12 = vector.broadcast %cst_6 : f32 to vector<1x128xf32>
    %13 = arith.mulf %11, %12 : vector<1x128xf32>
    %c0_7 = arith.constant 0 : index
    %c0_8 = arith.constant 0 : index
    %14 = vector.load %arg2[%c0_7, %c0_8] : memref<1x128xf32, #tpu.memory_space<vmem>>, vector<1x128xf32>
    %cst_9 = arith.constant 9.99999974E-6 : f32
    %15 = vector.broadcast %cst_9 : f32 to vector<1x128xf32>
    %16 = arith.addf %13, %15 : vector<1x128xf32>
    %17 = math.rsqrt %16 : vector<1x128xf32>
    %18 = arith.mulf %14, %17 : vector<1x128xf32>
    %19 = vector.broadcast %18 : vector<1x128xf32> to vector<8x128xf32>
    %20 = arith.mulf %8, %19 : vector<8x128xf32>
    %c0_10 = arith.constant 0 : index
    %c0_11 = arith.constant 0 : index
    %21 = vector.load %arg3[%c0_10, %c0_11] : memref<1x128xf32, #tpu.memory_space<vmem>>, vector<1x128xf32>
    %22 = vector.broadcast %21 : vector<1x128xf32> to vector<8x128xf32>
    %23 = arith.addf %20, %22 : vector<8x128xf32>
    %cst_12 = arith.constant 0.000000e+00 : f32
    %24 = vector.broadcast %cst_12 : f32 to vector<8x128xf32>
    %25 = arith.maximumf %23, %24 : vector<8x128xf32>
    %c0_13 = arith.constant 0 : index
    %c0_14 = arith.constant 0 : index
    %26 = vector.load %arg4[%c0_13, %c0_14] : memref<8x128xbf16, #tpu.memory_space<vmem>>, vector<8x128xbf16>
    %27 = arith.extf %26 : vector<8x128xbf16> to vector<8x128xf32>
    %28 = arith.addf %25, %27 : vector<8x128xf32>
    %29 = arith.truncf %28 : vector<8x128xf32> to vector<8x128xbf16>
    %c0_15 = arith.constant 0 : index
    %c0_16 = arith.constant 0 : index
    %30 = vector.load %arg5[%c0_15, %c0_16] : memref<8x128xbf16, #tpu.memory_space<vmem>>, vector<8x128xbf16>
    tpu.vector_store %arg5[%c0_15, %c0_16], %29 {strides = array<i32>} : memref<8x128xbf16, #tpu.memory_space<vmem>>, vector<8x128xbf16>,
    return
  }
}

</mosaic_0001>

<llo_original>
// kernel: cnn_classifier_forward.9
$region0: #{cnn_classifier_forward.9}
  #allocation0 [shape = 'u32[]', space=smem, size = 0x4, offset = 0x4, fixed_abs, tag = 'smem constant byte address 0x4 - core index']
  #allocation1 [shape = 'u32[144,128]{1,0:T(1,128)}', space=vmem, size = 0x12000, scoped, tag = 'internal scratch']
  %s0 = inlined_call_operand.vmem [shape: bf16[128,288], index: 0, kind: input, shape index: {}]
  %s1 = inlined_call_operand.vmem [shape: bf16[288,256], index: 1, kind: input, shape index: {}]
  %s2 = inlined_call_operand.vmem [shape: f32[1,256], index: 2, kind: input, shape index: {}]
  %s3 = inlined_call_operand.vmem [shape: f32[1,256], index: 3, kind: input, shape index: {}]
  %s4 = inlined_call_operand.vmem [shape: bf16[128,256], index: 4, kind: output, shape index: {}]
  %s5 = sld [smem:[#allocation0]]
  $region26: #{cnn_classifier_forward.9} parent=0
    _
  %s7 = ssub.s32 1, %s5
  %s8 = scalar_select 0, %s7, %s5
  // Predicated region
  $region2: #{cnn_classifier_forward.9} parent=0 // pred_check
    _
  $region3: #{cnn_classifier_forward.9} parent=0 // pred_check_branch
    %10 = sbr.rel (0) target = $region5
  $region4: #{cnn_classifier_forward.9} parent=0 // pred_region
    _
  $region5: #{cnn_classifier_forward.9} parent=0 // pred_fallthru
    _
  // Predicated region
  $region6: #{cnn_classifier_forward.9} parent=0 // pred_check
    _
  $region7: #{cnn_classifier_forward.9} parent=0 // pred_check_branch
    %12 = sbr.rel (0) target = $region9
  $region8: #{cnn_classifier_forward.9} parent=0 // pred_region
    _
  $region9: #{cnn_classifier_forward.9} parent=0 // pred_fallthru
    _
  // Predicated region
  $region10: #{cnn_classifier_forward.9} parent=0 // pred_check
    _
  $region11: #{cnn_classifier_forward.9} parent=0 // pred_check_branch
    %14 = sbr.rel (0) target = $region13
  $region12: #{cnn_classifier_forward.9} parent=0 // pred_region
    _
  $region13: #{cnn_classifier_forward.9} parent=0 // pred_fallthru
    _
  // Predicated region
  $region14: #{cnn_classifier_forward.9} parent=0 // pred_check
    _
  $region15: #{cnn_classifier_forward.9} parent=0 // pred_check_branch
    %16 = sbr.rel (0) target = $region17
  $region16: #{cnn_classifier_forward.9} parent=0 // pred_region
    _
  $region17: #{cnn_classifier_forward.9} parent=0 // pred_fallthru
    _
  %v18 = vld [vmem:[%s0] sm:$0xff]
  %v19 = vld [vmem:[%s0 + $0x8] sm:$0xf]
  %v20 = vld [vmem:[%s0 + $0xc] sm:$0xff]
  %v21 = vld [vmem:[%s0 + $0x14] sm:$0xf]
  %v22 = vld [vmem:[%s0 + $0x18] sm:$0xff]
  %v23 = vld [vmem:[%s0 + $0x20] sm:$0xf]
  %v24 = vld [vmem:[%s0 + $0x24] sm:$0xff]
  %v25 = vld [vmem:[%s0 + $0x2c] sm:$0xf]
  %v26 = vld [vmem:[%s0 + $0x30] sm:$0xff]
  %v27 = vld [vmem:[%s0 + $0x38] sm:$0xf]
  %v28 = vld [vmem:[%s0 + $0x3c] sm:$0xff]
  %v29 = vld [vmem:[%s0 + $0x44] sm:$0xf]
  %v30 = vld [vmem:[%s0 + $0x48] sm:$0xff]
  %v31 = vld [vmem:[%s0 + $0x50] sm:$0xf]
  %v32 = vld [vmem:[%s0 + $0x54] sm:$0xff]
  %v33 = vld [vmem:[%s0 + $0x5c] sm:$0xf]
  %v34 = vld [vmem:[%s0 + $0x60] sm:$0xff]
  %v35 = vld [vmem:[%s0 + $0x68] sm:$0xf]
  %v36 = vld [vmem:[%s0 + $0x6c] sm:$0xff]
  %v37 = vld [vmem:[%s0 + $0x74] sm:$0xf]
  %v38 = vld [vmem:[%s0 + $0x78] sm:$0xff]
  %v39 = vld [vmem:[%s0 + $0x80] sm:$0xf]
  %v40 = vld [vmem:[%s0 + $0x84] sm:$0xff]
  %v41 = vld [vmem:[%s0 + $0x8c] sm:$0xf]
  %v42 = vld [vmem:[%s0 + $0x90] sm:$0xff]
  %v43 = vld [vmem:[%s0 + $0x98] sm:$0xf]
  %v44 = vld [vmem:[%s0 + $0x9c] sm:$0xff]
  %v45 = vld [vmem:[%s0 + $0xa4] sm:$0xf]
  %v46 = vld [vmem:[%s0 + $0xa8] sm:$0xff]
  %v47 = vld [vmem:[%s0 + $0xb0] sm:$0xf]
  %v48 = vld [vmem:[%s0 + $0xb4] sm:$0xff]
  %v49 = vld [vmem:[%s0 + $0xbc] sm:$0xf]
  %v50 = vld [vmem:[%s1] sm:$0xff]
  %v51 = vld [vmem:[%s1 + $0x8] sm:$0xff]
  %v52 = vld [vmem:[%s1 + $0x10] sm:$0xff]
  %v53 = vld [vmem:[%s1 + $0x18] sm:$0xff]
  %v54 = vld [vmem:[%s1 + $0x20] sm:$0xff]
  %v55 = vld [vmem:[%s1 + $0x28] sm:$0xff]
  %v56 = vld [vmem:[%s1 + $0x30] sm:$0xff]
  %v57 = vld [vmem:[%s1 + $0x38] sm:$0xff]
  %v58 = vld [vmem:[%s1 + $0x40] sm:$0xff]
  %v59 = vld [vmem:[%s1 + $0x48] sm:$0xff]
  %v60 = vld [vmem:[%s1 + $0x50] sm:$0xff]
  %v61 = vld [vmem:[%s1 + $0x58] sm:$0xff]
  %v62 = vld [vmem:[%s1 + $0x60] sm:$0xff]
  %v63 = vld [vmem:[%s1 + $0x68] sm:$0xff]
  %v64 = vld [vmem:[%s1 + $0x70] sm:$0xff]
  %v65 = vld [vmem:[%s1 + $0x78] sm:$0xff]
  %v66 = vld [vmem:[%s1 + $0x80] sm:$0xff]
  %v67 = vld [vmem:[%s1 + $0x88] sm:$0xff]
  %v68 = vld [vmem:[%s1 + $0x90] sm:$0xff]
  %v69 = vld [vmem:[%s1 + $0x98] sm:$0xff]
  %v70 = vld [vmem:[%s1 + $0xa0] sm:$0xff]
  %v71 = vld [vmem:[%s1 + $0xa8] sm:$0xff]
  %v72 = vld [vmem:[%s1 + $0xb0] sm:$0xff]
  %v73 = vld [vmem:[%s1 + $0xb8] sm:$0xff]
  %v74 = vld [vmem:[%s1 + $0xc0] sm:$0xff]
  %v75 = vld [vmem:[%s1 + $0xc8] sm:$0xff]
  %v76 = vld [vmem:[%s1 + $0xd0] sm:$0xff]
  %v77 = vld [vmem:[%s1 + $0xd8] sm:$0xff]
  %v78 = vld [vmem:[%s1 + $0xe0] sm:$0xff]
  %v79 = vld [vmem:[%s1 + $0xe8] sm:$0xff]
  %v80 = vld [vmem:[%s1 + $0xf0] sm:$0xff]
  %v81 = vld [vmem:[%s1 + $0xf8] sm:$0xff]
  %v82 = vld [vmem:[%s1 + $0x100] sm:$0xff]
  %v83 = vld [vmem:[%s1 + $0x108] sm:$0xff]
  %v84 = vld [vmem:[%s1 + $0x110] sm:$0xff]
  %v85 = vld [vmem:[%s1 + $0x118] sm:$0xff]
  %v118 = vunpack.c.l.b16 %v18
  %v119 = vunpack.c.h.b16 %v18
  %v120 = vunpack.c.l.b16 %v19
  %v121 = vunpack.c.l.b16 %v20
  %v122 = vunpack.c.h.b16 %v20
  %v123 = vunpack.c.l.b16 %v21
  %v124 = vunpack.c.l.b16 %v22
  %v125 = vunpack.c.h.b16 %v22
  %v126 = vunpack.c.l.b16 %v23
  %v127 = vunpack.c.l.b16 %v24
  %v128 = vunpack.c.h.b16 %v24
  %v129 = vunpack.c.l.b16 %v25
  %v130 = vunpack.c.l.b16 %v26
  %v131 = vunpack.c.h.b16 %v26
  %v132 = vunpack.c.l.b16 %v27
  %v133 = vunpack.c.l.b16 %v28
  %v134 = vunpack.c.h.b16 %v28
  %v135 = vunpack.c.l.b16 %v29
  %v136 = vunpack.c.l.b16 %v30
  %v137 = vunpack.c.h.b16 %v30
  %v138 = vunpack.c.l.b16 %v31
  %v139 = vunpack.c.l.b16 %v32
  %v140 = vunpack.c.h.b16 %v32
  %v141 = vunpack.c.l.b16 %v33
  %v142 = vunpack.c.l.b16 %v34
  %v143 = vunpack.c.h.b16 %v34
  %v144 = vunpack.c.l.b16 %v35
  %v145 = vunpack.c.l.b16 %v36
  %v146 = vunpack.c.h.b16 %v36
  %v147 = vunpack.c.l.b16 %v37
  %v148 = vunpack.c.l.b16 %v38
  %v149 = vunpack.c.h.b16 %v38
  %v150 = vunpack.c.l.b16 %v39
  %v151 = vunpack.c.l.b16 %v40
  %v152 = vunpack.c.h.b16 %v40
  %v153 = vunpack.c.l.b16 %v41
  %v154 = vunpack.c.l.b16 %v42
  %v155 = vunpack.c.h.b16 %v42
  %v156 = vunpack.c.l.b16 %v43
  %v157 = vunpack.c.l.b16 %v44
  %v158 = vunpack.c.h.b16 %v44
  %v159 = vunpack.c.l.b16 %v45
  %v160 = vunpack.c.l.b16 %v46
  %v161 = vunpack.c.h.b16 %v46
  %v162 = vunpack.c.l.b16 %v47
  %v163 = vunpack.c.l.b16 %v48
  %v164 = vunpack.c.h.b16 %v48
  %v165 = vunpack.c.l.b16 %v49
  %v166 = vpack.c.b16 %v121, %v118
  %v167 = vpack.c.b16 %v122, %v119
  %v168 = vpack.c.b16 %v123, %v120
  %v169 = vpack.c.b16 %v127, %v124
  %v170 = vpack.c.b16 %v128, %v125
  %v171 = vpack.c.b16 %v129, %v126
  %v172 = vpack.c.b16 %v133, %v130
  %v173 = vpack.c.b16 %v134, %v131
  %v174 = vpack.c.b16 %v135, %v132
  %v175 = vpack.c.b16 %v139, %v136
  %v176 = vpack.c.b16 %v140, %v137
  %v177 = vpack.c.b16 %v141, %v138
  %v178 = vpack.c.b16 %v145, %v142
  %v179 = vpack.c.b16 %v146, %v143
  %v180 = vpack.c.b16 %v147, %v144
  %v181 = vpack.c.b16 %v151, %v148
  %v182 = vpack.c.b16 %v152, %v149
  %v183 = vpack.c.b16 %v153, %v150
  %v184 = vpack.c.b16 %v157, %v154
  %v185 = vpack.c.b16 %v158, %v155
  %v186 = vpack.c.b16 %v159, %v156
  %v187 = vpack.c.b16 %v163, %v160
  %v188 = vpack.c.b16 %v164, %v161
  %v189 = vpack.c.b16 %v165, %v162
  %v242 = vunpack.c.l.b16 %v50
  %v243 = vunpack.c.h.b16 %v50
  %v244 = vunpack.c.l.b16 %v51
  %v245 = vunpack.c.h.b16 %v51
  %v246 = vunpack.c.l.b16 %v52
  %v247 = vunpack.c.h.b16 %v52
  %v248 = vunpack.c.l.b16 %v53
  %v249 = vunpack.c.h.b16 %v53
  %v250 = vunpack.c.l.b16 %v54
  %v251 = vunpack.c.h.b16 %v54
  %v252 = vunpack.c.l.b16 %v55
  %v253 = vunpack.c.h.b16 %v55
  %v254 = vunpack.c.l.b16 %v56
  %v255 = vunpack.c.h.b16 %v56
  %v256 = vunpack.c.l.b16 %v57
  %v257 = vunpack.c.h.b16 %v57
  %v258 = vunpack.c.l.b16 %v58
  %v259 = vunpack.c.h.b16 %v58
  %v260 = vunpack.c.l.b16 %v59
  %v261 = vunpack.c.h.b16 %v59
  %v262 = vunpack.c.l.b16 %v60
  %v263 = vunpack.c.h.b16 %v60
  %v264 = vunpack.c.l.b16 %v61
  %v265 = vunpack.c.h.b16 %v61
  %v266 = vunpack.c.l.b16 %v62
  %v267 = vunpack.c.h.b16 %v62
  %v268 = vunpack.c.l.b16 %v63
  %v269 = vunpack.c.h.b16 %v63
  %v270 = vunpack.c.l.b16 %v64
  %v271 = vunpack.c.h.b16 %v64
  %v272 = vunpack.c.l.b16 %v65
  %v273 = vunpack.c.h.b16 %v65
  %v274 = vunpack.c.l.b16 %v66
  %v275 = vunpack.c.h.b16 %v66
  %v276 = vunpack.c.l.b16 %v67
  %v277 = vunpack.c.h.b16 %v67
  %v278 = vunpack.c.l.b16 %v68
  %v279 = vunpack.c.h.b16 %v68
  %v280 = vunpack.c.l.b16 %v69
  %v281 = vunpack.c.h.b16 %v69
  %v282 = vunpack.c.l.b16 %v70
  %v283 = vunpack.c.h.b16 %v70
  %v284 = vunpack.c.l.b16 %v71
  %v285 = vunpack.c.h.b16 %v71
  %v286 = vunpack.c.l.b16 %v72
  %v287 = vunpack.c.h.b16 %v72
  %v288 = vunpack.c.l.b16 %v73
  %v289 = vunpack.c.h.b16 %v73
  %v290 = vunpack.c.l.b16 %v74
  %v291 = vunpack.c.h.b16 %v74
  %v292 = vunpack.c.l.b16 %v75
  %v293 = vunpack.c.h.b16 %v75
  %v294 = vunpack.c.l.b16 %v76
  %v295 = vunpack.c.h.b16 %v76
  %v296 = vunpack.c.l.b16 %v77
  %v297 = vunpack.c.h.b16 %v77
  %v298 = vunpack.c.l.b16 %v78
  %v299 = vunpack.c.h.b16 %v78
  %v300 = vunpack.c.l.b16 %v79
  %v301 = vunpack.c.h.b16 %v79
  %v302 = vunpack.c.l.b16 %v80
  %v303 = vunpack.c.h.b16 %v80
  %v304 = vunpack.c.l.b16 %v81
  %v305 = vunpack.c.h.b16 %v81
  %v306 = vunpack.c.l.b16 %v82
  %v307 = vunpack.c.h.b16 %v82
  %v308 = vunpack.c.l.b16 %v83
  %v309 = vunpack.c.h.b16 %v83
  %v310 = vunpack.c.l.b16 %v84
  %v311 = vunpack.c.h.b16 %v84
  %v312 = vunpack.c.l.b16 %v85
  %v313 = vunpack.c.h.b16 %v85
  %v314 = vpack.c.b16 %v244, %v242
  %v315 = vpack.c.b16 %v245, %v243
  %v316 = vpack.c.b16 %v248, %v246
  %v317 = vpack.c.b16 %v249, %v247
  %v318 = vpack.c.b16 %v252, %v250
  %v319 = vpack.c.b16 %v253, %v251
  %v320 = vpack.c.b16 %v256, %v254
  %v321 = vpack.c.b16 %v257, %v255
  %v322 = vpack.c.b16 %v260, %v258
  %v323 = vpack.c.b16 %v261, %v259
  %v324 = vpack.c.b16 %v264, %v262
  %v325 = vpack.c.b16 %v265, %v263
  %v326 = vpack.c.b16 %v268, %v266
  %v327 = vpack.c.b16 %v269, %v267
  %v328 = vpack.c.b16 %v272, %v270
  %v329 = vpack.c.b16 %v273, %v271
  %v330 = vpack.c.b16 %v276, %v274
  %v331 = vpack.c.b16 %v277, %v275
  %v332 = vpack.c.b16 %v280, %v278
  %v333 = vpack.c.b16 %v281, %v279
  %v334 = vpack.c.b16 %v284, %v282
  %v335 = vpack.c.b16 %v285, %v283
  %v336 = vpack.c.b16 %v288, %v286
  %v337 = vpack.c.b16 %v289, %v287
  %v338 = vpack.c.b16 %v292, %v290
  %v339 = vpack.c.b16 %v293, %v291
  %v340 = vpack.c.b16 %v296, %v294
  %v341 = vpack.c.b16 %v297, %v295
  %v342 = vpack.c.b16 %v300, %v298
  %v343 = vpack.c.b16 %v301, %v299
  %v344 = vpack.c.b16 %v304, %v302
  %v345 = vpack.c.b16 %v305, %v303
  %v346 = vpack.c.b16 %v308, %v306
  %v347 = vpack.c.b16 %v309, %v307
  %v348 = vpack.c.b16 %v312, %v310
  %v349 = vpack.c.b16 %v313, %v311
  %vm386 = vcmask 261120
  %v388 = vsel %vm386, %v168, 0
  %v391 = vsel %vm386, %v171, 0
  %v394 = vsel %vm386, %v174, 0
  %v397 = vsel %vm386, %v177, 0
  %v400 = vsel %vm386, %v180, 0
  %v403 = vsel %vm386, %v183, 0
  %v406 = vsel %vm386, %v186, 0
  %v409 = vsel %vm386, %v189, 0
  %411 = vmatprep.subr.bf16.mxu0 %v329
  %412 = vmatpush1.bf16.msra.mxu0 %v328
  %413 = vmatprep.subr.bf16.mxu0 %v327
  %414 = vmatpush1.bf16.msra.mxu0 %v326
  %415 = vmatprep.subr.bf16.mxu0 %v325
  %416 = vmatpush1.bf16.msra.mxu0 %v324
  %417 = vmatprep.subr.bf16.mxu0 %v323
  %418 = vmatpush1.bf16.msra.mxu0 %v322
  %419 = vmatprep.subr.bf16.mxu0 %v321
  %420 = vmatpush1.bf16.msra.mxu0 %v320
  %421 = vmatprep.subr.bf16.mxu0 %v319
  %422 = vmatpush1.bf16.msra.mxu0 %v318
  %423 = vmatprep.subr.bf16.mxu0 %v317
  %424 = vmatpush1.bf16.msra.mxu0 %v316
  %425 = vmatprep.subr.bf16.mxu0 %v315
  %426 = vmatpush1.bf16.msra.mxu0 %v314
  %427 = vmatprep.subr.bf16.mxu0 %v345
  %428 = vmatpush2.bf16.msra.mxu0 %v344
  %429 = vmatprep.subr.bf16.mxu0 %v343
  %430 = vmatpush2.bf16.msra.mxu0 %v342
  %431 = vmatprep.subr.bf16.mxu0 %v341
  %432 = vmatpush2.bf16.msra.mxu0 %v340
  %433 = vmatprep.subr.bf16.mxu0 %v339
  %434 = vmatpush2.bf16.msra.mxu0 %v338
  %435 = vmatprep.subr.bf16.mxu0 %v337
  %436 = vmatpush2.bf16.msra.mxu0 %v336
  %437 = vmatprep.subr.bf16.mxu0 %v335
  %438 = vmatpush2.bf16.msra.mxu0 %v334
  %439 = vmatprep.subr.bf16.mxu0 %v333
  %440 = vmatpush2.bf16.msra.mxu0 %v332
  %441 = vmatprep.subr.bf16.mxu0 %v331
  %442 = vmatpush2.bf16.msra.mxu0 %v330
  %443 = vmatprep.mubr.bf16.mxu0 %v167
  %444 = vmatmul.mubr.bf16.gmra.mxu0 %v166
  %v445 = vpop.f32.mrf.mxu0
  %v446 = vadd.f32 0.0, %v445
  %v447 = vpop.f32.mrf.mxu0
  %v448 = vadd.f32 0.0, %v447
  %v449 = vpop.f32.mrf.mxu0
  %v450 = vadd.f32 0.0, %v449
  %v451 = vpop.f32.mrf.mxu0
  %v452 = vadd.f32 0.0, %v451
  %453 = vmatprep.mubr.bf16.mxu0 %v170
  %454 = vmatmul.mubr.bf16.gmra.mxu0 %v169
  %v455 = vpop.f32.mrf.mxu0
  %v456 = vadd.f32 0.0, %v455
  %v457 = vpop.f32.mrf.mxu0
  %v458 = vadd.f32 0.0, %v457
  %v459 = vpop.f32.mrf.mxu0
  %v460 = vadd.f32 0.0, %v459
  %v461 = vpop.f32.mrf.mxu0
  %v462 = vadd.f32 0.0, %v461
  %463 = vmatprep.mubr.bf16.mxu0 %v173
  %464 = vmatmul.mubr.bf16.gmra.mxu0 %v172
  %v465 = vpop.f32.mrf.mxu0
  %v466 = vadd.f32 0.0, %v465
  %v467 = vpop.f32.mrf.mxu0
  %v468 = vadd.f32 0.0, %v467
  %v469 = vpop.f32.mrf.mxu0
  %v470 = vadd.f32 0.0, %v469
  %v471 = vpop.f32.mrf.mxu0
  %v472 = vadd.f32 0.0, %v471
  %473 = vmatprep.mubr.bf16.mxu0 %v176
  %474 = vmatmul.mubr.bf16.gmra.mxu0 %v175
  %v475 = vpop.f32.mrf.mxu0
  %v476 = vadd.f32 0.0, %v475
  %v477 = vpop.f32.mrf.mxu0
  %v478 = vadd.f32 0.0, %v477
  %v479 = vpop.f32.mrf.mxu0
  %v480 = vadd.f32 0.0, %v479
  %v481 = vpop.f32.mrf.mxu0
  %v482 = vadd.f32 0.0, %v481
  %483 = vmatprep.mubr.bf16.mxu0 %v179
  %484 = vmatmul.mubr.bf16.gmra.mxu0 %v178
  %v485 = vpop.f32.mrf.mxu0
  %v486 = vadd.f32 0.0, %v485
  %v487 = vpop.f32.mrf.mxu0
  %v488 = vadd.f32 0.0, %v487
  %v489 = vpop.f32.mrf.mxu0
  %v490 = vadd.f32 0.0, %v489
  %v491 = vpop.f32.mrf.mxu0
  %v492 = vadd.f32 0.0, %v491
  %493 = vmatprep.mubr.bf16.mxu0 %v182
  %494 = vmatmul.mubr.bf16.gmra.mxu0 %v181
  %v495 = vpop.f32.mrf.mxu0
  %v496 = vadd.f32 0.0, %v495
  %v497 = vpop.f32.mrf.mxu0
  %v498 = vadd.f32 0.0, %v497
  %v499 = vpop.f32.mrf.mxu0
  %v500 = vadd.f32 0.0, %v499
  %v501 = vpop.f32.mrf.mxu0
  %v502 = vadd.f32 0.0, %v501
  %503 = vmatprep.mubr.bf16.mxu0 %v185
  %504 = vmatmul.mubr.bf16.gmra.mxu0 %v184
  %v505 = vpop.f32.mrf.mxu0
  %v506 = vadd.f32 0.0, %v505
  %v507 = vpop.f32.mrf.mxu0
  %v508 = vadd.f32 0.0, %v507
  %v509 = vpop.f32.mrf.mxu0
  %v510 = vadd.f32 0.0, %v509
  %v511 = vpop.f32.mrf.mxu0
  %v512 = vadd.f32 0.0, %v511
  %513 = vmatprep.mubr.bf16.mxu0 %v188
  %514 = vmatmul.mubr.bf16.gmra.mxu0 %v187
  %v515 = vpop.f32.mrf.mxu0
  %v516 = vadd.f32 0.0, %v515
  %v517 = vpop.f32.mrf.mxu0
  %v518 = vadd.f32 0.0, %v517
  %v519 = vpop.f32.mrf.mxu0
  %v520 = vadd.f32 0.0, %v519
  %v521 = vpop.f32.mrf.mxu0
  %v522 = vadd.f32 0.0, %v521
  %523 = vdwg.mxu0
  %524 = vmatprep.subr.bf16.mxu0 0
  %525 = vmatpush1.bf16.msra.mxu0 0
  %526 = vmatprep.subr.bf16.mxu0 0
  %527 = vmatpush1.bf16.msra.mxu0 0
  %528 = vmatprep.subr.bf16.mxu0 0
  %529 = vmatpush1.bf16.msra.mxu0 0
  %530 = vmatprep.subr.bf16.mxu0 0
  %531 = vmatpush1.bf16.msra.mxu0 0
  %532 = vmatprep.subr.bf16.mxu0 0
  %533 = vmatpush1.bf16.msra.mxu0 0
  %534 = vmatprep.subr.bf16.mxu0 0
  %535 = vmatpush1.bf16.msra.mxu0 0
  %536 = vmatprep.subr.bf16.mxu0 %v349
  %537 = vmatpush1.bf16.msra.mxu0 %v348
  %538 = vmatprep.subr.bf16.mxu0 %v347
  %539 = vmatpush1.bf16.msra.mxu0 %v346
  %540 = vmatprep.subr.bf16.mxu0 0
  %541 = vmatpush2.bf16.msra.mxu0 0
  %542 = vmatprep.subr.bf16.mxu0 0
  %543 = vmatpush2.bf16.msra.mxu0 0
  %544 = vmatprep.subr.bf16.mxu0 0
  %545 = vmatpush2.bf16.msra.mxu0 0
  %546 = vmatprep.subr.bf16.mxu0 0
  %547 = vmatpush2.bf16.msra.mxu0 0
  %548 = vmatprep.subr.bf16.mxu0 0
  %549 = vmatpush2.bf16.msra.mxu0 0
  %550 = vmatprep.subr.bf16.mxu0 0
  %551 = vmatpush2.bf16.msra.mxu0 0
  %552 = vmatprep.subr.bf16.mxu0 0
  %553 = vmatpush2.bf16.msra.mxu0 0
  %554 = vmatprep.subr.bf16.mxu0 0
  %555 = vmatpush2.bf16.msra.mxu0 0
  %556 = vmatprep.mubr.bf16.mxu0 0
  %557 = vmatmul.mubr.bf16.gmra.mxu0 %v388
  %v558 = vpop.f32.mrf.mxu0
  %v559 = vadd.f32 %v446, %v558
  %v560 = vpop.f32.mrf.mxu0
  %v561 = vadd.f32 %v448, %v560
  %v562 = vpop.f32.mrf.mxu0
  %v563 = vadd.f32 %v450, %v562
  %v564 = vpop.f32.mrf.mxu0
  %v565 = vadd.f32 %v452, %v564
  %566 = vmatprep.mubr.bf16.mxu0 0
  %567 = vmatmul.mubr.bf16.gmra.mxu0 %v391
  %v568 = vpop.f32.mrf.mxu0
  %v569 = vadd.f32 %v456, %v568
  %v570 = vpop.f32.mrf.mxu0
  %v571 = vadd.f32 %v458, %v570
  %v572 = vpop.f32.mrf.mxu0
  %v573 = vadd.f32 %v460, %v572
  %v574 = vpop.f32.mrf.mxu0
  %v575 = vadd.f32 %v462, %v574
  %576 = vmatprep.mubr.bf16.mxu0 0
  %577 = vmatmul.mubr.bf16.gmra.mxu0 %v394
  %v578 = vpop.f32.mrf.mxu0
  %v579 = vadd.f32 %v466, %v578
  %v580 = vpop.f32.mrf.mxu0
  %v581 = vadd.f32 %v468, %v580
  %v582 = vpop.f32.mrf.mxu0
  %v583 = vadd.f32 %v470, %v582
  %v584 = vpop.f32.mrf.mxu0
  %v585 = vadd.f32 %v472, %v584
  %586 = vmatprep.mubr.bf16.mxu0 0
  %587 = vmatmul.mubr.bf16.gmra.mxu0 %v397
  %v588 = vpop.f32.mrf.mxu0
  %v589 = vadd.f32 %v476, %v588
  %v590 = vpop.f32.mrf.mxu0
  %v591 = vadd.f32 %v478, %v590
  %v592 = vpop.f32.mrf.mxu0
  %v593 = vadd.f32 %v480, %v592
  %v594 = vpop.f32.mrf.mxu0
  %v595 = vadd.f32 %v482, %v594
  %596 = vmatprep.mubr.bf16.mxu0 0
  %597 = vmatmul.mubr.bf16.gmra.mxu0 %v400
  %v598 = vpop.f32.mrf.mxu0
  %v599 = vadd.f32 %v486, %v598
  %v600 = vpop.f32.mrf.mxu0
  %v601 = vadd.f32 %v488, %v600
  %v602 = vpop.f32.mrf.mxu0
  %v603 = vadd.f32 %v490, %v602
  %v604 = vpop.f32.mrf.mxu0
  %v605 = vadd.f32 %v492, %v604
  %606 = vmatprep.mubr.bf16.mxu0 0
  %607 = vmatmul.mubr.bf16.gmra.mxu0 %v403
  %v608 = vpop.f32.mrf.mxu0
  %v609 = vadd.f32 %v496, %v608
  %v610 = vpop.f32.mrf.mxu0
  %v611 = vadd.f32 %v498, %v610
  %v612 = vpop.f32.mrf.mxu0
  %v613 = vadd.f32 %v500, %v612
  %v614 = vpop.f32.mrf.mxu0
  %v615 = vadd.f32 %v502, %v614
  %616 = vmatprep.mubr.bf16.mxu0 0
  %617 = vmatmul.mubr.bf16.gmra.mxu0 %v406
  %v618 = vpop.f32.mrf.mxu0
  %v619 = vadd.f32 %v506, %v618
  %v620 = vpop.f32.mrf.mxu0
  %v621 = vadd.f32 %v508, %v620
  %v622 = vpop.f32.mrf.mxu0
  %v623 = vadd.f32 %v510, %v622
  %v624 = vpop.f32.mrf.mxu0
  %v625 = vadd.f32 %v512, %v624
  %626 = vmatprep.mubr.bf16.mxu0 0
  %627 = vmatmul.mubr.bf16.gmra.mxu0 %v409
  %v628 = vpop.f32.mrf.mxu0
  %v629 = vadd.f32 %v516, %v628
  %v630 = vpop.f32.mrf.mxu0
  %v631 = vadd.f32 %v518, %v630
  %v632 = vpop.f32.mrf.mxu0
  %v633 = vadd.f32 %v520, %v632
  %v634 = vpop.f32.mrf.mxu0
  %v635 = vadd.f32 %v522, %v634
  %636 = vdwg.mxu0
  %v637 = vadd.f32 %v559, %v563
  %v638 = vadd.f32 %v637, %v569
  %v639 = vadd.f32 %v638, %v573
  %v640 = vadd.f32 %v639, %v579
  %v641 = vadd.f32 %v640, %v583
  %v642 = vadd.f32 %v641, %v589
  %v643 = vadd.f32 %v642, %v593
  %v644 = vadd.f32 %v643, %v599
  %v645 = vadd.f32 %v644, %v603
  %v646 = vadd.f32 %v645, %v609
  %v647 = vadd.f32 %v646, %v613
  %v648 = vadd.f32 %v647, %v619
  %v649 = vadd.f32 %v648, %v623
  %v650 = vadd.f32 %v649, %v629
  %v651 = vadd.f32 %v650, %v633
  %v652 = vrot.slane %v651, 4
  %v653 = vadd.f32 %v651, %v652
  %v654 = vrot.slane %v653, 2
  %v655 = vadd.f32 %v653, %v654
  %v656 = vrot.slane %v655, 1
  %v657 = vadd.f32 %v655, %v656
  %v658 = vadd.f32 %v561, %v565
  %v659 = vadd.f32 %v658, %v571
  %v660 = vadd.f32 %v659, %v575
  %v661 = vadd.f32 %v660, %v581
  %v662 = vadd.f32 %v661, %v585
  %v663 = vadd.f32 %v662, %v591
  %v664 = vadd.f32 %v663, %v595
  %v665 = vadd.f32 %v664, %v601
  %v666 = vadd.f32 %v665, %v605
  %v667 = vadd.f32 %v666, %v611
  %v668 = vadd.f32 %v667, %v615
  %v669 = vadd.f32 %v668, %v621
  %v670 = vadd.f32 %v669, %v625
  %v671 = vadd.f32 %v670, %v631
  %v672 = vadd.f32 %v671, %v635
  %v673 = vrot.slane %v672, 4
  %v674 = vadd.f32 %v672, %v673
  %v675 = vrot.slane %v674, 2
  %v676 = vadd.f32 %v674, %v675
  %v677 = vrot.slane %v676, 1
  %v678 = vadd.f32 %v676, %v677
  %v679 = vmul.f32 %v657, 0.0078125
  %v680 = vmul.f32 %v678, 0.0078125
  %v681 = vsub.f32 %v559, %v679
  %v682 = vsub.f32 %v561, %v680
  %v683 = vsub.f32 %v563, %v679
  %v684 = vsub.f32 %v565, %v680
  %v685 = vsub.f32 %v569, %v679
  %v686 = vsub.f32 %v571, %v680
  %v687 = vsub.f32 %v573, %v679
  %v688 = vsub.f32 %v575, %v680
  %v689 = vsub.f32 %v579, %v679
  %v690 = vsub.f32 %v581, %v680
  %v691 = vsub.f32 %v583, %v679
  %v692 = vsub.f32 %v585, %v680
  %v693 = vsub.f32 %v589, %v679
  %v694 = vsub.f32 %v591, %v680
  %v695 = vsub.f32 %v593, %v679
  %v696 = vsub.f32 %v595, %v680
  %v697 = vsub.f32 %v599, %v679
  %v698 = vsub.f32 %v601, %v680
  %v699 = vsub.f32 %v603, %v679
  %v700 = vsub.f32 %v605, %v680
  %v701 = vsub.f32 %v609, %v679
  %v702 = vsub.f32 %v611, %v680
  %v703 = vsub.f32 %v613, %v679
  %v704 = vsub.f32 %v615, %v680
  %v705 = vsub.f32 %v619, %v679
  %v706 = vsub.f32 %v621, %v680
  %v707 = vsub.f32 %v623, %v679
  %v708 = vsub.f32 %v625, %v680
  %v709 = vsub.f32 %v629, %v679
  %v710 = vsub.f32 %v631, %v680
  %v711 = vsub.f32 %v633, %v679
  %v712 = vsub.f32 %v635, %v680
  %v713 = vmul.f32 %v681, %v681
  %v714 = vmul.f32 %v682, %v682
  %v715 = vmul.f32 %v683, %v683
  %v716 = vmul.f32 %v684, %v684
  %v717 = vmul.f32 %v685, %v685
  %v718 = vmul.f32 %v686, %v686
  %v719 = vmul.f32 %v687, %v687
  %v720 = vmul.f32 %v688, %v688
  %v721 = vmul.f32 %v689, %v689
  %v722 = vmul.f32 %v690, %v690
  %v723 = vmul.f32 %v691, %v691
  %v724 = vmul.f32 %v692, %v692
  %v725 = vmul.f32 %v693, %v693
  %v726 = vmul.f32 %v694, %v694
  %v727 = vmul.f32 %v695, %v695
  %v728 = vmul.f32 %v696, %v696
  %v729 = vmul.f32 %v697, %v697
  %v730 = vmul.f32 %v698, %v698
  %v731 = vmul.f32 %v699, %v699
  %v732 = vmul.f32 %v700, %v700
  %v733 = vmul.f32 %v701, %v701
  %v734 = vmul.f32 %v702, %v702
  %v735 = vmul.f32 %v703, %v703
  %v736 = vmul.f32 %v704, %v704
  %v737 = vmul.f32 %v705, %v705
  %v738 = vmul.f32 %v706, %v706
  %v739 = vmul.f32 %v707, %v707
  %v740 = vmul.f32 %v708, %v708
  %v741 = vmul.f32 %v709, %v709
  %v742 = vmul.f32 %v710, %v710
  %v743 = vmul.f32 %v711, %v711
  %v744 = vmul.f32 %v712, %v712
  %v745 = vadd.f32 %v713, %v715
  %v746 = vadd.f32 %v745, %v717
  %v747 = vadd.f32 %v746, %v719
  %v748 = vadd.f32 %v747, %v721
  %v749 = vadd.f32 %v748, %v723
  %v750 = vadd.f32 %v749, %v725
  %v751 = vadd.f32 %v750, %v727
  %v752 = vadd.f32 %v751, %v729
  %v753 = vadd.f32 %v752, %v731
  %v754 = vadd.f32 %v753, %v733
  %v755 = vadd.f32 %v754, %v735
  %v756 = vadd.f32 %v755, %v737
  %v757 = vadd.f32 %v756, %v739
  %v758 = vadd.f32 %v757, %v741
  %v759 = vadd.f32 %v758, %v743
  %v760 = vrot.slane %v759, 4
  %v761 = vadd.f32 %v759, %v760
  %v762 = vrot.slane %v761, 2
  %v763 = vadd.f32 %v761, %v762
  %v764 = vrot.slane %v763, 1
  %v765 = vadd.f32 %v763, %v764
  %v766 = vadd.f32 %v714, %v716
  %v767 = vadd.f32 %v766, %v718
  %v768 = vadd.f32 %v767, %v720
  %v769 = vadd.f32 %v768, %v722
  %v770 = vadd.f32 %v769, %v724
  %v771 = vadd.f32 %v770, %v726
  %v772 = vadd.f32 %v771, %v728
  %v773 = vadd.f32 %v772, %v730
  %v774 = vadd.f32 %v773, %v732
  %v775 = vadd.f32 %v774, %v734
  %v776 = vadd.f32 %v775, %v736
  %v777 = vadd.f32 %v776, %v738
  %v778 = vadd.f32 %v777, %v740
  %v779 = vadd.f32 %v778, %v742
  %v780 = vadd.f32 %v779, %v744
  %v781 = vrot.slane %v780, 4
  %v782 = vadd.f32 %v780, %v781
  %v783 = vrot.slane %v782, 2
  %v784 = vadd.f32 %v782, %v783
  %v785 = vrot.slane %v784, 1
  %v786 = vadd.f32 %v784, %v785
  %v787 = vmul.f32 %v765, 0.0078125
  %v788 = vmul.f32 %v786, 0.0078125
  %v789 = vld [vmem:[%s2] sm:$0x3]
  %v790 = vadd.f32 %v787, 1e-05
  %v791 = vadd.f32 %v788, 1e-05
  %v792 = vrsqrt.pop %v790
  %v793 = vrsqrt.pop %v791
  %v796 = vcombine.low %v792, %v793
  %v798 = vunpack.c.l.s4 1966171168
  %v799 = vunpack.c.0.s8 %v798
  %v800 = vlaneseq
  %v801 = vshrl.u32 %v800, 7
  %v802 = vsub.s32 %v799, %v801
  %v803 = vrot.slane %v796, %v802
  %v805 = vunpack.c.l.s4 1966171168
  %v806 = vunpack.c.0.s8 %v805
  %v807 = vlaneseq
  %v808 = vshrl.u32 %v807, 7
  %v809 = vsub.s32 %v806, %v808
  %v810 = vrot.slane %v803, %v809
  %v812 = vmul.f32 %v789, %v810
  %v814 = vlaneseq
  %v815 = vshrl.u32 %v814, 7
  %v816 = vsub.s32 0, %v815
  %v817 = vrot.slane %v812, %v816
  %v818 = vlaneseq
  %v819 = vshrl.u32 %v818, 7
  %v820 = vsub.s32 1, %v819
  %v821 = vrot.slane %v812, %v820
  %v824 = vmul.f32 %v681, %v817
  %v825 = vmul.f32 %v682, %v821
  %v826 = vmul.f32 %v683, %v817
  %v827 = vmul.f32 %v684, %v821
  %v828 = vmul.f32 %v685, %v817
  %v829 = vmul.f32 %v686, %v821
  %v830 = vmul.f32 %v687, %v817
  %v831 = vmul.f32 %v688, %v821
  %v832 = vmul.f32 %v689, %v817
  %v833 = vmul.f32 %v690, %v821
  %v834 = vmul.f32 %v691, %v817
  %v835 = vmul.f32 %v692, %v821
  %v836 = vmul.f32 %v693, %v817
  %v837 = vmul.f32 %v694, %v821
  %v838 = vmul.f32 %v695, %v817
  %v839 = vmul.f32 %v696, %v821
  %v840 = vmul.f32 %v697, %v817
  %v841 = vmul.f32 %v698, %v821
  %v842 = vmul.f32 %v699, %v817
  %v843 = vmul.f32 %v700, %v821
  %v844 = vmul.f32 %v701, %v817
  %v845 = vmul.f32 %v702, %v821
  %v846 = vmul.f32 %v703, %v817
  %v847 = vmul.f32 %v704, %v821
  %v848 = vmul.f32 %v705, %v817
  %v849 = vmul.f32 %v706, %v821
  %v850 = vmul.f32 %v707, %v817
  %v851 = vmul.f32 %v708, %v821
  %v852 = vmul.f32 %v709, %v817
  %v853 = vmul.f32 %v710, %v821
  %v854 = vmul.f32 %v711, %v817
  %v855 = vmul.f32 %v712, %v821
  %v856 = vld [vmem:[%s3] sm:$0x3]
  %v858 = vlaneseq
  %v859 = vshrl.u32 %v858, 7
  %v860 = vsub.s32 0, %v859
  %v861 = vrot.slane %v856, %v860
  %v862 = vlaneseq
  %v863 = vshrl.u32 %v862, 7
  %v864 = vsub.s32 1, %v863
  %v865 = vrot.slane %v856, %v864
  %v868 = vadd.f32 %v824, %v861
  %v869 = vadd.f32 %v825, %v865
  %v870 = vadd.f32 %v826, %v861
  %v871 = vadd.f32 %v827, %v865
  %v872 = vadd.f32 %v828, %v861
  %v873 = vadd.f32 %v829, %v865
  %v874 = vadd.f32 %v830, %v861
  %v875 = vadd.f32 %v831, %v865
  %v876 = vadd.f32 %v832, %v861
  %v877 = vadd.f32 %v833, %v865
  %v878 = vadd.f32 %v834, %v861
  %v879 = vadd.f32 %v835, %v865
  %v880 = vadd.f32 %v836, %v861
  %v881 = vadd.f32 %v837, %v865
  %v882 = vadd.f32 %v838, %v861
  %v883 = vadd.f32 %v839, %v865
  %v884 = vadd.f32 %v840, %v861
  %v885 = vadd.f32 %v841, %v865
  %v886 = vadd.f32 %v842, %v861
  %v887 = vadd.f32 %v843, %v865
  %v888 = vadd.f32 %v844, %v861
  %v889 = vadd.f32 %v845, %v865
  %v890 = vadd.f32 %v846, %v861
  %v891 = vadd.f32 %v847, %v865
  %v892 = vadd.f32 %v848, %v861
  %v893 = vadd.f32 %v849, %v865
  %v894 = vadd.f32 %v850, %v861
  %v895 = vadd.f32 %v851, %v865
  %v896 = vadd.f32 %v852, %v861
  %v897 = vadd.f32 %v853, %v865
  %v898 = vadd.f32 %v854, %v861
  %v899 = vadd.f32 %v855, %v865
  %v900 = vlaneseq
  %v901 = vand.u32 %v900, 127
  %v902 = vadd.s32 %v901, 128
  %vm903 = vcmp.lt.s32.totalorder %v901, 128
  %vm904 = vcmp.lt.s32.totalorder %v902, 128
  %v905 = vmax.f32 %v868, 0.0
  %v906 = vmax.f32 %v869, 0.0
  %v907 = vmax.f32 %v870, 0.0
  %v908 = vmax.f32 %v871, 0.0
  %v909 = vmax.f32 %v872, 0.0
  %v910 = vmax.f32 %v873, 0.0
  %v911 = vmax.f32 %v874, 0.0
  %v912 = vmax.f32 %v875, 0.0
  %v913 = vmax.f32 %v876, 0.0
  %v914 = vmax.f32 %v877, 0.0
  %v915 = vmax.f32 %v878, 0.0
  %v916 = vmax.f32 %v879, 0.0
  %v917 = vmax.f32 %v880, 0.0
  %v918 = vmax.f32 %v881, 0.0
  %v919 = vmax.f32 %v882, 0.0
  %v920 = vmax.f32 %v883, 0.0
  %v921 = vmax.f32 %v884, 0.0
  %v922 = vmax.f32 %v885, 0.0
  %v923 = vmax.f32 %v886, 0.0
  %v924 = vmax.f32 %v887, 0.0
  %v925 = vmax.f32 %v888, 0.0
  %v926 = vmax.f32 %v889, 0.0
  %v927 = vmax.f32 %v890, 0.0
  %v928 = vmax.f32 %v891, 0.0
  %v929 = vmax.f32 %v892, 0.0
  %v930 = vmax.f32 %v893, 0.0
  %v931 = vmax.f32 %v894, 0.0
  %v932 = vmax.f32 %v895, 0.0
  %v933 = vmax.f32 %v896, 0.0
  %v934 = vmax.f32 %v897, 0.0
  %v935 = vmax.f32 %v898, 0.0
  %v936 = vmax.f32 %v899, 0.0
  %v937 = vsel %vm903, %v905, %v868
  %v938 = vsel %vm904, %v906, %v869
  %v939 = vsel %vm903, %v907, %v870
  %v940 = vsel %vm904, %v908, %v871
  %v941 = vsel %vm903, %v909, %v872
  %v942 = vsel %vm904, %v910, %v873
  %v943 = vsel %vm903, %v911, %v874
  %v944 = vsel %vm904, %v912, %v875
  %v945 = vsel %vm903, %v913, %v876
  %v946 = vsel %vm904, %v914, %v877
  %v947 = vsel %vm903, %v915, %v878
  %v948 = vsel %vm904, %v916, %v879
  %v949 = vsel %vm903, %v917, %v880
  %v950 = vsel %vm904, %v918, %v881
  %v951 = vsel %vm903, %v919, %v882
  %v952 = vsel %vm904, %v920, %v883
  %v953 = vsel %vm903, %v921, %v884
  %v954 = vsel %vm904, %v922, %v885
  %v955 = vsel %vm903, %v923, %v886
  %v956 = vsel %vm904, %v924, %v887
  %v957 = vsel %vm903, %v925, %v888
  %v958 = vsel %vm904, %v926, %v889
  %v959 = vsel %vm903, %v927, %v890
  %v960 = vsel %vm904, %v928, %v891
  %v961 = vsel %vm903, %v929, %v892
  %v962 = vsel %vm904, %v930, %v893
  %v963 = vsel %vm903, %v931, %v894
  %v964 = vsel %vm904, %v932, %v895
  %v965 = vsel %vm903, %v933, %v896
  %v966 = vsel %vm904, %v934, %v897
  %v967 = vsel %vm903, %v935, %v898
  %v968 = vsel %vm904, %v936, %v899
  %v969 = vpack.c.bf16 %v939, %v937
  %v970 = vpack.c.bf16 %v940, %v938
  %v971 = vpack.c.bf16 %v943, %v941
  %v972 = vpack.c.bf16 %v944, %v942
  %v973 = vpack.c.bf16 %v947, %v945
  %v974 = vpack.c.bf16 %v948, %v946
  %v975 = vpack.c.bf16 %v951, %v949
  %v976 = vpack.c.bf16 %v952, %v950
  %v977 = vpack.c.bf16 %v955, %v953
  %v978 = vpack.c.bf16 %v956, %v954
  %v979 = vpack.c.bf16 %v959, %v957
  %v980 = vpack.c.bf16 %v960, %v958
  %v981 = vpack.c.bf16 %v963, %v961
  %v982 = vpack.c.bf16 %v964, %v962
  %v983 = vpack.c.bf16 %v967, %v965
  %v984 = vpack.c.bf16 %v968, %v966
  %v1001 = vunpack.c.l.b16 %v969
  %v1002 = vunpack.c.l.b16 %v970
  %v1003 = vunpack.c.h.b16 %v969
  %v1004 = vunpack.c.h.b16 %v970
  %v1005 = vunpack.c.l.b16 %v971
  %v1006 = vunpack.c.l.b16 %v972
  %v1007 = vunpack.c.h.b16 %v971
  %v1008 = vunpack.c.h.b16 %v972
  %v1009 = vunpack.c.l.b16 %v973
  %v1010 = vunpack.c.l.b16 %v974
  %v1011 = vunpack.c.h.b16 %v973
  %v1012 = vunpack.c.h.b16 %v974
  %v1013 = vunpack.c.l.b16 %v975
  %v1014 = vunpack.c.l.b16 %v976
  %v1015 = vunpack.c.h.b16 %v975
  %v1016 = vunpack.c.h.b16 %v976
  %v1017 = vunpack.c.l.b16 %v977
  %v1018 = vunpack.c.l.b16 %v978
  %v1019 = vunpack.c.h.b16 %v977
  %v1020 = vunpack.c.h.b16 %v978
  %v1021 = vunpack.c.l.b16 %v979
  %v1022 = vunpack.c.l.b16 %v980
  %v1023 = vunpack.c.h.b16 %v979
  %v1024 = vunpack.c.h.b16 %v980
  %v1025 = vunpack.c.l.b16 %v981
  %v1026 = vunpack.c.l.b16 %v982
  %v1027 = vunpack.c.h.b16 %v981
  %v1028 = vunpack.c.h.b16 %v982
  %v1029 = vunpack.c.l.b16 %v983
  %v1030 = vunpack.c.l.b16 %v984
  %v1031 = vunpack.c.h.b16 %v983
  %v1032 = vunpack.c.h.b16 %v984
  %v1033 = vpack.c.b16 %v1002, %v1001
  %v1034 = vpack.c.b16 %v1004, %v1003
  %v1035 = vpack.c.b16 %v1006, %v1005
  %v1036 = vpack.c.b16 %v1008, %v1007
  %v1037 = vpack.c.b16 %v1010, %v1009
  %v1038 = vpack.c.b16 %v1012, %v1011
  %v1039 = vpack.c.b16 %v1014, %v1013
  %v1040 = vpack.c.b16 %v1016, %v1015
  %v1041 = vpack.c.b16 %v1018, %v1017
  %v1042 = vpack.c.b16 %v1020, %v1019
  %v1043 = vpack.c.b16 %v1022, %v1021
  %v1044 = vpack.c.b16 %v1024, %v1023
  %v1045 = vpack.c.b16 %v1026, %v1025
  %v1046 = vpack.c.b16 %v1028, %v1027
  %v1047 = vpack.c.b16 %v1030, %v1029
  %v1048 = vpack.c.b16 %v1032, %v1031
  %1065 = vst [vmem:[%s4] sm:$0xff] %v1033
  %1066 = vst [vmem:[%s4 + $0x8] sm:$0xff] %v1034
  %1067 = vst [vmem:[%s4 + $0x10] sm:$0xff] %v1035
  %1068 = vst [vmem:[%s4 + $0x18] sm:$0xff] %v1036
  %1069 = vst [vmem:[%s4 + $0x20] sm:$0xff] %v1037
  %1070 = vst [vmem:[%s4 + $0x28] sm:$0xff] %v1038
  %1071 = vst [vmem:[%s4 + $0x30] sm:$0xff] %v1039
  %1072 = vst [vmem:[%s4 + $0x38] sm:$0xff] %v1040
  %1073 = vst [vmem:[%s4 + $0x40] sm:$0xff] %v1041
  %1074 = vst [vmem:[%s4 + $0x48] sm:$0xff] %v1042
  %1075 = vst [vmem:[%s4 + $0x50] sm:$0xff] %v1043
  %1076 = vst [vmem:[%s4 + $0x58] sm:$0xff] %v1044
  %1077 = vst [vmem:[%s4 + $0x60] sm:$0xff] %v1045
  %1078 = vst [vmem:[%s4 + $0x68] sm:$0xff] %v1046
  %1079 = vst [vmem:[%s4 + $0x70] sm:$0xff] %v1047
  %1080 = vst [vmem:[%s4 + $0x78] sm:$0xff] %v1048
  // Predicated region
  $region18: #{cnn_classifier_forward.9} parent=0 // pred_check
    _
  $region19: #{cnn_classifier_forward.9} parent=0 // pred_check_branch
    %1082 = sbr.rel (0) target = $region21
  $region20: #{cnn_classifier_forward.9} parent=0 // pred_region
    _
  $region21: #{cnn_classifier_forward.9} parent=0 // pred_fallthru
    _
  // Predicated region
  $region22: #{cnn_classifier_forward.9} parent=0 // pred_check
    _
  $region23: #{cnn_classifier_forward.9} parent=0 // pred_check_branch
    %1084 = sbr.rel (0) target = $region25
  $region24: #{cnn_classifier_forward.9} parent=0 // pred_region
    _
  $region25: #{cnn_classifier_forward.9} parent=0 // pred_fallthru
    _

// kernel: cnn_classifier_forward.10
$region0: #{cnn_classifier_forward.10}
  #allocation0 [shape = 'u32[]', space=smem, size = 0x4, offset = 0x4, fixed_abs, tag = 'smem constant byte address 0x4 - core index']
  #allocation1 [shape = 'u32[144,128]{1,0:T(1,128)}', space=vmem, size = 0x12000, scoped, tag = 'internal scratch']
  %s0 = inlined_call_operand.vmem [shape: bf16[128,288], index: 0, kind: input, shape index: {}]
  %s1 = inlined_call_operand.vmem [shape: bf16[288,128], index: 1, kind: input, shape index: {}]
  %s2 = inlined_call_operand.vmem [shape: f32[1,128], index: 2, kind: input, shape index: {}]
  %s3 = inlined_call_operand.vmem [shape: f32[1,128], index: 3, kind: input, shape index: {}]
  %s4 = inlined_call_operand.vmem [shape: bf16[128,128], index: 4, kind: input, shape index: {}]
  %s5 = inlined_call_operand.vmem [shape: bf16[128,128], index: 5, kind: output, shape index: {}]
  %s6 = sld [smem:[#allocation0]]
  $region30: #{cnn_classifier_forward.10} parent=0
    _
  %s8 = ssub.s32 1, %s6
  %s9 = scalar_select 0, %s8, %s6
  // Predicated region
  $region2: #{cnn_classifier_forward.10} parent=0 // pred_check
    _
  $region3: #{cnn_classifier_forward.10} parent=0 // pred_check_branch
    %11 = sbr.rel (0) target = $region5
  $region4: #{cnn_classifier_forward.10} parent=0 // pred_region
    _
  $region5: #{cnn_classifier_forward.10} parent=0 // pred_fallthru
    _
  // Predicated region
  $region6: #{cnn_classifier_forward.10} parent=0 // pred_check
    _
  $region7: #{cnn_classifier_forward.10} parent=0 // pred_check_branch
    %13 = sbr.rel (0) target = $region9
  $region8: #{cnn_classifier_forward.10} parent=0 // pred_region
    _
  $region9: #{cnn_classifier_forward.10} parent=0 // pred_fallthru
    _
  // Predicated region
  $region10: #{cnn_classifier_forward.10} parent=0 // pred_check
    _
  $region11: #{cnn_classifier_forward.10} parent=0 // pred_check_branch
    %15 = sbr.rel (0) target = $region13
  $region12: #{cnn_classifier_forward.10} parent=0 // pred_region
    _
  $region13: #{cnn_classifier_forward.10} parent=0 // pred_fallthru
    _
  // Predicated region
  $region14: #{cnn_classifier_forward.10} parent=0 // pred_check
    _
  $region15: #{cnn_classifier_forward.10} parent=0 // pred_check_branch
    %17 = sbr.rel (0) target = $region17
  $region16: #{cnn_classifier_forward.10} parent=0 // pred_region
    _
  $region17: #{cnn_classifier_forward.10} parent=0 // pred_fallthru
    _
  // Predicated region
  $region18: #{cnn_classifier_forward.10} parent=0 // pred_check
    _
  $region19: #{cnn_classifier_forward.10} parent=0 // pred_check_branch
    %19 = sbr.rel (0) target = $region21
  $region20: #{cnn_classifier_forward.10} parent=0 // pred_region
    _
  $region21: #{cnn_classifier_forward.10} parent=0 // pred_fallthru
    _
  %v21 = vld [vmem:[%s0] sm:$0xff]
  %v22 = vld [vmem:[%s0 + $0x8] sm:$0xf]
  %v23 = vld [vmem:[%s0 + $0xc] sm:$0xff]
  %v24 = vld [vmem:[%s0 + $0x14] sm:$0xf]
  %v25 = vld [vmem:[%s0 + $0x18] sm:$0xff]
  %v26 = vld [vmem:[%s0 + $0x20] sm:$0xf]
  %v27 = vld [vmem:[%s0 + $0x24] sm:$0xff]
  %v28 = vld [vmem:[%s0 + $0x2c] sm:$0xf]
  %v29 = vld [vmem:[%s0 + $0x30] sm:$0xff]
  %v30 = vld [vmem:[%s0 + $0x38] sm:$0xf]
  %v31 = vld [vmem:[%s0 + $0x3c] sm:$0xff]
  %v32 = vld [vmem:[%s0 + $0x44] sm:$0xf]
  %v33 = vld [vmem:[%s0 + $0x48] sm:$0xff]
  %v34 = vld [vmem:[%s0 + $0x50] sm:$0xf]
  %v35 = vld [vmem:[%s0 + $0x54] sm:$0xff]
  %v36 = vld [vmem:[%s0 + $0x5c] sm:$0xf]
  %v37 = vld [vmem:[%s0 + $0x60] sm:$0xff]
  %v38 = vld [vmem:[%s0 + $0x68] sm:$0xf]
  %v39 = vld [vmem:[%s0 + $0x6c] sm:$0xff]
  %v40 = vld [vmem:[%s0 + $0x74] sm:$0xf]
  %v41 = vld [vmem:[%s0 + $0x78] sm:$0xff]
  %v42 = vld [vmem:[%s0 + $0x80] sm:$0xf]
  %v43 = vld [vmem:[%s0 + $0x84] sm:$0xff]
  %v44 = vld [vmem:[%s0 + $0x8c] sm:$0xf]
  %v45 = vld [vmem:[%s0 + $0x90] sm:$0xff]
  %v46 = vld [vmem:[%s0 + $0x98] sm:$0xf]
  %v47 = vld [vmem:[%s0 + $0x9c] sm:$0xff]
  %v48 = vld [vmem:[%s0 + $0xa4] sm:$0xf]
  %v49 = vld [vmem:[%s0 + $0xa8] sm:$0xff]
  %v50 = vld [vmem:[%s0 + $0xb0] sm:$0xf]
  %v51 = vld [vmem:[%s0 + $0xb4] sm:$0xff]
  %v52 = vld [vmem:[%s0 + $0xbc] sm:$0xf]
  %v53 = vld [vmem:[%s1] sm:$0xf]
  %v54 = vld [vmem:[%s1 + $0x4] sm:$0xf]
  %v55 = vld [vmem:[%s1 + $0x8] sm:$0xf]
  %v56 = vld [vmem:[%s1 + $0xc] sm:$0xf]
  %v57 = vld [vmem:[%s1 + $0x10] sm:$0xf]
  %v58 = vld [vmem:[%s1 + $0x14] sm:$0xf]
  %v59 = vld [vmem:[%s1 + $0x18] sm:$0xf]
  %v60 = vld [vmem:[%s1 + $0x1c] sm:$0xf]
  %v61 = vld [vmem:[%s1 + $0x20] sm:$0xf]
  %v62 = vld [vmem:[%s1 + $0x24] sm:$0xf]
  %v63 = vld [vmem:[%s1 + $0x28] sm:$0xf]
  %v64 = vld [vmem:[%s1 + $0x2c] sm:$0xf]
  %v65 = vld [vmem:[%s1 + $0x30] sm:$0xf]
  %v66 = vld [vmem:[%s1 + $0x34] sm:$0xf]
  %v67 = vld [vmem:[%s1 + $0x38] sm:$0xf]
  %v68 = vld [vmem:[%s1 + $0x3c] sm:$0xf]
  %v69 = vld [vmem:[%s1 + $0x40] sm:$0xf]
  %v70 = vld [vmem:[%s1 + $0x44] sm:$0xf]
  %v71 = vld [vmem:[%s1 + $0x48] sm:$0xf]
  %v72 = vld [vmem:[%s1 + $0x4c] sm:$0xf]
  %v73 = vld [vmem:[%s1 + $0x50] sm:$0xf]
  %v74 = vld [vmem:[%s1 + $0x54] sm:$0xf]
  %v75 = vld [vmem:[%s1 + $0x58] sm:$0xf]
  %v76 = vld [vmem:[%s1 + $0x5c] sm:$0xf]
  %v77 = vld [vmem:[%s1 + $0x60] sm:$0xf]
  %v78 = vld [vmem:[%s1 + $0x64] sm:$0xf]
  %v79 = vld [vmem:[%s1 + $0x68] sm:$0xf]
  %v80 = vld [vmem:[%s1 + $0x6c] sm:$0xf]
  %v81 = vld [vmem:[%s1 + $0x70] sm:$0xf]
  %v82 = vld [vmem:[%s1 + $0x74] sm:$0xf]
  %v83 = vld [vmem:[%s1 + $0x78] sm:$0xf]
  %v84 = vld [vmem:[%s1 + $0x7c] sm:$0xf]
  %v85 = vld [vmem:[%s1 + $0x80] sm:$0xf]
  %v86 = vld [vmem:[%s1 + $0x84] sm:$0xf]
  %v87 = vld [vmem:[%s1 + $0x88] sm:$0xf]
  %v88 = vld [vmem:[%s1 + $0x8c] sm:$0xf]
  %v121 = vunpack.c.l.b16 %v21
  %v122 = vunpack.c.h.b16 %v21
  %v123 = vunpack.c.l.b16 %v22
  %v124 = vunpack.c.l.b16 %v23
  %v125 = vunpack.c.h.b16 %v23
  %v126 = vunpack.c.l.b16 %v24
  %v127 = vunpack.c.l.b16 %v25
  %v128 = vunpack.c.h.b16 %v25
  %v129 = vunpack.c.l.b16 %v26
  %v130 = vunpack.c.l.b16 %v27
  %v131 = vunpack.c.h.b16 %v27
  %v132 = vunpack.c.l.b16 %v28
  %v133 = vunpack.c.l.b16 %v29
  %v134 = vunpack.c.h.b16 %v29
  %v135 = vunpack.c.l.b16 %v30
  %v136 = vunpack.c.l.b16 %v31
  %v137 = vunpack.c.h.b16 %v31
  %v138 = vunpack.c.l.b16 %v32
  %v139 = vunpack.c.l.b16 %v33
  %v140 = vunpack.c.h.b16 %v33
  %v141 = vunpack.c.l.b16 %v34
  %v142 = vunpack.c.l.b16 %v35
  %v143 = vunpack.c.h.b16 %v35
  %v144 = vunpack.c.l.b16 %v36
  %v145 = vunpack.c.l.b16 %v37
  %v146 = vunpack.c.h.b16 %v37
  %v147 = vunpack.c.l.b16 %v38
  %v148 = vunpack.c.l.b16 %v39
  %v149 = vunpack.c.h.b16 %v39
  %v150 = vunpack.c.l.b16 %v40
  %v151 = vunpack.c.l.b16 %v41
  %v152 = vunpack.c.h.b16 %v41
  %v153 = vunpack.c.l.b16 %v42
  %v154 = vunpack.c.l.b16 %v43
  %v155 = vunpack.c.h.b16 %v43
  %v156 = vunpack.c.l.b16 %v44
  %v157 = vunpack.c.l.b16 %v45
  %v158 = vunpack.c.h.b16 %v45
  %v159 = vunpack.c.l.b16 %v46
  %v160 = vunpack.c.l.b16 %v47
  %v161 = vunpack.c.h.b16 %v47
  %v162 = vunpack.c.l.b16 %v48
  %v163 = vunpack.c.l.b16 %v49
  %v164 = vunpack.c.h.b16 %v49
  %v165 = vunpack.c.l.b16 %v50
  %v166 = vunpack.c.l.b16 %v51
  %v167 = vunpack.c.h.b16 %v51
  %v168 = vunpack.c.l.b16 %v52
  %v169 = vpack.c.b16 %v124, %v121
  %v170 = vpack.c.b16 %v125, %v122
  %v171 = vpack.c.b16 %v126, %v123
  %v172 = vpack.c.b16 %v130, %v127
  %v173 = vpack.c.b16 %v131, %v128
  %v174 = vpack.c.b16 %v132, %v129
  %v175 = vpack.c.b16 %v136, %v133
  %v176 = vpack.c.b16 %v137, %v134
  %v177 = vpack.c.b16 %v138, %v135
  %v178 = vpack.c.b16 %v142, %v139
  %v179 = vpack.c.b16 %v143, %v140
  %v180 = vpack.c.b16 %v144, %v141
  %v181 = vpack.c.b16 %v148, %v145
  %v182 = vpack.c.b16 %v149, %v146
  %v183 = vpack.c.b16 %v150, %v147
  %v184 = vpack.c.b16 %v154, %v151
  %v185 = vpack.c.b16 %v155, %v152
  %v186 = vpack.c.b16 %v156, %v153
  %v187 = vpack.c.b16 %v160, %v157
  %v188 = vpack.c.b16 %v161, %v158
  %v189 = vpack.c.b16 %v162, %v159
  %v190 = vpack.c.b16 %v166, %v163
  %v191 = vpack.c.b16 %v167, %v164
  %v192 = vpack.c.b16 %v168, %v165
  %v245 = vunpack.c.l.b16 %v53
  %v246 = vunpack.c.l.b16 %v54
  %v247 = vunpack.c.l.b16 %v55
  %v248 = vunpack.c.l.b16 %v56
  %v249 = vunpack.c.l.b16 %v57
  %v250 = vunpack.c.l.b16 %v58
  %v251 = vunpack.c.l.b16 %v59
  %v252 = vunpack.c.l.b16 %v60
  %v253 = vunpack.c.l.b16 %v61
  %v254 = vunpack.c.l.b16 %v62
  %v255 = vunpack.c.l.b16 %v63
  %v256 = vunpack.c.l.b16 %v64
  %v257 = vunpack.c.l.b16 %v65
  %v258 = vunpack.c.l.b16 %v66
  %v259 = vunpack.c.l.b16 %v67
  %v260 = vunpack.c.l.b16 %v68
  %v261 = vunpack.c.l.b16 %v69
  %v262 = vunpack.c.l.b16 %v70
  %v263 = vunpack.c.l.b16 %v71
  %v264 = vunpack.c.l.b16 %v72
  %v265 = vunpack.c.l.b16 %v73
  %v266 = vunpack.c.l.b16 %v74
  %v267 = vunpack.c.l.b16 %v75
  %v268 = vunpack.c.l.b16 %v76
  %v269 = vunpack.c.l.b16 %v77
  %v270 = vunpack.c.l.b16 %v78
  %v271 = vunpack.c.l.b16 %v79
  %v272 = vunpack.c.l.b16 %v80
  %v273 = vunpack.c.l.b16 %v81
  %v274 = vunpack.c.l.b16 %v82
  %v275 = vunpack.c.l.b16 %v83
  %v276 = vunpack.c.l.b16 %v84
  %v277 = vunpack.c.l.b16 %v85
  %v278 = vunpack.c.l.b16 %v86
  %v279 = vunpack.c.l.b16 %v87
  %v280 = vunpack.c.l.b16 %v88
  %v281 = vpack.c.b16 %v246, %v245
  %v282 = vpack.c.b16 %v248, %v247
  %v283 = vpack.c.b16 %v250, %v249
  %v284 = vpack.c.b16 %v252, %v251
  %v285 = vpack.c.b16 %v254, %v253
  %v286 = vpack.c.b16 %v256, %v255
  %v287 = vpack.c.b16 %v258, %v257
  %v288 = vpack.c.b16 %v260, %v259
  %v289 = vpack.c.b16 %v262, %v261
  %v290 = vpack.c.b16 %v264, %v263
  %v291 = vpack.c.b16 %v266, %v265
  %v292 = vpack.c.b16 %v268, %v267
  %v293 = vpack.c.b16 %v270, %v269
  %v294 = vpack.c.b16 %v272, %v271
  %v295 = vpack.c.b16 %v274, %v273
  %v296 = vpack.c.b16 %v276, %v275
  %v297 = vpack.c.b16 %v278, %v277
  %v298 = vpack.c.b16 %v280, %v279
  %vm317 = vcmask 261120
  %v319 = vsel %vm317, %v171, 0
  %v322 = vsel %vm317, %v174, 0
  %v325 = vsel %vm317, %v177, 0
  %v328 = vsel %vm317, %v180, 0
  %v331 = vsel %vm317, %v183, 0
  %v334 = vsel %vm317, %v186, 0
  %v337 = vsel %vm317, %v189, 0
  %v340 = vsel %vm317, %v192, 0
  %342 = vmatprep.subr.bf16.mxu0 0
  %343 = vmatpush1.bf16.msra.mxu0 %v288
  %344 = vmatprep.subr.bf16.mxu0 0
  %345 = vmatpush1.bf16.msra.mxu0 %v287
  %346 = vmatprep.subr.bf16.mxu0 0
  %347 = vmatpush1.bf16.msra.mxu0 %v286
  %348 = vmatprep.subr.bf16.mxu0 0
  %349 = vmatpush1.bf16.msra.mxu0 %v285
  %350 = vmatprep.subr.bf16.mxu0 0
  %351 = vmatpush1.bf16.msra.mxu0 %v284
  %352 = vmatprep.subr.bf16.mxu0 0
  %353 = vmatpush1.bf16.msra.mxu0 %v283
  %354 = vmatprep.subr.bf16.mxu0 0
  %355 = vmatpush1.bf16.msra.mxu0 %v282
  %356 = vmatprep.subr.bf16.mxu0 0
  %357 = vmatpush1.bf16.msra.mxu0 %v281
  %358 = vmatprep.subr.bf16.mxu0 0
  %359 = vmatpush2.bf16.msra.mxu0 %v296
  %360 = vmatprep.subr.bf16.mxu0 0
  %361 = vmatpush2.bf16.msra.mxu0 %v295
  %362 = vmatprep.subr.bf16.mxu0 0
  %363 = vmatpush2.bf16.msra.mxu0 %v294
  %364 = vmatprep.subr.bf16.mxu0 0
  %365 = vmatpush2.bf16.msra.mxu0 %v293
  %366 = vmatprep.subr.bf16.mxu0 0
  %367 = vmatpush2.bf16.msra.mxu0 %v292
  %368 = vmatprep.subr.bf16.mxu0 0
  %369 = vmatpush2.bf16.msra.mxu0 %v291
  %370 = vmatprep.subr.bf16.mxu0 0
  %371 = vmatpush2.bf16.msra.mxu0 %v290
  %372 = vmatprep.subr.bf16.mxu0 0
  %373 = vmatpush2.bf16.msra.mxu0 %v289
  %374 = vmatprep.mubr.bf16.mxu0 %v170
  %375 = vmatmul.mubr.bf16.gmra.mxu0 %v169
  %v376 = vpop.f32.mrf.mxu0
  %v377 = vadd.f32 0.0, %v376
  %v378 = vpop.f32.mrf.mxu0
  %v379 = vpop.f32.mrf.mxu0
  %v380 = vadd.f32 0.0, %v379
  %v381 = vpop.f32.mrf.mxu0
  %382 = vmatprep.mubr.bf16.mxu0 %v173
  %383 = vmatmul.mubr.bf16.gmra.mxu0 %v172
  %v384 = vpop.f32.mrf.mxu0
  %v385 = vadd.f32 0.0, %v384
  %v386 = vpop.f32.mrf.mxu0
  %v387 = vpop.f32.mrf.mxu0
  %v388 = vadd.f32 0.0, %v387
  %v389 = vpop.f32.mrf.mxu0
  %390 = vmatprep.mubr.bf16.mxu0 %v176
  %391 = vmatmul.mubr.bf16.gmra.mxu0 %v175
  %v392 = vpop.f32.mrf.mxu0
  %v393 = vadd.f32 0.0, %v392
  %v394 = vpop.f32.mrf.mxu0
  %v395 = vpop.f32.mrf.mxu0
  %v396 = vadd.f32 0.0, %v395
  %v397 = vpop.f32.mrf.mxu0
  %398 = vmatprep.mubr.bf16.mxu0 %v179
  %399 = vmatmul.mubr.bf16.gmra.mxu0 %v178
  %v400 = vpop.f32.mrf.mxu0
  %v401 = vadd.f32 0.0, %v400
  %v402 = vpop.f32.mrf.mxu0
  %v403 = vpop.f32.mrf.mxu0
  %v404 = vadd.f32 0.0, %v403
  %v405 = vpop.f32.mrf.mxu0
  %406 = vmatprep.mubr.bf16.mxu0 %v182
  %407 = vmatmul.mubr.bf16.gmra.mxu0 %v181
  %v408 = vpop.f32.mrf.mxu0
  %v409 = vadd.f32 0.0, %v408
  %v410 = vpop.f32.mrf.mxu0
  %v411 = vpop.f32.mrf.mxu0
  %v412 = vadd.f32 0.0, %v411
  %v413 = vpop.f32.mrf.mxu0
  %414 = vmatprep.mubr.bf16.mxu0 %v185
  %415 = vmatmul.mubr.bf16.gmra.mxu0 %v184
  %v416 = vpop.f32.mrf.mxu0
  %v417 = vadd.f32 0.0, %v416
  %v418 = vpop.f32.mrf.mxu0
  %v419 = vpop.f32.mrf.mxu0
  %v420 = vadd.f32 0.0, %v419
  %v421 = vpop.f32.mrf.mxu0
  %422 = vmatprep.mubr.bf16.mxu0 %v188
  %423 = vmatmul.mubr.bf16.gmra.mxu0 %v187
  %v424 = vpop.f32.mrf.mxu0
  %v425 = vadd.f32 0.0, %v424
  %v426 = vpop.f32.mrf.mxu0
  %v427 = vpop.f32.mrf.mxu0
  %v428 = vadd.f32 0.0, %v427
  %v429 = vpop.f32.mrf.mxu0
  %430 = vmatprep.mubr.bf16.mxu0 %v191
  %431 = vmatmul.mubr.bf16.gmra.mxu0 %v190
  %v432 = vpop.f32.mrf.mxu0
  %v433 = vadd.f32 0.0, %v432
  %v434 = vpop.f32.mrf.mxu0
  %v435 = vpop.f32.mrf.mxu0
  %v436 = vadd.f32 0.0, %v435
  %v437 = vpop.f32.mrf.mxu0
  %438 = vdwg.mxu0
  %439 = vmatprep.subr.bf16.mxu0 0
  %440 = vmatpush1.bf16.msra.mxu0 0
  %441 = vmatprep.subr.bf16.mxu0 0
  %442 = vmatpush1.bf16.msra.mxu0 0
  %443 = vmatprep.subr.bf16.mxu0 0
  %444 = vmatpush1.bf16.msra.mxu0 0
  %445 = vmatprep.subr.bf16.mxu0 0
  %446 = vmatpush1.bf16.msra.mxu0 0
  %447 = vmatprep.subr.bf16.mxu0 0
  %448 = vmatpush1.bf16.msra.mxu0 0
  %449 = vmatprep.subr.bf16.mxu0 0
  %450 = vmatpush1.bf16.msra.mxu0 0
  %451 = vmatprep.subr.bf16.mxu0 0
  %452 = vmatpush1.bf16.msra.mxu0 %v298
  %453 = vmatprep.subr.bf16.mxu0 0
  %454 = vmatpush1.bf16.msra.mxu0 %v297
  %455 = vmatprep.subr.bf16.mxu0 0
  %456 = vmatpush2.bf16.msra.mxu0 0
  %457 = vmatprep.subr.bf16.mxu0 0
  %458 = vmatpush2.bf16.msra.mxu0 0
  %459 = vmatprep.subr.bf16.mxu0 0
  %460 = vmatpush2.bf16.msra.mxu0 0
  %461 = vmatprep.subr.bf16.mxu0 0
  %462 = vmatpush2.bf16.msra.mxu0 0
  %463 = vmatprep.subr.bf16.mxu0 0
  %464 = vmatpush2.bf16.msra.mxu0 0
  %465 = vmatprep.subr.bf16.mxu0 0
  %466 = vmatpush2.bf16.msra.mxu0 0
  %467 = vmatprep.subr.bf16.mxu0 0
  %468 = vmatpush2.bf16.msra.mxu0 0
  %469 = vmatprep.subr.bf16.mxu0 0
  %470 = vmatpush2.bf16.msra.mxu0 0
  %471 = vmatprep.mubr.bf16.mxu0 0
  %472 = vmatmul.mubr.bf16.gmra.mxu0 %v319
  %v473 = vpop.f32.mrf.mxu0
  %v474 = vadd.f32 %v377, %v473
  %v475 = vpop.f32.mrf.mxu0
  %v476 = vpop.f32.mrf.mxu0
  %v477 = vadd.f32 %v380, %v476
  %v478 = vpop.f32.mrf.mxu0
  %479 = vmatprep.mubr.bf16.mxu0 0
  %480 = vmatmul.mubr.bf16.gmra.mxu0 %v322
  %v481 = vpop.f32.mrf.mxu0
  %v482 = vadd.f32 %v385, %v481
  %v483 = vpop.f32.mrf.mxu0
  %v484 = vpop.f32.mrf.mxu0
  %v485 = vadd.f32 %v388, %v484
  %v486 = vpop.f32.mrf.mxu0
  %487 = vmatprep.mubr.bf16.mxu0 0
  %488 = vmatmul.mubr.bf16.gmra.mxu0 %v325
  %v489 = vpop.f32.mrf.mxu0
  %v490 = vadd.f32 %v393, %v489
  %v491 = vpop.f32.mrf.mxu0
  %v492 = vpop.f32.mrf.mxu0
  %v493 = vadd.f32 %v396, %v492
  %v494 = vpop.f32.mrf.mxu0
  %495 = vmatprep.mubr.bf16.mxu0 0
  %496 = vmatmul.mubr.bf16.gmra.mxu0 %v328
  %v497 = vpop.f32.mrf.mxu0
  %v498 = vadd.f32 %v401, %v497
  %v499 = vpop.f32.mrf.mxu0
  %v500 = vpop.f32.mrf.mxu0
  %v501 = vadd.f32 %v404, %v500
  %v502 = vpop.f32.mrf.mxu0
  %503 = vmatprep.mubr.bf16.mxu0 0
  %504 = vmatmul.mubr.bf16.gmra.mxu0 %v331
  %v505 = vpop.f32.mrf.mxu0
  %v506 = vadd.f32 %v409, %v505
  %v507 = vpop.f32.mrf.mxu0
  %v508 = vpop.f32.mrf.mxu0
  %v509 = vadd.f32 %v412, %v508
  %v510 = vpop.f32.mrf.mxu0
  %511 = vmatprep.mubr.bf16.mxu0 0
  %512 = vmatmul.mubr.bf16.gmra.mxu0 %v334
  %v513 = vpop.f32.mrf.mxu0
  %v514 = vadd.f32 %v417, %v513
  %v515 = vpop.f32.mrf.mxu0
  %v516 = vpop.f32.mrf.mxu0
  %v517 = vadd.f32 %v420, %v516
  %v518 = vpop.f32.mrf.mxu0
  %519 = vmatprep.mubr.bf16.mxu0 0
  %520 = vmatmul.mubr.bf16.gmra.mxu0 %v337
  %v521 = vpop.f32.mrf.mxu0
  %v522 = vadd.f32 %v425, %v521
  %v523 = vpop.f32.mrf.mxu0
  %v524 = vpop.f32.mrf.mxu0
  %v525 = vadd.f32 %v428, %v524
  %v526 = vpop.f32.mrf.mxu0
  %527 = vmatprep.mubr.bf16.mxu0 0
  %528 = vmatmul.mubr.bf16.gmra.mxu0 %v340
  %v529 = vpop.f32.mrf.mxu0
  %v530 = vadd.f32 %v433, %v529
  %v531 = vpop.f32.mrf.mxu0
  %v532 = vpop.f32.mrf.mxu0
  %v533 = vadd.f32 %v436, %v532
  %v534 = vpop.f32.mrf.mxu0
  %535 = vdwg.mxu0
  %v536 = vadd.f32 %v474, %v477
  %v537 = vadd.f32 %v536, %v482
  %v538 = vadd.f32 %v537, %v485
  %v539 = vadd.f32 %v538, %v490
  %v540 = vadd.f32 %v539, %v493
  %v541 = vadd.f32 %v540, %v498
  %v542 = vadd.f32 %v541, %v501
  %v543 = vadd.f32 %v542, %v506
  %v544 = vadd.f32 %v543, %v509
  %v545 = vadd.f32 %v544, %v514
  %v546 = vadd.f32 %v545, %v517
  %v547 = vadd.f32 %v546, %v522
  %v548 = vadd.f32 %v547, %v525
  %v549 = vadd.f32 %v548, %v530
  %v550 = vadd.f32 %v549, %v533
  %v551 = vrot.slane %v550, 4
  %v552 = vadd.f32 %v550, %v551
  %v553 = vrot.slane %v552, 2
  %v554 = vadd.f32 %v552, %v553
  %v555 = vrot.slane %v554, 1
  %v556 = vadd.f32 %v554, %v555
  %v557 = vmul.f32 %v556, 0.0078125
  %v558 = vsub.f32 %v474, %v557
  %v559 = vsub.f32 %v477, %v557
  %v560 = vsub.f32 %v482, %v557
  %v561 = vsub.f32 %v485, %v557
  %v562 = vsub.f32 %v490, %v557
  %v563 = vsub.f32 %v493, %v557
  %v564 = vsub.f32 %v498, %v557
  %v565 = vsub.f32 %v501, %v557
  %v566 = vsub.f32 %v506, %v557
  %v567 = vsub.f32 %v509, %v557
  %v568 = vsub.f32 %v514, %v557
  %v569 = vsub.f32 %v517, %v557
  %v570 = vsub.f32 %v522, %v557
  %v571 = vsub.f32 %v525, %v557
  %v572 = vsub.f32 %v530, %v557
  %v573 = vsub.f32 %v533, %v557
  %v574 = vmul.f32 %v558, %v558
  %v575 = vmul.f32 %v559, %v559
  %v576 = vmul.f32 %v560, %v560
  %v577 = vmul.f32 %v561, %v561
  %v578 = vmul.f32 %v562, %v562
  %v579 = vmul.f32 %v563, %v563
  %v580 = vmul.f32 %v564, %v564
  %v581 = vmul.f32 %v565, %v565
  %v582 = vmul.f32 %v566, %v566
  %v583 = vmul.f32 %v567, %v567
  %v584 = vmul.f32 %v568, %v568
  %v585 = vmul.f32 %v569, %v569
  %v586 = vmul.f32 %v570, %v570
  %v587 = vmul.f32 %v571, %v571
  %v588 = vmul.f32 %v572, %v572
  %v589 = vmul.f32 %v573, %v573
  %v590 = vadd.f32 %v574, %v575
  %v591 = vadd.f32 %v590, %v576
  %v592 = vadd.f32 %v591, %v577
  %v593 = vadd.f32 %v592, %v578
  %v594 = vadd.f32 %v593, %v579
  %v595 = vadd.f32 %v594, %v580
  %v596 = vadd.f32 %v595, %v581
  %v597 = vadd.f32 %v596, %v582
  %v598 = vadd.f32 %v597, %v583
  %v599 = vadd.f32 %v598, %v584
  %v600 = vadd.f32 %v599, %v585
  %v601 = vadd.f32 %v600, %v586
  %v602 = vadd.f32 %v601, %v587
  %v603 = vadd.f32 %v602, %v588
  %v604 = vadd.f32 %v603, %v589
  %v605 = vrot.slane %v604, 4
  %v606 = vadd.f32 %v604, %v605
  %v607 = vrot.slane %v606, 2
  %v608 = vadd.f32 %v606, %v607
  %v609 = vrot.slane %v608, 1
  %v610 = vadd.f32 %v608, %v609
  %v611 = vmul.f32 %v610, 0.0078125
  %v612 = vld [vmem:[%s2] sm:$0x1]
  %v613 = vadd.f32 %v611, 1e-05
  %v614 = vrsqrt.pop %v613
  %v615 = vmul.f32 %v612, %v614
  %v617 = vlaneseq
  %v618 = vshrl.u32 %v617, 7
  %v619 = vsub.s32 0, %v618
  %v620 = vrot.slane %v615, %v619
  %v622 = vmul.f32 %v558, %v620
  %v623 = vmul.f32 %v559, %v620
  %v624 = vmul.f32 %v560, %v620
  %v625 = vmul.f32 %v561, %v620
  %v626 = vmul.f32 %v562, %v620
  %v627 = vmul.f32 %v563, %v620
  %v628 = vmul.f32 %v564, %v620
  %v629 = vmul.f32 %v565, %v620
  %v630 = vmul.f32 %v566, %v620
  %v631 = vmul.f32 %v567, %v620
  %v632 = vmul.f32 %v568, %v620
  %v633 = vmul.f32 %v569, %v620
  %v634 = vmul.f32 %v570, %v620
  %v635 = vmul.f32 %v571, %v620
  %v636 = vmul.f32 %v572, %v620
  %v637 = vmul.f32 %v573, %v620
  %v638 = vld [vmem:[%s3] sm:$0x1]
  %v640 = vlaneseq
  %v641 = vshrl.u32 %v640, 7
  %v642 = vsub.s32 0, %v641
  %v643 = vrot.slane %v638, %v642
  %v645 = vadd.f32 %v622, %v643
  %v646 = vadd.f32 %v623, %v643
  %v647 = vadd.f32 %v624, %v643
  %v648 = vadd.f32 %v625, %v643
  %v649 = vadd.f32 %v626, %v643
  %v650 = vadd.f32 %v627, %v643
  %v651 = vadd.f32 %v628, %v643
  %v652 = vadd.f32 %v629, %v643
  %v653 = vadd.f32 %v630, %v643
  %v654 = vadd.f32 %v631, %v643
  %v655 = vadd.f32 %v632, %v643
  %v656 = vadd.f32 %v633, %v643
  %v657 = vadd.f32 %v634, %v643
  %v658 = vadd.f32 %v635, %v643
  %v659 = vadd.f32 %v636, %v643
  %v660 = vadd.f32 %v637, %v643
  %v661 = vmax.f32 %v645, 0.0
  %v662 = vmax.f32 %v646, 0.0
  %v663 = vmax.f32 %v647, 0.0
  %v664 = vmax.f32 %v648, 0.0
  %v665 = vmax.f32 %v649, 0.0
  %v666 = vmax.f32 %v650, 0.0
  %v667 = vmax.f32 %v651, 0.0
  %v668 = vmax.f32 %v652, 0.0
  %v669 = vmax.f32 %v653, 0.0
  %v670 = vmax.f32 %v654, 0.0
  %v671 = vmax.f32 %v655, 0.0
  %v672 = vmax.f32 %v656, 0.0
  %v673 = vmax.f32 %v657, 0.0
  %v674 = vmax.f32 %v658, 0.0
  %v675 = vmax.f32 %v659, 0.0
  %v676 = vmax.f32 %v660, 0.0
  %v677 = vld [vmem:[%s4] sm:$0xf]
  %v678 = vld [vmem:[%s4 + $0x4] sm:$0xf]
  %v679 = vld [vmem:[%s4 + $0x8] sm:$0xf]
  %v680 = vld [vmem:[%s4 + $0xc] sm:$0xf]
  %v681 = vld [vmem:[%s4 + $0x10] sm:$0xf]
  %v682 = vld [vmem:[%s4 + $0x14] sm:$0xf]
  %v683 = vld [vmem:[%s4 + $0x18] sm:$0xf]
  %v684 = vld [vmem:[%s4 + $0x1c] sm:$0xf]
  %v685 = vld [vmem:[%s4 + $0x20] sm:$0xf]
  %v686 = vld [vmem:[%s4 + $0x24] sm:$0xf]
  %v687 = vld [vmem:[%s4 + $0x28] sm:$0xf]
  %v688 = vld [vmem:[%s4 + $0x2c] sm:$0xf]
  %v689 = vld [vmem:[%s4 + $0x30] sm:$0xf]
  %v690 = vld [vmem:[%s4 + $0x34] sm:$0xf]
  %v691 = vld [vmem:[%s4 + $0x38] sm:$0xf]
  %v692 = vld [vmem:[%s4 + $0x3c] sm:$0xf]
  %v693 = vunpack.c.l.bf16 %v677
  %v694 = vunpack.c.l.bf16 %v678
  %v695 = vunpack.c.l.bf16 %v679
  %v696 = vunpack.c.l.bf16 %v680
  %v697 = vunpack.c.l.bf16 %v681
  %v698 = vunpack.c.l.bf16 %v682
  %v699 = vunpack.c.l.bf16 %v683
  %v700 = vunpack.c.l.bf16 %v684
  %v701 = vunpack.c.l.bf16 %v685
  %v702 = vunpack.c.l.bf16 %v686
  %v703 = vunpack.c.l.bf16 %v687
  %v704 = vunpack.c.l.bf16 %v688
  %v705 = vunpack.c.l.bf16 %v689
  %v706 = vunpack.c.l.bf16 %v690
  %v707 = vunpack.c.l.bf16 %v691
  %v708 = vunpack.c.l.bf16 %v692
  %v709 = vadd.f32 %v661, %v693
  %v710 = vadd.f32 %v662, %v694
  %v711 = vadd.f32 %v663, %v695
  %v712 = vadd.f32 %v664, %v696
  %v713 = vadd.f32 %v665, %v697
  %v714 = vadd.f32 %v666, %v698
  %v715 = vadd.f32 %v667, %v699
  %v716 = vadd.f32 %v668, %v700
  %v717 = vadd.f32 %v669, %v701
  %v718 = vadd.f32 %v670, %v702
  %v719 = vadd.f32 %v671, %v703
  %v720 = vadd.f32 %v672, %v704
  %v721 = vadd.f32 %v673, %v705
  %v722 = vadd.f32 %v674, %v706
  %v723 = vadd.f32 %v675, %v707
  %v724 = vadd.f32 %v676, %v708
  %v725 = vpack.c.bf16 %v710, %v709
  %v726 = vpack.c.bf16 %v712, %v711
  %v727 = vpack.c.bf16 %v714, %v713
  %v728 = vpack.c.bf16 %v716, %v715
  %v729 = vpack.c.bf16 %v718, %v717
  %v730 = vpack.c.bf16 %v720, %v719
  %v731 = vpack.c.bf16 %v722, %v721
  %v732 = vpack.c.bf16 %v724, %v723
  %v741 = vunpack.c.l.b16 %v725
  %v742 = vunpack.c.h.b16 %v725
  %v743 = vunpack.c.l.b16 %v726
  %v744 = vunpack.c.h.b16 %v726
  %v745 = vunpack.c.l.b16 %v727
  %v746 = vunpack.c.h.b16 %v727
  %v747 = vunpack.c.l.b16 %v728
  %v748 = vunpack.c.h.b16 %v728
  %v749 = vunpack.c.l.b16 %v729
  %v750 = vunpack.c.h.b16 %v729
  %v751 = vunpack.c.l.b16 %v730
  %v752 = vunpack.c.h.b16 %v730
  %v753 = vunpack.c.l.b16 %v731
  %v754 = vunpack.c.h.b16 %v731
  %v755 = vunpack.c.l.b16 %v732
  %v756 = vunpack.c.h.b16 %v732
  %v757 = vpack.c.b16 %v741, %v741
  %v758 = vpack.c.b16 %v742, %v742
  %v759 = vpack.c.b16 %v743, %v743
  %v760 = vpack.c.b16 %v744, %v744
  %v761 = vpack.c.b16 %v745, %v745
  %v762 = vpack.c.b16 %v746, %v746
  %v763 = vpack.c.b16 %v747, %v747
  %v764 = vpack.c.b16 %v748, %v748
  %v765 = vpack.c.b16 %v749, %v749
  %v766 = vpack.c.b16 %v750, %v750
  %v767 = vpack.c.b16 %v751, %v751
  %v768 = vpack.c.b16 %v752, %v752
  %v769 = vpack.c.b16 %v753, %v753
  %v770 = vpack.c.b16 %v754, %v754
  %v771 = vpack.c.b16 %v755, %v755
  %v772 = vpack.c.b16 %v756, %v756
  %789 = vst [vmem:[%s5] sm:$0xf] %v757
  %790 = vst [vmem:[%s5 + $0x4] sm:$0xf] %v758
  %791 = vst [vmem:[%s5 + $0x8] sm:$0xf] %v759
  %792 = vst [vmem:[%s5 + $0xc] sm:$0xf] %v760
  %793 = vst [vmem:[%s5 + $0x10] sm:$0xf] %v761
  %794 = vst [vmem:[%s5 + $0x14] sm:$0xf] %v762
  %795 = vst [vmem:[%s5 + $0x18] sm:$0xf] %v763
  %796 = vst [vmem:[%s5 + $0x1c] sm:$0xf] %v764
  %797 = vst [vmem:[%s5 + $0x20] sm:$0xf] %v765
  %798 = vst [vmem:[%s5 + $0x24] sm:$0xf] %v766
  %799 = vst [vmem:[%s5 + $0x28] sm:$0xf] %v767
  %800 = vst [vmem:[%s5 + $0x2c] sm:$0xf] %v768
  %801 = vst [vmem:[%s5 + $0x30] sm:$0xf] %v769
  %802 = vst [vmem:[%s5 + $0x34] sm:$0xf] %v770
  %803 = vst [vmem:[%s5 + $0x38] sm:$0xf] %v771
  %804 = vst [vmem:[%s5 + $0x3c] sm:$0xf] %v772
  // Predicated region
  $region22: #{cnn_classifier_forward.10} parent=0 // pred_check
    _
  $region23: #{cnn_classifier_forward.10} parent=0 // pred_check_branch
    %806 = sbr.rel (0) target = $region25
  $region24: #{cnn_classifier_forward.10} parent=0 // pred_region
    _
  $region25: #{cnn_classifier_forward.10} parent=0 // pred_fallthru
    _
  // Predicated region
  $region26: #{cnn_classifier_forward.10} parent=0 // pred_check
    _
  $region27: #{cnn_classifier_forward.10} parent=0 // pred_check_branch
    %808 = sbr.rel (0) target = $region29
  $region28: #{cnn_classifier_forward.10} parent=0 // pred_region
    _
  $region29: #{cnn_classifier_forward.10} parent=0 // pred_fallthru
    _

// kernel: cnn_classifier_forward.8
$region0: #{cnn_classifier_forward.8}
  #allocation0 [shape = 'u32[]', space=smem, size = 0x4, offset = 0x4, fixed_abs, tag = 'smem constant byte address 0x4 - core index']
  #allocation1 [shape = 'u32[144,128]{1,0:T(1,128)}', space=vmem, size = 0x12000, scoped, tag = 'internal scratch']
  #allocation2 [shape = 'f32[64,40,128]{2,1,0:T(8,128)}', space=vmem, size = 0x140000, scoped, tag = 'scratch operand']
  %s0 = inlined_call_operand.vmem [shape: bf16[2048,160], index: 0, kind: input, shape index: {}]
  %s1 = inlined_call_operand.vmem [shape: bf16[160,128], index: 1, kind: input, shape index: {}]
  %s2 = inlined_call_operand.vmem [shape: f32[1,128], index: 2, kind: input, shape index: {}]
  %s3 = inlined_call_operand.vmem [shape: f32[1,128], index: 3, kind: input, shape index: {}]
  %s4 = inlined_call_operand.vmem [shape: bf16[2,16,16,128], index: 4, kind: output, shape index: {}]
  %s5 = sld [smem:[#allocation0]]
  $region26: #{cnn_classifier_forward.8} parent=0
    _
  %s7 = ssub.s32 1, %s5
  %s8 = scalar_select 0, %s7, %s5
  // Predicated region
  $region2: #{cnn_classifier_forward.8} parent=0 // pred_check
    _
  $region3: #{cnn_classifier_forward.8} parent=0 // pred_check_branch
    %10 = sbr.rel (0) target = $region5
  $region4: #{cnn_classifier_forward.8} parent=0 // pred_region
    _
  $region5: #{cnn_classifier_forward.8} parent=0 // pred_fallthru
    _
  // Predicated region
  $region6: #{cnn_classifier_forward.8} parent=0 // pred_check
    _
  $region7: #{cnn_classifier_forward.8} parent=0 // pred_check_branch
    %12 = sbr.rel (0) target = $region9
  $region8: #{cnn_classifier_forward.8} parent=0 // pred_region
    _
  $region9: #{cnn_classifier_forward.8} parent=0 // pred_fallthru
    _
  // Predicated region
  $region10: #{cnn_classifier_forward.8} parent=0 // pred_check
    _
  $region11: #{cnn_classifier_forward.8} parent=0 // pred_check_branch
    %14 = sbr.rel (0) target = $region13
  $region12: #{cnn_classifier_forward.8} parent=0 // pred_region
    _
  $region13: #{cnn_classifier_forward.8} parent=0 // pred_fallthru
    _
  // Predicated region
  $region14: #{cnn_classifier_forward.8} parent=0 // pred_check
    _
  $region15: #{cnn_classifier_forward.8} parent=0 // pred_check_branch
    %16 = sbr.rel (0) target = $region17
  $region16: #{cnn_classifier_forward.8} parent=0 // pred_region
    _
  $region17: #{cnn_classifier_forward.8} parent=0 // pred_fallthru
    _
  %v18 = vld [vmem:[%s0] sm:$0xff]
  %v19 = vld [vmem:[%s0 + $0x8] sm:$0xff]
  %v20 = vld [vmem:[%s0 + $0x10] sm:$0xff]
  %v21 = vld [vmem:[%s0 + $0x18] sm:$0xff]
  %v22 = vld [vmem:[%s0 + $0x20] sm:$0xff]
  %v23 = vld [vmem:[%s0 + $0x28] sm:$0xff]
  %v24 = vld [vmem:[%s0 + $0x30] sm:$0xff]
  %v25 = vld [vmem:[%s0 + $0x38] sm:$0xff]
  %v26 = vld [vmem:[%s0 + $0x40] sm:$0xff]
  %v27 = vld [vmem:[%s0 + $0x48] sm:$0xff]
  %v28 = vld [vmem:[%s0 + $0x50] sm:$0xff]
  %v29 = vld [vmem:[%s0 + $0x58] sm:$0xff]
  %v30 = vld [vmem:[%s0 + $0x60] sm:$0xff]
  %v31 = vld [vmem:[%s0 + $0x68] sm:$0xff]
  %v32 = vld [vmem:[%s0 + $0x70] sm:$0xff]
  %v33 = vld [vmem:[%s0 + $0x78] sm:$0xff]
  %v34 = vld [vmem:[%s0 + $0x80] sm:$0xff]
  %v35 = vld [vmem:[%s0 + $0x88] sm:$0xff]
  %v36 = vld [vmem:[%s0 + $0x90] sm:$0xff]
  %v37 = vld [vmem:[%s0 + $0x98] sm:$0xff]
  %v38 = vld [vmem:[%s0 + $0xa0] sm:$0xff]
  %v39 = vld [vmem:[%s0 + $0xa8] sm:$0xff]
  %v40 = vld [vmem:[%s0 + $0xb0] sm:$0xff]
  %v41 = vld [vmem:[%s0 + $0xb8] sm:$0xff]
  %v42 = vld [vmem:[%s0 + $0xc0] sm:$0xff]
  %v43 = vld [vmem:[%s0 + $0xc8] sm:$0xff]
  %v44 = vld [vmem:[%s0 + $0xd0] sm:$0xff]
  %v45 = vld [vmem:[%s0 + $0xd8] sm:$0xff]
  %v46 = vld [vmem:[%s0 + $0xe0] sm:$0xff]
  %v47 = vld [vmem:[%s0 + $0xe8] sm:$0xff]
  %v48 = vld [vmem:[%s0 + $0xf0] sm:$0xff]
  %v49 = vld [vmem:[%s0 + $0xf8] sm:$0xff]
  %v50 = vld [vmem:[%s0 + $0x100] sm:$0xff]
  %v51 = vld [vmem:[%s0 + $0x108] sm:$0xff]
  %v52 = vld [vmem:[%s0 + $0x110] sm:$0xff]
  %v53 = vld [vmem:[%s0 + $0x118] sm:$0xff]
  %v54 = vld [vmem:[%s0 + $0x120] sm:$0xff]
  %v55 = vld [vmem:[%s0 + $0x128] sm:$0xff]
  %v56 = vld [vmem:[%s0 + $0x130] sm:$0xff]
  %v57 = vld [vmem:[%s0 + $0x138] sm:$0xff]
  %v58 = vld [vmem:[%s0 + $0x140] sm:$0xff]
  %v59 = vld [vmem:[%s0 + $0x148] sm:$0xff]
  %v60 = vld [vmem:[%s0 + $0x150] sm:$0xff]
  %v61 = vld [vmem:[%s0 + $0x158] sm:$0xff]
  %v62 = vld [vmem:[%s0 + $0x160] sm:$0xff]
  %v63 = vld [vmem:[%s0 + $0x168] sm:$0xff]
  %v64 = vld [vmem:[%s0 + $0x170] sm:$0xff]
  %v65 = vld [vmem:[%s0 + $0x178] sm:$0xff]
  %v66 = vld [vmem:[%s0 + $0x180] sm:$0xff]
  %v67 = vld [vmem:[%s0 + $0x188] sm:$0xff]
  %v68 = vld [vmem:[%s0 + $0x190] sm:$0xff]
  %v69 = vld [vmem:[%s0 + $0x198] sm:$0xff]
  %v70 = vld [vmem:[%s0 + $0x1a0] sm:$0xff]
  %v71 = vld [vmem:[%s0 + $0x1a8] sm:$0xff]
  %v72 = vld [vmem:[%s0 + $0x1b0] sm:$0xff]
  %v73 = vld [vmem:[%s0 + $0x1b8] sm:$0xff]
  %v74 = vld [vmem:[%s0 + $0x1c0] sm:$0xff]
  %v75 = vld [vmem:[%s0 + $0x1c8] sm:$0xff]
  %v76 = vld [vmem:[%s0 + $0x1d0] sm:$0xff]
  %v77 = vld [vmem:[%s0 + $0x1d8] sm:$0xff]
  %v78 = vld [vmem:[%s0 + $0x1e0] sm:$0xff]
  %v79 = vld [vmem:[%s0 + $0x1e8] sm:$0xff]
  %v80 = vld [vmem:[%s0 + $0x1f0] sm:$0xff]
  %v81 = vld [vmem:[%s0 + $0x1f8] sm:$0xff]
  %v82 = vld [vmem:[%s0 + $0x200] sm:$0xff]
  %v83 = vld [vmem:[%s0 + $0x208] sm:$0xff]
  %v84 = vld [vmem:[%s0 + $0x210] sm:$0xff]
  %v85 = vld [vmem:[%s0 + $0x218] sm:$0xff]
  %v86 = vld [vmem:[%s0 + $0x220] sm:$0xff]
  %v87 = vld [vmem:[%s0 + $0x228] sm:$0xff]
  %v88 = vld [vmem:[%s0 + $0x230] sm:$0xff]
  %v89 = vld [vmem:[%s0 + $0x238] sm:$0xff]
  %v90 = vld [vmem:[%s0 + $0x240] sm:$0xff]
  %v91 = vld [vmem:[%s0 + $0x248] sm:$0xff]
  %v92 = vld [vmem:[%s0 + $0x250] sm:$0xff]
  %v93 = vld [vmem:[%s0 + $0x258] sm:$0xff]
  %v94 = vld [vmem:[%s0 + $0x260] sm:$0xff]
  %v95 = vld [vmem:[%s0 + $0x268] sm:$0xff]
  %v96 = vld [vmem:[%s0 + $0x270] sm:$0xff]
  %v97 = vld [vmem:[%s0 + $0x278] sm:$0xff]
  %v98 = vld [vmem:[%s0 + $0x280] sm:$0xff]
  %v99 = vld [vmem:[%s0 + $0x288] sm:$0xff]
  %v100 = vld [vmem:[%s0 + $0x290] sm:$0xff]
  %v101 = vld [vmem:[%s0 + $0x298] sm:$0xff]
  %v102 = vld [vmem:[%s0 + $0x2a0] sm:$0xff]
  %v103 = vld [vmem:[%s0 + $0x2a8] sm:$0xff]
  %v104 = vld [vmem:[%s0 + $0x2b0] sm:$0xff]
  %v105 = vld [vmem:[%s0 + $0x2b8] sm:$0xff]
  %v106 = vld [vmem:[%s0 + $0x2c0] sm:$0xff]
  %v107 = vld [vmem:[%s0 + $0x2c8] sm:$0xff]
  %v108 = vld [vmem:[%s0 + $0x2d0] sm:$0xff]
  %v109 = vld [vmem:[%s0 + $0x2d8] sm:$0xff]
  %v110 = vld [vmem:[%s0 + $0x2e0] sm:$0xff]
  %v111 = vld [vmem:[%s0 + $0x2e8] sm:$0xff]
  %v112 = vld [vmem:[%s0 + $0x2f0] sm:$0xff]
  %v113 = vld [vmem:[%s0 + $0x2f8] sm:$0xff]
  %v114 = vld [vmem:[%s0 + $0x300] sm:$0xff]
  %v115 = vld [vmem:[%s0 + $0x308] sm:$0xff]
  %v116 = vld [vmem:[%s0 + $0x310] sm:$0xff]
  %v117 = vld [vmem:[%s0 + $0x318] sm:$0xff]
  %v118 = vld [vmem:[%s0 + $0x320] sm:$0xff]
  %v119 = vld [vmem:[%s0 + $0x328] sm:$0xff]
  %v120 = vld [vmem:[%s0 + $0x330] sm:$0xff]
  %v121 = vld [vmem:[%s0 + $0x338] sm:$0xff]
  %v122 = vld [vmem:[%s0 + $0x340] sm:$0xff]
  %v123 = vld [vmem:[%s0 + $0x348] sm:$0xff]
  %v124 = vld [vmem:[%s0 + $0x350] sm:$0xff]
  %v125 = vld [vmem:[%s0 + $0x358] sm:$0xff]
  %v126 = vld [vmem:[%s0 + $0x360] sm:$0xff]
  %v127 = vld [vmem:[%s0 + $0x368] sm:$0xff]
  %v128 = vld [vmem:[%s0 + $0x370] sm:$0xff]
  %v129 = vld [vmem:[%s0 + $0x378] sm:$0xff]
  %v130 = vld [vmem:[%s0 + $0x380] sm:$0xff]
  %v131 = vld [vmem:[%s0 + $0x388] sm:$0xff]
  %v132 = vld [vmem:[%s0 + $0x390] sm:$0xff]
  %v133 = vld [vmem:[%s0 + $0x398] sm:$0xff]
  %v134 = vld [vmem:[%s0 + $0x3a0] sm:$0xff]
  %v135 = vld [vmem:[%s0 + $0x3a8] sm:$0xff]
  %v136 = vld [vmem:[%s0 + $0x3b0] sm:$0xff]
  %v137 = vld [vmem:[%s0 + $0x3b8] sm:$0xff]
  %v138 = vld [vmem:[%s0 + $0x3c0] sm:$0xff]
  %v139 = vld [vmem:[%s0 + $0x3c8] sm:$0xff]
  %v140 = vld [vmem:[%s0 + $0x3d0] sm:$0xff]
  %v141 = vld [vmem:[%s0 + $0x3d8] sm:$0xff]
  %v142 = vld [vmem:[%s0 + $0x3e0] sm:$0xff]
  %v143 = vld [vmem:[%s0 + $0x3e8] sm:$0xff]
  %v144 = vld [vmem:[%s0 + $0x3f0] sm:$0xff]
  %v145 = vld [vmem:[%s0 + $0x3f8] sm:$0xff]
  %v146 = vld [vmem:[%s0 + $0x400] sm:$0xff]
  %v147 = vld [vmem:[%s0 + $0x408] sm:$0xff]
  %v148 = vld [vmem:[%s0 + $0x410] sm:$0xff]
  %v149 = vld [vmem:[%s0 + $0x418] sm:$0xff]
  %v150 = vld [vmem:[%s0 + $0x420] sm:$0xff]
  %v151 = vld [vmem:[%s0 + $0x428] sm:$0xff]
  %v152 = vld [vmem:[%s0 + $0x430] sm:$0xff]
  %v153 = vld [vmem:[%s0 + $0x438] sm:$0xff]
  %v154 = vld [vmem:[%s0 + $0x440] sm:$0xff]
  %v155 = vld [vmem:[%s0 + $0x448] sm:$0xff]
  %v156 = vld [vmem:[%s0 + $0x450] sm:$0xff]
  %v157 = vld [vmem:[%s0 + $0x458] sm:$0xff]
  %v158 = vld [vmem:[%s0 + $0x460] sm:$0xff]
  %v159 = vld [vmem:[%s0 + $0x468] sm:$0xff]
  %v160 = vld [vmem:[%s0 + $0x470] sm:$0xff]
  %v161 = vld [vmem:[%s0 + $0x478] sm:$0xff]
  %v162 = vld [vmem:[%s0 + $0x480] sm:$0xff]
  %v163 = vld [vmem:[%s0 + $0x488] sm:$0xff]
  %v164 = vld [vmem:[%s0 + $0x490] sm:$0xff]
  %v165 = vld [vmem:[%s0 + $0x498] sm:$0xff]
  %v166 = vld [vmem:[%s0 + $0x4a0] sm:$0xff]
  %v167 = vld [vmem:[%s0 + $0x4a8] sm:$0xff]
  %v168 = vld [vmem:[%s0 + $0x4b0] sm:$0xff]
  %v169 = vld [vmem:[%s0 + $0x4b8] sm:$0xff]
  %v170 = vld [vmem:[%s0 + $0x4c0] sm:$0xff]
  %v171 = vld [vmem:[%s0 + $0x4c8] sm:$0xff]
  %v172 = vld [vmem:[%s0 + $0x4d0] sm:$0xff]
  %v173 = vld [vmem:[%s0 + $0x4d8] sm:$0xff]
  %v174 = vld [vmem:[%s0 + $0x4e0] sm:$0xff]
  %v175 = vld [vmem:[%s0 + $0x4e8] sm:$0xff]
  %v176 = vld [vmem:[%s0 + $0x4f0] sm:$0xff]
  %v177 = vld [vmem:[%s0 + $0x4f8] sm:$0xff]
  %v178 = vld [vmem:[%s0 + $0x500] sm:$0xff]
  %v179 = vld [vmem:[%s0 + $0x508] sm:$0xff]
  %v180 = vld [vmem:[%s0 + $0x510] sm:$0xff]
  %v181 = vld [vmem:[%s0 + $0x518] sm:$0xff]
  %v182 = vld [vmem:[%s0 + $0x520] sm:$0xff]
  %v183 = vld [vmem:[%s0 + $0x528] sm:$0xff]
  %v184 = vld [vmem:[%s0 + $0x530] sm:$0xff]
  %v185 = vld [vmem:[%s0 + $0x538] sm:$0xff]
  %v186 = vld [vmem:[%s0 + $0x540] sm:$0xff]
  %v187 = vld [vmem:[%s0 + $0x548] sm:$0xff]
  %v188 = vld [vmem:[%s0 + $0x550] sm:$0xff]
  %v189 = vld [vmem:[%s0 + $0x558] sm:$0xff]
  %v190 = vld [vmem:[%s0 + $0x560] sm:$0xff]
  %v191 = vld [vmem:[%s0 + $0x568] sm:$0xff]
  %v192 = vld [vmem:[%s0 + $0x570] sm:$0xff]
  %v193 = vld [vmem:[%s0 + $0x578] sm:$0xff]
  %v194 = vld [vmem:[%s0 + $0x580] sm:$0xff]
  %v195 = vld [vmem:[%s0 + $0x588] sm:$0xff]
  %v196 = vld [vmem:[%s0 + $0x590] sm:$0xff]
  %v197 = vld [vmem:[%s0 + $0x598] sm:$0xff]
  %v198 = vld [vmem:[%s0 + $0x5a0] sm:$0xff]
  %v199 = vld [vmem:[%s0 + $0x5a8] sm:$0xff]
  %v200 = vld [vmem:[%s0 + $0x5b0] sm:$0xff]
  %v201 = vld [vmem:[%s0 + $0x5b8] sm:$0xff]
  %v202 = vld [vmem:[%s0 + $0x5c0] sm:$0xff]
  %v203 = vld [vmem:[%s0 + $0x5c8] sm:$0xff]
  %v204 = vld [vmem:[%s0 + $0x5d0] sm:$0xff]
  %v205 = vld [vmem:[%s0 + $0x5d8] sm:$0xff]
  %v206 = vld [vmem:[%s0 + $0x5e0] sm:$0xff]
  %v207 = vld [vmem:[%s0 + $0x5e8] sm:$0xff]
  %v208 = vld [vmem:[%s0 + $0x5f0] sm:$0xff]
  %v209 = vld [vmem:[%s0 + $0x5f8] sm:$0xff]
  %v210 = vld [vmem:[%s0 + $0x600] sm:$0xff]
  %v211 = vld [vmem:[%s0 + $0x608] sm:$0xff]
  %v212 = vld [vmem:[%s0 + $0x610] sm:$0xff]
  %v213 = vld [vmem:[%s0 + $0x618] sm:$0xff]
  %v214 = vld [vmem:[%s0 + $0x620] sm:$0xff]
  %v215 = vld [vmem:[%s0 + $0x628] sm:$0xff]
  %v216 = vld [vmem:[%s0 + $0x630] sm:$0xff]
  %v217 = vld [vmem:[%s0 + $0x638] sm:$0xff]
  %v218 = vld [vmem:[%s0 + $0x640] sm:$0xff]
  %v219 = vld [vmem:[%s0 + $0x648] sm:$0xff]
  %v220 = vld [vmem:[%s0 + $0x650] sm:$0xff]
  %v221 = vld [vmem:[%s0 + $0x658] sm:$0xff]
  %v222 = vld [vmem:[%s0 + $0x660] sm:$0xff]
  %v223 = vld [vmem:[%s0 + $0x668] sm:$0xff]
  %v224 = vld [vmem:[%s0 + $0x670] sm:$0xff]
  %v225 = vld [vmem:[%s0 + $0x678] sm:$0xff]
  %v226 = vld [vmem:[%s0 + $0x680] sm:$0xff]
  %v227 = vld [vmem:[%s0 + $0x688] sm:$0xff]
  %v228 = vld [vmem:[%s0 + $0x690] sm:$0xff]
  %v229 = vld [vmem:[%s0 + $0x698] sm:$0xff]
  %v230 = vld [vmem:[%s0 + $0x6a0] sm:$0xff]
  %v231 = vld [vmem:[%s0 + $0x6a8] sm:$0xff]
  %v232 = vld [vmem:[%s0 + $0x6b0] sm:$0xff]
  %v233 = vld [vmem:[%s0 + $0x6b8] sm:$0xff]
  %v234 = vld [vmem:[%s0 + $0x6c0] sm:$0xff]
  %v235 = vld [vmem:[%s0 + $0x6c8] sm:$0xff]
  %v236 = vld [vmem:[%s0 + $0x6d0] sm:$0xff]
  %v237 = vld [vmem:[%s0 + $0x6d8] sm:$0xff]
  %v238 = vld [vmem:[%s0 + $0x6e0] sm:$0xff]
  %v239 = vld [vmem:[%s0 + $0x6e8] sm:$0xff]
  %v240 = vld [vmem:[%s0 + $0x6f0] sm:$0xff]
  %v241 = vld [vmem:[%s0 + $0x6f8] sm:$0xff]
  %v242 = vld [vmem:[%s0 + $0x700] sm:$0xff]
  %v243 = vld [vmem:[%s0 + $0x708] sm:$0xff]
  %v244 = vld [vmem:[%s0 + $0x710] sm:$0xff]
  %v245 = vld [vmem:[%s0 + $0x718] sm:$0xff]
  %v246 = vld [vmem:[%s0 + $0x720] sm:$0xff]
  %v247 = vld [vmem:[%s0 + $0x728] sm:$0xff]
  %v248 = vld [vmem:[%s0 + $0x730] sm:$0xff]
  %v249 = vld [vmem:[%s0 + $0x738] sm:$0xff]
  %v250 = vld [vmem:[%s0 + $0x740] sm:$0xff]
  %v251 = vld [vmem:[%s0 + $0x748] sm:$0xff]
  %v252 = vld [vmem:[%s0 + $0x750] sm:$0xff]
  %v253 = vld [vmem:[%s0 + $0x758] sm:$0xff]
  %v254 = vld [vmem:[%s0 + $0x760] sm:$0xff]
  %v255 = vld [vmem:[%s0 + $0x768] sm:$0xff]
  %v256 = vld [vmem:[%s0 + $0x770] sm:$0xff]
  %v257 = vld [vmem:[%s0 + $0x778] sm:$0xff]
  %v258 = vld [vmem:[%s0 + $0x780] sm:$0xff]
  %v259 = vld [vmem:[%s0 + $0x788] sm:$0xff]
  %v260 = vld [vmem:[%s0 + $0x790] sm:$0xff]
  %v261 = vld [vmem:[%s0 + $0x798] sm:$0xff]
  %v262 = vld [vmem:[%s0 + $0x7a0] sm:$0xff]
  %v263 = vld [vmem:[%s0 + $0x7a8] sm:$0xff]
  %v264 = vld [vmem:[%s0 + $0x7b0] sm:$0xff]
  %v265 = vld [vmem:[%s0 + $0x7b8] sm:$0xff]
  %v266 = vld [vmem:[%s0 + $0x7c0] sm:$0xff]
  %v267 = vld [vmem:[%s0 + $0x7c8] sm:$0xff]
  %v268 = vld [vmem:[%s0 + $0x7d0] sm:$0xff]
  %v269 = vld [vmem:[%s0 + $0x7d8] sm:$0xff]
  %v270 = vld [vmem:[%s0 + $0x7e0] sm:$0xff]
  %v271 = vld [vmem:[%s0 + $0x7e8] sm:$0xff]
  %v272 = vld [vmem:[%s0 + $0x7f0] sm:$0xff]
  %v273 = vld [vmem:[%s0 + $0x7f8] sm:$0xff]
  %v274 = vld [vmem:[%s1] sm:$0xf]
  %v275 = vld [vmem:[%s1 + $0x4] sm:$0xf]
  %v276 = vld [vmem:[%s1 + $0x8] sm:$0xf]
  %v277 = vld [vmem:[%s1 + $0xc] sm:$0xf]
  %v278 = vld [vmem:[%s1 + $0x10] sm:$0xf]
  %v279 = vld [vmem:[%s1 + $0x14] sm:$0xf]
  %v280 = vld [vmem:[%s1 + $0x18] sm:$0xf]
  %v281 = vld [vmem:[%s1 + $0x1c] sm:$0xf]
  %v282 = vld [vmem:[%s1 + $0x20] sm:$0xf]
  %v283 = vld [vmem:[%s1 + $0x24] sm:$0xf]
  %v284 = vld [vmem:[%s1 + $0x28] sm:$0xf]
  %v285 = vld [vmem:[%s1 + $0x2c] sm:$0xf]
  %v286 = vld [vmem:[%s1 + $0x30] sm:$0xf]
  %v287 = vld [vmem:[%s1 + $0x34] sm:$0xf]
  %v288 = vld [vmem:[%s1 + $0x38] sm:$0xf]
  %v289 = vld [vmem:[%s1 + $0x3c] sm:$0xf]
  %v290 = vld [vmem:[%s1 + $0x40] sm:$0xf]
  %v291 = vld [vmem:[%s1 + $0x44] sm:$0xf]
  %v292 = vld [vmem:[%s1 + $0x48] sm:$0xf]
  %v293 = vld [vmem:[%s1 + $0x4c] sm:$0xf]
  %v550 = vunpack.c.l.b16 %v18
  %v551 = vunpack.c.h.b16 %v18
  %v552 = vunpack.c.l.b16 %v19
  %v553 = vunpack.c.h.b16 %v19
  %v554 = vunpack.c.l.b16 %v20
  %v555 = vunpack.c.h.b16 %v20
  %v556 = vunpack.c.l.b16 %v21
  %v557 = vunpack.c.h.b16 %v21
  %v558 = vunpack.c.l.b16 %v22
  %v559 = vunpack.c.h.b16 %v22
  %v560 = vunpack.c.l.b16 %v23
  %v561 = vunpack.c.h.b16 %v23
  %v562 = vunpack.c.l.b16 %v24
  %v563 = vunpack.c.h.b16 %v24
  %v564 = vunpack.c.l.b16 %v25
  %v565 = vunpack.c.h.b16 %v25
  %v566 = vunpack.c.l.b16 %v26
  %v567 = vunpack.c.h.b16 %v26
  %v568 = vunpack.c.l.b16 %v27
  %v569 = vunpack.c.h.b16 %v27
  %v570 = vunpack.c.l.b16 %v28
  %v571 = vunpack.c.h.b16 %v28
  %v572 = vunpack.c.l.b16 %v29
  %v573 = vunpack.c.h.b16 %v29
  %v574 = vunpack.c.l.b16 %v30
  %v575 = vunpack.c.h.b16 %v30
  %v576 = vunpack.c.l.b16 %v31
  %v577 = vunpack.c.h.b16 %v31
  %v578 = vunpack.c.l.b16 %v32
  %v579 = vunpack.c.h.b16 %v32
  %v580 = vunpack.c.l.b16 %v33
  %v581 = vunpack.c.h.b16 %v33
  %v582 = vunpack.c.l.b16 %v34
  %v583 = vunpack.c.h.b16 %v34
  %v584 = vunpack.c.l.b16 %v35
  %v585 = vunpack.c.h.b16 %v35
  %v586 = vunpack.c.l.b16 %v36
  %v587 = vunpack.c.h.b16 %v36
  %v588 = vunpack.c.l.b16 %v37
  %v589 = vunpack.c.h.b16 %v37
  %v590 = vunpack.c.l.b16 %v38
  %v591 = vunpack.c.h.b16 %v38
  %v592 = vunpack.c.l.b16 %v39
  %v593 = vunpack.c.h.b16 %v39
  %v594 = vunpack.c.l.b16 %v40
  %v595 = vunpack.c.h.b16 %v40
  %v596 = vunpack.c.l.b16 %v41
  %v597 = vunpack.c.h.b16 %v41
  %v598 = vunpack.c.l.b16 %v42
  %v599 = vunpack.c.h.b16 %v42
  %v600 = vunpack.c.l.b16 %v43
  %v601 = vunpack.c.h.b16 %v43
  %v602 = vunpack.c.l.b16 %v44
  %v603 = vunpack.c.h.b16 %v44
  %v604 = vunpack.c.l.b16 %v45
  %v605 = vunpack.c.h.b16 %v45
  %v606 = vunpack.c.l.b16 %v46
  %v607 = vunpack.c.h.b16 %v46
  %v608 = vunpack.c.l.b16 %v47
  %v609 = vunpack.c.h.b16 %v47
  %v610 = vunpack.c.l.b16 %v48
  %v611 = vunpack.c.h.b16 %v48
  %v612 = vunpack.c.l.b16 %v49
  %v613 = vunpack.c.h.b16 %v49
  %v614 = vunpack.c.l.b16 %v50
  %v615 = vunpack.c.h.b16 %v50
  %v616 = vunpack.c.l.b16 %v51
  %v617 = vunpack.c.h.b16 %v51
  %v618 = vunpack.c.l.b16 %v52
  %v619 = vunpack.c.h.b16 %v52
  %v620 = vunpack.c.l.b16 %v53
  %v621 = vunpack.c.h.b16 %v53
  %v622 = vunpack.c.l.b16 %v54
  %v623 = vunpack.c.h.b16 %v54
  %v624 = vunpack.c.l.b16 %v55
  %v625 = vunpack.c.h.b16 %v55
  %v626 = vunpack.c.l.b16 %v56
  %v627 = vunpack.c.h.b16 %v56
  %v628 = vunpack.c.l.b16 %v57
  %v629 = vunpack.c.h.b16 %v57
  %v630 = vunpack.c.l.b16 %v58
  %v631 = vunpack.c.h.b16 %v58
  %v632 = vunpack.c.l.b16 %v59
  %v633 = vunpack.c.h.b16 %v59
  %v634 = vunpack.c.l.b16 %v60
  %v635 = vunpack.c.h.b16 %v60
  %v636 = vunpack.c.l.b16 %v61
  %v637 = vunpack.c.h.b16 %v61
  %v638 = vunpack.c.l.b16 %v62
  %v639 = vunpack.c.h.b16 %v62
  %v640 = vunpack.c.l.b16 %v63
  %v641 = vunpack.c.h.b16 %v63
  %v642 = vunpack.c.l.b16 %v64
  %v643 = vunpack.c.h.b16 %v64
  %v644 = vunpack.c.l.b16 %v65
  %v645 = vunpack.c.h.b16 %v65
  %v646 = vunpack.c.l.b16 %v66
  %v647 = vunpack.c.h.b16 %v66
  %v648 = vunpack.c.l.b16 %v67
  %v649 = vunpack.c.h.b16 %v67
  %v650 = vunpack.c.l.b16 %v68
  %v651 = vunpack.c.h.b16 %v68
  %v652 = vunpack.c.l.b16 %v69
  %v653 = vunpack.c.h.b16 %v69
  %v654 = vunpack.c.l.b16 %v70
  %v655 = vunpack.c.h.b16 %v70
  %v656 = vunpack.c.l.b16 %v71
  %v657 = vunpack.c.h.b16 %v71
  %v658 = vunpack.c.l.b16 %v72
  %v659 = vunpack.c.h.b16 %v72
  %v660 = vunpack.c.l.b16 %v73
  %v661 = vunpack.c.h.b16 %v73
  %v662 = vunpack.c.l.b16 %v74
  %v663 = vunpack.c.h.b16 %v74
  %v664 = vunpack.c.l.b16 %v75
  %v665 = vunpack.c.h.b16 %v75
  %v666 = vunpack.c.l.b16 %v76
  %v667 = vunpack.c.h.b16 %v76
  %v668 = vunpack.c.l.b16 %v77
  %v669 = vunpack.c.h.b16 %v77
  %v670 = vunpack.c.l.b16 %v78
  %v671 = vunpack.c.h.b16 %v78
  %v672 = vunpack.c.l.b16 %v79
  %v673 = vunpack.c.h.b16 %v79
  %v674 = vunpack.c.l.b16 %v80
  %v675 = vunpack.c.h.b16 %v80
  %v676 = vunpack.c.l.b16 %v81
  %v677 = vunpack.c.h.b16 %v81
  %v678 = vunpack.c.l.b16 %v82
  %v679 = vunpack.c.h.b16 %v82
  %v680 = vunpack.c.l.b16 %v83
  %v681 = vunpack.c.h.b16 %v83
  %v682 = vunpack.c.l.b16 %v84
  %v683 = vunpack.c.h.b16 %v84
  %v684 = vunpack.c.l.b16 %v85
  %v685 = vunpack.c.h.b16 %v85
  %v686 = vunpack.c.l.b16 %v86
  %v687 = vunpack.c.h.b16 %v86
  %v688 = vunpack.c.l.b16 %v87
  %v689 = vunpack.c.h.b16 %v87
  %v690 = vunpack.c.l.b16 %v88
  %v691 = vunpack.c.h.b16 %v88
  %v692 = vunpack.c.l.b16 %v89
  %v693 = vunpack.c.h.b16 %v89
  %v694 = vunpack.c.l.b16 %v90
  %v695 = vunpack.c.h.b16 %v90
  %v696 = vunpack.c.l.b16 %v91
  %v697 = vunpack.c.h.b16 %v91
  %v698 = vunpack.c.l.b16 %v92
  %v699 = vunpack.c.h.b16 %v92
  %v700 = vunpack.c.l.b16 %v93
  %v701 = vunpack.c.h.b16 %v93
  %v702 = vunpack.c.l.b16 %v94
  %v703 = vunpack.c.h.b16 %v94
  %v704 = vunpack.c.l.b16 %v95
  %v705 = vunpack.c.h.b16 %v95
  %v706 = vunpack.c.l.b16 %v96
  %v707 = vunpack.c.h.b16 %v96
  %v708 = vunpack.c.l.b16 %v97
  %v709 = vunpack.c.h.b16 %v97
  %v710 = vunpack.c.l.b16 %v98
  %v711 = vunpack.c.h.b16 %v98
  %v712 = vunpack.c.l.b16 %v99
  %v713 = vunpack.c.h.b16 %v99
  %v714 = vunpack.c.l.b16 %v100
  %v715 = vunpack.c.h.b16 %v100
  %v716 = vunpack.c.l.b16 %v101
  %v717 = vunpack.c.h.b16 %v101
  %v718 = vunpack.c.l.b16 %v102
  %v719 = vunpack.c.h.b16 %v102
  %v720 = vunpack.c.l.b16 %v103
  %v721 = vunpack.c.h.b16 %v103
  %v722 = vunpack.c.l.b16 %v104
  %v723 = vunpack.c.h.b16 %v104
  %v724 = vunpack.c.l.b16 %v105
  %v725 = vunpack.c.h.b16 %v105
  %v726 = vunpack.c.l.b16 %v106
  %v727 = vunpack.c.h.b16 %v106
  %v728 = vunpack.c.l.b16 %v107
  %v729 = vunpack.c.h.b16 %v107
  %v730 = vunpack.c.l.b16 %v108
  %v731 = vunpack.c.h.b16 %v108
  %v732 = vunpack.c.l.b16 %v109
  %v733 = vunpack.c.h.b16 %v109
  %v734 = vunpack.c.l.b16 %v110
  %v735 = vunpack.c.h.b16 %v110
  %v736 = vunpack.c.l.b16 %v111
  %v737 = vunpack.c.h.b16 %v111
  %v738 = vunpack.c.l.b16 %v112
  %v739 = vunpack.c.h.b16 %v112
  %v740 = vunpack.c.l.b16 %v113
  %v741 = vunpack.c.h.b16 %v113
  %v742 = vunpack.c.l.b16 %v114
  %v743 = vunpack.c.h.b16 %v114
  %v744 = vunpack.c.l.b16 %v115
  %v745 = vunpack.c.h.b16 %v115
  %v746 = vunpack.c.l.b16 %v116
  %v747 = vunpack.c.h.b16 %v116
  %v748 = vunpack.c.l.b16 %v117
  %v749 = vunpack.c.h.b16 %v117
  %v750 = vunpack.c.l.b16 %v118
  %v751 = vunpack.c.h.b16 %v118
  %v752 = vunpack.c.l.b16 %v119
  %v753 = vunpack.c.h.b16 %v119
  %v754 = vunpack.c.l.b16 %v120
  %v755 = vunpack.c.h.b16 %v120
  %v756 = vunpack.c.l.b16 %v121
  %v757 = vunpack.c.h.b16 %v121
  %v758 = vunpack.c.l.b16 %v122
  %v759 = vunpack.c.h.b16 %v122
  %v760 = vunpack.c.l.b16 %v123
  %v761 = vunpack.c.h.b16 %v123
  %v762 = vunpack.c.l.b16 %v124
  %v763 = vunpack.c.h.b16 %v124
  %v764 = vunpack.c.l.b16 %v125
  %v765 = vunpack.c.h.b16 %v125
  %v766 = vunpack.c.l.b16 %v126
  %v767 = vunpack.c.h.b16 %v126
  %v768 = vunpack.c.l.b16 %v127
  %v769 = vunpack.c.h.b16 %v127
  %v770 = vunpack.c.l.b16 %v128
  %v771 = vunpack.c.h.b16 %v128
  %v772 = vunpack.c.l.b16 %v129
  %v773 = vunpack.c.h.b16 %v129
  %v774 = vunpack.c.l.b16 %v130
  %v775 = vunpack.c.h.b16 %v130
  %v776 = vunpack.c.l.b16 %v131
  %v777 = vunpack.c.h.b16 %v131
  %v778 = vunpack.c.l.b16 %v132
  %v779 = vunpack.c.h.b16 %v132
  %v780 = vunpack.c.l.b16 %v133
  %v781 = vunpack.c.h.b16 %v133
  %v782 = vunpack.c.l.b16 %v134
  %v783 = vunpack.c.h.b16 %v134
  %v784 = vunpack.c.l.b16 %v135
  %v785 = vunpack.c.h.b16 %v135
  %v786 = vunpack.c.l.b16 %v136
  %v787 = vunpack.c.h.b16 %v136
  %v788 = vunpack.c.l.b16 %v137
  %v789 = vunpack.c.h.b16 %v137
  %v790 = vunpack.c.l.b16 %v138
  %v791 = vunpack.c.h.b16 %v138
  %v792 = vunpack.c.l.b16 %v139
  %v793 = vunpack.c.h.b16 %v139
  %v794 = vunpack.c.l.b16 %v140
  %v795 = vunpack.c.h.b16 %v140
  %v796 = vunpack.c.l.b16 %v141
  %v797 = vunpack.c.h.b16 %v141
  %v798 = vunpack.c.l.b16 %v142
  %v799 = vunpack.c.h.b16 %v142
  %v800 = vunpack.c.l.b16 %v143
  %v801 = vunpack.c.h.b16 %v143
  %v802 = vunpack.c.l.b16 %v144
  %v803 = vunpack.c.h.b16 %v144
  %v804 = vunpack.c.l.b16 %v145
  %v805 = vunpack.c.h.b16 %v145
  %v806 = vunpack.c.l.b16 %v146
  %v807 = vunpack.c.h.b16 %v146
  %v808 = vunpack.c.l.b16 %v147
  %v809 = vunpack.c.h.b16 %v147
  %v810 = vunpack.c.l.b16 %v148
  %v811 = vunpack.c.h.b16 %v148
  %v812 = vunpack.c.l.b16 %v149
  %v813 = vunpack.c.h.b16 %v149
  %v814 = vunpack.c.l.b16 %v150
  %v815 = vunpack.c.h.b16 %v150
  %v816 = vunpack.c.l.b16 %v151
  %v817 = vunpack.c.h.b16 %v151
  %v818 = vunpack.c.l.b16 %v152
  %v819 = vunpack.c.h.b16 %v152
  %v820 = vunpack.c.l.b16 %v153
  %v821 = vunpack.c.h.b16 %v153
  %v822 = vunpack.c.l.b16 %v154
  %v823 = vunpack.c.h.b16 %v154
  %v824 = vunpack.c.l.b16 %v155
  %v825 = vunpack.c.h.b16 %v155
  %v826 = vunpack.c.l.b16 %v156
  %v827 = vunpack.c.h.b16 %v156
  %v828 = vunpack.c.l.b16 %v157
  %v829 = vunpack.c.h.b16 %v157
  %v830 = vunpack.c.l.b16 %v158
  %v831 = vunpack.c.h.b16 %v158
  %v832 = vunpack.c.l.b16 %v159
  %v833 = vunpack.c.h.b16 %v159
  %v834 = vunpack.c.l.b16 %v160
  %v835 = vunpack.c.h.b16 %v160
  %v836 = vunpack.c.l.b16 %v161
  %v837 = vunpack.c.h.b16 %v161
  %v838 = vunpack.c.l.b16 %v162
  %v839 = vunpack.c.h.b16 %v162
  %v840 = vunpack.c.l.b16 %v163
  %v841 = vunpack.c.h.b16 %v163
  %v842 = vunpack.c.l.b16 %v164
  %v843 = vunpack.c.h.b16 %v164
  %v844 = vunpack.c.l.b16 %v165
  %v845 = vunpack.c.h.b16 %v165
  %v846 = vunpack.c.l.b16 %v166
  %v847 = vunpack.c.h.b16 %v166
  %v848 = vunpack.c.l.b16 %v167
  %v849 = vunpack.c.h.b16 %v167
  %v850 = vunpack.c.l.b16 %v168
  %v851 = vunpack.c.h.b16 %v168
  %v852 = vunpack.c.l.b16 %v169
  %v853 = vunpack.c.h.b16 %v169
  %v854 = vunpack.c.l.b16 %v170
  %v855 = vunpack.c.h.b16 %v170
  %v856 = vunpack.c.l.b16 %v171
  %v857 = vunpack.c.h.b16 %v171
  %v858 = vunpack.c.l.b16 %v172
  %v859 = vunpack.c.h.b16 %v172
  %v860 = vunpack.c.l.b16 %v173
  %v861 = vunpack.c.h.b16 %v173
  %v862 = vunpack.c.l.b16 %v174
  %v863 = vunpack.c.h.b16 %v174
  %v864 = vunpack.c.l.b16 %v175
  %v865 = vunpack.c.h.b16 %v175
  %v866 = vunpack.c.l.b16 %v176
  %v867 = vunpack.c.h.b16 %v176
  %v868 = vunpack.c.l.b16 %v177
  %v869 = vunpack.c.h.b16 %v177
  %v870 = vunpack.c.l.b16 %v178
  %v871 = vunpack.c.h.b16 %v178
  %v872 = vunpack.c.l.b16 %v179
  %v873 = vunpack.c.h.b16 %v179
  %v874 = vunpack.c.l.b16 %v180
  %v875 = vunpack.c.h.b16 %v180
  %v876 = vunpack.c.l.b16 %v181
  %v877 = vunpack.c.h.b16 %v181
  %v878 = vunpack.c.l.b16 %v182
  %v879 = vunpack.c.h.b16 %v182
  %v880 = vunpack.c.l.b16 %v183
  %v881 = vunpack.c.h.b16 %v183
  %v882 = vunpack.c.l.b16 %v184
  %v883 = vunpack.c.h.b16 %v184
  %v884 = vunpack.c.l.b16 %v185
  %v885 = vunpack.c.h.b16 %v185
  %v886 = vunpack.c.l.b16 %v186
  %v887 = vunpack.c.h.b16 %v186
  %v888 = vunpack.c.l.b16 %v187
  %v889 = vunpack.c.h.b16 %v187
  %v890 = vunpack.c.l.b16 %v188
  %v891 = vunpack.c.h.b16 %v188
  %v892 = vunpack.c.l.b16 %v189
  %v893 = vunpack.c.h.b16 %v189
  %v894 = vunpack.c.l.b16 %v190
  %v895 = vunpack.c.h.b16 %v190
  %v896 = vunpack.c.l.b16 %v191
  %v897 = vunpack.c.h.b16 %v191
  %v898 = vunpack.c.l.b16 %v192
  %v899 = vunpack.c.h.b16 %v192
  %v900 = vunpack.c.l.b16 %v193
  %v901 = vunpack.c.h.b16 %v193
  %v902 = vunpack.c.l.b16 %v194
  %v903 = vunpack.c.h.b16 %v194
  %v904 = vunpack.c.l.b16 %v195
  %v905 = vunpack.c.h.b16 %v195
  %v906 = vunpack.c.l.b16 %v196
  %v907 = vunpack.c.h.b16 %v196
  %v908 = vunpack.c.l.b16 %v197
  %v909 = vunpack.c.h.b16 %v197
  %v910 = vunpack.c.l.b16 %v198
  %v911 = vunpack.c.h.b16 %v198
  %v912 = vunpack.c.l.b16 %v199
  %v913 = vunpack.c.h.b16 %v199
  %v914 = vunpack.c.l.b16 %v200
  %v915 = vunpack.c.h.b16 %v200
  %v916 = vunpack.c.l.b16 %v201
  %v917 = vunpack.c.h.b16 %v201
  %v918 = vunpack.c.l.b16 %v202
  %v919 = vunpack.c.h.b16 %v202
  %v920 = vunpack.c.l.b16 %v203
  %v921 = vunpack.c.h.b16 %v203
  %v922 = vunpack.c.l.b16 %v204
  %v923 = vunpack.c.h.b16 %v204
  %v924 = vunpack.c.l.b16 %v205
  %v925 = vunpack.c.h.b16 %v205
  %v926 = vunpack.c.l.b16 %v206
  %v927 = vunpack.c.h.b16 %v206
  %v928 = vunpack.c.l.b16 %v207
  %v929 = vunpack.c.h.b16 %v207
  %v930 = vunpack.c.l.b16 %v208
  %v931 = vunpack.c.h.b16 %v208
  %v932 = vunpack.c.l.b16 %v209
  %v933 = vunpack.c.h.b16 %v209
  %v934 = vunpack.c.l.b16 %v210
  %v935 = vunpack.c.h.b16 %v210
  %v936 = vunpack.c.l.b16 %v211
  %v937 = vunpack.c.h.b16 %v211
  %v938 = vunpack.c.l.b16 %v212
  %v939 = vunpack.c.h.b16 %v212
  %v940 = vunpack.c.l.b16 %v213
  %v941 = vunpack.c.h.b16 %v213
  %v942 = vunpack.c.l.b16 %v214
  %v943 = vunpack.c.h.b16 %v214
  %v944 = vunpack.c.l.b16 %v215
  %v945 = vunpack.c.h.b16 %v215
  %v946 = vunpack.c.l.b16 %v216
  %v947 = vunpack.c.h.b16 %v216
  %v948 = vunpack.c.l.b16 %v217
  %v949 = vunpack.c.h.b16 %v217
  %v950 = vunpack.c.l.b16 %v218
  %v951 = vunpack.c.h.b16 %v218
  %v952 = vunpack.c.l.b16 %v219
  %v953 = vunpack.c.h.b16 %v219
  %v954 = vunpack.c.l.b16 %v220
  %v955 = vunpack.c.h.b16 %v220
  %v956 = vunpack.c.l.b16 %v221
  %v957 = vunpack.c.h.b16 %v221
  %v958 = vunpack.c.l.b16 %v222
  %v959 = vunpack.c.h.b16 %v222
  %v960 = vunpack.c.l.b16 %v223
  %v961 = vunpack.c.h.b16 %v223
  %v962 = vunpack.c.l.b16 %v224
  %v963 = vunpack.c.h.b16 %v224
  %v964 = vunpack.c.l.b16 %v225
  %v965 = vunpack.c.h.b16 %v225
  %v966 = vunpack.c.l.b16 %v226
  %v967 = vunpack.c.h.b16 %v226
  %v968 = vunpack.c.l.b16 %v227
  %v969 = vunpack.c.h.b16 %v227
  %v970 = vunpack.c.l.b16 %v228
  %v971 = vunpack.c.h.b16 %v228
  %v972 = vunpack.c.l.b16 %v229
  %v973 = vunpack.c.h.b16 %v229
  %v974 = vunpack.c.l.b16 %v230
  %v975 = vunpack.c.h.b16 %v230
  %v976 = vunpack.c.l.b16 %v231
  %v977 = vunpack.c.h.b16 %v231
  %v978 = vunpack.c.l.b16 %v232
  %v979 = vunpack.c.h.b16 %v232
  %v980 = vunpack.c.l.b16 %v233
  %v981 = vunpack.c.h.b16 %v233
  %v982 = vunpack.c.l.b16 %v234
  %v983 = vunpack.c.h.b16 %v234
  %v984 = vunpack.c.l.b16 %v235
  %v985 = vunpack.c.h.b16 %v235
  %v986 = vunpack.c.l.b16 %v236
  %v987 = vunpack.c.h.b16 %v236
  %v988 = vunpack.c.l.b16 %v237
  %v989 = vunpack.c.h.b16 %v237
  %v990 = vunpack.c.l.b16 %v238
  %v991 = vunpack.c.h.b16 %v238
  %v992 = vunpack.c.l.b16 %v239
  %v993 = vunpack.c.h.b16 %v239
  %v994 = vunpack.c.l.b16 %v240
  %v995 = vunpack.c.h.b16 %v240
  %v996 = vunpack.c.l.b16 %v241
  %v997 = vunpack.c.h.b16 %v241
  %v998 = vunpack.c.l.b16 %v242
  %v999 = vunpack.c.h.b16 %v242
  %v1000 = vunpack.c.l.b16 %v243
  %v1001 = vunpack.c.h.b16 %v243
  %v1002 = vunpack.c.l.b16 %v244
  %v1003 = vunpack.c.h.b16 %v244
  %v1004 = vunpack.c.l.b16 %v245
  %v1005 = vunpack.c.h.b16 %v245
  %v1006 = vunpack.c.l.b16 %v246
  %v1007 = vunpack.c.h.b16 %v246
  %v1008 = vunpack.c.l.b16 %v247
  %v1009 = vunpack.c.h.b16 %v247
  %v1010 = vunpack.c.l.b16 %v248
  %v1011 = vunpack.c.h.b16 %v248
  %v1012 = vunpack.c.l.b16 %v249
  %v1013 = vunpack.c.h.b16 %v249
  %v1014 = vunpack.c.l.b16 %v250
  %v1015 = vunpack.c.h.b16 %v250
  %v1016 = vunpack.c.l.b16 %v251
  %v1017 = vunpack.c.h.b16 %v251
  %v1018 = vunpack.c.l.b16 %v252
  %v1019 = vunpack.c.h.b16 %v252
  %v1020 = vunpack.c.l.b16 %v253
  %v1021 = vunpack.c.h.b16 %v253
  %v1022 = vunpack.c.l.b16 %v254
  %v1023 = vunpack.c.h.b16 %v254
  %v1024 = vunpack.c.l.b16 %v255
  %v1025 = vunpack.c.h.b16 %v255
  %v1026 = vunpack.c.l.b16 %v256
  %v1027 = vunpack.c.h.b16 %v256
  %v1028 = vunpack.c.l.b16 %v257
  %v1029 = vunpack.c.h.b16 %v257
  %v1030 = vunpack.c.l.b16 %v258
  %v1031 = vunpack.c.h.b16 %v258
  %v1032 = vunpack.c.l.b16 %v259
  %v1033 = vunpack.c.h.b16 %v259
  %v1034 = vunpack.c.l.b16 %v260
  %v1035 = vunpack.c.h.b16 %v260
  %v1036 = vunpack.c.l.b16 %v261
  %v1037 = vunpack.c.h.b16 %v261
  %v1038 = vunpack.c.l.b16 %v262
  %v1039 = vunpack.c.h.b16 %v262
  %v1040 = vunpack.c.l.b16 %v263
  %v1041 = vunpack.c.h.b16 %v263
  %v1042 = vunpack.c.l.b16 %v264
  %v1043 = vunpack.c.h.b16 %v264
  %v1044 = vunpack.c.l.b16 %v265
  %v1045 = vunpack.c.h.b16 %v265
  %v1046 = vunpack.c.l.b16 %v266
  %v1047 = vunpack.c.h.b16 %v266
  %v1048 = vunpack.c.l.b16 %v267
  %v1049 = vunpack.c.h.b16 %v267
  %v1050 = vunpack.c.l.b16 %v268
  %v1051 = vunpack.c.h.b16 %v268
  %v1052 = vunpack.c.l.b16 %v269
  %v1053 = vunpack.c.h.b16 %v269
  %v1054 = vunpack.c.l.b16 %v270
  %v1055 = vunpack.c.h.b16 %v270
  %v1056 = vunpack.c.l.b16 %v271
  %v1057 = vunpack.c.h.b16 %v271
  %v1058 = vunpack.c.l.b16 %v272
  %v1059 = vunpack.c.h.b16 %v272
  %v1060 = vunpack.c.l.b16 %v273
  %v1061 = vunpack.c.h.b16 %v273
  %v1062 = vpack.c.b16 %v552, %v550
  %v1063 = vpack.c.b16 %v553, %v551
  %v1064 = vpack.c.b16 %v556, %v554
  %v1065 = vpack.c.b16 %v557, %v555
  %v1066 = vpack.c.b16 %v560, %v558
  %v1067 = vpack.c.b16 %v561, %v559
  %v1068 = vpack.c.b16 %v564, %v562
  %v1069 = vpack.c.b16 %v565, %v563
  %v1070 = vpack.c.b16 %v568, %v566
  %v1071 = vpack.c.b16 %v569, %v567
  %v1072 = vpack.c.b16 %v572, %v570
  %v1073 = vpack.c.b16 %v573, %v571
  %v1074 = vpack.c.b16 %v576, %v574
  %v1075 = vpack.c.b16 %v577, %v575
  %v1076 = vpack.c.b16 %v580, %v578
  %v1077 = vpack.c.b16 %v581, %v579
  %v1078 = vpack.c.b16 %v584, %v582
  %v1079 = vpack.c.b16 %v585, %v583
  %v1080 = vpack.c.b16 %v588, %v586
  %v1081 = vpack.c.b16 %v589, %v587
  %v1082 = vpack.c.b16 %v592, %v590
  %v1083 = vpack.c.b16 %v593, %v591
  %v1084 = vpack.c.b16 %v596, %v594
  %v1085 = vpack.c.b16 %v597, %v595
  %v1086 = vpack.c.b16 %v600, %v598
  %v1087 = vpack.c.b16 %v601, %v599
  %v1088 = vpack.c.b16 %v604, %v602
  %v1089 = vpack.c.b16 %v605, %v603
  %v1090 = vpack.c.b16 %v608, %v606
  %v1091 = vpack.c.b16 %v609, %v607
  %v1092 = vpack.c.b16 %v612, %v610
  %v1093 = vpack.c.b16 %v613, %v611
  %v1094 = vpack.c.b16 %v616, %v614
  %v1095 = vpack.c.b16 %v617, %v615
  %v1096 = vpack.c.b16 %v620, %v618
  %v1097 = vpack.c.b16 %v621, %v619
  %v1098 = vpack.c.b16 %v624, %v622
  %v1099 = vpack.c.b16 %v625, %v623
  %v1100 = vpack.c.b16 %v628, %v626
  %v1101 = vpack.c.b16 %v629, %v627
  %v1102 = vpack.c.b16 %v632, %v630
  %v1103 = vpack.c.b16 %v633, %v631
  %v1104 = vpack.c.b16 %v636, %v634
  %v1105 = vpack.c.b16 %v637, %v635
  %v1106 = vpack.c.b16 %v640, %v638
  %v1107 = vpack.c.b16 %v641, %v639
  %v1108 = vpack.c.b16 %v644, %v642
  %v1109 = vpack.c.b16 %v645, %v643
  %v1110 = vpack.c.b16 %v648, %v646
  %v1111 = vpack.c.b16 %v649, %v647
  %v1112 = vpack.c.b16 %v652, %v650
  %v1113 = vpack.c.b16 %v653, %v651
  %v1114 = vpack.c.b16 %v656, %v654
  %v1115 = vpack.c.b16 %v657, %v655
  %v1116 = vpack.c.b16 %v660, %v658
  %v1117 = vpack.c.b16 %v661, %v659
  %v1118 = vpack.c.b16 %v664, %v662
  %v1119 = vpack.c.b16 %v665, %v663
  %v1120 = vpack.c.b16 %v668, %v666
  %v1121 = vpack.c.b16 %v669, %v667
  %v1122 = vpack.c.b16 %v672, %v670
  %v1123 = vpack.c.b16 %v673, %v671
  %v1124 = vpack.c.b16 %v676, %v674
  %v1125 = vpack.c.b16 %v677, %v675
  %v1126 = vpack.c.b16 %v680, %v678
  %v1127 = vpack.c.b16 %v681, %v679
  %v1128 = vpack.c.b16 %v684, %v682
  %v1129 = vpack.c.b16 %v685, %v683
  %v1130 = vpack.c.b16 %v688, %v686
  %v1131 = vpack.c.b16 %v689, %v687
  %v1132 = vpack.c.b16 %v692, %v690
  %v1133 = vpack.c.b16 %v693, %v691
  %v1134 = vpack.c.b16 %v696, %v694
  %v1135 = vpack.c.b16 %v697, %v695
  %v1136 = vpack.c.b16 %v700, %v698
  %v1137 = vpack.c.b16 %v701, %v699
  %v1138 = vpack.c.b16 %v704, %v702
  %v1139 = vpack.c.b16 %v705, %v703
  %v1140 = vpack.c.b16 %v708, %v706
  %v1141 = vpack.c.b16 %v709, %v707
  %v1142 = vpack.c.b16 %v712, %v710
  %v1143 = vpack.c.b16 %v713, %v711
  %v1144 = vpack.c.b16 %v716, %v714
  %v1145 = vpack.c.b16 %v717, %v715
  %v1146 = vpack.c.b16 %v720, %v718
  %v1147 = vpack.c.b16 %v721, %v719
  %v1148 = vpack.c.b16 %v724, %v722
  %v1149 = vpack.c.b16 %v725, %v723
  %v1150 = vpack.c.b16 %v728, %v726
  %v1151 = vpack.c.b16 %v729, %v727
  %v1152 = vpack.c.b16 %v732, %v730
  %v1153 = vpack.c.b16 %v733, %v731
  %v1154 = vpack.c.b16 %v736, %v734
  %v1155 = vpack.c.b16 %v737, %v735
  %v1156 = vpack.c.b16 %v740, %v738
  %v1157 = vpack.c.b16 %v741, %v739
  %v1158 = vpack.c.b16 %v744, %v742
  %v1159 = vpack.c.b16 %v745, %v743
  %v1160 = vpack.c.b16 %v748, %v746
  %v1161 = vpack.c.b16 %v749, %v747
  %v1162 = vpack.c.b16 %v752, %v750
  %v1163 = vpack.c.b16 %v753, %v751
  %v1164 = vpack.c.b16 %v756, %v754
  %v1165 = vpack.c.b16 %v757, %v755
  %v1166 = vpack.c.b16 %v760, %v758
  %v1167 = vpack.c.b16 %v761, %v759
  %v1168 = vpack.c.b16 %v764, %v762
  %v1169 = vpack.c.b16 %v765, %v763
  %v1170 = vpack.c.b16 %v768, %v766
  %v1171 = vpack.c.b16 %v769, %v767
  %v1172 = vpack.c.b16 %v772, %v770
  %v1173 = vpack.c.b16 %v773, %v771
  %v1174 = vpack.c.b16 %v776, %v774
  %v1175 = vpack.c.b16 %v777, %v775
  %v1176 = vpack.c.b16 %v780, %v778
  %v1177 = vpack.c.b16 %v781, %v779
  %v1178 = vpack.c.b16 %v784, %v782
  %v1179 = vpack.c.b16 %v785, %v783
  %v1180 = vpack.c.b16 %v788, %v786
  %v1181 = vpack.c.b16 %v789, %v787
  %v1182 = vpack.c.b16 %v792, %v790
  %v1183 = vpack.c.b16 %v793, %v791
  %v1184 = vpack.c.b16 %v796, %v794
  %v1185 = vpack.c.b16 %v797, %v795
  %v1186 = vpack.c.b16 %v800, %v798
  %v1187 = vpack.c.b16 %v801, %v799
  %v1188 = vpack.c.b16 %v804, %v802
  %v1189 = vpack.c.b16 %v805, %v803
  %v1190 = vpack.c.b16 %v808, %v806
  %v1191 = vpack.c.b16 %v809, %v807
  %v1192 = vpack.c.b16 %v812, %v810
  %v1193 = vpack.c.b16 %v813, %v811
  %v1194 = vpack.c.b16 %v816, %v814
  %v1195 = vpack.c.b16 %v817, %v815
  %v1196 = vpack.c.b16 %v820, %v818
  %v1197 = vpack.c.b16 %v821, %v819
  %v1198 = vpack.c.b16 %v824, %v822
  %v1199 = vpack.c.b16 %v825, %v823
  %v1200 = vpack.c.b16 %v828, %v826
  %v1201 = vpack.c.b16 %v829, %v827
  %v1202 = vpack.c.b16 %v832, %v830
  %v1203 = vpack.c.b16 %v833, %v831
  %v1204 = vpack.c.b16 %v836, %v834
  %v1205 = vpack.c.b16 %v837, %v835
  %v1206 = vpack.c.b16 %v840, %v838
  %v1207 = vpack.c.b16 %v841, %v839
  %v1208 = vpack.c.b16 %v844, %v842
  %v1209 = vpack.c.b16 %v845, %v843
  %v1210 = vpack.c.b16 %v848, %v846
  %v1211 = vpack.c.b16 %v849, %v847
  %v1212 = vpack.c.b16 %v852, %v850
  %v1213 = vpack.c.b16 %v853, %v851
  %v1214 = vpack.c.b16 %v856, %v854
  %v1215 = vpack.c.b16 %v857, %v855
  %v1216 = vpack.c.b16 %v860, %v858
  %v1217 = vpack.c.b16 %v861, %v859
  %v1218 = vpack.c.b16 %v864, %v862
  %v1219 = vpack.c.b16 %v865, %v863
  %v1220 = vpack.c.b16 %v868, %v866
  %v1221 = vpack.c.b16 %v869, %v867
  %v1222 = vpack.c.b16 %v872, %v870
  %v1223 = vpack.c.b16 %v873, %v871
  %v1224 = vpack.c.b16 %v876, %v874
  %v1225 = vpack.c.b16 %v877, %v875
  %v1226 = vpack.c.b16 %v880, %v878
  %v1227 = vpack.c.b16 %v881, %v879
  %v1228 = vpack.c.b16 %v884, %v882
  %v1229 = vpack.c.b16 %v885, %v883
  %v1230 = vpack.c.b16 %v888, %v886
  %v1231 = vpack.c.b16 %v889, %v887
  %v1232 = vpack.c.b16 %v892, %v890
  %v1233 = vpack.c.b16 %v893, %v891
  %v1234 = vpack.c.b16 %v896, %v894
  %v1235 = vpack.c.b16 %v897, %v895
  %v1236 = vpack.c.b16 %v900, %v898
  %v1237 = vpack.c.b16 %v901, %v899
  %v1238 = vpack.c.b16 %v904, %v902
  %v1239 = vpack.c.b16 %v905, %v903
  %v1240 = vpack.c.b16 %v908, %v906
  %v1241 = vpack.c.b16 %v909, %v907
  %v1242 = vpack.c.b16 %v912, %v910
  %v1243 = vpack.c.b16 %v913, %v911
  %v1244 = vpack.c.b16 %v916, %v914
  %v1245 = vpack.c.b16 %v917, %v915
  %v1246 = vpack.c.b16 %v920, %v918
  %v1247 = vpack.c.b16 %v921, %v919
  %v1248 = vpack.c.b16 %v924, %v922
  %v1249 = vpack.c.b16 %v925, %v923
  %v1250 = vpack.c.b16 %v928, %v926
  %v1251 = vpack.c.b16 %v929, %v927
  %v1252 = vpack.c.b16 %v932, %v930
  %v1253 = vpack.c.b16 %v933, %v931
  %v1254 = vpack.c.b16 %v936, %v934
  %v1255 = vpack.c.b16 %v937, %v935
  %v1256 = vpack.c.b16 %v940, %v938
  %v1257 = vpack.c.b16 %v941, %v939
  %v1258 = vpack.c.b16 %v944, %v942
  %v1259 = vpack.c.b16 %v945, %v943
  %v1260 = vpack.c.b16 %v948, %v946
  %v1261 = vpack.c.b16 %v949, %v947
  %v1262 = vpack.c.b16 %v952, %v950
  %v1263 = vpack.c.b16 %v953, %v951
  %v1264 = vpack.c.b16 %v956, %v954
  %v1265 = vpack.c.b16 %v957, %v955
  %v1266 = vpack.c.b16 %v960, %v958
  %v1267 = vpack.c.b16 %v961, %v959
  %v1268 = vpack.c.b16 %v964, %v962
  %v1269 = vpack.c.b16 %v965, %v963
  %v1270 = vpack.c.b16 %v968, %v966
  %v1271 = vpack.c.b16 %v969, %v967
  %v1272 = vpack.c.b16 %v972, %v970
  %v1273 = vpack.c.b16 %v973, %v971
  %v1274 = vpack.c.b16 %v976, %v974
  %v1275 = vpack.c.b16 %v977, %v975
  %v1276 = vpack.c.b16 %v980, %v978
  %v1277 = vpack.c.b16 %v981, %v979
  %v1278 = vpack.c.b16 %v984, %v982
  %v1279 = vpack.c.b16 %v985, %v983
  %v1280 = vpack.c.b16 %v988, %v986
  %v1281 = vpack.c.b16 %v989, %v987
  %v1282 = vpack.c.b16 %v992, %v990
  %v1283 = vpack.c.b16 %v993, %v991
  %v1284 = vpack.c.b16 %v996, %v994
  %v1285 = vpack.c.b16 %v997, %v995
  %v1286 = vpack.c.b16 %v1000, %v998
  %v1287 = vpack.c.b16 %v1001, %v999
  %v1288 = vpack.c.b16 %v1004, %v1002
  %v1289 = vpack.c.b16 %v1005, %v1003
  %v1290 = vpack.c.b16 %v1008, %v1006
  %v1291 = vpack.c.b16 %v1009, %v1007
  %v1292 = vpack.c.b16 %v1012, %v1010
  %v1293 = vpack.c.b16 %v1013, %v1011
  %v1294 = vpack.c.b16 %v1016, %v1014
  %v1295 = vpack.c.b16 %v1017, %v1015
  %v1296 = vpack.c.b16 %v1020, %v1018
  %v1297 = vpack.c.b16 %v1021, %v1019
  %v1298 = vpack.c.b16 %v1024, %v1022
  %v1299 = vpack.c.b16 %v1025, %v1023
  %v1300 = vpack.c.b16 %v1028, %v1026
  %v1301 = vpack.c.b16 %v1029, %v1027
  %v1302 = vpack.c.b16 %v1032, %v1030
  %v1303 = vpack.c.b16 %v1033, %v1031
  %v1304 = vpack.c.b16 %v1036, %v1034
  %v1305 = vpack.c.b16 %v1037, %v1035
  %v1306 = vpack.c.b16 %v1040, %v1038
  %v1307 = vpack.c.b16 %v1041, %v1039
  %v1308 = vpack.c.b16 %v1044, %v1042
  %v1309 = vpack.c.b16 %v1045, %v1043
  %v1310 = vpack.c.b16 %v1048, %v1046
  %v1311 = vpack.c.b16 %v1049, %v1047
  %v1312 = vpack.c.b16 %v1052, %v1050
  %v1313 = vpack.c.b16 %v1053, %v1051
  %v1314 = vpack.c.b16 %v1056, %v1054
  %v1315 = vpack.c.b16 %v1057, %v1055
  %v1316 = vpack.c.b16 %v1060, %v1058
  %v1317 = vpack.c.b16 %v1061, %v1059
  %v1466 = vunpack.c.l.b16 %v274
  %v1467 = vunpack.c.l.b16 %v275
  %v1468 = vunpack.c.l.b16 %v276
  %v1469 = vunpack.c.l.b16 %v277
  %v1470 = vunpack.c.l.b16 %v278
  %v1471 = vunpack.c.l.b16 %v279
  %v1472 = vunpack.c.l.b16 %v280
  %v1473 = vunpack.c.l.b16 %v281
  %v1474 = vunpack.c.l.b16 %v282
  %v1475 = vunpack.c.l.b16 %v283
  %v1476 = vunpack.c.l.b16 %v284
  %v1477 = vunpack.c.l.b16 %v285
  %v1478 = vunpack.c.l.b16 %v286
  %v1479 = vunpack.c.l.b16 %v287
  %v1480 = vunpack.c.l.b16 %v288
  %v1481 = vunpack.c.l.b16 %v289
  %v1482 = vunpack.c.l.b16 %v290
  %v1483 = vunpack.c.l.b16 %v291
  %v1484 = vunpack.c.l.b16 %v292
  %v1485 = vunpack.c.l.b16 %v293
  %v1486 = vpack.c.b16 %v1467, %v1466
  %v1487 = vpack.c.b16 %v1469, %v1468
  %v1488 = vpack.c.b16 %v1471, %v1470
  %v1489 = vpack.c.b16 %v1473, %v1472
  %v1490 = vpack.c.b16 %v1475, %v1474
  %v1491 = vpack.c.b16 %v1477, %v1476
  %v1492 = vpack.c.b16 %v1479, %v1478
  %v1493 = vpack.c.b16 %v1481, %v1480
  %v1494 = vpack.c.b16 %v1483, %v1482
  %v1495 = vpack.c.b16 %v1485, %v1484
  %vm1506 = vcmask 261120
  %v1508 = vsel %vm1506, %v1063, 0
  %v1511 = vsel %vm1506, %v1065, 0
  %v1514 = vsel %vm1506, %v1067, 0
  %v1517 = vsel %vm1506, %v1069, 0
  %v1520 = vsel %vm1506, %v1071, 0
  %v1523 = vsel %vm1506, %v1073, 0
  %v1526 = vsel %vm1506, %v1075, 0
  %v1529 = vsel %vm1506, %v1077, 0
  %v1532 = vsel %vm1506, %v1079, 0
  %v1535 = vsel %vm1506, %v1081, 0
  %v1538 = vsel %vm1506, %v1083, 0
  %v1541 = vsel %vm1506, %v1085, 0
  %v1544 = vsel %vm1506, %v1087, 0
  %v1547 = vsel %vm1506, %v1089, 0
  %v1550 = vsel %vm1506, %v1091, 0
  %v1553 = vsel %vm1506, %v1093, 0
  %v1556 = vsel %vm1506, %v1095, 0
  %v1559 = vsel %vm1506, %v1097, 0
  %v1562 = vsel %vm1506, %v1099, 0
  %v1565 = vsel %vm1506, %v1101, 0
  %v1568 = vsel %vm1506, %v1103, 0
  %v1571 = vsel %vm1506, %v1105, 0
  %v1574 = vsel %vm1506, %v1107, 0
  %v1577 = vsel %vm1506, %v1109, 0
  %v1580 = vsel %vm1506, %v1111, 0
  %v1583 = vsel %vm1506, %v1113, 0
  %v1586 = vsel %vm1506, %v1115, 0
  %v1589 = vsel %vm1506, %v1117, 0
  %v1592 = vsel %vm1506, %v1119, 0
  %v1595 = vsel %vm1506, %v1121, 0
  %v1598 = vsel %vm1506, %v1123, 0
  %v1601 = vsel %vm1506, %v1125, 0
  %v1604 = vsel %vm1506, %v1127, 0
  %v1607 = vsel %vm1506, %v1129, 0
  %v1610 = vsel %vm1506, %v1131, 0
  %v1613 = vsel %vm1506, %v1133, 0
  %v1616 = vsel %vm1506, %v1135, 0
  %v1619 = vsel %vm1506, %v1137, 0
  %v1622 = vsel %vm1506, %v1139, 0
  %v1625 = vsel %vm1506, %v1141, 0
  %v1628 = vsel %vm1506, %v1143, 0
  %v1631 = vsel %vm1506, %v1145, 0
  %v1634 = vsel %vm1506, %v1147, 0
  %v1637 = vsel %vm1506, %v1149, 0
  %v1640 = vsel %vm1506, %v1151, 0
  %v1643 = vsel %vm1506, %v1153, 0
  %v1646 = vsel %vm1506, %v1155, 0
  %v1649 = vsel %vm1506, %v1157, 0
  %v1652 = vsel %vm1506, %v1159, 0
  %v1655 = vsel %vm1506, %v1161, 0
  %v1658 = vsel %vm1506, %v1163, 0
  %v1661 = vsel %vm1506, %v1165, 0
  %v1664 = vsel %vm1506, %v1167, 0
  %v1667 = vsel %vm1506, %v1169, 0
  %v1670 = vsel %vm1506, %v1171, 0
  %v1673 = vsel %vm1506, %v1173, 0
  %v1676 = vsel %vm1506, %v1175, 0
  %v1679 = vsel %vm1506, %v1177, 0
  %v1682 = vsel %vm1506, %v1179, 0
  %v1685 = vsel %vm1506, %v1181, 0
  %v1688 = vsel %vm1506, %v1183, 0
  %v1691 = vsel %vm1506, %v1185, 0
  %v1694 = vsel %vm1506, %v1187, 0
  %v1697 = vsel %vm1506, %v1189, 0
  %v1700 = vsel %vm1506, %v1191, 0
  %v1703 = vsel %vm1506, %v1193, 0
  %v1706 = vsel %vm1506, %v1195, 0
  %v1709 = vsel %vm1506, %v1197, 0
  %v1712 = vsel %vm1506, %v1199, 0
  %v1715 = vsel %vm1506, %v1201, 0
  %v1718 = vsel %vm1506, %v1203, 0
  %v1721 = vsel %vm1506, %v1205, 0
  %v1724 = vsel %vm1506, %v1207, 0
  %v1727 = vsel %vm1506, %v1209, 0
  %v1730 = vsel %vm1506, %v1211, 0
  %v1733 = vsel %vm1506, %v1213, 0
  %v1736 = vsel %vm1506, %v1215, 0
  %v1739 = vsel %vm1506, %v1217, 0
  %v1742 = vsel %vm1506, %v1219, 0
  %v1745 = vsel %vm1506, %v1221, 0
  %v1748 = vsel %vm1506, %v1223, 0
  %v1751 = vsel %vm1506, %v1225, 0
  %v1754 = vsel %vm1506, %v1227, 0
  %v1757 = vsel %vm1506, %v1229, 0
  %v1760 = vsel %vm1506, %v1231, 0
  %v1763 = vsel %vm1506, %v1233, 0
  %v1766 = vsel %vm1506, %v1235, 0
  %v1769 = vsel %vm1506, %v1237, 0
  %v1772 = vsel %vm1506, %v1239, 0
  %v1775 = vsel %vm1506, %v1241, 0
  %v1778 = vsel %vm1506, %v1243, 0
  %v1781 = vsel %vm1506, %v1245, 0
  %v1784 = vsel %vm1506, %v1247, 0
  %v1787 = vsel %vm1506, %v1249, 0
  %v1790 = vsel %vm1506, %v1251, 0
  %v1793 = vsel %vm1506, %v1253, 0
  %v1796 = vsel %vm1506, %v1255, 0
  %v1799 = vsel %vm1506, %v1257, 0
  %v1802 = vsel %vm1506, %v1259, 0
  %v1805 = vsel %vm1506, %v1261, 0
  %v1808 = vsel %vm1506, %v1263, 0
  %v1811 = vsel %vm1506, %v1265, 0
  %v1814 = vsel %vm1506, %v1267, 0
  %v1817 = vsel %vm1506, %v1269, 0
  %v1820 = vsel %vm1506, %v1271, 0
  %v1823 = vsel %vm1506, %v1273, 0
  %v1826 = vsel %vm1506, %v1275, 0
  %v1829 = vsel %vm1506, %v1277, 0
  %v1832 = vsel %vm1506, %v1279, 0
  %v1835 = vsel %vm1506, %v1281, 0
  %v1838 = vsel %vm1506, %v1283, 0
  %v1841 = vsel %vm1506, %v1285, 0
  %v1844 = vsel %vm1506, %v1287, 0
  %v1847 = vsel %vm1506, %v1289, 0
  %v1850 = vsel %vm1506, %v1291, 0
  %v1853 = vsel %vm1506, %v1293, 0
  %v1856 = vsel %vm1506, %v1295, 0
  %v1859 = vsel %vm1506, %v1297, 0
  %v1862 = vsel %vm1506, %v1299, 0
  %v1865 = vsel %vm1506, %v1301, 0
  %v1868 = vsel %vm1506, %v1303, 0
  %v1871 = vsel %vm1506, %v1305, 0
  %v1874 = vsel %vm1506, %v1307, 0
  %v1877 = vsel %vm1506, %v1309, 0
  %v1880 = vsel %vm1506, %v1311, 0
  %v1883 = vsel %vm1506, %v1313, 0
  %v1886 = vsel %vm1506, %v1315, 0
  %v1889 = vsel %vm1506, %v1317, 0
  %1891 = vmatprep.subr.bf16.mxu0 0
  %1892 = vmatpush1.bf16.msra.mxu0 %v1493
  %1893 = vmatprep.subr.bf16.mxu0 0
  %1894 = vmatpush1.bf16.msra.mxu0 %v1492
  %1895 = vmatprep.subr.bf16.mxu0 0
  %1896 = vmatpush1.bf16.msra.mxu0 %v1491
  %1897 = vmatprep.subr.bf16.mxu0 0
  %1898 = vmatpush1.bf16.msra.mxu0 %v1490
  %1899 = vmatprep.subr.bf16.mxu0 0
  %1900 = vmatpush1.bf16.msra.mxu0 %v1489
  %1901 = vmatprep.subr.bf16.mxu0 0
  %1902 = vmatpush1.bf16.msra.mxu0 %v1488
  %1903 = vmatprep.subr.bf16.mxu0 0
  %1904 = vmatpush1.bf16.msra.mxu0 %v1487
  %1905 = vmatprep.subr.bf16.mxu0 0
  %1906 = vmatpush1.bf16.msra.mxu0 %v1486
  %1907 = vmatprep.subr.bf16.mxu0 0
  %1908 = vmatpush2.bf16.msra.mxu0 0
  %1909 = vmatprep.subr.bf16.mxu0 0
  %1910 = vmatpush2.bf16.msra.mxu0 0
  %1911 = vmatprep.subr.bf16.mxu0 0
  %1912 = vmatpush2.bf16.msra.mxu0 0
  %1913 = vmatprep.subr.bf16.mxu0 0
  %1914 = vmatpush2.bf16.msra.mxu0 0
  %1915 = vmatprep.subr.bf16.mxu0 0
  %1916 = vmatpush2.bf16.msra.mxu0 0
  %1917 = vmatprep.subr.bf16.mxu0 0
  %1918 = vmatpush2.bf16.msra.mxu0 0
  %1919 = vmatprep.subr.bf16.mxu0 0
  %1920 = vmatpush2.bf16.msra.mxu0 %v1495
  %1921 = vmatprep.subr.bf16.mxu0 0
  %1922 = vmatpush2.bf16.msra.mxu0 %v1494
  %1923 = vmatprep.mubr.bf16.mxu0 %v1508
  %1924 = vmatmul.mubr.bf16.gmra.mxu0 %v1062
  %v1925 = vpop.f32.mrf.mxu0
  %v1926 = vadd.f32 0.0, %v1925
  %v1927 = vpop.f32.mrf.mxu0
  %v1928 = vpop.f32.mrf.mxu0
  %v1929 = vadd.f32 0.0, %v1928
  %v1930 = vpop.f32.mrf.mxu0
  %1931 = vmatprep.mubr.bf16.mxu0 %v1511
  %1932 = vmatmul.mubr.bf16.gmra.mxu0 %v1064
  %v1933 = vpop.f32.mrf.mxu0
  %v1934 = vadd.f32 0.0, %v1933
  %v1935 = vpop.f32.mrf.mxu0
  %v1936 = vpop.f32.mrf.mxu0
  %v1937 = vadd.f32 0.0, %v1936
  %v1938 = vpop.f32.mrf.mxu0
  %1939 = vmatprep.mubr.bf16.mxu0 %v1514
  %1940 = vmatmul.mubr.bf16.gmra.mxu0 %v1066
  %v1941 = vpop.f32.mrf.mxu0
  %v1942 = vadd.f32 0.0, %v1941
  %v1943 = vpop.f32.mrf.mxu0
  %v1944 = vpop.f32.mrf.mxu0
  %v1945 = vadd.f32 0.0, %v1944
  %v1946 = vpop.f32.mrf.mxu0
  %1947 = vmatprep.mubr.bf16.mxu0 %v1517
  %1948 = vmatmul.mubr.bf16.gmra.mxu0 %v1068
  %v1949 = vpop.f32.mrf.mxu0
  %v1950 = vadd.f32 0.0, %v1949
  %v1951 = vpop.f32.mrf.mxu0
  %v1952 = vpop.f32.mrf.mxu0
  %v1953 = vadd.f32 0.0, %v1952
  %v1954 = vpop.f32.mrf.mxu0
  %1955 = vmatprep.mubr.bf16.mxu0 %v1520
  %1956 = vmatmul.mubr.bf16.gmra.mxu0 %v1070
  %v1957 = vpop.f32.mrf.mxu0
  %v1958 = vadd.f32 0.0, %v1957
  %v1959 = vpop.f32.mrf.mxu0
  %v1960 = vpop.f32.mrf.mxu0
  %v1961 = vadd.f32 0.0, %v1960
  %v1962 = vpop.f32.mrf.mxu0
  %1963 = vmatprep.mubr.bf16.mxu0 %v1523
  %1964 = vmatmul.mubr.bf16.gmra.mxu0 %v1072
  %v1965 = vpop.f32.mrf.mxu0
  %v1966 = vadd.f32 0.0, %v1965
  %v1967 = vpop.f32.mrf.mxu0
  %v1968 = vpop.f32.mrf.mxu0
  %v1969 = vadd.f32 0.0, %v1968
  %v1970 = vpop.f32.mrf.mxu0
  %1971 = vmatprep.mubr.bf16.mxu0 %v1526
  %1972 = vmatmul.mubr.bf16.gmra.mxu0 %v1074
  %v1973 = vpop.f32.mrf.mxu0
  %v1974 = vadd.f32 0.0, %v1973
  %v1975 = vpop.f32.mrf.mxu0
  %v1976 = vpop.f32.mrf.mxu0
  %v1977 = vadd.f32 0.0, %v1976
  %v1978 = vpop.f32.mrf.mxu0
  %1979 = vmatprep.mubr.bf16.mxu0 %v1529
  %1980 = vmatmul.mubr.bf16.gmra.mxu0 %v1076
  %v1981 = vpop.f32.mrf.mxu0
  %v1982 = vadd.f32 0.0, %v1981
  %v1983 = vpop.f32.mrf.mxu0
  %v1984 = vpop.f32.mrf.mxu0
  %v1985 = vadd.f32 0.0, %v1984
  %v1986 = vpop.f32.mrf.mxu0
  %1987 = vmatprep.mubr.bf16.mxu0 %v1532
  %1988 = vmatmul.mubr.bf16.gmra.mxu0 %v1078
  %v1989 = vpop.f32.mrf.mxu0
  %v1990 = vadd.f32 0.0, %v1989
  %v1991 = vpop.f32.mrf.mxu0
  %v1992 = vpop.f32.mrf.mxu0
  %v1993 = vadd.f32 0.0, %v1992
  %v1994 = vpop.f32.mrf.mxu0
  %1995 = vmatprep.mubr.bf16.mxu0 %v1535
  %1996 = vmatmul.mubr.bf16.gmra.mxu0 %v1080
  %v1997 = vpop.f32.mrf.mxu0
  %v1998 = vadd.f32 0.0, %v1997
  %v1999 = vpop.f32.mrf.mxu0
  %v2000 = vpop.f32.mrf.mxu0
  %v2001 = vadd.f32 0.0, %v2000
  %v2002 = vpop.f32.mrf.mxu0
  %2003 = vmatprep.mubr.bf16.mxu0 %v1538
  %2004 = vmatmul.mubr.bf16.gmra.mxu0 %v1082
  %v2005 = vpop.f32.mrf.mxu0
  %v2006 = vadd.f32 0.0, %v2005
  %v2007 = vpop.f32.mrf.mxu0
  %v2008 = vpop.f32.mrf.mxu0
  %v2009 = vadd.f32 0.0, %v2008
  %v2010 = vpop.f32.mrf.mxu0
  %2011 = vmatprep.mubr.bf16.mxu0 %v1541
  %2012 = vmatmul.mubr.bf16.gmra.mxu0 %v1084
  %v2013 = vpop.f32.mrf.mxu0
  %v2014 = vadd.f32 0.0, %v2013
  %v2015 = vpop.f32.mrf.mxu0
  %v2016 = vpop.f32.mrf.mxu0
  %v2017 = vadd.f32 0.0, %v2016
  %v2018 = vpop.f32.mrf.mxu0
  %2019 = vmatprep.mubr.bf16.mxu0 %v1544
  %2020 = vmatmul.mubr.bf16.gmra.mxu0 %v1086
  %v2021 = vpop.f32.mrf.mxu0
  %v2022 = vadd.f32 0.0, %v2021
  %v2023 = vpop.f32.mrf.mxu0
  %v2024 = vpop.f32.mrf.mxu0
  %v2025 = vadd.f32 0.0, %v2024
  %v2026 = vpop.f32.mrf.mxu0
  %2027 = vmatprep.mubr.bf16.mxu0 %v1547
  %2028 = vmatmul.mubr.bf16.gmra.mxu0 %v1088
  %v2029 = vpop.f32.mrf.mxu0
  %v2030 = vadd.f32 0.0, %v2029
  %v2031 = vpop.f32.mrf.mxu0
  %v2032 = vpop.f32.mrf.mxu0
  %v2033 = vadd.f32 0.0, %v2032
  %v2034 = vpop.f32.mrf.mxu0
  %2035 = vmatprep.mubr.bf16.mxu0 %v1550
  %2036 = vmatmul.mubr.bf16.gmra.mxu0 %v1090
  %v2037 = vpop.f32.mrf.mxu0
  %v2038 = vadd.f32 0.0, %v2037
  %v2039 = vpop.f32.mrf.mxu0
  %v2040 = vpop.f32.mrf.mxu0
  %v2041 = vadd.f32 0.0, %v2040
  %v2042 = vpop.f32.mrf.mxu0
  %2043 = vmatprep.mubr.bf16.mxu0 %v1553
  %2044 = vmatmul.mubr.bf16.gmra.mxu0 %v1092
  %v2045 = vpop.f32.mrf.mxu0
  %v2046 = vadd.f32 0.0, %v2045
  %v2047 = vpop.f32.mrf.mxu0
  %v2048 = vpop.f32.mrf.mxu0
  %v2049 = vadd.f32 0.0, %v2048
  %v2050 = vpop.f32.mrf.mxu0
  %2051 = vmatprep.mubr.bf16.mxu0 %v1556
  %2052 = vmatmul.mubr.bf16.gmra.mxu0 %v1094
  %v2053 = vpop.f32.mrf.mxu0
  %v2054 = vadd.f32 0.0, %v2053
  %v2055 = vpop.f32.mrf.mxu0
  %v2056 = vpop.f32.mrf.mxu0
  %v2057 = vadd.f32 0.0, %v2056
  %v2058 = vpop.f32.mrf.mxu0
  %2059 = vmatprep.mubr.bf16.mxu0 %v1559
  %2060 = vmatmul.mubr.bf16.gmra.mxu0 %v1096
  %v2061 = vpop.f32.mrf.mxu0
  %v2062 = vadd.f32 0.0, %v2061
  %v2063 = vpop.f32.mrf.mxu0
  %v2064 = vpop.f32.mrf.mxu0
  %v2065 = vadd.f32 0.0, %v2064
  %v2066 = vpop.f32.mrf.mxu0
  %2067 = vmatprep.mubr.bf16.mxu0 %v1562
  %2068 = vmatmul.mubr.bf16.gmra.mxu0 %v1098
  %v2069 = vpop.f32.mrf.mxu0
  %v2070 = vadd.f32 0.0, %v2069
  %v2071 = vpop.f32.mrf.mxu0
  %v2072 = vpop.f32.mrf.mxu0
  %v2073 = vadd.f32 0.0, %v2072
  %v2074 = vpop.f32.mrf.mxu0
  %2075 = vmatprep.mubr.bf16.mxu0 %v1565
  %2076 = vmatmul.mubr.bf16.gmra.mxu0 %v1100
  %v2077 = vpop.f32.mrf.mxu0
  %v2078 = vadd.f32 0.0, %v2077
  %v2079 = vpop.f32.mrf.mxu0
  %v2080 = vpop.f32.mrf.mxu0
  %v2081 = vadd.f32 0.0, %v2080
  %v2082 = vpop.f32.mrf.mxu0
  %2083 = vmatprep.mubr.bf16.mxu0 %v1568
  %2084 = vmatmul.mubr.bf16.gmra.mxu0 %v1102
  %v2085 = vpop.f32.mrf.mxu0
  %v2086 = vadd.f32 0.0, %v2085
  %v2087 = vpop.f32.mrf.mxu0
  %v2088 = vpop.f32.mrf.mxu0
  %v2089 = vadd.f32 0.0, %v2088
  %v2090 = vpop.f32.mrf.mxu0
  %2091 = vmatprep.mubr.bf16.mxu0 %v1571
  %2092 = vmatmul.mubr.bf16.gmra.mxu0 %v1104
  %v2093 = vpop.f32.mrf.mxu0
  %v2094 = vadd.f32 0.0, %v2093
  %v2095 = vpop.f32.mrf.mxu0
  %v2096 = vpop.f32.mrf.mxu0
  %v2097 = vadd.f32 0.0, %v2096
  %v2098 = vpop.f32.mrf.mxu0
  %2099 = vmatprep.mubr.bf16.mxu0 %v1574
  %2100 = vmatmul.mubr.bf16.gmra.mxu0 %v1106
  %v2101 = vpop.f32.mrf.mxu0
  %v2102 = vadd.f32 0.0, %v2101
  %v2103 = vpop.f32.mrf.mxu0
  %v2104 = vpop.f32.mrf.mxu0
  %v2105 = vadd.f32 0.0, %v2104
  %v2106 = vpop.f32.mrf.mxu0
  %2107 = vmatprep.mubr.bf16.mxu0 %v1577
  %2108 = vmatmul.mubr.bf16.gmra.mxu0 %v1108
  %v2109 = vpop.f32.mrf.mxu0
  %v2110 = vadd.f32 0.0, %v2109
  %v2111 = vpop.f32.mrf.mxu0
  %v2112 = vpop.f32.mrf.mxu0
  %v2113 = vadd.f32 0.0, %v2112
  %v2114 = vpop.f32.mrf.mxu0
  %2115 = vmatprep.mubr.bf16.mxu0 %v1580
  %2116 = vmatmul.mubr.bf16.gmra.mxu0 %v1110
  %v2117 = vpop.f32.mrf.mxu0
  %v2118 = vadd.f32 0.0, %v2117
  %v2119 = vpop.f32.mrf.mxu0
  %v2120 = vpop.f32.mrf.mxu0
  %v2121 = vadd.f32 0.0, %v2120
  %v2122 = vpop.f32.mrf.mxu0
  %2123 = vmatprep.mubr.bf16.mxu0 %v1583
  %2124 = vmatmul.mubr.bf16.gmra.mxu0 %v1112
  %v2125 = vpop.f32.mrf.mxu0
  %v2126 = vadd.f32 0.0, %v2125
  %v2127 = vpop.f32.mrf.mxu0
  %v2128 = vpop.f32.mrf.mxu0
  %v2129 = vadd.f32 0.0, %v2128
  %v2130 = vpop.f32.mrf.mxu0
  %2131 = vmatprep.mubr.bf16.mxu0 %v1586
  %2132 = vmatmul.mubr.bf16.gmra.mxu0 %v1114
  %v2133 = vpop.f32.mrf.mxu0
  %v2134 = vadd.f32 0.0, %v2133
  %v2135 = vpop.f32.mrf.mxu0
  %v2136 = vpop.f32.mrf.mxu0
  %v2137 = vadd.f32 0.0, %v2136
  %v2138 = vpop.f32.mrf.mxu0
  %2139 = vmatprep.mubr.bf16.mxu0 %v1589
  %2140 = vmatmul.mubr.bf16.gmra.mxu0 %v1116
  %v2141 = vpop.f32.mrf.mxu0
  %v2142 = vadd.f32 0.0, %v2141
  %v2143 = vpop.f32.mrf.mxu0
  %v2144 = vpop.f32.mrf.mxu0
  %v2145 = vadd.f32 0.0, %v2144
  %v2146 = vpop.f32.mrf.mxu0
  %2147 = vmatprep.mubr.bf16.mxu0 %v1592
  %2148 = vmatmul.mubr.bf16.gmra.mxu0 %v1118
  %v2149 = vpop.f32.mrf.mxu0
  %v2150 = vadd.f32 0.0, %v2149
  %v2151 = vpop.f32.mrf.mxu0
  %v2152 = vpop.f32.mrf.mxu0
  %v2153 = vadd.f32 0.0, %v2152
  %v2154 = vpop.f32.mrf.mxu0
  %2155 = vmatprep.mubr.bf16.mxu0 %v1595
  %2156 = vmatmul.mubr.bf16.gmra.mxu0 %v1120
  %v2157 = vpop.f32.mrf.mxu0
  %v2158 = vadd.f32 0.0, %v2157
  %v2159 = vpop.f32.mrf.mxu0
  %v2160 = vpop.f32.mrf.mxu0
  %v2161 = vadd.f32 0.0, %v2160
  %v2162 = vpop.f32.mrf.mxu0
  %2163 = vmatprep.mubr.bf16.mxu0 %v1598
  %2164 = vmatmul.mubr.bf16.gmra.mxu0 %v1122
  %v2165 = vpop.f32.mrf.mxu0
  %v2166 = vadd.f32 0.0, %v2165
  %v2167 = vpop.f32.mrf.mxu0
  %v2168 = vpop.f32.mrf.mxu0
  %v2169 = vadd.f32 0.0, %v2168
  %v2170 = vpop.f32.mrf.mxu0
  %2171 = vmatprep.mubr.bf16.mxu0 %v1601
  %2172 = vmatmul.mubr.bf16.gmra.mxu0 %v1124
  %v2173 = vpop.f32.mrf.mxu0
  %v2174 = vadd.f32 0.0, %v2173
  %v2175 = vpop.f32.mrf.mxu0
  %v2176 = vpop.f32.mrf.mxu0
  %v2177 = vadd.f32 0.0, %v2176
  %v2178 = vpop.f32.mrf.mxu0
  %2179 = vmatprep.mubr.bf16.mxu0 %v1604
  %2180 = vmatmul.mubr.bf16.gmra.mxu0 %v1126
  %v2181 = vpop.f32.mrf.mxu0
  %v2182 = vadd.f32 0.0, %v2181
  %v2183 = vpop.f32.mrf.mxu0
  %v2184 = vpop.f32.mrf.mxu0
  %v2185 = vadd.f32 0.0, %v2184
  %v2186 = vpop.f32.mrf.mxu0
  %2187 = vmatprep.mubr.bf16.mxu0 %v1607
  %2188 = vmatmul.mubr.bf16.gmra.mxu0 %v1128
  %v2189 = vpop.f32.mrf.mxu0
  %v2190 = vadd.f32 0.0, %v2189
  %v2191 = vpop.f32.mrf.mxu0
  %v2192 = vpop.f32.mrf.mxu0
  %v2193 = vadd.f32 0.0, %v2192
  %v2194 = vpop.f32.mrf.mxu0
  %2195 = vmatprep.mubr.bf16.mxu0 %v1610
  %2196 = vmatmul.mubr.bf16.gmra.mxu0 %v1130
  %v2197 = vpop.f32.mrf.mxu0
  %v2198 = vadd.f32 0.0, %v2197
  %v2199 = vpop.f32.mrf.mxu0
  %v2200 = vpop.f32.mrf.mxu0
  %v2201 = vadd.f32 0.0, %v2200
  %v2202 = vpop.f32.mrf.mxu0
  %2203 = vmatprep.mubr.bf16.mxu0 %v1613
  %2204 = vmatmul.mubr.bf16.gmra.mxu0 %v1132
  %v2205 = vpop.f32.mrf.mxu0
  %v2206 = vadd.f32 0.0, %v2205
  %v2207 = vpop.f32.mrf.mxu0
  %v2208 = vpop.f32.mrf.mxu0
  %v2209 = vadd.f32 0.0, %v2208
  %v2210 = vpop.f32.mrf.mxu0
  %2211 = vmatprep.mubr.bf16.mxu0 %v1616
  %2212 = vmatmul.mubr.bf16.gmra.mxu0 %v1134
  %v2213 = vpop.f32.mrf.mxu0
  %v2214 = vadd.f32 0.0, %v2213
  %v2215 = vpop.f32.mrf.mxu0
  %v2216 = vpop.f32.mrf.mxu0
  %v2217 = vadd.f32 0.0, %v2216
  %v2218 = vpop.f32.mrf.mxu0
  %2219 = vmatprep.mubr.bf16.mxu0 %v1619
  %2220 = vmatmul.mubr.bf16.gmra.mxu0 %v1136
  %v2221 = vpop.f32.mrf.mxu0
  %v2222 = vadd.f32 0.0, %v2221
  %v2223 = vpop.f32.mrf.mxu0
  %v2224 = vpop.f32.mrf.mxu0
  %v2225 = vadd.f32 0.0, %v2224
  %v2226 = vpop.f32.mrf.mxu0
  %2227 = vmatprep.mubr.bf16.mxu0 %v1622
  %2228 = vmatmul.mubr.bf16.gmra.mxu0 %v1138
  %v2229 = vpop.f32.mrf.mxu0
  %v2230 = vadd.f32 0.0, %v2229
  %v2231 = vpop.f32.mrf.mxu0
  %v2232 = vpop.f32.mrf.mxu0
  %v2233 = vadd.f32 0.0, %v2232
  %v2234 = vpop.f32.mrf.mxu0
  %2235 = vmatprep.mubr.bf16.mxu0 %v1625
  %2236 = vmatmul.mubr.bf16.gmra.mxu0 %v1140
  %v2237 = vpop.f32.mrf.mxu0
  %v2238 = vadd.f32 0.0, %v2237
  %v2239 = vpop.f32.mrf.mxu0
  %v2240 = vpop.f32.mrf.mxu0
  %v2241 = vadd.f32 0.0, %v2240
  %v2242 = vpop.f32.mrf.mxu0
  %2243 = vmatprep.mubr.bf16.mxu0 %v1628
  %2244 = vmatmul.mubr.bf16.gmra.mxu0 %v1142
  %v2245 = vpop.f32.mrf.mxu0
  %v2246 = vadd.f32 0.0, %v2245
  %v2247 = vpop.f32.mrf.mxu0
  %v2248 = vpop.f32.mrf.mxu0
  %v2249 = vadd.f32 0.0, %v2248
  %v2250 = vpop.f32.mrf.mxu0
  %2251 = vmatprep.mubr.bf16.mxu0 %v1631
  %2252 = vmatmul.mubr.bf16.gmra.mxu0 %v1144
  %v2253 = vpop.f32.mrf.mxu0
  %v2254 = vadd.f32 0.0, %v2253
  %v2255 = vpop.f32.mrf.mxu0
  %v2256 = vpop.f32.mrf.mxu0
  %v2257 = vadd.f32 0.0, %v2256
  %v2258 = vpop.f32.mrf.mxu0
  %2259 = vmatprep.mubr.bf16.mxu0 %v1634
  %2260 = vmatmul.mubr.bf16.gmra.mxu0 %v1146
  %v2261 = vpop.f32.mrf.mxu0
  %v2262 = vadd.f32 0.0, %v2261
  %v2263 = vpop.f32.mrf.mxu0
  %v2264 = vpop.f32.mrf.mxu0
  %v2265 = vadd.f32 0.0, %v2264
  %v2266 = vpop.f32.mrf.mxu0
  %2267 = vmatprep.mubr.bf16.mxu0 %v1637
  %2268 = vmatmul.mubr.bf16.gmra.mxu0 %v1148
  %v2269 = vpop.f32.mrf.mxu0
  %v2270 = vadd.f32 0.0, %v2269
  %v2271 = vpop.f32.mrf.mxu0
  %v2272 = vpop.f32.mrf.mxu0
  %v2273 = vadd.f32 0.0, %v2272
  %v2274 = vpop.f32.mrf.mxu0
  %2275 = vmatprep.mubr.bf16.mxu0 %v1640
  %2276 = vmatmul.mubr.bf16.gmra.mxu0 %v1150
  %v2277 = vpop.f32.mrf.mxu0
  %v2278 = vadd.f32 0.0, %v2277
  %v2279 = vpop.f32.mrf.mxu0
  %v2280 = vpop.f32.mrf.mxu0
  %v2281 = vadd.f32 0.0, %v2280
  %v2282 = vpop.f32.mrf.mxu0
  %2283 = vmatprep.mubr.bf16.mxu0 %v1643
  %2284 = vmatmul.mubr.bf16.gmra.mxu0 %v1152
  %v2285 = vpop.f32.mrf.mxu0
  %v2286 = vadd.f32 0.0, %v2285
  %v2287 = vpop.f32.mrf.mxu0
  %v2288 = vpop.f32.mrf.mxu0
  %v2289 = vadd.f32 0.0, %v2288
  %v2290 = vpop.f32.mrf.mxu0
  %2291 = vmatprep.mubr.bf16.mxu0 %v1646
  %2292 = vmatmul.mubr.bf16.gmra.mxu0 %v1154
  %v2293 = vpop.f32.mrf.mxu0
  %v2294 = vadd.f32 0.0, %v2293
  %v2295 = vpop.f32.mrf.mxu0
  %v2296 = vpop.f32.mrf.mxu0
  %v2297 = vadd.f32 0.0, %v2296
  %v2298 = vpop.f32.mrf.mxu0
  %2299 = vmatprep.mubr.bf16.mxu0 %v1649
  %2300 = vmatmul.mubr.bf16.gmra.mxu0 %v1156
  %v2301 = vpop.f32.mrf.mxu0
  %v2302 = vadd.f32 0.0, %v2301
  %v2303 = vpop.f32.mrf.mxu0
  %v2304 = vpop.f32.mrf.mxu0
  %v2305 = vadd.f32 0.0, %v2304
  %v2306 = vpop.f32.mrf.mxu0
  %2307 = vmatprep.mubr.bf16.mxu0 %v1652
  %2308 = vmatmul.mubr.bf16.gmra.mxu0 %v1158
  %v2309 = vpop.f32.mrf.mxu0
  %v2310 = vadd.f32 0.0, %v2309
  %v2311 = vpop.f32.mrf.mxu0
  %v2312 = vpop.f32.mrf.mxu0
  %v2313 = vadd.f32 0.0, %v2312
  %v2314 = vpop.f32.mrf.mxu0
  %2315 = vmatprep.mubr.bf16.mxu0 %v1655
  %2316 = vmatmul.mubr.bf16.gmra.mxu0 %v1160
  %v2317 = vpop.f32.mrf.mxu0
  %v2318 = vadd.f32 0.0, %v2317
  %v2319 = vpop.f32.mrf.mxu0
  %v2320 = vpop.f32.mrf.mxu0
  %v2321 = vadd.f32 0.0, %v2320
  %v2322 = vpop.f32.mrf.mxu0
  %2323 = vmatprep.mubr.bf16.mxu0 %v1658
  %2324 = vmatmul.mubr.bf16.gmra.mxu0 %v1162
  %v2325 = vpop.f32.mrf.mxu0
  %v2326 = vadd.f32 0.0, %v2325
  %v2327 = vpop.f32.mrf.mxu0
  %v2328 = vpop.f32.mrf.mxu0
  %v2329 = vadd.f32 0.0, %v2328
  %v2330 = vpop.f32.mrf.mxu0
  %2331 = vmatprep.mubr.bf16.mxu0 %v1661
  %2332 = vmatmul.mubr.bf16.gmra.mxu0 %v1164
  %v2333 = vpop.f32.mrf.mxu0
  %v2334 = vadd.f32 0.0, %v2333
  %v2335 = vpop.f32.mrf.mxu0
  %v2336 = vpop.f32.mrf.mxu0
  %v2337 = vadd.f32 0.0, %v2336
  %v2338 = vpop.f32.mrf.mxu0
  %2339 = vmatprep.mubr.bf16.mxu0 %v1664
  %2340 = vmatmul.mubr.bf16.gmra.mxu0 %v1166
  %v2341 = vpop.f32.mrf.mxu0
  %v2342 = vadd.f32 0.0, %v2341
  %v2343 = vpop.f32.mrf.mxu0
  %v2344 = vpop.f32.mrf.mxu0
  %v2345 = vadd.f32 0.0, %v2344
  %v2346 = vpop.f32.mrf.mxu0
  %2347 = vmatprep.mubr.bf16.mxu0 %v1667
  %2348 = vmatmul.mubr.bf16.gmra.mxu0 %v1168
  %v2349 = vpop.f32.mrf.mxu0
  %v2350 = vadd.f32 0.0, %v2349
  %v2351 = vpop.f32.mrf.mxu0
  %v2352 = vpop.f32.mrf.mxu0
  %v2353 = vadd.f32 0.0, %v2352
  %v2354 = vpop.f32.mrf.mxu0
  %2355 = vmatprep.mubr.bf16.mxu0 %v1670
  %2356 = vmatmul.mubr.bf16.gmra.mxu0 %v1170
  %v2357 = vpop.f32.mrf.mxu0
  %v2358 = vadd.f32 0.0, %v2357
  %v2359 = vpop.f32.mrf.mxu0
  %v2360 = vpop.f32.mrf.mxu0
  %v2361 = vadd.f32 0.0, %v2360
  %v2362 = vpop.f32.mrf.mxu0
  %2363 = vmatprep.mubr.bf16.mxu0 %v1673
  %2364 = vmatmul.mubr.bf16.gmra.mxu0 %v1172
  %v2365 = vpop.f32.mrf.mxu0
  %v2366 = vadd.f32 0.0, %v2365
  %v2367 = vpop.f32.mrf.mxu0
  %v2368 = vpop.f32.mrf.mxu0
  %v2369 = vadd.f32 0.0, %v2368
  %v2370 = vpop.f32.mrf.mxu0
  %2371 = vmatprep.mubr.bf16.mxu0 %v1676
  %2372 = vmatmul.mubr.bf16.gmra.mxu0 %v1174
  %v2373 = vpop.f32.mrf.mxu0
  %v2374 = vadd.f32 0.0, %v2373
  %v2375 = vpop.f32.mrf.mxu0
  %v2376 = vpop.f32.mrf.mxu0
  %v2377 = vadd.f32 0.0, %v2376
  %v2378 = vpop.f32.mrf.mxu0
  %2379 = vmatprep.mubr.bf16.mxu0 %v1679
  %2380 = vmatmul.mubr.bf16.gmra.mxu0 %v1176
  %v2381 = vpop.f32.mrf.mxu0
  %v2382 = vadd.f32 0.0, %v2381
  %v2383 = vpop.f32.mrf.mxu0
  %v2384 = vpop.f32.mrf.mxu0
  %v2385 = vadd.f32 0.0, %v2384
  %v2386 = vpop.f32.mrf.mxu0
  %2387 = vmatprep.mubr.bf16.mxu0 %v1682
  %2388 = vmatmul.mubr.bf16.gmra.mxu0 %v1178
  %v2389 = vpop.f32.mrf.mxu0
  %v2390 = vadd.f32 0.0, %v2389
  %v2391 = vpop.f32.mrf.mxu0
  %v2392 = vpop.f32.mrf.mxu0
  %v2393 = vadd.f32 0.0, %v2392
  %v2394 = vpop.f32.mrf.mxu0
  %2395 = vmatprep.mubr.bf16.mxu0 %v1685
  %2396 = vmatmul.mubr.bf16.gmra.mxu0 %v1180
  %v2397 = vpop.f32.mrf.mxu0
  %v2398 = vadd.f32 0.0, %v2397
  %v2399 = vpop.f32.mrf.mxu0
  %v2400 = vpop.f32.mrf.mxu0
  %v2401 = vadd.f32 0.0, %v2400
  %v2402 = vpop.f32.mrf.mxu0
  %2403 = vmatprep.mubr.bf16.mxu0 %v1688
  %2404 = vmatmul.mubr.bf16.gmra.mxu0 %v1182
  %v2405 = vpop.f32.mrf.mxu0
  %v2406 = vadd.f32 0.0, %v2405
  %v2407 = vpop.f32.mrf.mxu0
  %v2408 = vpop.f32.mrf.mxu0
  %v2409 = vadd.f32 0.0, %v2408
  %v2410 = vpop.f32.mrf.mxu0
  %2411 = vmatprep.mubr.bf16.mxu0 %v1691
  %2412 = vmatmul.mubr.bf16.gmra.mxu0 %v1184
  %v2413 = vpop.f32.mrf.mxu0
  %v2414 = vadd.f32 0.0, %v2413
  %v2415 = vpop.f32.mrf.mxu0
  %v2416 = vpop.f32.mrf.mxu0
  %v2417 = vadd.f32 0.0, %v2416
  %v2418 = vpop.f32.mrf.mxu0
  %2419 = vmatprep.mubr.bf16.mxu0 %v1694
  %2420 = vmatmul.mubr.bf16.gmra.mxu0 %v1186
  %v2421 = vpop.f32.mrf.mxu0
  %v2422 = vadd.f32 0.0, %v2421
  %v2423 = vpop.f32.mrf.mxu0
  %v2424 = vpop.f32.mrf.mxu0
  %v2425 = vadd.f32 0.0, %v2424
  %v2426 = vpop.f32.mrf.mxu0
  %2427 = vmatprep.mubr.bf16.mxu0 %v1697
  %2428 = vmatmul.mubr.bf16.gmra.mxu0 %v1188
  %v2429 = vpop.f32.mrf.mxu0
  %v2430 = vadd.f32 0.0, %v2429
  %v2431 = vpop.f32.mrf.mxu0
  %v2432 = vpop.f32.mrf.mxu0
  %v2433 = vadd.f32 0.0, %v2432
  %v2434 = vpop.f32.mrf.mxu0
  %2435 = vmatprep.mubr.bf16.mxu0 %v1700
  %2436 = vmatmul.mubr.bf16.gmra.mxu0 %v1190
  %v2437 = vpop.f32.mrf.mxu0
  %v2438 = vadd.f32 0.0, %v2437
  %v2439 = vpop.f32.mrf.mxu0
  %v2440 = vpop.f32.mrf.mxu0
  %v2441 = vadd.f32 0.0, %v2440
  %v2442 = vpop.f32.mrf.mxu0
  %2443 = vmatprep.mubr.bf16.mxu0 %v1703
  %2444 = vmatmul.mubr.bf16.gmra.mxu0 %v1192
  %v2445 = vpop.f32.mrf.mxu0
  %v2446 = vadd.f32 0.0, %v2445
  %v2447 = vpop.f32.mrf.mxu0
  %v2448 = vpop.f32.mrf.mxu0
  %v2449 = vadd.f32 0.0, %v2448
  %v2450 = vpop.f32.mrf.mxu0
  %2451 = vmatprep.mubr.bf16.mxu0 %v1706
  %2452 = vmatmul.mubr.bf16.gmra.mxu0 %v1194
  %v2453 = vpop.f32.mrf.mxu0
  %v2454 = vadd.f32 0.0, %v2453
  %v2455 = vpop.f32.mrf.mxu0
  %v2456 = vpop.f32.mrf.mxu0
  %v2457 = vadd.f32 0.0, %v2456
  %v2458 = vpop.f32.mrf.mxu0
  %2459 = vmatprep.mubr.bf16.mxu0 %v1709
  %2460 = vmatmul.mubr.bf16.gmra.mxu0 %v1196
  %v2461 = vpop.f32.mrf.mxu0
  %v2462 = vadd.f32 0.0, %v2461
  %v2463 = vpop.f32.mrf.mxu0
  %v2464 = vpop.f32.mrf.mxu0
  %v2465 = vadd.f32 0.0, %v2464
  %v2466 = vpop.f32.mrf.mxu0
  %2467 = vmatprep.mubr.bf16.mxu0 %v1712
  %2468 = vmatmul.mubr.bf16.gmra.mxu0 %v1198
  %v2469 = vpop.f32.mrf.mxu0
  %v2470 = vadd.f32 0.0, %v2469
  %v2471 = vpop.f32.mrf.mxu0
  %v2472 = vpop.f32.mrf.mxu0
  %v2473 = vadd.f32 0.0, %v2472
  %v2474 = vpop.f32.mrf.mxu0
  %2475 = vmatprep.mubr.bf16.mxu0 %v1715
  %2476 = vmatmul.mubr.bf16.gmra.mxu0 %v1200
  %v2477 = vpop.f32.mrf.mxu0
  %v2478 = vadd.f32 0.0, %v2477
  %v2479 = vpop.f32.mrf.mxu0
  %v2480 = vpop.f32.mrf.mxu0
  %v2481 = vadd.f32 0.0, %v2480
  %v2482 = vpop.f32.mrf.mxu0
  %2483 = vmatprep.mubr.bf16.mxu0 %v1718
  %2484 = vmatmul.mubr.bf16.gmra.mxu0 %v1202
  %v2485 = vpop.f32.mrf.mxu0
  %v2486 = vadd.f32 0.0, %v2485
  %v2487 = vpop.f32.mrf.mxu0
  %v2488 = vpop.f32.mrf.mxu0
  %v2489 = vadd.f32 0.0, %v2488
  %v2490 = vpop.f32.mrf.mxu0
  %2491 = vmatprep.mubr.bf16.mxu0 %v1721
  %2492 = vmatmul.mubr.bf16.gmra.mxu0 %v1204
  %v2493 = vpop.f32.mrf.mxu0
  %v2494 = vadd.f32 0.0, %v2493
  %v2495 = vpop.f32.mrf.mxu0
  %v2496 = vpop.f32.mrf.mxu0
  %v2497 = vadd.f32 0.0, %v2496
  %v2498 = vpop.f32.mrf.mxu0
  %2499 = vmatprep.mubr.bf16.mxu0 %v1724
  %2500 = vmatmul.mubr.bf16.gmra.mxu0 %v1206
  %v2501 = vpop.f32.mrf.mxu0
  %v2502 = vadd.f32 0.0, %v2501
  %v2503 = vpop.f32.mrf.mxu0
  %v2504 = vpop.f32.mrf.mxu0
  %v2505 = vadd.f32 0.0, %v2504
  %v2506 = vpop.f32.mrf.mxu0
  %2507 = vmatprep.mubr.bf16.mxu0 %v1727
  %2508 = vmatmul.mubr.bf16.gmra.mxu0 %v1208
  %v2509 = vpop.f32.mrf.mxu0
  %v2510 = vadd.f32 0.0, %v2509
  %v2511 = vpop.f32.mrf.mxu0
  %v2512 = vpop.f32.mrf.mxu0
  %v2513 = vadd.f32 0.0, %v2512
  %v2514 = vpop.f32.mrf.mxu0
  %2515 = vmatprep.mubr.bf16.mxu0 %v1730
  %2516 = vmatmul.mubr.bf16.gmra.mxu0 %v1210
  %v2517 = vpop.f32.mrf.mxu0
  %v2518 = vadd.f32 0.0, %v2517
  %v2519 = vpop.f32.mrf.mxu0
  %v2520 = vpop.f32.mrf.mxu0
  %v2521 = vadd.f32 0.0, %v2520
  %v2522 = vpop.f32.mrf.mxu0
  %2523 = vmatprep.mubr.bf16.mxu0 %v1733
  %2524 = vmatmul.mubr.bf16.gmra.mxu0 %v1212
  %v2525 = vpop.f32.mrf.mxu0
  %v2526 = vadd.f32 0.0, %v2525
  %v2527 = vpop.f32.mrf.mxu0
  %v2528 = vpop.f32.mrf.mxu0
  %v2529 = vadd.f32 0.0, %v2528
  %v2530 = vpop.f32.mrf.mxu0
  %2531 = vmatprep.mubr.bf16.mxu0 %v1736
  %2532 = vmatmul.mubr.bf16.gmra.mxu0 %v1214
  %v2533 = vpop.f32.mrf.mxu0
  %v2534 = vadd.f32 0.0, %v2533
  %v2535 = vpop.f32.mrf.mxu0
  %v2536 = vpop.f32.mrf.mxu0
  %v2537 = vadd.f32 0.0, %v2536
  %v2538 = vpop.f32.mrf.mxu0
  %2539 = vmatprep.mubr.bf16.mxu0 %v1739
  %2540 = vmatmul.mubr.bf16.gmra.mxu0 %v1216
  %v2541 = vpop.f32.mrf.mxu0
  %v2542 = vadd.f32 0.0, %v2541
  %v2543 = vpop.f32.mrf.mxu0
  %v2544 = vpop.f32.mrf.mxu0
  %v2545 = vadd.f32 0.0, %v2544
  %v2546 = vpop.f32.mrf.mxu0
  %2547 = vmatprep.mubr.bf16.mxu0 %v1742
  %2548 = vmatmul.mubr.bf16.gmra.mxu0 %v1218
  %v2549 = vpop.f32.mrf.mxu0
  %v2550 = vadd.f32 0.0, %v2549
  %v2551 = vpop.f32.mrf.mxu0
  %v2552 = vpop.f32.mrf.mxu0
  %v2553 = vadd.f32 0.0, %v2552
  %v2554 = vpop.f32.mrf.mxu0
  %2555 = vmatprep.mubr.bf16.mxu0 %v1745
  %2556 = vmatmul.mubr.bf16.gmra.mxu0 %v1220
  %v2557 = vpop.f32.mrf.mxu0
  %v2558 = vadd.f32 0.0, %v2557
  %v2559 = vpop.f32.mrf.mxu0
  %v2560 = vpop.f32.mrf.mxu0
  %v2561 = vadd.f32 0.0, %v2560
  %v2562 = vpop.f32.mrf.mxu0
  %2563 = vmatprep.mubr.bf16.mxu0 %v1748
  %2564 = vmatmul.mubr.bf16.gmra.mxu0 %v1222
  %v2565 = vpop.f32.mrf.mxu0
  %v2566 = vadd.f32 0.0, %v2565
  %v2567 = vpop.f32.mrf.mxu0
  %v2568 = vpop.f32.mrf.mxu0
  %v2569 = vadd.f32 0.0, %v2568
  %v2570 = vpop.f32.mrf.mxu0
  %2571 = vmatprep.mubr.bf16.mxu0 %v1751
  %2572 = vmatmul.mubr.bf16.gmra.mxu0 %v1224
  %v2573 = vpop.f32.mrf.mxu0
  %v2574 = vadd.f32 0.0, %v2573
  %v2575 = vpop.f32.mrf.mxu0
  %v2576 = vpop.f32.mrf.mxu0
  %v2577 = vadd.f32 0.0, %v2576
  %v2578 = vpop.f32.mrf.mxu0
  %2579 = vmatprep.mubr.bf16.mxu0 %v1754
  %2580 = vmatmul.mubr.bf16.gmra.mxu0 %v1226
  %v2581 = vpop.f32.mrf.mxu0
  %v2582 = vadd.f32 0.0, %v2581
  %v2583 = vpop.f32.mrf.mxu0
  %v2584 = vpop.f32.mrf.mxu0
  %v2585 = vadd.f32 0.0, %v2584
  %v2586 = vpop.f32.mrf.mxu0
  %2587 = vmatprep.mubr.bf16.mxu0 %v1757
  %2588 = vmatmul.mubr.bf16.gmra.mxu0 %v1228
  %v2589 = vpop.f32.mrf.mxu0
  %v2590 = vadd.f32 0.0, %v2589
  %v2591 = vpop.f32.mrf.mxu0
  %v2592 = vpop.f32.mrf.mxu0
  %v2593 = vadd.f32 0.0, %v2592
  %v2594 = vpop.f32.mrf.mxu0
  %2595 = vmatprep.mubr.bf16.mxu0 %v1760
  %2596 = vmatmul.mubr.bf16.gmra.mxu0 %v1230
  %v2597 = vpop.f32.mrf.mxu0
  %v2598 = vadd.f32 0.0, %v2597
  %v2599 = vpop.f32.mrf.mxu0
  %v2600 = vpop.f32.mrf.mxu0
  %v2601 = vadd.f32 0.0, %v2600
  %v2602 = vpop.f32.mrf.mxu0
  %2603 = vmatprep.mubr.bf16.mxu0 %v1763
  %2604 = vmatmul.mubr.bf16.gmra.mxu0 %v1232
  %v2605 = vpop.f32.mrf.mxu0
  %v2606 = vadd.f32 0.0, %v2605
  %v2607 = vpop.f32.mrf.mxu0
  %v2608 = vpop.f32.mrf.mxu0
  %v2609 = vadd.f32 0.0, %v2608
  %v2610 = vpop.f32.mrf.mxu0
  %2611 = vmatprep.mubr.bf16.mxu0 %v1766
  %2612 = vmatmul.mubr.bf16.gmra.mxu0 %v1234
  %v2613 = vpop.f32.mrf.mxu0
  %v2614 = vadd.f32 0.0, %v2613
  %v2615 = vpop.f32.mrf.mxu0
  %v2616 = vpop.f32.mrf.mxu0
  %v2617 = vadd.f32 0.0, %v2616
  %v2618 = vpop.f32.mrf.mxu0
  %2619 = vmatprep.mubr.bf16.mxu0 %v1769
  %2620 = vmatmul.mubr.bf16.gmra.mxu0 %v1236
  %v2621 = vpop.f32.mrf.mxu0
  %v2622 = vadd.f32 0.0, %v2621
  %v2623 = vpop.f32.mrf.mxu0
  %v2624 = vpop.f32.mrf.mxu0
  %v2625 = vadd.f32 0.0, %v2624
  %v2626 = vpop.f32.mrf.mxu0
  %2627 = vmatprep.mubr.bf16.mxu0 %v1772
  %2628 = vmatmul.mubr.bf16.gmra.mxu0 %v1238
  %v2629 = vpop.f32.mrf.mxu0
  %v2630 = vadd.f32 0.0, %v2629
  %v2631 = vpop.f32.mrf.mxu0
  %v2632 = vpop.f32.mrf.mxu0
  %v2633 = vadd.f32 0.0, %v2632
  %v2634 = vpop.f32.mrf.mxu0
  %2635 = vmatprep.mubr.bf16.mxu0 %v1775
  %2636 = vmatmul.mubr.bf16.gmra.mxu0 %v1240
  %v2637 = vpop.f32.mrf.mxu0
  %v2638 = vadd.f32 0.0, %v2637
  %v2639 = vpop.f32.mrf.mxu0
  %v2640 = vpop.f32.mrf.mxu0
  %v2641 = vadd.f32 0.0, %v2640
  %v2642 = vpop.f32.mrf.mxu0
  %2643 = vmatprep.mubr.bf16.mxu0 %v1778
  %2644 = vmatmul.mubr.bf16.gmra.mxu0 %v1242
  %v2645 = vpop.f32.mrf.mxu0
  %v2646 = vadd.f32 0.0, %v2645
  %v2647 = vpop.f32.mrf.mxu0
  %v2648 = vpop.f32.mrf.mxu0
  %v2649 = vadd.f32 0.0, %v2648
  %v2650 = vpop.f32.mrf.mxu0
  %2651 = vmatprep.mubr.bf16.mxu0 %v1781
  %2652 = vmatmul.mubr.bf16.gmra.mxu0 %v1244
  %v2653 = vpop.f32.mrf.mxu0
  %v2654 = vadd.f32 0.0, %v2653
  %v2655 = vpop.f32.mrf.mxu0
  %v2656 = vpop.f32.mrf.mxu0
  %v2657 = vadd.f32 0.0, %v2656
  %v2658 = vpop.f32.mrf.mxu0
  %2659 = vmatprep.mubr.bf16.mxu0 %v1784
  %2660 = vmatmul.mubr.bf16.gmra.mxu0 %v1246
  %v2661 = vpop.f32.mrf.mxu0
  %v2662 = vadd.f32 0.0, %v2661
  %v2663 = vpop.f32.mrf.mxu0
  %v2664 = vpop.f32.mrf.mxu0
  %v2665 = vadd.f32 0.0, %v2664
  %v2666 = vpop.f32.mrf.mxu0
  %2667 = vmatprep.mubr.bf16.mxu0 %v1787
  %2668 = vmatmul.mubr.bf16.gmra.mxu0 %v1248
  %v2669 = vpop.f32.mrf.mxu0
  %v2670 = vadd.f32 0.0, %v2669
  %v2671 = vpop.f32.mrf.mxu0
  %v2672 = vpop.f32.mrf.mxu0
  %v2673 = vadd.f32 0.0, %v2672
  %v2674 = vpop.f32.mrf.mxu0
  %2675 = vmatprep.mubr.bf16.mxu0 %v1790
  %2676 = vmatmul.mubr.bf16.gmra.mxu0 %v1250
  %v2677 = vpop.f32.mrf.mxu0
  %v2678 = vadd.f32 0.0, %v2677
  %v2679 = vpop.f32.mrf.mxu0
  %v2680 = vpop.f32.mrf.mxu0
  %v2681 = vadd.f32 0.0, %v2680
  %v2682 = vpop.f32.mrf.mxu0
  %2683 = vmatprep.mubr.bf16.mxu0 %v1793
  %2684 = vmatmul.mubr.bf16.gmra.mxu0 %v1252
  %v2685 = vpop.f32.mrf.mxu0
  %v2686 = vadd.f32 0.0, %v2685
  %v2687 = vpop.f32.mrf.mxu0
  %v2688 = vpop.f32.mrf.mxu0
  %v2689 = vadd.f32 0.0, %v2688
  %v2690 = vpop.f32.mrf.mxu0
  %2691 = vmatprep.mubr.bf16.mxu0 %v1796
  %2692 = vmatmul.mubr.bf16.gmra.mxu0 %v1254
  %v2693 = vpop.f32.mrf.mxu0
  %v2694 = vadd.f32 0.0, %v2693
  %v2695 = vpop.f32.mrf.mxu0
  %v2696 = vpop.f32.mrf.mxu0
  %v2697 = vadd.f32 0.0, %v2696
  %v2698 = vpop.f32.mrf.mxu0
  %2699 = vmatprep.mubr.bf16.mxu0 %v1799
  %2700 = vmatmul.mubr.bf16.gmra.mxu0 %v1256
  %v2701 = vpop.f32.mrf.mxu0
  %v2702 = vadd.f32 0.0, %v2701
  %v2703 = vpop.f32.mrf.mxu0
  %v2704 = vpop.f32.mrf.mxu0
  %v2705 = vadd.f32 0.0, %v2704
  %v2706 = vpop.f32.mrf.mxu0
  %2707 = vmatprep.mubr.bf16.mxu0 %v1802
  %2708 = vmatmul.mubr.bf16.gmra.mxu0 %v1258
  %v2709 = vpop.f32.mrf.mxu0
  %v2710 = vadd.f32 0.0, %v2709
  %v2711 = vpop.f32.mrf.mxu0
  %v2712 = vpop.f32.mrf.mxu0
  %v2713 = vadd.f32 0.0, %v2712
  %v2714 = vpop.f32.mrf.mxu0
  %2715 = vmatprep.mubr.bf16.mxu0 %v1805
  %2716 = vmatmul.mubr.bf16.gmra.mxu0 %v1260
  %v2717 = vpop.f32.mrf.mxu0
  %v2718 = vadd.f32 0.0, %v2717
  %v2719 = vpop.f32.mrf.mxu0
  %v2720 = vpop.f32.mrf.mxu0
  %v2721 = vadd.f32 0.0, %v2720
  %v2722 = vpop.f32.mrf.mxu0
  %2723 = vmatprep.mubr.bf16.mxu0 %v1808
  %2724 = vmatmul.mubr.bf16.gmra.mxu0 %v1262
  %v2725 = vpop.f32.mrf.mxu0
  %v2726 = vadd.f32 0.0, %v2725
  %v2727 = vpop.f32.mrf.mxu0
  %v2728 = vpop.f32.mrf.mxu0
  %v2729 = vadd.f32 0.0, %v2728
  %v2730 = vpop.f32.mrf.mxu0
  %2731 = vmatprep.mubr.bf16.mxu0 %v1811
  %2732 = vmatmul.mubr.bf16.gmra.mxu0 %v1264
  %v2733 = vpop.f32.mrf.mxu0
  %v2734 = vadd.f32 0.0, %v2733
  %v2735 = vpop.f32.mrf.mxu0
  %v2736 = vpop.f32.mrf.mxu0
  %v2737 = vadd.f32 0.0, %v2736
  %v2738 = vpop.f32.mrf.mxu0
  %2739 = vmatprep.mubr.bf16.mxu0 %v1814
  %2740 = vmatmul.mubr.bf16.gmra.mxu0 %v1266
  %v2741 = vpop.f32.mrf.mxu0
  %v2742 = vadd.f32 0.0, %v2741
  %v2743 = vpop.f32.mrf.mxu0
  %v2744 = vpop.f32.mrf.mxu0
  %v2745 = vadd.f32 0.0, %v2744
  %v2746 = vpop.f32.mrf.mxu0
  %2747 = vmatprep.mubr.bf16.mxu0 %v1817
  %2748 = vmatmul.mubr.bf16.gmra.mxu0 %v1268
  %v2749 = vpop.f32.mrf.mxu0
  %v2750 = vadd.f32 0.0, %v2749
  %v2751 = vpop.f32.mrf.mxu0
  %v2752 = vpop.f32.mrf.mxu0
  %v2753 = vadd.f32 0.0, %v2752
  %v2754 = vpop.f32.mrf.mxu0
  %2755 = vmatprep.mubr.bf16.mxu0 %v1820
  %2756 = vmatmul.mubr.bf16.gmra.mxu0 %v1270
  %v2757 = vpop.f32.mrf.mxu0
  %v2758 = vadd.f32 0.0, %v2757
  %v2759 = vpop.f32.mrf.mxu0
  %v2760 = vpop.f32.mrf.mxu0
  %v2761 = vadd.f32 0.0, %v2760
  %v2762 = vpop.f32.mrf.mxu0
  %2763 = vmatprep.mubr.bf16.mxu0 %v1823
  %2764 = vmatmul.mubr.bf16.gmra.mxu0 %v1272
  %v2765 = vpop.f32.mrf.mxu0
  %v2766 = vadd.f32 0.0, %v2765
  %v2767 = vpop.f32.mrf.mxu0
  %v2768 = vpop.f32.mrf.mxu0
  %v2769 = vadd.f32 0.0, %v2768
  %v2770 = vpop.f32.mrf.mxu0
  %2771 = vmatprep.mubr.bf16.mxu0 %v1826
  %2772 = vmatmul.mubr.bf16.gmra.mxu0 %v1274
  %v2773 = vpop.f32.mrf.mxu0
  %v2774 = vadd.f32 0.0, %v2773
  %v2775 = vpop.f32.mrf.mxu0
  %v2776 = vpop.f32.mrf.mxu0
  %v2777 = vadd.f32 0.0, %v2776
  %v2778 = vpop.f32.mrf.mxu0
  %2779 = vmatprep.mubr.bf16.mxu0 %v1829
  %2780 = vmatmul.mubr.bf16.gmra.mxu0 %v1276
  %v2781 = vpop.f32.mrf.mxu0
  %v2782 = vadd.f32 0.0, %v2781
  %v2783 = vpop.f32.mrf.mxu0
  %v2784 = vpop.f32.mrf.mxu0
  %v2785 = vadd.f32 0.0, %v2784
  %v2786 = vpop.f32.mrf.mxu0
  %2787 = vmatprep.mubr.bf16.mxu0 %v1832
  %2788 = vmatmul.mubr.bf16.gmra.mxu0 %v1278
  %v2789 = vpop.f32.mrf.mxu0
  %v2790 = vadd.f32 0.0, %v2789
  %v2791 = vpop.f32.mrf.mxu0
  %v2792 = vpop.f32.mrf.mxu0
  %v2793 = vadd.f32 0.0, %v2792
  %v2794 = vpop.f32.mrf.mxu0
  %2795 = vmatprep.mubr.bf16.mxu0 %v1835
  %2796 = vmatmul.mubr.bf16.gmra.mxu0 %v1280
  %v2797 = vpop.f32.mrf.mxu0
  %v2798 = vadd.f32 0.0, %v2797
  %v2799 = vpop.f32.mrf.mxu0
  %v2800 = vpop.f32.mrf.mxu0
  %v2801 = vadd.f32 0.0, %v2800
  %v2802 = vpop.f32.mrf.mxu0
  %2803 = vmatprep.mubr.bf16.mxu0 %v1838
  %2804 = vmatmul.mubr.bf16.gmra.mxu0 %v1282
  %v2805 = vpop.f32.mrf.mxu0
  %v2806 = vadd.f32 0.0, %v2805
  %v2807 = vpop.f32.mrf.mxu0
  %v2808 = vpop.f32.mrf.mxu0
  %v2809 = vadd.f32 0.0, %v2808
  %v2810 = vpop.f32.mrf.mxu0
  %2811 = vmatprep.mubr.bf16.mxu0 %v1841
  %2812 = vmatmul.mubr.bf16.gmra.mxu0 %v1284
  %v2813 = vpop.f32.mrf.mxu0
  %v2814 = vadd.f32 0.0, %v2813
  %v2815 = vpop.f32.mrf.mxu0
  %v2816 = vpop.f32.mrf.mxu0
  %v2817 = vadd.f32 0.0, %v2816
  %v2818 = vpop.f32.mrf.mxu0
  %2819 = vmatprep.mubr.bf16.mxu0 %v1844
  %2820 = vmatmul.mubr.bf16.gmra.mxu0 %v1286
  %v2821 = vpop.f32.mrf.mxu0
  %v2822 = vadd.f32 0.0, %v2821
  %v2823 = vpop.f32.mrf.mxu0
  %v2824 = vpop.f32.mrf.mxu0
  %v2825 = vadd.f32 0.0, %v2824
  %v2826 = vpop.f32.mrf.mxu0
  %2827 = vmatprep.mubr.bf16.mxu0 %v1847
  %2828 = vmatmul.mubr.bf16.gmra.mxu0 %v1288
  %v2829 = vpop.f32.mrf.mxu0
  %v2830 = vadd.f32 0.0, %v2829
  %v2831 = vpop.f32.mrf.mxu0
  %v2832 = vpop.f32.mrf.mxu0
  %v2833 = vadd.f32 0.0, %v2832
  %v2834 = vpop.f32.mrf.mxu0
  %2835 = vmatprep.mubr.bf16.mxu0 %v1850
  %2836 = vmatmul.mubr.bf16.gmra.mxu0 %v1290
  %v2837 = vpop.f32.mrf.mxu0
  %v2838 = vadd.f32 0.0, %v2837
  %v2839 = vpop.f32.mrf.mxu0
  %v2840 = vpop.f32.mrf.mxu0
  %v2841 = vadd.f32 0.0, %v2840
  %v2842 = vpop.f32.mrf.mxu0
  %2843 = vmatprep.mubr.bf16.mxu0 %v1853
  %2844 = vmatmul.mubr.bf16.gmra.mxu0 %v1292
  %v2845 = vpop.f32.mrf.mxu0
  %v2846 = vadd.f32 0.0, %v2845
  %v2847 = vpop.f32.mrf.mxu0
  %v2848 = vpop.f32.mrf.mxu0
  %v2849 = vadd.f32 0.0, %v2848
  %v2850 = vpop.f32.mrf.mxu0
  %2851 = vmatprep.mubr.bf16.mxu0 %v1856
  %2852 = vmatmul.mubr.bf16.gmra.mxu0 %v1294
  %v2853 = vpop.f32.mrf.mxu0
  %v2854 = vadd.f32 0.0, %v2853
  %v2855 = vpop.f32.mrf.mxu0
  %v2856 = vpop.f32.mrf.mxu0
  %v2857 = vadd.f32 0.0, %v2856
  %v2858 = vpop.f32.mrf.mxu0
  %2859 = vmatprep.mubr.bf16.mxu0 %v1859
  %2860 = vmatmul.mubr.bf16.gmra.mxu0 %v1296
  %v2861 = vpop.f32.mrf.mxu0
  %v2862 = vadd.f32 0.0, %v2861
  %v2863 = vpop.f32.mrf.mxu0
  %v2864 = vpop.f32.mrf.mxu0
  %v2865 = vadd.f32 0.0, %v2864
  %v2866 = vpop.f32.mrf.mxu0
  %2867 = vmatprep.mubr.bf16.mxu0 %v1862
  %2868 = vmatmul.mubr.bf16.gmra.mxu0 %v1298
  %v2869 = vpop.f32.mrf.mxu0
  %v2870 = vadd.f32 0.0, %v2869
  %v2871 = vpop.f32.mrf.mxu0
  %v2872 = vpop.f32.mrf.mxu0
  %v2873 = vadd.f32 0.0, %v2872
  %v2874 = vpop.f32.mrf.mxu0
  %2875 = vmatprep.mubr.bf16.mxu0 %v1865
  %2876 = vmatmul.mubr.bf16.gmra.mxu0 %v1300
  %v2877 = vpop.f32.mrf.mxu0
  %v2878 = vadd.f32 0.0, %v2877
  %v2879 = vpop.f32.mrf.mxu0
  %v2880 = vpop.f32.mrf.mxu0
  %v2881 = vadd.f32 0.0, %v2880
  %v2882 = vpop.f32.mrf.mxu0
  %2883 = vmatprep.mubr.bf16.mxu0 %v1868
  %2884 = vmatmul.mubr.bf16.gmra.mxu0 %v1302
  %v2885 = vpop.f32.mrf.mxu0
  %v2886 = vadd.f32 0.0, %v2885
  %v2887 = vpop.f32.mrf.mxu0
  %v2888 = vpop.f32.mrf.mxu0
  %v2889 = vadd.f32 0.0, %v2888
  %v2890 = vpop.f32.mrf.mxu0
  %2891 = vmatprep.mubr.bf16.mxu0 %v1871
  %2892 = vmatmul.mubr.bf16.gmra.mxu0 %v1304
  %v2893 = vpop.f32.mrf.mxu0
  %v2894 = vadd.f32 0.0, %v2893
  %v2895 = vpop.f32.mrf.mxu0
  %v2896 = vpop.f32.mrf.mxu0
  %v2897 = vadd.f32 0.0, %v2896
  %v2898 = vpop.f32.mrf.mxu0
  %2899 = vmatprep.mubr.bf16.mxu0 %v1874
  %2900 = vmatmul.mubr.bf16.gmra.mxu0 %v1306
  %v2901 = vpop.f32.mrf.mxu0
  %v2902 = vadd.f32 0.0, %v2901
  %v2903 = vpop.f32.mrf.mxu0
  %v2904 = vpop.f32.mrf.mxu0
  %v2905 = vadd.f32 0.0, %v2904
  %v2906 = vpop.f32.mrf.mxu0
  %2907 = vmatprep.mubr.bf16.mxu0 %v1877
  %2908 = vmatmul.mubr.bf16.gmra.mxu0 %v1308
  %v2909 = vpop.f32.mrf.mxu0
  %v2910 = vadd.f32 0.0, %v2909
  %v2911 = vpop.f32.mrf.mxu0
  %v2912 = vpop.f32.mrf.mxu0
  %v2913 = vadd.f32 0.0, %v2912
  %v2914 = vpop.f32.mrf.mxu0
  %2915 = vmatprep.mubr.bf16.mxu0 %v1880
  %2916 = vmatmul.mubr.bf16.gmra.mxu0 %v1310
  %v2917 = vpop.f32.mrf.mxu0
  %v2918 = vadd.f32 0.0, %v2917
  %v2919 = vpop.f32.mrf.mxu0
  %v2920 = vpop.f32.mrf.mxu0
  %v2921 = vadd.f32 0.0, %v2920
  %v2922 = vpop.f32.mrf.mxu0
  %2923 = vmatprep.mubr.bf16.mxu0 %v1883
  %2924 = vmatmul.mubr.bf16.gmra.mxu0 %v1312
  %v2925 = vpop.f32.mrf.mxu0
  %v2926 = vadd.f32 0.0, %v2925
  %v2927 = vpop.f32.mrf.mxu0
  %v2928 = vpop.f32.mrf.mxu0
  %v2929 = vadd.f32 0.0, %v2928
  %v2930 = vpop.f32.mrf.mxu0
  %2931 = vmatprep.mubr.bf16.mxu0 %v1886
  %2932 = vmatmul.mubr.bf16.gmra.mxu0 %v1314
  %v2933 = vpop.f32.mrf.mxu0
  %v2934 = vadd.f32 0.0, %v2933
  %v2935 = vpop.f32.mrf.mxu0
  %v2936 = vpop.f32.mrf.mxu0
  %v2937 = vadd.f32 0.0, %v2936
  %v2938 = vpop.f32.mrf.mxu0
  %2939 = vmatprep.mubr.bf16.mxu0 %v1889
  %2940 = vmatmul.mubr.bf16.gmra.mxu0 %v1316
  %v2941 = vpop.f32.mrf.mxu0
  %v2942 = vadd.f32 0.0, %v2941
  %v2943 = vpop.f32.mrf.mxu0
  %v2944 = vpop.f32.mrf.mxu0
  %v2945 = vadd.f32 0.0, %v2944
  %v2946 = vpop.f32.mrf.mxu0
  %2947 = vdwg.mxu0
  %v2948 = vadd.f32 %v1926, %v1929
  %v2949 = vadd.f32 %v2948, %v1934
  %v2950 = vadd.f32 %v2949, %v1937
  %v2951 = vadd.f32 %v2950, %v1942
  %v2952 = vadd.f32 %v2951, %v1945
  %v2953 = vadd.f32 %v2952, %v1950
  %v2954 = vadd.f32 %v2953, %v1953
  %v2955 = vadd.f32 %v2954, %v1958
  %v2956 = vadd.f32 %v2955, %v1961
  %v2957 = vadd.f32 %v2956, %v1966
  %v2958 = vadd.f32 %v2957, %v1969
  %v2959 = vadd.f32 %v2958, %v1974
  %v2960 = vadd.f32 %v2959, %v1977
  %v2961 = vadd.f32 %v2960, %v1982
  %v2962 = vadd.f32 %v2961, %v1985
  %v2963 = vadd.f32 %v2962, %v1990
  %v2964 = vadd.f32 %v2963, %v1993
  %v2965 = vadd.f32 %v2964, %v1998
  %v2966 = vadd.f32 %v2965, %v2001
  %v2967 = vadd.f32 %v2966, %v2006
  %v2968 = vadd.f32 %v2967, %v2009
  %v2969 = vadd.f32 %v2968, %v2014
  %v2970 = vadd.f32 %v2969, %v2017
  %v2971 = vadd.f32 %v2970, %v2022
  %v2972 = vadd.f32 %v2971, %v2025
  %v2973 = vadd.f32 %v2972, %v2030
  %v2974 = vadd.f32 %v2973, %v2033
  %v2975 = vadd.f32 %v2974, %v2038
  %v2976 = vadd.f32 %v2975, %v2041
  %v2977 = vadd.f32 %v2976, %v2046
  %v2978 = vadd.f32 %v2977, %v2049
  %v2979 = vadd.f32 %v2978, %v2054
  %v2980 = vadd.f32 %v2979, %v2057
  %v2981 = vadd.f32 %v2980, %v2062
  %v2982 = vadd.f32 %v2981, %v2065
  %v2983 = vadd.f32 %v2982, %v2070
  %v2984 = vadd.f32 %v2983, %v2073
  %v2985 = vadd.f32 %v2984, %v2078
  %v2986 = vadd.f32 %v2985, %v2081
  %v2987 = vadd.f32 %v2986, %v2086
  %v2988 = vadd.f32 %v2987, %v2089
  %v2989 = vadd.f32 %v2988, %v2094
  %v2990 = vadd.f32 %v2989, %v2097
  %v2991 = vadd.f32 %v2990, %v2102
  %v2992 = vadd.f32 %v2991, %v2105
  %v2993 = vadd.f32 %v2992, %v2110
  %v2994 = vadd.f32 %v2993, %v2113
  %v2995 = vadd.f32 %v2994, %v2118
  %v2996 = vadd.f32 %v2995, %v2121
  %v2997 = vadd.f32 %v2996, %v2126
  %v2998 = vadd.f32 %v2997, %v2129
  %v2999 = vadd.f32 %v2998, %v2134
  %v3000 = vadd.f32 %v2999, %v2137
  %v3001 = vadd.f32 %v3000, %v2142
  %v3002 = vadd.f32 %v3001, %v2145
  %v3003 = vadd.f32 %v3002, %v2150
  %v3004 = vadd.f32 %v3003, %v2153
  %v3005 = vadd.f32 %v3004, %v2158
  %v3006 = vadd.f32 %v3005, %v2161
  %v3007 = vadd.f32 %v3006, %v2166
  %v3008 = vadd.f32 %v3007, %v2169
  %v3009 = vadd.f32 %v3008, %v2174
  %v3010 = vadd.f32 %v3009, %v2177
  %v3011 = vadd.f32 %v3010, %v2182
  %v3012 = vadd.f32 %v3011, %v2185
  %v3013 = vadd.f32 %v3012, %v2190
  %v3014 = vadd.f32 %v3013, %v2193
  %v3015 = vadd.f32 %v3014, %v2198
  %v3016 = vadd.f32 %v3015, %v2201
  %v3017 = vadd.f32 %v3016, %v2206
  %v3018 = vadd.f32 %v3017, %v2209
  %v3019 = vadd.f32 %v3018, %v2214
  %v3020 = vadd.f32 %v3019, %v2217
  %v3021 = vadd.f32 %v3020, %v2222
  %v3022 = vadd.f32 %v3021, %v2225
  %v3023 = vadd.f32 %v3022, %v2230
  %v3024 = vadd.f32 %v3023, %v2233
  %v3025 = vadd.f32 %v3024, %v2238
  %v3026 = vadd.f32 %v3025, %v2241
  %v3027 = vadd.f32 %v3026, %v2246
  %v3028 = vadd.f32 %v3027, %v2249
  %v3029 = vadd.f32 %v3028, %v2254
  %v3030 = vadd.f32 %v3029, %v2257
  %v3031 = vadd.f32 %v3030, %v2262
  %v3032 = vadd.f32 %v3031, %v2265
  %v3033 = vadd.f32 %v3032, %v2270
  %v3034 = vadd.f32 %v3033, %v2273
  %v3035 = vadd.f32 %v3034, %v2278
  %v3036 = vadd.f32 %v3035, %v2281
  %v3037 = vadd.f32 %v3036, %v2286
  %v3038 = vadd.f32 %v3037, %v2289
  %v3039 = vadd.f32 %v3038, %v2294
  %v3040 = vadd.f32 %v3039, %v2297
  %v3041 = vadd.f32 %v3040, %v2302
  %v3042 = vadd.f32 %v3041, %v2305
  %v3043 = vadd.f32 %v3042, %v2310
  %v3044 = vadd.f32 %v3043, %v2313
  %v3045 = vadd.f32 %v3044, %v2318
  %v3046 = vadd.f32 %v3045, %v2321
  %v3047 = vadd.f32 %v3046, %v2326
  %v3048 = vadd.f32 %v3047, %v2329
  %v3049 = vadd.f32 %v3048, %v2334
  %v3050 = vadd.f32 %v3049, %v2337
  %v3051 = vadd.f32 %v3050, %v2342
  %v3052 = vadd.f32 %v3051, %v2345
  %v3053 = vadd.f32 %v3052, %v2350
  %v3054 = vadd.f32 %v3053, %v2353
  %v3055 = vadd.f32 %v3054, %v2358
  %v3056 = vadd.f32 %v3055, %v2361
  %v3057 = vadd.f32 %v3056, %v2366
  %v3058 = vadd.f32 %v3057, %v2369
  %v3059 = vadd.f32 %v3058, %v2374
  %v3060 = vadd.f32 %v3059, %v2377
  %v3061 = vadd.f32 %v3060, %v2382
  %v3062 = vadd.f32 %v3061, %v2385
  %v3063 = vadd.f32 %v3062, %v2390
  %v3064 = vadd.f32 %v3063, %v2393
  %v3065 = vadd.f32 %v3064, %v2398
  %v3066 = vadd.f32 %v3065, %v2401
  %v3067 = vadd.f32 %v3066, %v2406
  %v3068 = vadd.f32 %v3067, %v2409
  %v3069 = vadd.f32 %v3068, %v2414
  %v3070 = vadd.f32 %v3069, %v2417
  %v3071 = vadd.f32 %v3070, %v2422
  %v3072 = vadd.f32 %v3071, %v2425
  %v3073 = vadd.f32 %v3072, %v2430
  %v3074 = vadd.f32 %v3073, %v2433
  %v3075 = vadd.f32 %v3074, %v2438
  %v3076 = vadd.f32 %v3075, %v2441
  %v3077 = vadd.f32 %v3076, %v2446
  %v3078 = vadd.f32 %v3077, %v2449
  %v3079 = vadd.f32 %v3078, %v2454
  %v3080 = vadd.f32 %v3079, %v2457
  %v3081 = vadd.f32 %v3080, %v2462
  %v3082 = vadd.f32 %v3081, %v2465
  %v3083 = vadd.f32 %v3082, %v2470
  %v3084 = vadd.f32 %v3083, %v2473
  %v3085 = vadd.f32 %v3084, %v2478
  %v3086 = vadd.f32 %v3085, %v2481
  %v3087 = vadd.f32 %v3086, %v2486
  %v3088 = vadd.f32 %v3087, %v2489
  %v3089 = vadd.f32 %v3088, %v2494
  %v3090 = vadd.f32 %v3089, %v2497
  %v3091 = vadd.f32 %v3090, %v2502
  %v3092 = vadd.f32 %v3091, %v2505
  %v3093 = vadd.f32 %v3092, %v2510
  %v3094 = vadd.f32 %v3093, %v2513
  %v3095 = vadd.f32 %v3094, %v2518
  %v3096 = vadd.f32 %v3095, %v2521
  %v3097 = vadd.f32 %v3096, %v2526
  %v3098 = vadd.f32 %v3097, %v2529
  %v3099 = vadd.f32 %v3098, %v2534
  %v3100 = vadd.f32 %v3099, %v2537
  %v3101 = vadd.f32 %v3100, %v2542
  %v3102 = vadd.f32 %v3101, %v2545
  %v3103 = vadd.f32 %v3102, %v2550
  %v3104 = vadd.f32 %v3103, %v2553
  %v3105 = vadd.f32 %v3104, %v2558
  %v3106 = vadd.f32 %v3105, %v2561
  %v3107 = vadd.f32 %v3106, %v2566
  %v3108 = vadd.f32 %v3107, %v2569
  %v3109 = vadd.f32 %v3108, %v2574
  %v3110 = vadd.f32 %v3109, %v2577
  %v3111 = vadd.f32 %v3110, %v2582
  %v3112 = vadd.f32 %v3111, %v2585
  %v3113 = vadd.f32 %v3112, %v2590
  %v3114 = vadd.f32 %v3113, %v2593
  %v3115 = vadd.f32 %v3114, %v2598
  %v3116 = vadd.f32 %v3115, %v2601
  %v3117 = vadd.f32 %v3116, %v2606
  %v3118 = vadd.f32 %v3117, %v2609
  %v3119 = vadd.f32 %v3118, %v2614
  %v3120 = vadd.f32 %v3119, %v2617
  %v3121 = vadd.f32 %v3120, %v2622
  %v3122 = vadd.f32 %v3121, %v2625
  %v3123 = vadd.f32 %v3122, %v2630
  %v3124 = vadd.f32 %v3123, %v2633
  %v3125 = vadd.f32 %v3124, %v2638
  %v3126 = vadd.f32 %v3125, %v2641
  %v3127 = vadd.f32 %v3126, %v2646
  %v3128 = vadd.f32 %v3127, %v2649
  %v3129 = vadd.f32 %v3128, %v2654
  %v3130 = vadd.f32 %v3129, %v2657
  %v3131 = vadd.f32 %v3130, %v2662
  %v3132 = vadd.f32 %v3131, %v2665
  %v3133 = vadd.f32 %v3132, %v2670
  %v3134 = vadd.f32 %v3133, %v2673
  %v3135 = vadd.f32 %v3134, %v2678
  %v3136 = vadd.f32 %v3135, %v2681
  %v3137 = vadd.f32 %v3136, %v2686
  %v3138 = vadd.f32 %v3137, %v2689
  %v3139 = vadd.f32 %v3138, %v2694
  %v3140 = vadd.f32 %v3139, %v2697
  %v3141 = vadd.f32 %v3140, %v2702
  %v3142 = vadd.f32 %v3141, %v2705
  %v3143 = vadd.f32 %v3142, %v2710
  %v3144 = vadd.f32 %v3143, %v2713
  %v3145 = vadd.f32 %v3144, %v2718
  %v3146 = vadd.f32 %v3145, %v2721
  %v3147 = vadd.f32 %v3146, %v2726
  %v3148 = vadd.f32 %v3147, %v2729
  %v3149 = vadd.f32 %v3148, %v2734
  %v3150 = vadd.f32 %v3149, %v2737
  %v3151 = vadd.f32 %v3150, %v2742
  %v3152 = vadd.f32 %v3151, %v2745
  %v3153 = vadd.f32 %v3152, %v2750
  %v3154 = vadd.f32 %v3153, %v2753
  %v3155 = vadd.f32 %v3154, %v2758
  %v3156 = vadd.f32 %v3155, %v2761
  %v3157 = vadd.f32 %v3156, %v2766
  %v3158 = vadd.f32 %v3157, %v2769
  %v3159 = vadd.f32 %v3158, %v2774
  %v3160 = vadd.f32 %v3159, %v2777
  %v3161 = vadd.f32 %v3160, %v2782
  %v3162 = vadd.f32 %v3161, %v2785
  %v3163 = vadd.f32 %v3162, %v2790
  %v3164 = vadd.f32 %v3163, %v2793
  %v3165 = vadd.f32 %v3164, %v2798
  %v3166 = vadd.f32 %v3165, %v2801
  %v3167 = vadd.f32 %v3166, %v2806
  %v3168 = vadd.f32 %v3167, %v2809
  %v3169 = vadd.f32 %v3168, %v2814
  %v3170 = vadd.f32 %v3169, %v2817
  %v3171 = vadd.f32 %v3170, %v2822
  %v3172 = vadd.f32 %v3171, %v2825
  %v3173 = vadd.f32 %v3172, %v2830
  %v3174 = vadd.f32 %v3173, %v2833
  %v3175 = vadd.f32 %v3174, %v2838
  %v3176 = vadd.f32 %v3175, %v2841
  %v3177 = vadd.f32 %v3176, %v2846
  %v3178 = vadd.f32 %v3177, %v2849
  %v3179 = vadd.f32 %v3178, %v2854
  %v3180 = vadd.f32 %v3179, %v2857
  %v3181 = vadd.f32 %v3180, %v2862
  %v3182 = vadd.f32 %v3181, %v2865
  %v3183 = vadd.f32 %v3182, %v2870
  %v3184 = vadd.f32 %v3183, %v2873
  %v3185 = vadd.f32 %v3184, %v2878
  %v3186 = vadd.f32 %v3185, %v2881
  %v3187 = vadd.f32 %v3186, %v2886
  %v3188 = vadd.f32 %v3187, %v2889
  %v3189 = vadd.f32 %v3188, %v2894
  %v3190 = vadd.f32 %v3189, %v2897
  %v3191 = vadd.f32 %v3190, %v2902
  %v3192 = vadd.f32 %v3191, %v2905
  %v3193 = vadd.f32 %v3192, %v2910
  %v3194 = vadd.f32 %v3193, %v2913
  %v3195 = vadd.f32 %v3194, %v2918
  %v3196 = vadd.f32 %v3195, %v2921
  %v3197 = vadd.f32 %v3196, %v2926
  %v3198 = vadd.f32 %v3197, %v2929
  %v3199 = vadd.f32 %v3198, %v2934
  %v3200 = vadd.f32 %v3199, %v2937
  %v3201 = vadd.f32 %v3200, %v2942
  %v3202 = vadd.f32 %v3201, %v2945
  %v3203 = vrot.slane %v3202, 4
  %v3204 = vadd.f32 %v3202, %v3203
  %v3205 = vrot.slane %v3204, 2
  %v3206 = vadd.f32 %v3204, %v3205
  %v3207 = vrot.slane %v3206, 1
  %v3208 = vadd.f32 %v3206, %v3207
  %v3209 = vmul.f32 %v3208, 0.00048828125
  %v3210 = vsub.f32 %v1926, %v3209
  %v3211 = vsub.f32 %v1929, %v3209
  %v3212 = vsub.f32 %v1934, %v3209
  %v3213 = vsub.f32 %v1937, %v3209
  %v3214 = vsub.f32 %v1942, %v3209
  %v3215 = vsub.f32 %v1945, %v3209
  %v3216 = vsub.f32 %v1950, %v3209
  %v3217 = vsub.f32 %v1953, %v3209
  %v3218 = vsub.f32 %v1958, %v3209
  %v3219 = vsub.f32 %v1961, %v3209
  %v3220 = vsub.f32 %v1966, %v3209
  %v3221 = vsub.f32 %v1969, %v3209
  %v3222 = vsub.f32 %v1974, %v3209
  %v3223 = vsub.f32 %v1977, %v3209
  %v3224 = vsub.f32 %v1982, %v3209
  %v3225 = vsub.f32 %v1985, %v3209
  %v3226 = vsub.f32 %v1990, %v3209
  %v3227 = vsub.f32 %v1993, %v3209
  %v3228 = vsub.f32 %v1998, %v3209
  %v3229 = vsub.f32 %v2001, %v3209
  %v3230 = vsub.f32 %v2006, %v3209
  %v3231 = vsub.f32 %v2009, %v3209
  %v3232 = vsub.f32 %v2014, %v3209
  %v3233 = vsub.f32 %v2017, %v3209
  %v3234 = vsub.f32 %v2022, %v3209
  %v3235 = vsub.f32 %v2025, %v3209
  %v3236 = vsub.f32 %v2030, %v3209
  %v3237 = vsub.f32 %v2033, %v3209
  %v3238 = vsub.f32 %v2038, %v3209
  %v3239 = vsub.f32 %v2041, %v3209
  %v3240 = vsub.f32 %v2046, %v3209
  %v3241 = vsub.f32 %v2049, %v3209
  %v3242 = vsub.f32 %v2054, %v3209
  %v3243 = vsub.f32 %v2057, %v3209
  %v3244 = vsub.f32 %v2062, %v3209
  %v3245 = vsub.f32 %v2065, %v3209
  %v3246 = vsub.f32 %v2070, %v3209
  %v3247 = vsub.f32 %v2073, %v3209
  %v3248 = vsub.f32 %v2078, %v3209
  %v3249 = vsub.f32 %v2081, %v3209
  %v3250 = vsub.f32 %v2086, %v3209
  %v3251 = vsub.f32 %v2089, %v3209
  %v3252 = vsub.f32 %v2094, %v3209
  %v3253 = vsub.f32 %v2097, %v3209
  %v3254 = vsub.f32 %v2102, %v3209
  %v3255 = vsub.f32 %v2105, %v3209
  %v3256 = vsub.f32 %v2110, %v3209
  %v3257 = vsub.f32 %v2113, %v3209
  %v3258 = vsub.f32 %v2118, %v3209
  %v3259 = vsub.f32 %v2121, %v3209
  %v3260 = vsub.f32 %v2126, %v3209
  %v3261 = vsub.f32 %v2129, %v3209
  %v3262 = vsub.f32 %v2134, %v3209
  %v3263 = vsub.f32 %v2137, %v3209
  %v3264 = vsub.f32 %v2142, %v3209
  %v3265 = vsub.f32 %v2145, %v3209
  %v3266 = vsub.f32 %v2150, %v3209
  %v3267 = vsub.f32 %v2153, %v3209
  %v3268 = vsub.f32 %v2158, %v3209
  %v3269 = vsub.f32 %v2161, %v3209
  %v3270 = vsub.f32 %v2166, %v3209
  %v3271 = vsub.f32 %v2169, %v3209
  %v3272 = vsub.f32 %v2174, %v3209
  %v3273 = vsub.f32 %v2177, %v3209
  %v3274 = vsub.f32 %v2182, %v3209
  %v3275 = vsub.f32 %v2185, %v3209
  %v3276 = vsub.f32 %v2190, %v3209
  %v3277 = vsub.f32 %v2193, %v3209
  %v3278 = vsub.f32 %v2198, %v3209
  %v3279 = vsub.f32 %v2201, %v3209
  %v3280 = vsub.f32 %v2206, %v3209
  %v3281 = vsub.f32 %v2209, %v3209
  %v3282 = vsub.f32 %v2214, %v3209
  %v3283 = vsub.f32 %v2217, %v3209
  %v3284 = vsub.f32 %v2222, %v3209
  %v3285 = vsub.f32 %v2225, %v3209
  %v3286 = vsub.f32 %v2230, %v3209
  %v3287 = vsub.f32 %v2233, %v3209
  %v3288 = vsub.f32 %v2238, %v3209
  %v3289 = vsub.f32 %v2241, %v3209
  %v3290 = vsub.f32 %v2246, %v3209
  %v3291 = vsub.f32 %v2249, %v3209
  %v3292 = vsub.f32 %v2254, %v3209
  %v3293 = vsub.f32 %v2257, %v3209
  %v3294 = vsub.f32 %v2262, %v3209
  %v3295 = vsub.f32 %v2265, %v3209
  %v3296 = vsub.f32 %v2270, %v3209
  %v3297 = vsub.f32 %v2273, %v3209
  %v3298 = vsub.f32 %v2278, %v3209
  %v3299 = vsub.f32 %v2281, %v3209
  %v3300 = vsub.f32 %v2286, %v3209
  %v3301 = vsub.f32 %v2289, %v3209
  %v3302 = vsub.f32 %v2294, %v3209
  %v3303 = vsub.f32 %v2297, %v3209
  %v3304 = vsub.f32 %v2302, %v3209
  %v3305 = vsub.f32 %v2305, %v3209
  %v3306 = vsub.f32 %v2310, %v3209
  %v3307 = vsub.f32 %v2313, %v3209
  %v3308 = vsub.f32 %v2318, %v3209
  %v3309 = vsub.f32 %v2321, %v3209
  %v3310 = vsub.f32 %v2326, %v3209
  %v3311 = vsub.f32 %v2329, %v3209
  %v3312 = vsub.f32 %v2334, %v3209
  %v3313 = vsub.f32 %v2337, %v3209
  %v3314 = vsub.f32 %v2342, %v3209
  %v3315 = vsub.f32 %v2345, %v3209
  %v3316 = vsub.f32 %v2350, %v3209
  %v3317 = vsub.f32 %v2353, %v3209
  %v3318 = vsub.f32 %v2358, %v3209
  %v3319 = vsub.f32 %v2361, %v3209
  %v3320 = vsub.f32 %v2366, %v3209
  %v3321 = vsub.f32 %v2369, %v3209
  %v3322 = vsub.f32 %v2374, %v3209
  %v3323 = vsub.f32 %v2377, %v3209
  %v3324 = vsub.f32 %v2382, %v3209
  %v3325 = vsub.f32 %v2385, %v3209
  %v3326 = vsub.f32 %v2390, %v3209
  %v3327 = vsub.f32 %v2393, %v3209
  %v3328 = vsub.f32 %v2398, %v3209
  %v3329 = vsub.f32 %v2401, %v3209
  %v3330 = vsub.f32 %v2406, %v3209
  %v3331 = vsub.f32 %v2409, %v3209
  %v3332 = vsub.f32 %v2414, %v3209
  %v3333 = vsub.f32 %v2417, %v3209
  %v3334 = vsub.f32 %v2422, %v3209
  %v3335 = vsub.f32 %v2425, %v3209
  %v3336 = vsub.f32 %v2430, %v3209
  %v3337 = vsub.f32 %v2433, %v3209
  %v3338 = vsub.f32 %v2438, %v3209
  %v3339 = vsub.f32 %v2441, %v3209
  %v3340 = vsub.f32 %v2446, %v3209
  %v3341 = vsub.f32 %v2449, %v3209
  %v3342 = vsub.f32 %v2454, %v3209
  %v3343 = vsub.f32 %v2457, %v3209
  %v3344 = vsub.f32 %v2462, %v3209
  %v3345 = vsub.f32 %v2465, %v3209
  %v3346 = vsub.f32 %v2470, %v3209
  %v3347 = vsub.f32 %v2473, %v3209
  %v3348 = vsub.f32 %v2478, %v3209
  %v3349 = vsub.f32 %v2481, %v3209
  %v3350 = vsub.f32 %v2486, %v3209
  %v3351 = vsub.f32 %v2489, %v3209
  %v3352 = vsub.f32 %v2494, %v3209
  %v3353 = vsub.f32 %v2497, %v3209
  %v3354 = vsub.f32 %v2502, %v3209
  %v3355 = vsub.f32 %v2505, %v3209
  %v3356 = vsub.f32 %v2510, %v3209
  %v3357 = vsub.f32 %v2513, %v3209
  %v3358 = vsub.f32 %v2518, %v3209
  %v3359 = vsub.f32 %v2521, %v3209
  %v3360 = vsub.f32 %v2526, %v3209
  %v3361 = vsub.f32 %v2529, %v3209
  %v3362 = vsub.f32 %v2534, %v3209
  %v3363 = vsub.f32 %v2537, %v3209
  %v3364 = vsub.f32 %v2542, %v3209
  %v3365 = vsub.f32 %v2545, %v3209
  %v3366 = vsub.f32 %v2550, %v3209
  %v3367 = vsub.f32 %v2553, %v3209
  %v3368 = vsub.f32 %v2558, %v3209
  %v3369 = vsub.f32 %v2561, %v3209
  %v3370 = vsub.f32 %v2566, %v3209
  %v3371 = vsub.f32 %v2569, %v3209
  %v3372 = vsub.f32 %v2574, %v3209
  %v3373 = vsub.f32 %v2577, %v3209
  %v3374 = vsub.f32 %v2582, %v3209
  %v3375 = vsub.f32 %v2585, %v3209
  %v3376 = vsub.f32 %v2590, %v3209
  %v3377 = vsub.f32 %v2593, %v3209
  %v3378 = vsub.f32 %v2598, %v3209
  %v3379 = vsub.f32 %v2601, %v3209
  %v3380 = vsub.f32 %v2606, %v3209
  %v3381 = vsub.f32 %v2609, %v3209
  %v3382 = vsub.f32 %v2614, %v3209
  %v3383 = vsub.f32 %v2617, %v3209
  %v3384 = vsub.f32 %v2622, %v3209
  %v3385 = vsub.f32 %v2625, %v3209
  %v3386 = vsub.f32 %v2630, %v3209
  %v3387 = vsub.f32 %v2633, %v3209
  %v3388 = vsub.f32 %v2638, %v3209
  %v3389 = vsub.f32 %v2641, %v3209
  %v3390 = vsub.f32 %v2646, %v3209
  %v3391 = vsub.f32 %v2649, %v3209
  %v3392 = vsub.f32 %v2654, %v3209
  %v3393 = vsub.f32 %v2657, %v3209
  %v3394 = vsub.f32 %v2662, %v3209
  %v3395 = vsub.f32 %v2665, %v3209
  %v3396 = vsub.f32 %v2670, %v3209
  %v3397 = vsub.f32 %v2673, %v3209
  %v3398 = vsub.f32 %v2678, %v3209
  %v3399 = vsub.f32 %v2681, %v3209
  %v3400 = vsub.f32 %v2686, %v3209
  %v3401 = vsub.f32 %v2689, %v3209
  %v3402 = vsub.f32 %v2694, %v3209
  %v3403 = vsub.f32 %v2697, %v3209
  %v3404 = vsub.f32 %v2702, %v3209
  %v3405 = vsub.f32 %v2705, %v3209
  %v3406 = vsub.f32 %v2710, %v3209
  %v3407 = vsub.f32 %v2713, %v3209
  %v3408 = vsub.f32 %v2718, %v3209
  %v3409 = vsub.f32 %v2721, %v3209
  %v3410 = vsub.f32 %v2726, %v3209
  %v3411 = vsub.f32 %v2729, %v3209
  %v3412 = vsub.f32 %v2734, %v3209
  %v3413 = vsub.f32 %v2737, %v3209
  %v3414 = vsub.f32 %v2742, %v3209
  %v3415 = vsub.f32 %v2745, %v3209
  %v3416 = vsub.f32 %v2750, %v3209
  %v3417 = vsub.f32 %v2753, %v3209
  %v3418 = vsub.f32 %v2758, %v3209
  %v3419 = vsub.f32 %v2761, %v3209
  %v3420 = vsub.f32 %v2766, %v3209
  %v3421 = vsub.f32 %v2769, %v3209
  %v3422 = vsub.f32 %v2774, %v3209
  %v3423 = vsub.f32 %v2777, %v3209
  %v3424 = vsub.f32 %v2782, %v3209
  %v3425 = vsub.f32 %v2785, %v3209
  %v3426 = vsub.f32 %v2790, %v3209
  %v3427 = vsub.f32 %v2793, %v3209
  %v3428 = vsub.f32 %v2798, %v3209
  %v3429 = vsub.f32 %v2801, %v3209
  %v3430 = vsub.f32 %v2806, %v3209
  %v3431 = vsub.f32 %v2809, %v3209
  %v3432 = vsub.f32 %v2814, %v3209
  %v3433 = vsub.f32 %v2817, %v3209
  %v3434 = vsub.f32 %v2822, %v3209
  %v3435 = vsub.f32 %v2825, %v3209
  %v3436 = vsub.f32 %v2830, %v3209
  %v3437 = vsub.f32 %v2833, %v3209
  %v3438 = vsub.f32 %v2838, %v3209
  %v3439 = vsub.f32 %v2841, %v3209
  %v3440 = vsub.f32 %v2846, %v3209
  %v3441 = vsub.f32 %v2849, %v3209
  %v3442 = vsub.f32 %v2854, %v3209
  %v3443 = vsub.f32 %v2857, %v3209
  %v3444 = vsub.f32 %v2862, %v3209
  %v3445 = vsub.f32 %v2865, %v3209
  %v3446 = vsub.f32 %v2870, %v3209
  %v3447 = vsub.f32 %v2873, %v3209
  %v3448 = vsub.f32 %v2878, %v3209
  %v3449 = vsub.f32 %v2881, %v3209
  %v3450 = vsub.f32 %v2886, %v3209
  %v3451 = vsub.f32 %v2889, %v3209
  %v3452 = vsub.f32 %v2894, %v3209
  %v3453 = vsub.f32 %v2897, %v3209
  %v3454 = vsub.f32 %v2902, %v3209
  %v3455 = vsub.f32 %v2905, %v3209
  %v3456 = vsub.f32 %v2910, %v3209
  %v3457 = vsub.f32 %v2913, %v3209
  %v3458 = vsub.f32 %v2918, %v3209
  %v3459 = vsub.f32 %v2921, %v3209
  %v3460 = vsub.f32 %v2926, %v3209
  %v3461 = vsub.f32 %v2929, %v3209
  %v3462 = vsub.f32 %v2934, %v3209
  %v3463 = vsub.f32 %v2937, %v3209
  %v3464 = vsub.f32 %v2942, %v3209
  %v3465 = vsub.f32 %v2945, %v3209
  %v3466 = vmul.f32 %v3210, %v3210
  %v3467 = vmul.f32 %v3211, %v3211
  %v3468 = vmul.f32 %v3212, %v3212
  %v3469 = vmul.f32 %v3213, %v3213
  %v3470 = vmul.f32 %v3214, %v3214
  %v3471 = vmul.f32 %v3215, %v3215
  %v3472 = vmul.f32 %v3216, %v3216
  %v3473 = vmul.f32 %v3217, %v3217
  %v3474 = vmul.f32 %v3218, %v3218
  %v3475 = vmul.f32 %v3219, %v3219
  %v3476 = vmul.f32 %v3220, %v3220
  %v3477 = vmul.f32 %v3221, %v3221
  %v3478 = vmul.f32 %v3222, %v3222
  %v3479 = vmul.f32 %v3223, %v3223
  %v3480 = vmul.f32 %v3224, %v3224
  %v3481 = vmul.f32 %v3225, %v3225
  %v3482 = vmul.f32 %v3226, %v3226
  %v3483 = vmul.f32 %v3227, %v3227
  %v3484 = vmul.f32 %v3228, %v3228
  %v3485 = vmul.f32 %v3229, %v3229
  %v3486 = vmul.f32 %v3230, %v3230
  %v3487 = vmul.f32 %v3231, %v3231
  %v3488 = vmul.f32 %v3232, %v3232
  %v3489 = vmul.f32 %v3233, %v3233
  %v3490 = vmul.f32 %v3234, %v3234
  %v3491 = vmul.f32 %v3235, %v3235
  %v3492 = vmul.f32 %v3236, %v3236
  %v3493 = vmul.f32 %v3237, %v3237
  %v3494 = vmul.f32 %v3238, %v3238
  %v3495 = vmul.f32 %v3239, %v3239
  %v3496 = vmul.f32 %v3240, %v3240
  %v3497 = vmul.f32 %v3241, %v3241
  %v3498 = vmul.f32 %v3242, %v3242
  %v3499 = vmul.f32 %v3243, %v3243
  %v3500 = vmul.f32 %v3244, %v3244
  %v3501 = vmul.f32 %v3245, %v3245
  %v3502 = vmul.f32 %v3246, %v3246
  %v3503 = vmul.f32 %v3247, %v3247
  %v3504 = vmul.f32 %v3248, %v3248
  %v3505 = vmul.f32 %v3249, %v3249
  %v3506 = vmul.f32 %v3250, %v3250
  %v3507 = vmul.f32 %v3251, %v3251
  %v3508 = vmul.f32 %v3252, %v3252
  %v3509 = vmul.f32 %v3253, %v3253
  %v3510 = vmul.f32 %v3254, %v3254
  %v3511 = vmul.f32 %v3255, %v3255
  %v3512 = vmul.f32 %v3256, %v3256
  %v3513 = vmul.f32 %v3257, %v3257
  %v3514 = vmul.f32 %v3258, %v3258
  %v3515 = vmul.f32 %v3259, %v3259
  %v3516 = vmul.f32 %v3260, %v3260
  %v3517 = vmul.f32 %v3261, %v3261
  %v3518 = vmul.f32 %v3262, %v3262
  %v3519 = vmul.f32 %v3263, %v3263
  %v3520 = vmul.f32 %v3264, %v3264
  %v3521 = vmul.f32 %v3265, %v3265
  %v3522 = vmul.f32 %v3266, %v3266
  %v3523 = vmul.f32 %v3267, %v3267
  %v3524 = vmul.f32 %v3268, %v3268
  %v3525 = vmul.f32 %v3269, %v3269
  %v3526 = vmul.f32 %v3270, %v3270
  %v3527 = vmul.f32 %v3271, %v3271
  %v3528 = vmul.f32 %v3272, %v3272
  %v3529 = vmul.f32 %v3273, %v3273
  %v3530 = vmul.f32 %v3274, %v3274
  %v3531 = vmul.f32 %v3275, %v3275
  %v3532 = vmul.f32 %v3276, %v3276
  %v3533 = vmul.f32 %v3277, %v3277
  %v3534 = vmul.f32 %v3278, %v3278
  %v3535 = vmul.f32 %v3279, %v3279
  %v3536 = vmul.f32 %v3280, %v3280
  %v3537 = vmul.f32 %v3281, %v3281
  %v3538 = vmul.f32 %v3282, %v3282
  %v3539 = vmul.f32 %v3283, %v3283
  %v3540 = vmul.f32 %v3284, %v3284
  %v3541 = vmul.f32 %v3285, %v3285
  %v3542 = vmul.f32 %v3286, %v3286
  %v3543 = vmul.f32 %v3287, %v3287
  %v3544 = vmul.f32 %v3288, %v3288
  %v3545 = vmul.f32 %v3289, %v3289
  %v3546 = vmul.f32 %v3290, %v3290
  %v3547 = vmul.f32 %v3291, %v3291
  %v3548 = vmul.f32 %v3292, %v3292
  %v3549 = vmul.f32 %v3293, %v3293
  %v3550 = vmul.f32 %v3294, %v3294
  %v3551 = vmul.f32 %v3295, %v3295
  %v3552 = vmul.f32 %v3296, %v3296
  %v3553 = vmul.f32 %v3297, %v3297
  %v3554 = vmul.f32 %v3298, %v3298
  %v3555 = vmul.f32 %v3299, %v3299
  %v3556 = vmul.f32 %v3300, %v3300
  %v3557 = vmul.f32 %v3301, %v3301
  %v3558 = vmul.f32 %v3302, %v3302
  %v3559 = vmul.f32 %v3303, %v3303
  %v3560 = vmul.f32 %v3304, %v3304
  %v3561 = vmul.f32 %v3305, %v3305
  %v3562 = vmul.f32 %v3306, %v3306
  %v3563 = vmul.f32 %v3307, %v3307
  %v3564 = vmul.f32 %v3308, %v3308
  %v3565 = vmul.f32 %v3309, %v3309
  %v3566 = vmul.f32 %v3310, %v3310
  %v3567 = vmul.f32 %v3311, %v3311
  %v3568 = vmul.f32 %v3312, %v3312
  %v3569 = vmul.f32 %v3313, %v3313
  %v3570 = vmul.f32 %v3314, %v3314
  %v3571 = vmul.f32 %v3315, %v3315
  %v3572 = vmul.f32 %v3316, %v3316
  %v3573 = vmul.f32 %v3317, %v3317
  %v3574 = vmul.f32 %v3318, %v3318
  %v3575 = vmul.f32 %v3319, %v3319
  %v3576 = vmul.f32 %v3320, %v3320
  %v3577 = vmul.f32 %v3321, %v3321
  %v3578 = vmul.f32 %v3322, %v3322
  %v3579 = vmul.f32 %v3323, %v3323
  %v3580 = vmul.f32 %v3324, %v3324
  %v3581 = vmul.f32 %v3325, %v3325
  %v3582 = vmul.f32 %v3326, %v3326
  %v3583 = vmul.f32 %v3327, %v3327
  %v3584 = vmul.f32 %v3328, %v3328
  %v3585 = vmul.f32 %v3329, %v3329
  %v3586 = vmul.f32 %v3330, %v3330
  %v3587 = vmul.f32 %v3331, %v3331
  %v3588 = vmul.f32 %v3332, %v3332
  %v3589 = vmul.f32 %v3333, %v3333
  %v3590 = vmul.f32 %v3334, %v3334
  %v3591 = vmul.f32 %v3335, %v3335
  %v3592 = vmul.f32 %v3336, %v3336
  %v3593 = vmul.f32 %v3337, %v3337
  %v3594 = vmul.f32 %v3338, %v3338
  %v3595 = vmul.f32 %v3339, %v3339
  %v3596 = vmul.f32 %v3340, %v3340
  %v3597 = vmul.f32 %v3341, %v3341
  %v3598 = vmul.f32 %v3342, %v3342
  %v3599 = vmul.f32 %v3343, %v3343
  %v3600 = vmul.f32 %v3344, %v3344
  %v3601 = vmul.f32 %v3345, %v3345
  %v3602 = vmul.f32 %v3346, %v3346
  %v3603 = vmul.f32 %v3347, %v3347
  %v3604 = vmul.f32 %v3348, %v3348
  %v3605 = vmul.f32 %v3349, %v3349
  %v3606 = vmul.f32 %v3350, %v3350
  %v3607 = vmul.f32 %v3351, %v3351
  %v3608 = vmul.f32 %v3352, %v3352
  %v3609 = vmul.f32 %v3353, %v3353
  %v3610 = vmul.f32 %v3354, %v3354
  %v3611 = vmul.f32 %v3355, %v3355
  %v3612 = vmul.f32 %v3356, %v3356
  %v3613 = vmul.f32 %v3357, %v3357
  %v3614 = vmul.f32 %v3358, %v3358
  %v3615 = vmul.f32 %v3359, %v3359
  %v3616 = vmul.f32 %v3360, %v3360
  %v3617 = vmul.f32 %v3361, %v3361
  %v3618 = vmul.f32 %v3362, %v3362
  %v3619 = vmul.f32 %v3363, %v3363
  %v3620 = vmul.f32 %v3364, %v3364
  %v3621 = vmul.f32 %v3365, %v3365
  %v3622 = vmul.f32 %v3366, %v3366
  %v3623 = vmul.f32 %v3367, %v3367
  %v3624 = vmul.f32 %v3368, %v3368
  %v3625 = vmul.f32 %v3369, %v3369
  %v3626 = vmul.f32 %v3370, %v3370
  %v3627 = vmul.f32 %v3371, %v3371
  %v3628 = vmul.f32 %v3372, %v3372
  %v3629 = vmul.f32 %v3373, %v3373
  %v3630 = vmul.f32 %v3374, %v3374
  %v3631 = vmul.f32 %v3375, %v3375
  %v3632 = vmul.f32 %v3376, %v3376
  %v3633 = vmul.f32 %v3377, %v3377
  %v3634 = vmul.f32 %v3378, %v3378
  %v3635 = vmul.f32 %v3379, %v3379
  %v3636 = vmul.f32 %v3380, %v3380
  %v3637 = vmul.f32 %v3381, %v3381
  %v3638 = vmul.f32 %v3382, %v3382
  %v3639 = vmul.f32 %v3383, %v3383
  %v3640 = vmul.f32 %v3384, %v3384
  %v3641 = vmul.f32 %v3385, %v3385
  %v3642 = vmul.f32 %v3386, %v3386
  %v3643 = vmul.f32 %v3387, %v3387
  %v3644 = vmul.f32 %v3388, %v3388
  %v3645 = vmul.f32 %v3389, %v3389
  %v3646 = vmul.f32 %v3390, %v3390
  %v3647 = vmul.f32 %v3391, %v3391
  %v3648 = vmul.f32 %v3392, %v3392
  %v3649 = vmul.f32 %v3393, %v3393
  %v3650 = vmul.f32 %v3394, %v3394
  %v3651 = vmul.f32 %v3395, %v3395
  %v3652 = vmul.f32 %v3396, %v3396
  %v3653 = vmul.f32 %v3397, %v3397
  %v3654 = vmul.f32 %v3398, %v3398
  %v3655 = vmul.f32 %v3399, %v3399
  %v3656 = vmul.f32 %v3400, %v3400
  %v3657 = vmul.f32 %v3401, %v3401
  %v3658 = vmul.f32 %v3402, %v3402
  %v3659 = vmul.f32 %v3403, %v3403
  %v3660 = vmul.f32 %v3404, %v3404
  %v3661 = vmul.f32 %v3405, %v3405
  %v3662 = vmul.f32 %v3406, %v3406
  %v3663 = vmul.f32 %v3407, %v3407
  %v3664 = vmul.f32 %v3408, %v3408
  %v3665 = vmul.f32 %v3409, %v3409
  %v3666 = vmul.f32 %v3410, %v3410
  %v3667 = vmul.f32 %v3411, %v3411
  %v3668 = vmul.f32 %v3412, %v3412
  %v3669 = vmul.f32 %v3413, %v3413
  %v3670 = vmul.f32 %v3414, %v3414
  %v3671 = vmul.f32 %v3415, %v3415
  %v3672 = vmul.f32 %v3416, %v3416
  %v3673 = vmul.f32 %v3417, %v3417
  %v3674 = vmul.f32 %v3418, %v3418
  %v3675 = vmul.f32 %v3419, %v3419
  %v3676 = vmul.f32 %v3420, %v3420
  %v3677 = vmul.f32 %v3421, %v3421
  %v3678 = vmul.f32 %v3422, %v3422
  %v3679 = vmul.f32 %v3423, %v3423
  %v3680 = vmul.f32 %v3424, %v3424
  %v3681 = vmul.f32 %v3425, %v3425
  %v3682 = vmul.f32 %v3426, %v3426
  %v3683 = vmul.f32 %v3427, %v3427
  %v3684 = vmul.f32 %v3428, %v3428
  %v3685 = vmul.f32 %v3429, %v3429
  %v3686 = vmul.f32 %v3430, %v3430
  %v3687 = vmul.f32 %v3431, %v3431
  %v3688 = vmul.f32 %v3432, %v3432
  %v3689 = vmul.f32 %v3433, %v3433
  %v3690 = vmul.f32 %v3434, %v3434
  %v3691 = vmul.f32 %v3435, %v3435
  %v3692 = vmul.f32 %v3436, %v3436
  %v3693 = vmul.f32 %v3437, %v3437
  %v3694 = vmul.f32 %v3438, %v3438
  %v3695 = vmul.f32 %v3439, %v3439
  %v3696 = vmul.f32 %v3440, %v3440
  %v3697 = vmul.f32 %v3441, %v3441
  %v3698 = vmul.f32 %v3442, %v3442
  %v3699 = vmul.f32 %v3443, %v3443
  %v3700 = vmul.f32 %v3444, %v3444
  %v3701 = vmul.f32 %v3445, %v3445
  %v3702 = vmul.f32 %v3446, %v3446
  %v3703 = vmul.f32 %v3447, %v3447
  %v3704 = vmul.f32 %v3448, %v3448
  %v3705 = vmul.f32 %v3449, %v3449
  %v3706 = vmul.f32 %v3450, %v3450
  %v3707 = vmul.f32 %v3451, %v3451
  %v3708 = vmul.f32 %v3452, %v3452
  %v3709 = vmul.f32 %v3453, %v3453
  %v3710 = vmul.f32 %v3454, %v3454
  %v3711 = vmul.f32 %v3455, %v3455
  %v3712 = vmul.f32 %v3456, %v3456
  %v3713 = vmul.f32 %v3457, %v3457
  %v3714 = vmul.f32 %v3458, %v3458
  %v3715 = vmul.f32 %v3459, %v3459
  %v3716 = vmul.f32 %v3460, %v3460
  %v3717 = vmul.f32 %v3461, %v3461
  %v3718 = vmul.f32 %v3462, %v3462
  %v3719 = vmul.f32 %v3463, %v3463
  %v3720 = vmul.f32 %v3464, %v3464
  %v3721 = vmul.f32 %v3465, %v3465
  %v3722 = vadd.f32 %v3466, %v3467
  %v3723 = vadd.f32 %v3722, %v3468
  %v3724 = vadd.f32 %v3723, %v3469
  %v3725 = vadd.f32 %v3724, %v3470
  %v3726 = vadd.f32 %v3725, %v3471
  %v3727 = vadd.f32 %v3726, %v3472
  %v3728 = vadd.f32 %v3727, %v3473
  %v3729 = vadd.f32 %v3728, %v3474
  %v3730 = vadd.f32 %v3729, %v3475
  %v3731 = vadd.f32 %v3730, %v3476
  %v3732 = vadd.f32 %v3731, %v3477
  %v3733 = vadd.f32 %v3732, %v3478
  %v3734 = vadd.f32 %v3733, %v3479
  %v3735 = vadd.f32 %v3734, %v3480
  %v3736 = vadd.f32 %v3735, %v3481
  %v3737 = vadd.f32 %v3736, %v3482
  %v3738 = vadd.f32 %v3737, %v3483
  %v3739 = vadd.f32 %v3738, %v3484
  %v3740 = vadd.f32 %v3739, %v3485
  %v3741 = vadd.f32 %v3740, %v3486
  %v3742 = vadd.f32 %v3741, %v3487
  %v3743 = vadd.f32 %v3742, %v3488
  %v3744 = vadd.f32 %v3743, %v3489
  %v3745 = vadd.f32 %v3744, %v3490
  %v3746 = vadd.f32 %v3745, %v3491
  %v3747 = vadd.f32 %v3746, %v3492
  %v3748 = vadd.f32 %v3747, %v3493
  %v3749 = vadd.f32 %v3748, %v3494
  %v3750 = vadd.f32 %v3749, %v3495
  %v3751 = vadd.f32 %v3750, %v3496
  %v3752 = vadd.f32 %v3751, %v3497
  %v3753 = vadd.f32 %v3752, %v3498
  %v3754 = vadd.f32 %v3753, %v3499
  %v3755 = vadd.f32 %v3754, %v3500
  %v3756 = vadd.f32 %v3755, %v3501
  %v3757 = vadd.f32 %v3756, %v3502
  %v3758 = vadd.f32 %v3757, %v3503
  %v3759 = vadd.f32 %v3758, %v3504
  %v3760 = vadd.f32 %v3759, %v3505
  %v3761 = vadd.f32 %v3760, %v3506
  %v3762 = vadd.f32 %v3761, %v3507
  %v3763 = vadd.f32 %v3762, %v3508
  %v3764 = vadd.f32 %v3763, %v3509
  %v3765 = vadd.f32 %v3764, %v3510
  %v3766 = vadd.f32 %v3765, %v3511
  %v3767 = vadd.f32 %v3766, %v3512
  %v3768 = vadd.f32 %v3767, %v3513
  %v3769 = vadd.f32 %v3768, %v3514
  %v3770 = vadd.f32 %v3769, %v3515
  %v3771 = vadd.f32 %v3770, %v3516
  %v3772 = vadd.f32 %v3771, %v3517
  %v3773 = vadd.f32 %v3772, %v3518
  %v3774 = vadd.f32 %v3773, %v3519
  %v3775 = vadd.f32 %v3774, %v3520
  %v3776 = vadd.f32 %v3775, %v3521
  %v3777 = vadd.f32 %v3776, %v3522
  %v3778 = vadd.f32 %v3777, %v3523
  %v3779 = vadd.f32 %v3778, %v3524
  %v3780 = vadd.f32 %v3779, %v3525
  %v3781 = vadd.f32 %v3780, %v3526
  %v3782 = vadd.f32 %v3781, %v3527
  %v3783 = vadd.f32 %v3782, %v3528
  %v3784 = vadd.f32 %v3783, %v3529
  %v3785 = vadd.f32 %v3784, %v3530
  %v3786 = vadd.f32 %v3785, %v3531
  %v3787 = vadd.f32 %v3786, %v3532
  %v3788 = vadd.f32 %v3787, %v3533
  %v3789 = vadd.f32 %v3788, %v3534
  %v3790 = vadd.f32 %v3789, %v3535
  %v3791 = vadd.f32 %v3790, %v3536
  %v3792 = vadd.f32 %v3791, %v3537
  %v3793 = vadd.f32 %v3792, %v3538
  %v3794 = vadd.f32 %v3793, %v3539
  %v3795 = vadd.f32 %v3794, %v3540
  %v3796 = vadd.f32 %v3795, %v3541
  %v3797 = vadd.f32 %v3796, %v3542
  %v3798 = vadd.f32 %v3797, %v3543
  %v3799 = vadd.f32 %v3798, %v3544
  %v3800 = vadd.f32 %v3799, %v3545
  %v3801 = vadd.f32 %v3800, %v3546
  %v3802 = vadd.f32 %v3801, %v3547
  %v3803 = vadd.f32 %v3802, %v3548
  %v3804 = vadd.f32 %v3803, %v3549
  %v3805 = vadd.f32 %v3804, %v3550
  %v3806 = vadd.f32 %v3805, %v3551
  %v3807 = vadd.f32 %v3806, %v3552
  %v3808 = vadd.f32 %v3807, %v3553
  %v3809 = vadd.f32 %v3808, %v3554
  %v3810 = vadd.f32 %v3809, %v3555
  %v3811 = vadd.f32 %v3810, %v3556
  %v3812 = vadd.f32 %v3811, %v3557
  %v3813 = vadd.f32 %v3812, %v3558
  %v3814 = vadd.f32 %v3813, %v3559
  %v3815 = vadd.f32 %v3814, %v3560
  %v3816 = vadd.f32 %v3815, %v3561
  %v3817 = vadd.f32 %v3816, %v3562
  %v3818 = vadd.f32 %v3817, %v3563
  %v3819 = vadd.f32 %v3818, %v3564
  %v3820 = vadd.f32 %v3819, %v3565
  %v3821 = vadd.f32 %v3820, %v3566
  %v3822 = vadd.f32 %v3821, %v3567
  %v3823 = vadd.f32 %v3822, %v3568
  %v3824 = vadd.f32 %v3823, %v3569
  %v3825 = vadd.f32 %v3824, %v3570
  %v3826 = vadd.f32 %v3825, %v3571
  %v3827 = vadd.f32 %v3826, %v3572
  %v3828 = vadd.f32 %v3827, %v3573
  %v3829 = vadd.f32 %v3828, %v3574
  %v3830 = vadd.f32 %v3829, %v3575
  %v3831 = vadd.f32 %v3830, %v3576
  %v3832 = vadd.f32 %v3831, %v3577
  %v3833 = vadd.f32 %v3832, %v3578
  %v3834 = vadd.f32 %v3833, %v3579
  %v3835 = vadd.f32 %v3834, %v3580
  %v3836 = vadd.f32 %v3835, %v3581
  %v3837 = vadd.f32 %v3836, %v3582
  %v3838 = vadd.f32 %v3837, %v3583
  %v3839 = vadd.f32 %v3838, %v3584
  %v3840 = vadd.f32 %v3839, %v3585
  %v3841 = vadd.f32 %v3840, %v3586
  %v3842 = vadd.f32 %v3841, %v3587
  %v3843 = vadd.f32 %v3842, %v3588
  %v3844 = vadd.f32 %v3843, %v3589
  %v3845 = vadd.f32 %v3844, %v3590
  %v3846 = vadd.f32 %v3845, %v3591
  %v3847 = vadd.f32 %v3846, %v3592
  %v3848 = vadd.f32 %v3847, %v3593
  %v3849 = vadd.f32 %v3848, %v3594
  %v3850 = vadd.f32 %v3849, %v3595
  %v3851 = vadd.f32 %v3850, %v3596
  %v3852 = vadd.f32 %v3851, %v3597
  %v3853 = vadd.f32 %v3852, %v3598
  %v3854 = vadd.f32 %v3853, %v3599
  %v3855 = vadd.f32 %v3854, %v3600
  %v3856 = vadd.f32 %v3855, %v3601
  %v3857 = vadd.f32 %v3856, %v3602
  %v3858 = vadd.f32 %v3857, %v3603
  %v3859 = vadd.f32 %v3858, %v3604
  %v3860 = vadd.f32 %v3859, %v3605
  %v3861 = vadd.f32 %v3860, %v3606
  %v3862 = vadd.f32 %v3861, %v3607
  %v3863 = vadd.f32 %v3862, %v3608
  %v3864 = vadd.f32 %v3863, %v3609
  %v3865 = vadd.f32 %v3864, %v3610
  %v3866 = vadd.f32 %v3865, %v3611
  %v3867 = vadd.f32 %v3866, %v3612
  %v3868 = vadd.f32 %v3867, %v3613
  %v3869 = vadd.f32 %v3868, %v3614
  %v3870 = vadd.f32 %v3869, %v3615
  %v3871 = vadd.f32 %v3870, %v3616
  %v3872 = vadd.f32 %v3871, %v3617
  %v3873 = vadd.f32 %v3872, %v3618
  %v3874 = vadd.f32 %v3873, %v3619
  %v3875 = vadd.f32 %v3874, %v3620
  %v3876 = vadd.f32 %v3875, %v3621
  %v3877 = vadd.f32 %v3876, %v3622
  %v3878 = vadd.f32 %v3877, %v3623
  %v3879 = vadd.f32 %v3878, %v3624
  %v3880 = vadd.f32 %v3879, %v3625
  %v3881 = vadd.f32 %v3880, %v3626
  %v3882 = vadd.f32 %v3881, %v3627
  %v3883 = vadd.f32 %v3882, %v3628
  %v3884 = vadd.f32 %v3883, %v3629
  %v3885 = vadd.f32 %v3884, %v3630
  %v3886 = vadd.f32 %v3885, %v3631
  %v3887 = vadd.f32 %v3886, %v3632
  %v3888 = vadd.f32 %v3887, %v3633
  %v3889 = vadd.f32 %v3888, %v3634
  %v3890 = vadd.f32 %v3889, %v3635
  %v3891 = vadd.f32 %v3890, %v3636
  %v3892 = vadd.f32 %v3891, %v3637
  %v3893 = vadd.f32 %v3892, %v3638
  %v3894 = vadd.f32 %v3893, %v3639
  %v3895 = vadd.f32 %v3894, %v3640
  %v3896 = vadd.f32 %v3895, %v3641
  %v3897 = vadd.f32 %v3896, %v3642
  %v3898 = vadd.f32 %v3897, %v3643
  %v3899 = vadd.f32 %v3898, %v3644
  %v3900 = vadd.f32 %v3899, %v3645
  %v3901 = vadd.f32 %v3900, %v3646
  %v3902 = vadd.f32 %v3901, %v3647
  %v3903 = vadd.f32 %v3902, %v3648
  %v3904 = vadd.f32 %v3903, %v3649
  %v3905 = vadd.f32 %v3904, %v3650
  %v3906 = vadd.f32 %v3905, %v3651
  %v3907 = vadd.f32 %v3906, %v3652
  %v3908 = vadd.f32 %v3907, %v3653
  %v3909 = vadd.f32 %v3908, %v3654
  %v3910 = vadd.f32 %v3909, %v3655
  %v3911 = vadd.f32 %v3910, %v3656
  %v3912 = vadd.f32 %v3911, %v3657
  %v3913 = vadd.f32 %v3912, %v3658
  %v3914 = vadd.f32 %v3913, %v3659
  %v3915 = vadd.f32 %v3914, %v3660
  %v3916 = vadd.f32 %v3915, %v3661
  %v3917 = vadd.f32 %v3916, %v3662
  %v3918 = vadd.f32 %v3917, %v3663
  %v3919 = vadd.f32 %v3918, %v3664
  %v3920 = vadd.f32 %v3919, %v3665
  %v3921 = vadd.f32 %v3920, %v3666
  %v3922 = vadd.f32 %v3921, %v3667
  %v3923 = vadd.f32 %v3922, %v3668
  %v3924 = vadd.f32 %v3923, %v3669
  %v3925 = vadd.f32 %v3924, %v3670
  %v3926 = vadd.f32 %v3925, %v3671
  %v3927 = vadd.f32 %v3926, %v3672
  %v3928 = vadd.f32 %v3927, %v3673
  %v3929 = vadd.f32 %v3928, %v3674
  %v3930 = vadd.f32 %v3929, %v3675
  %v3931 = vadd.f32 %v3930, %v3676
  %v3932 = vadd.f32 %v3931, %v3677
  %v3933 = vadd.f32 %v3932, %v3678
  %v3934 = vadd.f32 %v3933, %v3679
  %v3935 = vadd.f32 %v3934, %v3680
  %v3936 = vadd.f32 %v3935, %v3681
  %v3937 = vadd.f32 %v3936, %v3682
  %v3938 = vadd.f32 %v3937, %v3683
  %v3939 = vadd.f32 %v3938, %v3684
  %v3940 = vadd.f32 %v3939, %v3685
  %v3941 = vadd.f32 %v3940, %v3686
  %v3942 = vadd.f32 %v3941, %v3687
  %v3943 = vadd.f32 %v3942, %v3688
  %v3944 = vadd.f32 %v3943, %v3689
  %v3945 = vadd.f32 %v3944, %v3690
  %v3946 = vadd.f32 %v3945, %v3691
  %v3947 = vadd.f32 %v3946, %v3692
  %v3948 = vadd.f32 %v3947, %v3693
  %v3949 = vadd.f32 %v3948, %v3694
  %v3950 = vadd.f32 %v3949, %v3695
  %v3951 = vadd.f32 %v3950, %v3696
  %v3952 = vadd.f32 %v3951, %v3697
  %v3953 = vadd.f32 %v3952, %v3698
  %v3954 = vadd.f32 %v3953, %v3699
  %v3955 = vadd.f32 %v3954, %v3700
  %v3956 = vadd.f32 %v3955, %v3701
  %v3957 = vadd.f32 %v3956, %v3702
  %v3958 = vadd.f32 %v3957, %v3703
  %v3959 = vadd.f32 %v3958, %v3704
  %v3960 = vadd.f32 %v3959, %v3705
  %v3961 = vadd.f32 %v3960, %v3706
  %v3962 = vadd.f32 %v3961, %v3707
  %v3963 = vadd.f32 %v3962, %v3708
  %v3964 = vadd.f32 %v3963, %v3709
  %v3965 = vadd.f32 %v3964, %v3710
  %v3966 = vadd.f32 %v3965, %v3711
  %v3967 = vadd.f32 %v3966, %v3712
  %v3968 = vadd.f32 %v3967, %v3713
  %v3969 = vadd.f32 %v3968, %v3714
  %v3970 = vadd.f32 %v3969, %v3715
  %v3971 = vadd.f32 %v3970, %v3716
  %v3972 = vadd.f32 %v3971, %v3717
  %v3973 = vadd.f32 %v3972, %v3718
  %v3974 = vadd.f32 %v3973, %v3719
  %v3975 = vadd.f32 %v3974, %v3720
  %v3976 = vadd.f32 %v3975, %v3721
  %v3977 = vrot.slane %v3976, 4
  %v3978 = vadd.f32 %v3976, %v3977
  %v3979 = vrot.slane %v3978, 2
  %v3980 = vadd.f32 %v3978, %v3979
  %v3981 = vrot.slane %v3980, 1
  %v3982 = vadd.f32 %v3980, %v3981
  %v3983 = vmul.f32 %v3982, 0.00048828125
  %v3984 = vld [vmem:[%s2] sm:$0x1]
  %v3985 = vadd.f32 %v3983, 1e-05
  %v3986 = vrsqrt.pop %v3985
  %v3987 = vmul.f32 %v3984, %v3986
  %v3989 = vlaneseq
  %v3990 = vshrl.u32 %v3989, 7
  %v3991 = vsub.s32 0, %v3990
  %v3992 = vrot.slane %v3987, %v3991
  %v3994 = vmul.f32 %v3210, %v3992
  %v3995 = vmul.f32 %v3211, %v3992
  %v3996 = vmul.f32 %v3212, %v3992
  %v3997 = vmul.f32 %v3213, %v3992
  %v3998 = vmul.f32 %v3214, %v3992
  %v3999 = vmul.f32 %v3215, %v3992
  %v4000 = vmul.f32 %v3216, %v3992
  %v4001 = vmul.f32 %v3217, %v3992
  %v4002 = vmul.f32 %v3218, %v3992
  %v4003 = vmul.f32 %v3219, %v3992
  %v4004 = vmul.f32 %v3220, %v3992
  %v4005 = vmul.f32 %v3221, %v3992
  %v4006 = vmul.f32 %v3222, %v3992
  %v4007 = vmul.f32 %v3223, %v3992
  %v4008 = vmul.f32 %v3224, %v3992
  %v4009 = vmul.f32 %v3225, %v3992
  %v4010 = vmul.f32 %v3226, %v3992
  %v4011 = vmul.f32 %v3227, %v3992
  %v4012 = vmul.f32 %v3228, %v3992
  %v4013 = vmul.f32 %v3229, %v3992
  %v4014 = vmul.f32 %v3230, %v3992
  %v4015 = vmul.f32 %v3231, %v3992
  %v4016 = vmul.f32 %v3232, %v3992
  %v4017 = vmul.f32 %v3233, %v3992
  %v4018 = vmul.f32 %v3234, %v3992
  %v4019 = vmul.f32 %v3235, %v3992
  %v4020 = vmul.f32 %v3236, %v3992
  %v4021 = vmul.f32 %v3237, %v3992
  %v4022 = vmul.f32 %v3238, %v3992
  %v4023 = vmul.f32 %v3239, %v3992
  %v4024 = vmul.f32 %v3240, %v3992
  %v4025 = vmul.f32 %v3241, %v3992
  %v4026 = vmul.f32 %v3242, %v3992
  %v4027 = vmul.f32 %v3243, %v3992
  %v4028 = vmul.f32 %v3244, %v3992
  %v4029 = vmul.f32 %v3245, %v3992
  %v4030 = vmul.f32 %v3246, %v3992
  %v4031 = vmul.f32 %v3247, %v3992
  %v4032 = vmul.f32 %v3248, %v3992
  %v4033 = vmul.f32 %v3249, %v3992
  %v4034 = vmul.f32 %v3250, %v3992
  %v4035 = vmul.f32 %v3251, %v3992
  %v4036 = vmul.f32 %v3252, %v3992
  %v4037 = vmul.f32 %v3253, %v3992
  %v4038 = vmul.f32 %v3254, %v3992
  %v4039 = vmul.f32 %v3255, %v3992
  %v4040 = vmul.f32 %v3256, %v3992
  %v4041 = vmul.f32 %v3257, %v3992
  %v4042 = vmul.f32 %v3258, %v3992
  %v4043 = vmul.f32 %v3259, %v3992
  %v4044 = vmul.f32 %v3260, %v3992
  %v4045 = vmul.f32 %v3261, %v3992
  %v4046 = vmul.f32 %v3262, %v3992
  %v4047 = vmul.f32 %v3263, %v3992
  %v4048 = vmul.f32 %v3264, %v3992
  %v4049 = vmul.f32 %v3265, %v3992
  %v4050 = vmul.f32 %v3266, %v3992
  %v4051 = vmul.f32 %v3267, %v3992
  %v4052 = vmul.f32 %v3268, %v3992
  %v4053 = vmul.f32 %v3269, %v3992
  %v4054 = vmul.f32 %v3270, %v3992
  %v4055 = vmul.f32 %v3271, %v3992
  %v4056 = vmul.f32 %v3272, %v3992
  %v4057 = vmul.f32 %v3273, %v3992
  %v4058 = vmul.f32 %v3274, %v3992
  %v4059 = vmul.f32 %v3275, %v3992
  %v4060 = vmul.f32 %v3276, %v3992
  %v4061 = vmul.f32 %v3277, %v3992
  %v4062 = vmul.f32 %v3278, %v3992
  %v4063 = vmul.f32 %v3279, %v3992
  %v4064 = vmul.f32 %v3280, %v3992
  %v4065 = vmul.f32 %v3281, %v3992
  %v4066 = vmul.f32 %v3282, %v3992
  %v4067 = vmul.f32 %v3283, %v3992
  %v4068 = vmul.f32 %v3284, %v3992
  %v4069 = vmul.f32 %v3285, %v3992
  %v4070 = vmul.f32 %v3286, %v3992
  %v4071 = vmul.f32 %v3287, %v3992
  %v4072 = vmul.f32 %v3288, %v3992
  %v4073 = vmul.f32 %v3289, %v3992
  %v4074 = vmul.f32 %v3290, %v3992
  %v4075 = vmul.f32 %v3291, %v3992
  %v4076 = vmul.f32 %v3292, %v3992
  %v4077 = vmul.f32 %v3293, %v3992
  %v4078 = vmul.f32 %v3294, %v3992
  %v4079 = vmul.f32 %v3295, %v3992
  %v4080 = vmul.f32 %v3296, %v3992
  %v4081 = vmul.f32 %v3297, %v3992
  %v4082 = vmul.f32 %v3298, %v3992
  %v4083 = vmul.f32 %v3299, %v3992
  %v4084 = vmul.f32 %v3300, %v3992
  %v4085 = vmul.f32 %v3301, %v3992
  %v4086 = vmul.f32 %v3302, %v3992
  %v4087 = vmul.f32 %v3303, %v3992
  %v4088 = vmul.f32 %v3304, %v3992
  %v4089 = vmul.f32 %v3305, %v3992
  %v4090 = vmul.f32 %v3306, %v3992
  %v4091 = vmul.f32 %v3307, %v3992
  %v4092 = vmul.f32 %v3308, %v3992
  %v4093 = vmul.f32 %v3309, %v3992
  %v4094 = vmul.f32 %v3310, %v3992
  %v4095 = vmul.f32 %v3311, %v3992
  %v4096 = vmul.f32 %v3312, %v3992
  %v4097 = vmul.f32 %v3313, %v3992
  %v4098 = vmul.f32 %v3314, %v3992
  %v4099 = vmul.f32 %v3315, %v3992
  %v4100 = vmul.f32 %v3316, %v3992
  %v4101 = vmul.f32 %v3317, %v3992
  %v4102 = vmul.f32 %v3318, %v3992
  %v4103 = vmul.f32 %v3319, %v3992
  %v4104 = vmul.f32 %v3320, %v3992
  %v4105 = vmul.f32 %v3321, %v3992
  %v4106 = vmul.f32 %v3322, %v3992
  %v4107 = vmul.f32 %v3323, %v3992
  %v4108 = vmul.f32 %v3324, %v3992
  %v4109 = vmul.f32 %v3325, %v3992
  %v4110 = vmul.f32 %v3326, %v3992
  %v4111 = vmul.f32 %v3327, %v3992
  %v4112 = vmul.f32 %v3328, %v3992
  %v4113 = vmul.f32 %v3329, %v3992
  %v4114 = vmul.f32 %v3330, %v3992
  %v4115 = vmul.f32 %v3331, %v3992
  %v4116 = vmul.f32 %v3332, %v3992
  %v4117 = vmul.f32 %v3333, %v3992
  %v4118 = vmul.f32 %v3334, %v3992
  %v4119 = vmul.f32 %v3335, %v3992
  %v4120 = vmul.f32 %v3336, %v3992
  %v4121 = vmul.f32 %v3337, %v3992
  %v4122 = vmul.f32 %v3338, %v3992
  %v4123 = vmul.f32 %v3339, %v3992
  %v4124 = vmul.f32 %v3340, %v3992
  %v4125 = vmul.f32 %v3341, %v3992
  %v4126 = vmul.f32 %v3342, %v3992
  %v4127 = vmul.f32 %v3343, %v3992
  %v4128 = vmul.f32 %v3344, %v3992
  %v4129 = vmul.f32 %v3345, %v3992
  %v4130 = vmul.f32 %v3346, %v3992
  %v4131 = vmul.f32 %v3347, %v3992
  %v4132 = vmul.f32 %v3348, %v3992
  %v4133 = vmul.f32 %v3349, %v3992
  %v4134 = vmul.f32 %v3350, %v3992
  %v4135 = vmul.f32 %v3351, %v3992
  %v4136 = vmul.f32 %v3352, %v3992
  %v4137 = vmul.f32 %v3353, %v3992
  %v4138 = vmul.f32 %v3354, %v3992
  %v4139 = vmul.f32 %v3355, %v3992
  %v4140 = vmul.f32 %v3356, %v3992
  %v4141 = vmul.f32 %v3357, %v3992
  %v4142 = vmul.f32 %v3358, %v3992
  %v4143 = vmul.f32 %v3359, %v3992
  %v4144 = vmul.f32 %v3360, %v3992
  %v4145 = vmul.f32 %v3361, %v3992
  %v4146 = vmul.f32 %v3362, %v3992
  %v4147 = vmul.f32 %v3363, %v3992
  %v4148 = vmul.f32 %v3364, %v3992
  %v4149 = vmul.f32 %v3365, %v3992
  %v4150 = vmul.f32 %v3366, %v3992
  %v4151 = vmul.f32 %v3367, %v3992
  %v4152 = vmul.f32 %v3368, %v3992
  %v4153 = vmul.f32 %v3369, %v3992
  %v4154 = vmul.f32 %v3370, %v3992
  %v4155 = vmul.f32 %v3371, %v3992
  %v4156 = vmul.f32 %v3372, %v3992
  %v4157 = vmul.f32 %v3373, %v3992
  %v4158 = vmul.f32 %v3374, %v3992
  %v4159 = vmul.f32 %v3375, %v3992
  %v4160 = vmul.f32 %v3376, %v3992
  %v4161 = vmul.f32 %v3377, %v3992
  %v4162 = vmul.f32 %v3378, %v3992
  %v4163 = vmul.f32 %v3379, %v3992
  %v4164 = vmul.f32 %v3380, %v3992
  %v4165 = vmul.f32 %v3381, %v3992
  %v4166 = vmul.f32 %v3382, %v3992
  %v4167 = vmul.f32 %v3383, %v3992
  %v4168 = vmul.f32 %v3384, %v3992
  %v4169 = vmul.f32 %v3385, %v3992
  %v4170 = vmul.f32 %v3386, %v3992
  %v4171 = vmul.f32 %v3387, %v3992
  %v4172 = vmul.f32 %v3388, %v3992
  %v4173 = vmul.f32 %v3389, %v3992
  %v4174 = vmul.f32 %v3390, %v3992
  %v4175 = vmul.f32 %v3391, %v3992
  %v4176 = vmul.f32 %v3392, %v3992
  %v4177 = vmul.f32 %v3393, %v3992
  %v4178 = vmul.f32 %v3394, %v3992
  %v4179 = vmul.f32 %v3395, %v3992
  %v4180 = vmul.f32 %v3396, %v3992
  %v4181 = vmul.f32 %v3397, %v3992
  %v4182 = vmul.f32 %v3398, %v3992
  %v4183 = vmul.f32 %v3399, %v3992
  %v4184 = vmul.f32 %v3400, %v3992
  %v4185 = vmul.f32 %v3401, %v3992
  %v4186 = vmul.f32 %v3402, %v3992
  %v4187 = vmul.f32 %v3403, %v3992
  %v4188 = vmul.f32 %v3404, %v3992
  %v4189 = vmul.f32 %v3405, %v3992
  %v4190 = vmul.f32 %v3406, %v3992
  %v4191 = vmul.f32 %v3407, %v3992
  %v4192 = vmul.f32 %v3408, %v3992
  %v4193 = vmul.f32 %v3409, %v3992
  %v4194 = vmul.f32 %v3410, %v3992
  %v4195 = vmul.f32 %v3411, %v3992
  %v4196 = vmul.f32 %v3412, %v3992
  %v4197 = vmul.f32 %v3413, %v3992
  %v4198 = vmul.f32 %v3414, %v3992
  %v4199 = vmul.f32 %v3415, %v3992
  %v4200 = vmul.f32 %v3416, %v3992
  %v4201 = vmul.f32 %v3417, %v3992
  %v4202 = vmul.f32 %v3418, %v3992
  %v4203 = vmul.f32 %v3419, %v3992
  %v4204 = vmul.f32 %v3420, %v3992
  %v4205 = vmul.f32 %v3421, %v3992
  %v4206 = vmul.f32 %v3422, %v3992
  %v4207 = vmul.f32 %v3423, %v3992
  %v4208 = vmul.f32 %v3424, %v3992
  %v4209 = vmul.f32 %v3425, %v3992
  %v4210 = vmul.f32 %v3426, %v3992
  %v4211 = vmul.f32 %v3427, %v3992
  %v4212 = vmul.f32 %v3428, %v3992
  %v4213 = vmul.f32 %v3429, %v3992
  %v4214 = vmul.f32 %v3430, %v3992
  %v4215 = vmul.f32 %v3431, %v3992
  %v4216 = vmul.f32 %v3432, %v3992
  %v4217 = vmul.f32 %v3433, %v3992
  %v4218 = vmul.f32 %v3434, %v3992
  %v4219 = vmul.f32 %v3435, %v3992
  %v4220 = vmul.f32 %v3436, %v3992
  %v4221 = vmul.f32 %v3437, %v3992
  %v4222 = vmul.f32 %v3438, %v3992
  %v4223 = vmul.f32 %v3439, %v3992
  %v4224 = vmul.f32 %v3440, %v3992
  %v4225 = vmul.f32 %v3441, %v3992
  %v4226 = vmul.f32 %v3442, %v3992
  %v4227 = vmul.f32 %v3443, %v3992
  %v4228 = vmul.f32 %v3444, %v3992
  %v4229 = vmul.f32 %v3445, %v3992
  %v4230 = vmul.f32 %v3446, %v3992
  %v4231 = vmul.f32 %v3447, %v3992
  %v4232 = vmul.f32 %v3448, %v3992
  %v4233 = vmul.f32 %v3449, %v3992
  %v4234 = vmul.f32 %v3450, %v3992
  %v4235 = vmul.f32 %v3451, %v3992
  %v4236 = vmul.f32 %v3452, %v3992
  %v4237 = vmul.f32 %v3453, %v3992
  %v4238 = vmul.f32 %v3454, %v3992
  %v4239 = vmul.f32 %v3455, %v3992
  %v4240 = vmul.f32 %v3456, %v3992
  %v4241 = vmul.f32 %v3457, %v3992
  %v4242 = vmul.f32 %v3458, %v3992
  %v4243 = vmul.f32 %v3459, %v3992
  %v4244 = vmul.f32 %v3460, %v3992
  %v4245 = vmul.f32 %v3461, %v3992
  %v4246 = vmul.f32 %v3462, %v3992
  %v4247 = vmul.f32 %v3463, %v3992
  %v4248 = vmul.f32 %v3464, %v3992
  %v4249 = vmul.f32 %v3465, %v3992
  %v4250 = vld [vmem:[%s3] sm:$0x1]
  %v4252 = vlaneseq
  %v4253 = vshrl.u32 %v4252, 7
  %v4254 = vsub.s32 0, %v4253
  %v4255 = vrot.slane %v4250, %v4254
  %v4257 = vadd.f32 %v3994, %v4255
  %v4258 = vadd.f32 %v3995, %v4255
  %v4259 = vadd.f32 %v3996, %v4255
  %v4260 = vadd.f32 %v3997, %v4255
  %v4261 = vadd.f32 %v3998, %v4255
  %v4262 = vadd.f32 %v3999, %v4255
  %v4263 = vadd.f32 %v4000, %v4255
  %v4264 = vadd.f32 %v4001, %v4255
  %v4265 = vadd.f32 %v4002, %v4255
  %v4266 = vadd.f32 %v4003, %v4255
  %v4267 = vadd.f32 %v4004, %v4255
  %v4268 = vadd.f32 %v4005, %v4255
  %v4269 = vadd.f32 %v4006, %v4255
  %v4270 = vadd.f32 %v4007, %v4255
  %v4271 = vadd.f32 %v4008, %v4255
  %v4272 = vadd.f32 %v4009, %v4255
  %v4273 = vadd.f32 %v4010, %v4255
  %v4274 = vadd.f32 %v4011, %v4255
  %v4275 = vadd.f32 %v4012, %v4255
  %v4276 = vadd.f32 %v4013, %v4255
  %v4277 = vadd.f32 %v4014, %v4255
  %v4278 = vadd.f32 %v4015, %v4255
  %v4279 = vadd.f32 %v4016, %v4255
  %v4280 = vadd.f32 %v4017, %v4255
  %v4281 = vadd.f32 %v4018, %v4255
  %v4282 = vadd.f32 %v4019, %v4255
  %v4283 = vadd.f32 %v4020, %v4255
  %v4284 = vadd.f32 %v4021, %v4255
  %v4285 = vadd.f32 %v4022, %v4255
  %v4286 = vadd.f32 %v4023, %v4255
  %v4287 = vadd.f32 %v4024, %v4255
  %v4288 = vadd.f32 %v4025, %v4255
  %v4289 = vadd.f32 %v4026, %v4255
  %v4290 = vadd.f32 %v4027, %v4255
  %v4291 = vadd.f32 %v4028, %v4255
  %v4292 = vadd.f32 %v4029, %v4255
  %v4293 = vadd.f32 %v4030, %v4255
  %v4294 = vadd.f32 %v4031, %v4255
  %v4295 = vadd.f32 %v4032, %v4255
  %v4296 = vadd.f32 %v4033, %v4255
  %v4297 = vadd.f32 %v4034, %v4255
  %v4298 = vadd.f32 %v4035, %v4255
  %v4299 = vadd.f32 %v4036, %v4255
  %v4300 = vadd.f32 %v4037, %v4255
  %v4301 = vadd.f32 %v4038, %v4255
  %v4302 = vadd.f32 %v4039, %v4255
  %v4303 = vadd.f32 %v4040, %v4255
  %v4304 = vadd.f32 %v4041, %v4255
  %v4305 = vadd.f32 %v4042, %v4255
  %v4306 = vadd.f32 %v4043, %v4255
  %v4307 = vadd.f32 %v4044, %v4255
  %v4308 = vadd.f32 %v4045, %v4255
  %v4309 = vadd.f32 %v4046, %v4255
  %v4310 = vadd.f32 %v4047, %v4255
  %v4311 = vadd.f32 %v4048, %v4255
  %v4312 = vadd.f32 %v4049, %v4255
  %v4313 = vadd.f32 %v4050, %v4255
  %v4314 = vadd.f32 %v4051, %v4255
  %v4315 = vadd.f32 %v4052, %v4255
  %v4316 = vadd.f32 %v4053, %v4255
  %v4317 = vadd.f32 %v4054, %v4255
  %v4318 = vadd.f32 %v4055, %v4255
  %v4319 = vadd.f32 %v4056, %v4255
  %v4320 = vadd.f32 %v4057, %v4255
  %v4321 = vadd.f32 %v4058, %v4255
  %v4322 = vadd.f32 %v4059, %v4255
  %v4323 = vadd.f32 %v4060, %v4255
  %v4324 = vadd.f32 %v4061, %v4255
  %v4325 = vadd.f32 %v4062, %v4255
  %v4326 = vadd.f32 %v4063, %v4255
  %v4327 = vadd.f32 %v4064, %v4255
  %v4328 = vadd.f32 %v4065, %v4255
  %v4329 = vadd.f32 %v4066, %v4255
  %v4330 = vadd.f32 %v4067, %v4255
  %v4331 = vadd.f32 %v4068, %v4255
  %v4332 = vadd.f32 %v4069, %v4255
  %v4333 = vadd.f32 %v4070, %v4255
  %v4334 = vadd.f32 %v4071, %v4255
  %v4335 = vadd.f32 %v4072, %v4255
  %v4336 = vadd.f32 %v4073, %v4255
  %v4337 = vadd.f32 %v4074, %v4255
  %v4338 = vadd.f32 %v4075, %v4255
  %v4339 = vadd.f32 %v4076, %v4255
  %v4340 = vadd.f32 %v4077, %v4255
  %v4341 = vadd.f32 %v4078, %v4255
  %v4342 = vadd.f32 %v4079, %v4255
  %v4343 = vadd.f32 %v4080, %v4255
  %v4344 = vadd.f32 %v4081, %v4255
  %v4345 = vadd.f32 %v4082, %v4255
  %v4346 = vadd.f32 %v4083, %v4255
  %v4347 = vadd.f32 %v4084, %v4255
  %v4348 = vadd.f32 %v4085, %v4255
  %v4349 = vadd.f32 %v4086, %v4255
  %v4350 = vadd.f32 %v4087, %v4255
  %v4351 = vadd.f32 %v4088, %v4255
  %v4352 = vadd.f32 %v4089, %v4255
  %v4353 = vadd.f32 %v4090, %v4255
  %v4354 = vadd.f32 %v4091, %v4255
  %v4355 = vadd.f32 %v4092, %v4255
  %v4356 = vadd.f32 %v4093, %v4255
  %v4357 = vadd.f32 %v4094, %v4255
  %v4358 = vadd.f32 %v4095, %v4255
  %v4359 = vadd.f32 %v4096, %v4255
  %v4360 = vadd.f32 %v4097, %v4255
  %v4361 = vadd.f32 %v4098, %v4255
  %v4362 = vadd.f32 %v4099, %v4255
  %v4363 = vadd.f32 %v4100, %v4255
  %v4364 = vadd.f32 %v4101, %v4255
  %v4365 = vadd.f32 %v4102, %v4255
  %v4366 = vadd.f32 %v4103, %v4255
  %v4367 = vadd.f32 %v4104, %v4255
  %v4368 = vadd.f32 %v4105, %v4255
  %v4369 = vadd.f32 %v4106, %v4255
  %v4370 = vadd.f32 %v4107, %v4255
  %v4371 = vadd.f32 %v4108, %v4255
  %v4372 = vadd.f32 %v4109, %v4255
  %v4373 = vadd.f32 %v4110, %v4255
  %v4374 = vadd.f32 %v4111, %v4255
  %v4375 = vadd.f32 %v4112, %v4255
  %v4376 = vadd.f32 %v4113, %v4255
  %v4377 = vadd.f32 %v4114, %v4255
  %v4378 = vadd.f32 %v4115, %v4255
  %v4379 = vadd.f32 %v4116, %v4255
  %v4380 = vadd.f32 %v4117, %v4255
  %v4381 = vadd.f32 %v4118, %v4255
  %v4382 = vadd.f32 %v4119, %v4255
  %v4383 = vadd.f32 %v4120, %v4255
  %v4384 = vadd.f32 %v4121, %v4255
  %v4385 = vadd.f32 %v4122, %v4255
  %v4386 = vadd.f32 %v4123, %v4255
  %v4387 = vadd.f32 %v4124, %v4255
  %v4388 = vadd.f32 %v4125, %v4255
  %v4389 = vadd.f32 %v4126, %v4255
  %v4390 = vadd.f32 %v4127, %v4255
  %v4391 = vadd.f32 %v4128, %v4255
  %v4392 = vadd.f32 %v4129, %v4255
  %v4393 = vadd.f32 %v4130, %v4255
  %v4394 = vadd.f32 %v4131, %v4255
  %v4395 = vadd.f32 %v4132, %v4255
  %v4396 = vadd.f32 %v4133, %v4255
  %v4397 = vadd.f32 %v4134, %v4255
  %v4398 = vadd.f32 %v4135, %v4255
  %v4399 = vadd.f32 %v4136, %v4255
  %v4400 = vadd.f32 %v4137, %v4255
  %v4401 = vadd.f32 %v4138, %v4255
  %v4402 = vadd.f32 %v4139, %v4255
  %v4403 = vadd.f32 %v4140, %v4255
  %v4404 = vadd.f32 %v4141, %v4255
  %v4405 = vadd.f32 %v4142, %v4255
  %v4406 = vadd.f32 %v4143, %v4255
  %v4407 = vadd.f32 %v4144, %v4255
  %v4408 = vadd.f32 %v4145, %v4255
  %v4409 = vadd.f32 %v4146, %v4255
  %v4410 = vadd.f32 %v4147, %v4255
  %v4411 = vadd.f32 %v4148, %v4255
  %v4412 = vadd.f32 %v4149, %v4255
  %v4413 = vadd.f32 %v4150, %v4255
  %v4414 = vadd.f32 %v4151, %v4255
  %v4415 = vadd.f32 %v4152, %v4255
  %v4416 = vadd.f32 %v4153, %v4255
  %v4417 = vadd.f32 %v4154, %v4255
  %v4418 = vadd.f32 %v4155, %v4255
  %v4419 = vadd.f32 %v4156, %v4255
  %v4420 = vadd.f32 %v4157, %v4255
  %v4421 = vadd.f32 %v4158, %v4255
  %v4422 = vadd.f32 %v4159, %v4255
  %v4423 = vadd.f32 %v4160, %v4255
  %v4424 = vadd.f32 %v4161, %v4255
  %v4425 = vadd.f32 %v4162, %v4255
  %v4426 = vadd.f32 %v4163, %v4255
  %v4427 = vadd.f32 %v4164, %v4255
  %v4428 = vadd.f32 %v4165, %v4255
  %v4429 = vadd.f32 %v4166, %v4255
  %v4430 = vadd.f32 %v4167, %v4255
  %v4431 = vadd.f32 %v4168, %v4255
  %v4432 = vadd.f32 %v4169, %v4255
  %v4433 = vadd.f32 %v4170, %v4255
  %v4434 = vadd.f32 %v4171, %v4255
  %v4435 = vadd.f32 %v4172, %v4255
  %v4436 = vadd.f32 %v4173, %v4255
  %v4437 = vadd.f32 %v4174, %v4255
  %v4438 = vadd.f32 %v4175, %v4255
  %v4439 = vadd.f32 %v4176, %v4255
  %v4440 = vadd.f32 %v4177, %v4255
  %v4441 = vadd.f32 %v4178, %v4255
  %v4442 = vadd.f32 %v4179, %v4255
  %v4443 = vadd.f32 %v4180, %v4255
  %v4444 = vadd.f32 %v4181, %v4255
  %v4445 = vadd.f32 %v4182, %v4255
  %v4446 = vadd.f32 %v4183, %v4255
  %v4447 = vadd.f32 %v4184, %v4255
  %v4448 = vadd.f32 %v4185, %v4255
  %v4449 = vadd.f32 %v4186, %v4255
  %v4450 = vadd.f32 %v4187, %v4255
  %v4451 = vadd.f32 %v4188, %v4255
  %v4452 = vadd.f32 %v4189, %v4255
  %v4453 = vadd.f32 %v4190, %v4255
  %v4454 = vadd.f32 %v4191, %v4255
  %v4455 = vadd.f32 %v4192, %v4255
  %v4456 = vadd.f32 %v4193, %v4255
  %v4457 = vadd.f32 %v4194, %v4255
  %v4458 = vadd.f32 %v4195, %v4255
  %v4459 = vadd.f32 %v4196, %v4255
  %v4460 = vadd.f32 %v4197, %v4255
  %v4461 = vadd.f32 %v4198, %v4255
  %v4462 = vadd.f32 %v4199, %v4255
  %v4463 = vadd.f32 %v4200, %v4255
  %v4464 = vadd.f32 %v4201, %v4255
  %v4465 = vadd.f32 %v4202, %v4255
  %v4466 = vadd.f32 %v4203, %v4255
  %v4467 = vadd.f32 %v4204, %v4255
  %v4468 = vadd.f32 %v4205, %v4255
  %v4469 = vadd.f32 %v4206, %v4255
  %v4470 = vadd.f32 %v4207, %v4255
  %v4471 = vadd.f32 %v4208, %v4255
  %v4472 = vadd.f32 %v4209, %v4255
  %v4473 = vadd.f32 %v4210, %v4255
  %v4474 = vadd.f32 %v4211, %v4255
  %v4475 = vadd.f32 %v4212, %v4255
  %v4476 = vadd.f32 %v4213, %v4255
  %v4477 = vadd.f32 %v4214, %v4255
  %v4478 = vadd.f32 %v4215, %v4255
  %v4479 = vadd.f32 %v4216, %v4255
  %v4480 = vadd.f32 %v4217, %v4255
  %v4481 = vadd.f32 %v4218, %v4255
  %v4482 = vadd.f32 %v4219, %v4255
  %v4483 = vadd.f32 %v4220, %v4255
  %v4484 = vadd.f32 %v4221, %v4255
  %v4485 = vadd.f32 %v4222, %v4255
  %v4486 = vadd.f32 %v4223, %v4255
  %v4487 = vadd.f32 %v4224, %v4255
  %v4488 = vadd.f32 %v4225, %v4255
  %v4489 = vadd.f32 %v4226, %v4255
  %v4490 = vadd.f32 %v4227, %v4255
  %v4491 = vadd.f32 %v4228, %v4255
  %v4492 = vadd.f32 %v4229, %v4255
  %v4493 = vadd.f32 %v4230, %v4255
  %v4494 = vadd.f32 %v4231, %v4255
  %v4495 = vadd.f32 %v4232, %v4255
  %v4496 = vadd.f32 %v4233, %v4255
  %v4497 = vadd.f32 %v4234, %v4255
  %v4498 = vadd.f32 %v4235, %v4255
  %v4499 = vadd.f32 %v4236, %v4255
  %v4500 = vadd.f32 %v4237, %v4255
  %v4501 = vadd.f32 %v4238, %v4255
  %v4502 = vadd.f32 %v4239, %v4255
  %v4503 = vadd.f32 %v4240, %v4255
  %v4504 = vadd.f32 %v4241, %v4255
  %v4505 = vadd.f32 %v4242, %v4255
  %v4506 = vadd.f32 %v4243, %v4255
  %v4507 = vadd.f32 %v4244, %v4255
  %v4508 = vadd.f32 %v4245, %v4255
  %v4509 = vadd.f32 %v4246, %v4255
  %v4510 = vadd.f32 %v4247, %v4255
  %v4511 = vadd.f32 %v4248, %v4255
  %v4512 = vadd.f32 %v4249, %v4255
  %v4513 = vmax.f32 %v4257, 0.0
  %v4514 = vmax.f32 %v4258, 0.0
  %v4515 = vmax.f32 %v4259, 0.0
  %v4516 = vmax.f32 %v4260, 0.0
  %v4517 = vmax.f32 %v4261, 0.0
  %v4518 = vmax.f32 %v4262, 0.0
  %v4519 = vmax.f32 %v4263, 0.0
  %v4520 = vmax.f32 %v4264, 0.0
  %v4521 = vmax.f32 %v4265, 0.0
  %v4522 = vmax.f32 %v4266, 0.0
  %v4523 = vmax.f32 %v4267, 0.0
  %v4524 = vmax.f32 %v4268, 0.0
  %v4525 = vmax.f32 %v4269, 0.0
  %v4526 = vmax.f32 %v4270, 0.0
  %v4527 = vmax.f32 %v4271, 0.0
  %v4528 = vmax.f32 %v4272, 0.0
  %v4529 = vmax.f32 %v4273, 0.0
  %v4530 = vmax.f32 %v4274, 0.0
  %v4531 = vmax.f32 %v4275, 0.0
  %v4532 = vmax.f32 %v4276, 0.0
  %v4533 = vmax.f32 %v4277, 0.0
  %v4534 = vmax.f32 %v4278, 0.0
  %v4535 = vmax.f32 %v4279, 0.0
  %v4536 = vmax.f32 %v4280, 0.0
  %v4537 = vmax.f32 %v4281, 0.0
  %v4538 = vmax.f32 %v4282, 0.0
  %v4539 = vmax.f32 %v4283, 0.0
  %v4540 = vmax.f32 %v4284, 0.0
  %v4541 = vmax.f32 %v4285, 0.0
  %v4542 = vmax.f32 %v4286, 0.0
  %v4543 = vmax.f32 %v4287, 0.0
  %v4544 = vmax.f32 %v4288, 0.0
  %v4545 = vmax.f32 %v4289, 0.0
  %v4546 = vmax.f32 %v4290, 0.0
  %v4547 = vmax.f32 %v4291, 0.0
  %v4548 = vmax.f32 %v4292, 0.0
  %v4549 = vmax.f32 %v4293, 0.0
  %v4550 = vmax.f32 %v4294, 0.0
  %v4551 = vmax.f32 %v4295, 0.0
  %v4552 = vmax.f32 %v4296, 0.0
  %v4553 = vmax.f32 %v4297, 0.0
  %v4554 = vmax.f32 %v4298, 0.0
  %v4555 = vmax.f32 %v4299, 0.0
  %v4556 = vmax.f32 %v4300, 0.0
  %v4557 = vmax.f32 %v4301, 0.0
  %v4558 = vmax.f32 %v4302, 0.0
  %v4559 = vmax.f32 %v4303, 0.0
  %v4560 = vmax.f32 %v4304, 0.0
  %v4561 = vmax.f32 %v4305, 0.0
  %v4562 = vmax.f32 %v4306, 0.0
  %v4563 = vmax.f32 %v4307, 0.0
  %v4564 = vmax.f32 %v4308, 0.0
  %v4565 = vmax.f32 %v4309, 0.0
  %v4566 = vmax.f32 %v4310, 0.0
  %v4567 = vmax.f32 %v4311, 0.0
  %v4568 = vmax.f32 %v4312, 0.0
  %v4569 = vmax.f32 %v4313, 0.0
  %v4570 = vmax.f32 %v4314, 0.0
  %v4571 = vmax.f32 %v4315, 0.0
  %v4572 = vmax.f32 %v4316, 0.0
  %v4573 = vmax.f32 %v4317, 0.0
  %v4574 = vmax.f32 %v4318, 0.0
  %v4575 = vmax.f32 %v4319, 0.0
  %v4576 = vmax.f32 %v4320, 0.0
  %v4577 = vmax.f32 %v4321, 0.0
  %v4578 = vmax.f32 %v4322, 0.0
  %v4579 = vmax.f32 %v4323, 0.0
  %v4580 = vmax.f32 %v4324, 0.0
  %v4581 = vmax.f32 %v4325, 0.0
  %v4582 = vmax.f32 %v4326, 0.0
  %v4583 = vmax.f32 %v4327, 0.0
  %v4584 = vmax.f32 %v4328, 0.0
  %v4585 = vmax.f32 %v4329, 0.0
  %v4586 = vmax.f32 %v4330, 0.0
  %v4587 = vmax.f32 %v4331, 0.0
  %v4588 = vmax.f32 %v4332, 0.0
  %v4589 = vmax.f32 %v4333, 0.0
  %v4590 = vmax.f32 %v4334, 0.0
  %v4591 = vmax.f32 %v4335, 0.0
  %v4592 = vmax.f32 %v4336, 0.0
  %v4593 = vmax.f32 %v4337, 0.0
  %v4594 = vmax.f32 %v4338, 0.0
  %v4595 = vmax.f32 %v4339, 0.0
  %v4596 = vmax.f32 %v4340, 0.0
  %v4597 = vmax.f32 %v4341, 0.0
  %v4598 = vmax.f32 %v4342, 0.0
  %v4599 = vmax.f32 %v4343, 0.0
  %v4600 = vmax.f32 %v4344, 0.0
  %v4601 = vmax.f32 %v4345, 0.0
  %v4602 = vmax.f32 %v4346, 0.0
  %v4603 = vmax.f32 %v4347, 0.0
  %v4604 = vmax.f32 %v4348, 0.0
  %v4605 = vmax.f32 %v4349, 0.0
  %v4606 = vmax.f32 %v4350, 0.0
  %v4607 = vmax.f32 %v4351, 0.0
  %v4608 = vmax.f32 %v4352, 0.0
  %v4609 = vmax.f32 %v4353, 0.0
  %v4610 = vmax.f32 %v4354, 0.0
  %v4611 = vmax.f32 %v4355, 0.0
  %v4612 = vmax.f32 %v4356, 0.0
  %v4613 = vmax.f32 %v4357, 0.0
  %v4614 = vmax.f32 %v4358, 0.0
  %v4615 = vmax.f32 %v4359, 0.0
  %v4616 = vmax.f32 %v4360, 0.0
  %v4617 = vmax.f32 %v4361, 0.0
  %v4618 = vmax.f32 %v4362, 0.0
  %v4619 = vmax.f32 %v4363, 0.0
  %v4620 = vmax.f32 %v4364, 0.0
  %v4621 = vmax.f32 %v4365, 0.0
  %v4622 = vmax.f32 %v4366, 0.0
  %v4623 = vmax.f32 %v4367, 0.0
  %v4624 = vmax.f32 %v4368, 0.0
  %v4625 = vmax.f32 %v4369, 0.0
  %v4626 = vmax.f32 %v4370, 0.0
  %v4627 = vmax.f32 %v4371, 0.0
  %v4628 = vmax.f32 %v4372, 0.0
  %v4629 = vmax.f32 %v4373, 0.0
  %v4630 = vmax.f32 %v4374, 0.0
  %v4631 = vmax.f32 %v4375, 0.0
  %v4632 = vmax.f32 %v4376, 0.0
  %v4633 = vmax.f32 %v4377, 0.0
  %v4634 = vmax.f32 %v4378, 0.0
  %v4635 = vmax.f32 %v4379, 0.0
  %v4636 = vmax.f32 %v4380, 0.0
  %v4637 = vmax.f32 %v4381, 0.0
  %v4638 = vmax.f32 %v4382, 0.0
  %v4639 = vmax.f32 %v4383, 0.0
  %v4640 = vmax.f32 %v4384, 0.0
  %v4641 = vmax.f32 %v4385, 0.0
  %v4642 = vmax.f32 %v4386, 0.0
  %v4643 = vmax.f32 %v4387, 0.0
  %v4644 = vmax.f32 %v4388, 0.0
  %v4645 = vmax.f32 %v4389, 0.0
  %v4646 = vmax.f32 %v4390, 0.0
  %v4647 = vmax.f32 %v4391, 0.0
  %v4648 = vmax.f32 %v4392, 0.0
  %v4649 = vmax.f32 %v4393, 0.0
  %v4650 = vmax.f32 %v4394, 0.0
  %v4651 = vmax.f32 %v4395, 0.0
  %v4652 = vmax.f32 %v4396, 0.0
  %v4653 = vmax.f32 %v4397, 0.0
  %v4654 = vmax.f32 %v4398, 0.0
  %v4655 = vmax.f32 %v4399, 0.0
  %v4656 = vmax.f32 %v4400, 0.0
  %v4657 = vmax.f32 %v4401, 0.0
  %v4658 = vmax.f32 %v4402, 0.0
  %v4659 = vmax.f32 %v4403, 0.0
  %v4660 = vmax.f32 %v4404, 0.0
  %v4661 = vmax.f32 %v4405, 0.0
  %v4662 = vmax.f32 %v4406, 0.0
  %v4663 = vmax.f32 %v4407, 0.0
  %v4664 = vmax.f32 %v4408, 0.0
  %v4665 = vmax.f32 %v4409, 0.0
  %v4666 = vmax.f32 %v4410, 0.0
  %v4667 = vmax.f32 %v4411, 0.0
  %v4668 = vmax.f32 %v4412, 0.0
  %v4669 = vmax.f32 %v4413, 0.0
  %v4670 = vmax.f32 %v4414, 0.0
  %v4671 = vmax.f32 %v4415, 0.0
  %v4672 = vmax.f32 %v4416, 0.0
  %v4673 = vmax.f32 %v4417, 0.0
  %v4674 = vmax.f32 %v4418, 0.0
  %v4675 = vmax.f32 %v4419, 0.0
  %v4676 = vmax.f32 %v4420, 0.0
  %v4677 = vmax.f32 %v4421, 0.0
  %v4678 = vmax.f32 %v4422, 0.0
  %v4679 = vmax.f32 %v4423, 0.0
  %v4680 = vmax.f32 %v4424, 0.0
  %v4681 = vmax.f32 %v4425, 0.0
  %v4682 = vmax.f32 %v4426, 0.0
  %v4683 = vmax.f32 %v4427, 0.0
  %v4684 = vmax.f32 %v4428, 0.0
  %v4685 = vmax.f32 %v4429, 0.0
  %v4686 = vmax.f32 %v4430, 0.0
  %v4687 = vmax.f32 %v4431, 0.0
  %v4688 = vmax.f32 %v4432, 0.0
  %v4689 = vmax.f32 %v4433, 0.0
  %v4690 = vmax.f32 %v4434, 0.0
  %v4691 = vmax.f32 %v4435, 0.0
  %v4692 = vmax.f32 %v4436, 0.0
  %v4693 = vmax.f32 %v4437, 0.0
  %v4694 = vmax.f32 %v4438, 0.0
  %v4695 = vmax.f32 %v4439, 0.0
  %v4696 = vmax.f32 %v4440, 0.0
  %v4697 = vmax.f32 %v4441, 0.0
  %v4698 = vmax.f32 %v4442, 0.0
  %v4699 = vmax.f32 %v4443, 0.0
  %v4700 = vmax.f32 %v4444, 0.0
  %v4701 = vmax.f32 %v4445, 0.0
  %v4702 = vmax.f32 %v4446, 0.0
  %v4703 = vmax.f32 %v4447, 0.0
  %v4704 = vmax.f32 %v4448, 0.0
  %v4705 = vmax.f32 %v4449, 0.0
  %v4706 = vmax.f32 %v4450, 0.0
  %v4707 = vmax.f32 %v4451, 0.0
  %v4708 = vmax.f32 %v4452, 0.0
  %v4709 = vmax.f32 %v4453, 0.0
  %v4710 = vmax.f32 %v4454, 0.0
  %v4711 = vmax.f32 %v4455, 0.0
  %v4712 = vmax.f32 %v4456, 0.0
  %v4713 = vmax.f32 %v4457, 0.0
  %v4714 = vmax.f32 %v4458, 0.0
  %v4715 = vmax.f32 %v4459, 0.0
  %v4716 = vmax.f32 %v4460, 0.0
  %v4717 = vmax.f32 %v4461, 0.0
  %v4718 = vmax.f32 %v4462, 0.0
  %v4719 = vmax.f32 %v4463, 0.0
  %v4720 = vmax.f32 %v4464, 0.0
  %v4721 = vmax.f32 %v4465, 0.0
  %v4722 = vmax.f32 %v4466, 0.0
  %v4723 = vmax.f32 %v4467, 0.0
  %v4724 = vmax.f32 %v4468, 0.0
  %v4725 = vmax.f32 %v4469, 0.0
  %v4726 = vmax.f32 %v4470, 0.0
  %v4727 = vmax.f32 %v4471, 0.0
  %v4728 = vmax.f32 %v4472, 0.0
  %v4729 = vmax.f32 %v4473, 0.0
  %v4730 = vmax.f32 %v4474, 0.0
  %v4731 = vmax.f32 %v4475, 0.0
  %v4732 = vmax.f32 %v4476, 0.0
  %v4733 = vmax.f32 %v4477, 0.0
  %v4734 = vmax.f32 %v4478, 0.0
  %v4735 = vmax.f32 %v4479, 0.0
  %v4736 = vmax.f32 %v4480, 0.0
  %v4737 = vmax.f32 %v4481, 0.0
  %v4738 = vmax.f32 %v4482, 0.0
  %v4739 = vmax.f32 %v4483, 0.0
  %v4740 = vmax.f32 %v4484, 0.0
  %v4741 = vmax.f32 %v4485, 0.0
  %v4742 = vmax.f32 %v4486, 0.0
  %v4743 = vmax.f32 %v4487, 0.0
  %v4744 = vmax.f32 %v4488, 0.0
  %v4745 = vmax.f32 %v4489, 0.0
  %v4746 = vmax.f32 %v4490, 0.0
  %v4747 = vmax.f32 %v4491, 0.0
  %v4748 = vmax.f32 %v4492, 0.0
  %v4749 = vmax.f32 %v4493, 0.0
  %v4750 = vmax.f32 %v4494, 0.0
  %v4751 = vmax.f32 %v4495, 0.0
  %v4752 = vmax.f32 %v4496, 0.0
  %v4753 = vmax.f32 %v4497, 0.0
  %v4754 = vmax.f32 %v4498, 0.0
  %v4755 = vmax.f32 %v4499, 0.0
  %v4756 = vmax.f32 %v4500, 0.0
  %v4757 = vmax.f32 %v4501, 0.0
  %v4758 = vmax.f32 %v4502, 0.0
  %v4759 = vmax.f32 %v4503, 0.0
  %v4760 = vmax.f32 %v4504, 0.0
  %v4761 = vmax.f32 %v4505, 0.0
  %v4762 = vmax.f32 %v4506, 0.0
  %v4763 = vmax.f32 %v4507, 0.0
  %v4764 = vmax.f32 %v4508, 0.0
  %v4765 = vmax.f32 %v4509, 0.0
  %v4766 = vmax.f32 %v4510, 0.0
  %v4767 = vmax.f32 %v4511, 0.0
  %v4768 = vmax.f32 %v4512, 0.0
  %4769 = vst [vmem:[#allocation2] sm:$0xff] 0.0
  %4770 = vst [vmem:[#allocation2 + $0x8] sm:$0xff] 0.0
  %4771 = vst [vmem:[#allocation2 + $0x10] sm:$0xff] 0.0
  %4772 = vst [vmem:[#allocation2 + $0x18] sm:$0xff] 0.0
  %4773 = vst [vmem:[#allocation2 + $0x20] sm:$0xff] 0.0
  %4774 = vst [vmem:[#allocation2 + $0x28] sm:$0xff] 0.0
  %4775 = vst [vmem:[#allocation2 + $0x30] sm:$0xff] 0.0
  %4776 = vst [vmem:[#allocation2 + $0x38] sm:$0xff] 0.0
  %4777 = vst [vmem:[#allocation2 + $0x40] sm:$0xff] 0.0
  %4778 = vst [vmem:[#allocation2 + $0x48] sm:$0xff] 0.0
  %4779 = vst [vmem:[#allocation2 + $0x50] sm:$0xff] 0.0
  %4780 = vst [vmem:[#allocation2 + $0x58] sm:$0xff] 0.0
  %4781 = vst [vmem:[#allocation2 + $0x60] sm:$0xff] 0.0
  %4782 = vst [vmem:[#allocation2 + $0x68] sm:$0xff] 0.0
  %4783 = vst [vmem:[#allocation2 + $0x70] sm:$0xff] 0.0
  %4784 = vst [vmem:[#allocation2 + $0x78] sm:$0xff] 0.0
  %4785 = vst [vmem:[#allocation2 + $0x80] sm:$0xff] 0.0
  %4786 = vst [vmem:[#allocation2 + $0x88] sm:$0xff] 0.0
  %4787 = vst [vmem:[#allocation2 + $0x90] sm:$0xff] 0.0
  %4788 = vst [vmem:[#allocation2 + $0x98] sm:$0xff] 0.0
  %4789 = vst [vmem:[#allocation2 + $0xa0] sm:$0xff] 0.0
  %4790 = vst [vmem:[#allocation2 + $0xa8] sm:$0xff] 0.0
  %4791 = vst [vmem:[#allocation2 + $0xb0] sm:$0xff] 0.0
  %4792 = vst [vmem:[#allocation2 + $0xb8] sm:$0xff] 0.0
  %4793 = vst [vmem:[#allocation2 + $0xc0] sm:$0xff] 0.0
  %4794 = vst [vmem:[#allocation2 + $0xc8] sm:$0xff] 0.0
  %4795 = vst [vmem:[#allocation2 + $0xd0] sm:$0xff] 0.0
  %4796 = vst [vmem:[#allocation2 + $0xd8] sm:$0xff] 0.0
  %4797 = vst [vmem:[#allocation2 + $0xe0] sm:$0xff] 0.0
  %4798 = vst [vmem:[#allocation2 + $0xe8] sm:$0xff] 0.0
  %4799 = vst [vmem:[#allocation2 + $0xf0] sm:$0xff] 0.0
  %4800 = vst [vmem:[#allocation2 + $0xf8] sm:$0xff] 0.0
  %4801 = vst [vmem:[#allocation2 + $0x100] sm:$0xff] 0.0
  %4802 = vst [vmem:[#allocation2 + $0x108] sm:$0xff] 0.0
  %4803 = vst [vmem:[#allocation2 + $0x110] sm:$0xff] 0.0
  %4804 = vst [vmem:[#allocation2 + $0x118] sm:$0xff] 0.0
  %4805 = vst [vmem:[#allocation2 + $0x120] sm:$0xff] 0.0
  %4806 = vst [vmem:[#allocation2 + $0x128] sm:$0xff] 0.0
  %4807 = vst [vmem:[#allocation2 + $0x130] sm:$0xff] 0.0
  %4808 = vst [vmem:[#allocation2 + $0x138] sm:$0xff] 0.0
  %4809 = vst [vmem:[#allocation2 + $0x140] sm:$0xff] 0.0
  %4810 = vst [vmem:[#allocation2 + $0x148] sm:$0xff] 0.0
  %4811 = vst [vmem:[#allocation2 + $0x150] sm:$0xff] 0.0
  %4812 = vst [vmem:[#allocation2 + $0x158] sm:$0xff] 0.0
  %4813 = vst [vmem:[#allocation2 + $0x160] sm:$0xff] 0.0
  %4814 = vst [vmem:[#allocation2 + $0x168] sm:$0xff] 0.0
  %4815 = vst [vmem:[#allocation2 + $0x170] sm:$0xff] 0.0
  %4816 = vst [vmem:[#allocation2 + $0x178] sm:$0xff] 0.0
  %4817 = vst [vmem:[#allocation2 + $0x180] sm:$0xff] 0.0
  %4818 = vst [vmem:[#allocation2 + $0x188] sm:$0xff] 0.0
  %4819 = vst [vmem:[#allocation2 + $0x190] sm:$0xff] 0.0
  %4820 = vst [vmem:[#allocation2 + $0x198] sm:$0xff] 0.0
  %4821 = vst [vmem:[#allocation2 + $0x1a0] sm:$0xff] 0.0
  %4822 = vst [vmem:[#allocation2 + $0x1a8] sm:$0xff] 0.0
  %4823 = vst [vmem:[#allocation2 + $0x1b0] sm:$0xff] 0.0
  %4824 = vst [vmem:[#allocation2 + $0x1b8] sm:$0xff] 0.0
  %4825 = vst [vmem:[#allocation2 + $0x1c0] sm:$0xff] 0.0
  %4826 = vst [vmem:[#allocation2 + $0x1c8] sm:$0xff] 0.0
  %4827 = vst [vmem:[#allocation2 + $0x1d0] sm:$0xff] 0.0
  %4828 = vst [vmem:[#allocation2 + $0x1d8] sm:$0xff] 0.0
  %4829 = vst [vmem:[#allocation2 + $0x1e0] sm:$0xff] 0.0
  %4830 = vst [vmem:[#allocation2 + $0x1e8] sm:$0xff] 0.0
  %4831 = vst [vmem:[#allocation2 + $0x1f0] sm:$0xff] 0.0
  %4832 = vst [vmem:[#allocation2 + $0x1f8] sm:$0xff] 0.0
  %4833 = vst [vmem:[#allocation2 + $0x200] sm:$0xff] 0.0
  %4834 = vst [vmem:[#allocation2 + $0x208] sm:$0xff] 0.0
  %4835 = vst [vmem:[#allocation2 + $0x210] sm:$0xff] 0.0
  %4836 = vst [vmem:[#allocation2 + $0x218] sm:$0xff] 0.0
  %4837 = vst [vmem:[#allocation2 + $0x220] sm:$0xff] 0.0
  %4838 = vst [vmem:[#allocation2 + $0x228] sm:$0xff] 0.0
  %4839 = vst [vmem:[#allocation2 + $0x230] sm:$0xff] 0.0
  %4840 = vst [vmem:[#allocation2 + $0x238] sm:$0xff] 0.0
  %4841 = vst [vmem:[#allocation2 + $0x240] sm:$0xff] 0.0
  %4842 = vst [vmem:[#allocation2 + $0x248] sm:$0xff] 0.0
  %4843 = vst [vmem:[#allocation2 + $0x250] sm:$0xff] 0.0
  %4844 = vst [vmem:[#allocation2 + $0x258] sm:$0xff] 0.0
  %4845 = vst [vmem:[#allocation2 + $0x260] sm:$0xff] 0.0
  %4846 = vst [vmem:[#allocation2 + $0x268] sm:$0xff] 0.0
  %4847 = vst [vmem:[#allocation2 + $0x270] sm:$0xff] 0.0
  %4848 = vst [vmem:[#allocation2 + $0x278] sm:$0xff] 0.0
  %4849 = vst [vmem:[#allocation2 + $0x280] sm:$0xff] 0.0
  %4850 = vst [vmem:[#allocation2 + $0x288] sm:$0xff] 0.0
  %4851 = vst [vmem:[#allocation2 + $0x290] sm:$0xff] 0.0
  %4852 = vst [vmem:[#allocation2 + $0x298] sm:$0xff] 0.0
  %4853 = vst [vmem:[#allocation2 + $0x2a0] sm:$0xff] 0.0
  %4854 = vst [vmem:[#allocation2 + $0x2a8] sm:$0xff] 0.0
  %4855 = vst [vmem:[#allocation2 + $0x2b0] sm:$0xff] 0.0
  %4856 = vst [vmem:[#allocation2 + $0x2b8] sm:$0xff] 0.0
  %4857 = vst [vmem:[#allocation2 + $0x2c0] sm:$0xff] 0.0
  %4858 = vst [vmem:[#allocation2 + $0x2c8] sm:$0xff] 0.0
  %4859 = vst [vmem:[#allocation2 + $0x2d0] sm:$0xff] 0.0
  %4860 = vst [vmem:[#allocation2 + $0x2d8] sm:$0xff] 0.0
  %4861 = vst [vmem:[#allocation2 + $0x2e0] sm:$0xff] 0.0
  %4862 = vst [vmem:[#allocation2 + $0x2e8] sm:$0xff] 0.0
  %4863 = vst [vmem:[#allocation2 + $0x2f0] sm:$0xff] 0.0
  %4864 = vst [vmem:[#allocation2 + $0x2f8] sm:$0xff] 0.0
  %4865 = vst [vmem:[#allocation2 + $0x300] sm:$0xff] 0.0
  %4866 = vst [vmem:[#allocation2 + $0x308] sm:$0xff] 0.0
  %4867 = vst [vmem:[#allocation2 + $0x310] sm:$0xff] 0.0
  %4868 = vst [vmem:[#allocation2 + $0x318] sm:$0xff] 0.0
  %4869 = vst [vmem:[#allocation2 + $0x320] sm:$0xff] 0.0
  %4870 = vst [vmem:[#allocation2 + $0x328] sm:$0xff] 0.0
  %4871 = vst [vmem:[#allocation2 + $0x330] sm:$0xff] 0.0
  %4872 = vst [vmem:[#allocation2 + $0x338] sm:$0xff] 0.0
  %4873 = vst [vmem:[#allocation2 + $0x340] sm:$0xff] 0.0
  %4874 = vst [vmem:[#allocation2 + $0x348] sm:$0xff] 0.0
  %4875 = vst [vmem:[#allocation2 + $0x350] sm:$0xff] 0.0
  %4876 = vst [vmem:[#allocation2 + $0x358] sm:$0xff] 0.0
  %4877 = vst [vmem:[#allocation2 + $0x360] sm:$0xff] 0.0
  %4878 = vst [vmem:[#allocation2 + $0x368] sm:$0xff] 0.0
  %4879 = vst [vmem:[#allocation2 + $0x370] sm:$0xff] 0.0
  %4880 = vst [vmem:[#allocation2 + $0x378] sm:$0xff] 0.0
  %4881 = vst [vmem:[#allocation2 + $0x380] sm:$0xff] 0.0
  %4882 = vst [vmem:[#allocation2 + $0x388] sm:$0xff] 0.0
  %4883 = vst [vmem:[#allocation2 + $0x390] sm:$0xff] 0.0
  %4884 = vst [vmem:[#allocation2 + $0x398] sm:$0xff] 0.0
  %4885 = vst [vmem:[#allocation2 + $0x3a0] sm:$0xff] 0.0
  %4886 = vst [vmem:[#allocation2 + $0x3a8] sm:$0xff] 0.0
  %4887 = vst [vmem:[#allocation2 + $0x3b0] sm:$0xff] 0.0
  %4888 = vst [vmem:[#allocation2 + $0x3b8] sm:$0xff] 0.0
  %4889 = vst [vmem:[#allocation2 + $0x3c0] sm:$0xff] 0.0
  %4890 = vst [vmem:[#allocation2 + $0x3c8] sm:$0xff] 0.0
  %4891 = vst [vmem:[#allocation2 + $0x3d0] sm:$0xff] 0.0
  %4892 = vst [vmem:[#allocation2 + $0x3d8] sm:$0xff] 0.0
  %4893 = vst [vmem:[#allocation2 + $0x3e0] sm:$0xff] 0.0
  %4894 = vst [vmem:[#allocation2 + $0x3e8] sm:$0xff] 0.0
  %4895 = vst [vmem:[#allocation2 + $0x3f0] sm:$0xff] 0.0
  %4896 = vst [vmem:[#allocation2 + $0x3f8] sm:$0xff] 0.0
  %4897 = vst [vmem:[#allocation2 + $0x400] sm:$0xff] 0.0
  %4898 = vst [vmem:[#allocation2 + $0x408] sm:$0xff] 0.0
  %4899 = vst [vmem:[#allocation2 + $0x410] sm:$0xff] 0.0
  %4900 = vst [vmem:[#allocation2 + $0x418] sm:$0xff] 0.0
  %4901 = vst [vmem:[#allocation2 + $0x420] sm:$0xff] 0.0
  %4902 = vst [vmem:[#allocation2 + $0x428] sm:$0xff] 0.0
  %4903 = vst [vmem:[#allocation2 + $0x430] sm:$0xff] 0.0
  %4904 = vst [vmem:[#allocation2 + $0x438] sm:$0xff] 0.0
  %4905 = vst [vmem:[#allocation2 + $0x440] sm:$0xff] 0.0
  %4906 = vst [vmem:[#allocation2 + $0x448] sm:$0xff] 0.0
  %4907 = vst [vmem:[#allocation2 + $0x450] sm:$0xff] 0.0
  %4908 = vst [vmem:[#allocation2 + $0x458] sm:$0xff] 0.0
  %4909 = vst [vmem:[#allocation2 + $0x460] sm:$0xff] 0.0
  %4910 = vst [vmem:[#allocation2 + $0x468] sm:$0xff] 0.0
  %4911 = vst [vmem:[#allocation2 + $0x470] sm:$0xff] 0.0
  %4912 = vst [vmem:[#allocation2 + $0x478] sm:$0xff] 0.0
  %4913 = vst [vmem:[#allocation2 + $0x480] sm:$0xff] 0.0
  %4914 = vst [vmem:[#allocation2 + $0x488] sm:$0xff] 0.0
  %4915 = vst [vmem:[#allocation2 + $0x490] sm:$0xff] 0.0
  %4916 = vst [vmem:[#allocation2 + $0x498] sm:$0xff] 0.0
  %4917 = vst [vmem:[#allocation2 + $0x4a0] sm:$0xff] 0.0
  %4918 = vst [vmem:[#allocation2 + $0x4a8] sm:$0xff] 0.0
  %4919 = vst [vmem:[#allocation2 + $0x4b0] sm:$0xff] 0.0
  %4920 = vst [vmem:[#allocation2 + $0x4b8] sm:$0xff] 0.0
  %4921 = vst [vmem:[#allocation2 + $0x4c0] sm:$0xff] 0.0
  %4922 = vst [vmem:[#allocation2 + $0x4c8] sm:$0xff] 0.0
  %4923 = vst [vmem:[#allocation2 + $0x4d0] sm:$0xff] 0.0
  %4924 = vst [vmem:[#allocation2 + $0x4d8] sm:$0xff] 0.0
  %4925 = vst [vmem:[#allocation2 + $0x4e0] sm:$0xff] 0.0
  %4926 = vst [vmem:[#allocation2 + $0x4e8] sm:$0xff] 0.0
  %4927 = vst [vmem:[#allocation2 + $0x4f0] sm:$0xff] 0.0
  %4928 = vst [vmem:[#allocation2 + $0x4f8] sm:$0xff] 0.0
  %4929 = vst [vmem:[#allocation2 + $0x500] sm:$0xff] 0.0
  %4930 = vst [vmem:[#allocation2 + $0x508] sm:$0xff] 0.0
  %4931 = vst [vmem:[#allocation2 + $0x510] sm:$0xff] 0.0
  %4932 = vst [vmem:[#allocation2 + $0x518] sm:$0xff] 0.0
  %4933 = vst [vmem:[#allocation2 + $0x520] sm:$0xff] 0.0
  %4934 = vst [vmem:[#allocation2 + $0x528] sm:$0xff] 0.0
  %4935 = vst [vmem:[#allocation2 + $0x530] sm:$0xff] 0.0
  %4936 = vst [vmem:[#allocation2 + $0x538] sm:$0xff] 0.0
  %4937 = vst [vmem:[#allocation2 + $0x540] sm:$0xff] 0.0
  %4938 = vst [vmem:[#allocation2 + $0x548] sm:$0xff] 0.0
  %4939 = vst [vmem:[#allocation2 + $0x550] sm:$0xff] 0.0
  %4940 = vst [vmem:[#allocation2 + $0x558] sm:$0xff] 0.0
  %4941 = vst [vmem:[#allocation2 + $0x560] sm:$0xff] 0.0
  %4942 = vst [vmem:[#allocation2 + $0x568] sm:$0xff] 0.0
  %4943 = vst [vmem:[#allocation2 + $0x570] sm:$0xff] 0.0
  %4944 = vst [vmem:[#allocation2 + $0x578] sm:$0xff] 0.0
  %4945 = vst [vmem:[#allocation2 + $0x580] sm:$0xff] 0.0
  %4946 = vst [vmem:[#allocation2 + $0x588] sm:$0xff] 0.0
  %4947 = vst [vmem:[#allocation2 + $0x590] sm:$0xff] 0.0
  %4948 = vst [vmem:[#allocation2 + $0x598] sm:$0xff] 0.0
  %4949 = vst [vmem:[#allocation2 + $0x5a0] sm:$0xff] 0.0
  %4950 = vst [vmem:[#allocation2 + $0x5a8] sm:$0xff] 0.0
  %4951 = vst [vmem:[#allocation2 + $0x5b0] sm:$0xff] 0.0
  %4952 = vst [vmem:[#allocation2 + $0x5b8] sm:$0xff] 0.0
  %4953 = vst [vmem:[#allocation2 + $0x5c0] sm:$0xff] 0.0
  %4954 = vst [vmem:[#allocation2 + $0x5c8] sm:$0xff] 0.0
  %4955 = vst [vmem:[#allocation2 + $0x5d0] sm:$0xff] 0.0
  %4956 = vst [vmem:[#allocation2 + $0x5d8] sm:$0xff] 0.0
  %4957 = vst [vmem:[#allocation2 + $0x5e0] sm:$0xff] 0.0
  %4958 = vst [vmem:[#allocation2 + $0x5e8] sm:$0xff] 0.0
  %4959 = vst [vmem:[#allocation2 + $0x5f0] sm:$0xff] 0.0
  %4960 = vst [vmem:[#allocation2 + $0x5f8] sm:$0xff] 0.0
  %4961 = vst [vmem:[#allocation2 + $0x600] sm:$0xff] 0.0
  %4962 = vst [vmem:[#allocation2 + $0x608] sm:$0xff] 0.0
  %4963 = vst [vmem:[#allocation2 + $0x610] sm:$0xff] 0.0
  %4964 = vst [vmem:[#allocation2 + $0x618] sm:$0xff] 0.0
  %4965 = vst [vmem:[#allocation2 + $0x620] sm:$0xff] 0.0
  %4966 = vst [vmem:[#allocation2 + $0x628] sm:$0xff] 0.0
  %4967 = vst [vmem:[#allocation2 + $0x630] sm:$0xff] 0.0
  %4968 = vst [vmem:[#allocation2 + $0x638] sm:$0xff] 0.0
  %4969 = vst [vmem:[#allocation2 + $0x640] sm:$0xff] 0.0
  %4970 = vst [vmem:[#allocation2 + $0x648] sm:$0xff] 0.0
  %4971 = vst [vmem:[#allocation2 + $0x650] sm:$0xff] 0.0
  %4972 = vst [vmem:[#allocation2 + $0x658] sm:$0xff] 0.0
  %4973 = vst [vmem:[#allocation2 + $0x660] sm:$0xff] 0.0
  %4974 = vst [vmem:[#allocation2 + $0x668] sm:$0xff] 0.0
  %4975 = vst [vmem:[#allocation2 + $0x670] sm:$0xff] 0.0
  %4976 = vst [vmem:[#allocation2 + $0x678] sm:$0xff] 0.0
  %4977 = vst [vmem:[#allocation2 + $0x680] sm:$0xff] 0.0
  %4978 = vst [vmem:[#allocation2 + $0x688] sm:$0xff] 0.0
  %4979 = vst [vmem:[#allocation2 + $0x690] sm:$0xff] 0.0
  %4980 = vst [vmem:[#allocation2 + $0x698] sm:$0xff] 0.0
  %4981 = vst [vmem:[#allocation2 + $0x6a0] sm:$0xff] 0.0
  %4982 = vst [vmem:[#allocation2 + $0x6a8] sm:$0xff] 0.0
  %4983 = vst [vmem:[#allocation2 + $0x6b0] sm:$0xff] 0.0
  %4984 = vst [vmem:[#allocation2 + $0x6b8] sm:$0xff] 0.0
  %4985 = vst [vmem:[#allocation2 + $0x6c0] sm:$0xff] 0.0
  %4986 = vst [vmem:[#allocation2 + $0x6c8] sm:$0xff] 0.0
  %4987 = vst [vmem:[#allocation2 + $0x6d0] sm:$0xff] 0.0
  %4988 = vst [vmem:[#allocation2 + $0x6d8] sm:$0xff] 0.0
  %4989 = vst [vmem:[#allocation2 + $0x6e0] sm:$0xff] 0.0
  %4990 = vst [vmem:[#allocation2 + $0x6e8] sm:$0xff] 0.0
  %4991 = vst [vmem:[#allocation2 + $0x6f0] sm:$0xff] 0.0
  %4992 = vst [vmem:[#allocation2 + $0x6f8] sm:$0xff] 0.0
  %4993 = vst [vmem:[#allocation2 + $0x700] sm:$0xff] 0.0
  %4994 = vst [vmem:[#allocation2 + $0x708] sm:$0xff] 0.0
  %4995 = vst [vmem:[#allocation2 + $0x710] sm:$0xff] 0.0
  %4996 = vst [vmem:[#allocation2 + $0x718] sm:$0xff] 0.0
  %4997 = vst [vmem:[#allocation2 + $0x720] sm:$0xff] 0.0
  %4998 = vst [vmem:[#allocation2 + $0x728] sm:$0xff] 0.0
  %4999 = vst [vmem:[#allocation2 + $0x730] sm:$0xff] 0.0
  %5000 = vst [vmem:[#allocation2 + $0x738] sm:$0xff] 0.0
  %5001 = vst [vmem:[#allocation2 + $0x740] sm:$0xff] 0.0
  %5002 = vst [vmem:[#allocation2 + $0x748] sm:$0xff] 0.0
  %5003 = vst [vmem:[#allocation2 + $0x750] sm:$0xff] 0.0
  %5004 = vst [vmem:[#allocation2 + $0x758] sm:$0xff] 0.0
  %5005 = vst [vmem:[#allocation2 + $0x760] sm:$0xff] 0.0
  %5006 = vst [vmem:[#allocation2 + $0x768] sm:$0xff] 0.0
  %5007 = vst [vmem:[#allocation2 + $0x770] sm:$0xff] 0.0
  %5008 = vst [vmem:[#allocation2 + $0x778] sm:$0xff] 0.0
  %5009 = vst [vmem:[#allocation2 + $0x780] sm:$0xff] 0.0
  %5010 = vst [vmem:[#allocation2 + $0x788] sm:$0xff] 0.0
  %5011 = vst [vmem:[#allocation2 + $0x790] sm:$0xff] 0.0
  %5012 = vst [vmem:[#allocation2 + $0x798] sm:$0xff] 0.0
  %5013 = vst [vmem:[#allocation2 + $0x7a0] sm:$0xff] 0.0
  %5014 = vst [vmem:[#allocation2 + $0x7a8] sm:$0xff] 0.0
  %5015 = vst [vmem:[#allocation2 + $0x7b0] sm:$0xff] 0.0
  %5016 = vst [vmem:[#allocation2 + $0x7b8] sm:$0xff] 0.0
  %5017 = vst [vmem:[#allocation2 + $0x7c0] sm:$0xff] 0.0
  %5018 = vst [vmem:[#allocation2 + $0x7c8] sm:$0xff] 0.0
  %5019 = vst [vmem:[#allocation2 + $0x7d0] sm:$0xff] 0.0
  %5020 = vst [vmem:[#allocation2 + $0x7d8] sm:$0xff] 0.0
  %5021 = vst [vmem:[#allocation2 + $0x7e0] sm:$0xff] 0.0
  %5022 = vst [vmem:[#allocation2 + $0x7e8] sm:$0xff] 0.0
  %5023 = vst [vmem:[#allocation2 + $0x7f0] sm:$0xff] 0.0
  %5024 = vst [vmem:[#allocation2 + $0x7f8] sm:$0xff] 0.0
  %5025 = vst [vmem:[#allocation2 + $0x800] sm:$0xff] 0.0
  %5026 = vst [vmem:[#allocation2 + $0x808] sm:$0xff] 0.0
  %5027 = vst [vmem:[#allocation2 + $0x810] sm:$0xff] 0.0
  %5028 = vst [vmem:[#allocation2 + $0x818] sm:$0xff] 0.0
  %5029 = vst [vmem:[#allocation2 + $0x820] sm:$0xff] 0.0
  %5030 = vst [vmem:[#allocation2 + $0x828] sm:$0xff] 0.0
  %5031 = vst [vmem:[#allocation2 + $0x830] sm:$0xff] 0.0
  %5032 = vst [vmem:[#allocation2 + $0x838] sm:$0xff] 0.0
  %5033 = vst [vmem:[#allocation2 + $0x840] sm:$0xff] 0.0
  %5034 = vst [vmem:[#allocation2 + $0x848] sm:$0xff] 0.0
  %5035 = vst [vmem:[#allocation2 + $0x850] sm:$0xff] 0.0
  %5036 = vst [vmem:[#allocation2 + $0x858] sm:$0xff] 0.0
  %5037 = vst [vmem:[#allocation2 + $0x860] sm:$0xff] 0.0
  %5038 = vst [vmem:[#allocation2 + $0x868] sm:$0xff] 0.0
  %5039 = vst [vmem:[#allocation2 + $0x870] sm:$0xff] 0.0
  %5040 = vst [vmem:[#allocation2 + $0x878] sm:$0xff] 0.0
  %5041 = vst [vmem:[#allocation2 + $0x880] sm:$0xff] 0.0
  %5042 = vst [vmem:[#allocation2 + $0x888] sm:$0xff] 0.0
  %5043 = vst [vmem:[#allocation2 + $0x890] sm:$0xff] 0.0
  %5044 = vst [vmem:[#allocation2 + $0x898] sm:$0xff] 0.0
  %5045 = vst [vmem:[#allocation2 + $0x8a0] sm:$0xff] 0.0
  %5046 = vst [vmem:[#allocation2 + $0x8a8] sm:$0xff] 0.0
  %5047 = vst [vmem:[#allocation2 + $0x8b0] sm:$0xff] 0.0
  %5048 = vst [vmem:[#allocation2 + $0x8b8] sm:$0xff] 0.0
  %5049 = vst [vmem:[#allocation2 + $0x8c0] sm:$0xff] 0.0
  %5050 = vst [vmem:[#allocation2 + $0x8c8] sm:$0xff] 0.0
  %5051 = vst [vmem:[#allocation2 + $0x8d0] sm:$0xff] 0.0
  %5052 = vst [vmem:[#allocation2 + $0x8d8] sm:$0xff] 0.0
  %5053 = vst [vmem:[#allocation2 + $0x8e0] sm:$0xff] 0.0
  %5054 = vst [vmem:[#allocation2 + $0x8e8] sm:$0xff] 0.0
  %5055 = vst [vmem:[#allocation2 + $0x8f0] sm:$0xff] 0.0
  %5056 = vst [vmem:[#allocation2 + $0x8f8] sm:$0xff] 0.0
  %5057 = vst [vmem:[#allocation2 + $0x900] sm:$0xff] 0.0
  %5058 = vst [vmem:[#allocation2 + $0x908] sm:$0xff] 0.0
  %5059 = vst [vmem:[#allocation2 + $0x910] sm:$0xff] 0.0
  %5060 = vst [vmem:[#allocation2 + $0x918] sm:$0xff] 0.0
  %5061 = vst [vmem:[#allocation2 + $0x920] sm:$0xff] 0.0
  %5062 = vst [vmem:[#allocation2 + $0x928] sm:$0xff] 0.0
  %5063 = vst [vmem:[#allocation2 + $0x930] sm:$0xff] 0.0
  %5064 = vst [vmem:[#allocation2 + $0x938] sm:$0xff] 0.0
  %5065 = vst [vmem:[#allocation2 + $0x940] sm:$0xff] 0.0
  %5066 = vst [vmem:[#allocation2 + $0x948] sm:$0xff] 0.0
  %5067 = vst [vmem:[#allocation2 + $0x950] sm:$0xff] 0.0
  %5068 = vst [vmem:[#allocation2 + $0x958] sm:$0xff] 0.0
  %5069 = vst [vmem:[#allocation2 + $0x960] sm:$0xff] 0.0
  %5070 = vst [vmem:[#allocation2 + $0x968] sm:$0xff] 0.0
  %5071 = vst [vmem:[#allocation2 + $0x970] sm:$0xff] 0.0
  %5072 = vst [vmem:[#allocation2 + $0x978] sm:$0xff] 0.0
  %5073 = vst [vmem:[#allocation2 + $0x980] sm:$0xff] 0.0
  %5074 = vst [vmem:[#allocation2 + $0x988] sm:$0xff] 0.0
  %5075 = vst [vmem:[#allocation2 + $0x990] sm:$0xff] 0.0
  %5076 = vst [vmem:[#allocation2 + $0x998] sm:$0xff] 0.0
  %5077 = vst [vmem:[#allocation2 + $0x9a0] sm:$0xff] 0.0
  %5078 = vst [vmem:[#allocation2 + $0x9a8] sm:$0xff] 0.0
  %5079 = vst [vmem:[#allocation2 + $0x9b0] sm:$0xff] 0.0
  %5080 = vst [vmem:[#allocation2 + $0x9b8] sm:$0xff] 0.0
  %5081 = vst [vmem:[#allocation2 + $0x9c0] sm:$0xff] 0.0
  %5082 = vst [vmem:[#allocation2 + $0x9c8] sm:$0xff] 0.0
  %5083 = vst [vmem:[#allocation2 + $0x9d0] sm:$0xff] 0.0
  %5084 = vst [vmem:[#allocation2 + $0x9d8] sm:$0xff] 0.0
  %5085 = vst [vmem:[#allocation2 + $0x9e0] sm:$0xff] 0.0
  %5086 = vst [vmem:[#allocation2 + $0x9e8] sm:$0xff] 0.0
  %5087 = vst [vmem:[#allocation2 + $0x9f0] sm:$0xff] 0.0
  %5088 = vst [vmem:[#allocation2 + $0x9f8] sm:$0xff] 0.0
  %5089 = vst [vmem:[#allocation2 + $0x8] sm:$0xff] %v4513
  %5090 = vst [vmem:[#allocation2 + $0x10] sm:$0xff] %v4514
  %5091 = vst [vmem:[#allocation2 + $0x18] sm:$0xff] %v4515
  %5092 = vst [vmem:[#allocation2 + $0x20] sm:$0xff] %v4516
  %5093 = vst [vmem:[#allocation2 + $0x30] sm:$0xff] %v4517
  %5094 = vst [vmem:[#allocation2 + $0x38] sm:$0xff] %v4518
  %5095 = vst [vmem:[#allocation2 + $0x40] sm:$0xff] %v4519
  %5096 = vst [vmem:[#allocation2 + $0x48] sm:$0xff] %v4520
  %5097 = vst [vmem:[#allocation2 + $0x58] sm:$0xff] %v4521
  %5098 = vst [vmem:[#allocation2 + $0x60] sm:$0xff] %v4522
  %5099 = vst [vmem:[#allocation2 + $0x68] sm:$0xff] %v4523
  %5100 = vst [vmem:[#allocation2 + $0x70] sm:$0xff] %v4524
  %5101 = vst [vmem:[#allocation2 + $0x80] sm:$0xff] %v4525
  %5102 = vst [vmem:[#allocation2 + $0x88] sm:$0xff] %v4526
  %5103 = vst [vmem:[#allocation2 + $0x90] sm:$0xff] %v4527
  %5104 = vst [vmem:[#allocation2 + $0x98] sm:$0xff] %v4528
  %5105 = vst [vmem:[#allocation2 + $0xa8] sm:$0xff] %v4529
  %5106 = vst [vmem:[#allocation2 + $0xb0] sm:$0xff] %v4530
  %5107 = vst [vmem:[#allocation2 + $0xb8] sm:$0xff] %v4531
  %5108 = vst [vmem:[#allocation2 + $0xc0] sm:$0xff] %v4532
  %5109 = vst [vmem:[#allocation2 + $0xd0] sm:$0xff] %v4533
  %5110 = vst [vmem:[#allocation2 + $0xd8] sm:$0xff] %v4534
  %5111 = vst [vmem:[#allocation2 + $0xe0] sm:$0xff] %v4535
  %5112 = vst [vmem:[#allocation2 + $0xe8] sm:$0xff] %v4536
  %5113 = vst [vmem:[#allocation2 + $0xf8] sm:$0xff] %v4537
  %5114 = vst [vmem:[#allocation2 + $0x100] sm:$0xff] %v4538
  %5115 = vst [vmem:[#allocation2 + $0x108] sm:$0xff] %v4539
  %5116 = vst [vmem:[#allocation2 + $0x110] sm:$0xff] %v4540
  %5117 = vst [vmem:[#allocation2 + $0x120] sm:$0xff] %v4541
  %5118 = vst [vmem:[#allocation2 + $0x128] sm:$0xff] %v4542
  %5119 = vst [vmem:[#allocation2 + $0x130] sm:$0xff] %v4543
  %5120 = vst [vmem:[#allocation2 + $0x138] sm:$0xff] %v4544
  %5121 = vst [vmem:[#allocation2 + $0x148] sm:$0xff] %v4545
  %5122 = vst [vmem:[#allocation2 + $0x150] sm:$0xff] %v4546
  %5123 = vst [vmem:[#allocation2 + $0x158] sm:$0xff] %v4547
  %5124 = vst [vmem:[#allocation2 + $0x160] sm:$0xff] %v4548
  %5125 = vst [vmem:[#allocation2 + $0x170] sm:$0xff] %v4549
  %5126 = vst [vmem:[#allocation2 + $0x178] sm:$0xff] %v4550
  %5127 = vst [vmem:[#allocation2 + $0x180] sm:$0xff] %v4551
  %5128 = vst [vmem:[#allocation2 + $0x188] sm:$0xff] %v4552
  %5129 = vst [vmem:[#allocation2 + $0x198] sm:$0xff] %v4553
  %5130 = vst [vmem:[#allocation2 + $0x1a0] sm:$0xff] %v4554
  %5131 = vst [vmem:[#allocation2 + $0x1a8] sm:$0xff] %v4555
  %5132 = vst [vmem:[#allocation2 + $0x1b0] sm:$0xff] %v4556
  %5133 = vst [vmem:[#allocation2 + $0x1c0] sm:$0xff] %v4557
  %5134 = vst [vmem:[#allocation2 + $0x1c8] sm:$0xff] %v4558
  %5135 = vst [vmem:[#allocation2 + $0x1d0] sm:$0xff] %v4559
  %5136 = vst [vmem:[#allocation2 + $0x1d8] sm:$0xff] %v4560
  %5137 = vst [vmem:[#allocation2 + $0x1e8] sm:$0xff] %v4561
  %5138 = vst [vmem:[#allocation2 + $0x1f0] sm:$0xff] %v4562
  %5139 = vst [vmem:[#allocation2 + $0x1f8] sm:$0xff] %v4563
  %5140 = vst [vmem:[#allocation2 + $0x200] sm:$0xff] %v4564
  %5141 = vst [vmem:[#allocation2 + $0x210] sm:$0xff] %v4565
  %5142 = vst [vmem:[#allocation2 + $0x218] sm:$0xff] %v4566
  %5143 = vst [vmem:[#allocation2 + $0x220] sm:$0xff] %v4567
  %5144 = vst [vmem:[#allocation2 + $0x228] sm:$0xff] %v4568
  %5145 = vst [vmem:[#allocation2 + $0x238] sm:$0xff] %v4569
  %5146 = vst [vmem:[#allocation2 + $0x240] sm:$0xff] %v4570
  %5147 = vst [vmem:[#allocation2 + $0x248] sm:$0xff] %v4571
  %5148 = vst [vmem:[#allocation2 + $0x250] sm:$0xff] %v4572
  %5149 = vst [vmem:[#allocation2 + $0x260] sm:$0xff] %v4573
  %5150 = vst [vmem:[#allocation2 + $0x268] sm:$0xff] %v4574
  %5151 = vst [vmem:[#allocation2 + $0x270] sm:$0xff] %v4575
  %5152 = vst [vmem:[#allocation2 + $0x278] sm:$0xff] %v4576
  %5153 = vst [vmem:[#allocation2 + $0x288] sm:$0xff] %v4577
  %5154 = vst [vmem:[#allocation2 + $0x290] sm:$0xff] %v4578
  %5155 = vst [vmem:[#allocation2 + $0x298] sm:$0xff] %v4579
  %5156 = vst [vmem:[#allocation2 + $0x2a0] sm:$0xff] %v4580
  %5157 = vst [vmem:[#allocation2 + $0x2b0] sm:$0xff] %v4581
  %5158 = vst [vmem:[#allocation2 + $0x2b8] sm:$0xff] %v4582
  %5159 = vst [vmem:[#allocation2 + $0x2c0] sm:$0xff] %v4583
  %5160 = vst [vmem:[#allocation2 + $0x2c8] sm:$0xff] %v4584
  %5161 = vst [vmem:[#allocation2 + $0x2d8] sm:$0xff] %v4585
  %5162 = vst [vmem:[#allocation2 + $0x2e0] sm:$0xff] %v4586
  %5163 = vst [vmem:[#allocation2 + $0x2e8] sm:$0xff] %v4587
  %5164 = vst [vmem:[#allocation2 + $0x2f0] sm:$0xff] %v4588
  %5165 = vst [vmem:[#allocation2 + $0x300] sm:$0xff] %v4589
  %5166 = vst [vmem:[#allocation2 + $0x308] sm:$0xff] %v4590
  %5167 = vst [vmem:[#allocation2 + $0x310] sm:$0xff] %v4591
  %5168 = vst [vmem:[#allocation2 + $0x318] sm:$0xff] %v4592
  %5169 = vst [vmem:[#allocation2 + $0x328] sm:$0xff] %v4593
  %5170 = vst [vmem:[#allocation2 + $0x330] sm:$0xff] %v4594
  %5171 = vst [vmem:[#allocation2 + $0x338] sm:$0xff] %v4595
  %5172 = vst [vmem:[#allocation2 + $0x340] sm:$0xff] %v4596
  %5173 = vst [vmem:[#allocation2 + $0x350] sm:$0xff] %v4597
  %5174 = vst [vmem:[#allocation2 + $0x358] sm:$0xff] %v4598
  %5175 = vst [vmem:[#allocation2 + $0x360] sm:$0xff] %v4599
  %5176 = vst [vmem:[#allocation2 + $0x368] sm:$0xff] %v4600
  %5177 = vst [vmem:[#allocation2 + $0x378] sm:$0xff] %v4601
  %5178 = vst [vmem:[#allocation2 + $0x380] sm:$0xff] %v4602
  %5179 = vst [vmem:[#allocation2 + $0x388] sm:$0xff] %v4603
  %5180 = vst [vmem:[#allocation2 + $0x390] sm:$0xff] %v4604
  %5181 = vst [vmem:[#allocation2 + $0x3a0] sm:$0xff] %v4605
  %5182 = vst [vmem:[#allocation2 + $0x3a8] sm:$0xff] %v4606
  %5183 = vst [vmem:[#allocation2 + $0x3b0] sm:$0xff] %v4607
  %5184 = vst [vmem:[#allocation2 + $0x3b8] sm:$0xff] %v4608
  %5185 = vst [vmem:[#allocation2 + $0x3c8] sm:$0xff] %v4609
  %5186 = vst [vmem:[#allocation2 + $0x3d0] sm:$0xff] %v4610
  %5187 = vst [vmem:[#allocation2 + $0x3d8] sm:$0xff] %v4611
  %5188 = vst [vmem:[#allocation2 + $0x3e0] sm:$0xff] %v4612
  %5189 = vst [vmem:[#allocation2 + $0x3f0] sm:$0xff] %v4613
  %5190 = vst [vmem:[#allocation2 + $0x3f8] sm:$0xff] %v4614
  %5191 = vst [vmem:[#allocation2 + $0x400] sm:$0xff] %v4615
  %5192 = vst [vmem:[#allocation2 + $0x408] sm:$0xff] %v4616
  %5193 = vst [vmem:[#allocation2 + $0x418] sm:$0xff] %v4617
  %5194 = vst [vmem:[#allocation2 + $0x420] sm:$0xff] %v4618
  %5195 = vst [vmem:[#allocation2 + $0x428] sm:$0xff] %v4619
  %5196 = vst [vmem:[#allocation2 + $0x430] sm:$0xff] %v4620
  %5197 = vst [vmem:[#allocation2 + $0x440] sm:$0xff] %v4621
  %5198 = vst [vmem:[#allocation2 + $0x448] sm:$0xff] %v4622
  %5199 = vst [vmem:[#allocation2 + $0x450] sm:$0xff] %v4623
  %5200 = vst [vmem:[#allocation2 + $0x458] sm:$0xff] %v4624
  %5201 = vst [vmem:[#allocation2 + $0x468] sm:$0xff] %v4625
  %5202 = vst [vmem:[#allocation2 + $0x470] sm:$0xff] %v4626
  %5203 = vst [vmem:[#allocation2 + $0x478] sm:$0xff] %v4627
  %5204 = vst [vmem:[#allocation2 + $0x480] sm:$0xff] %v4628
  %5205 = vst [vmem:[#allocation2 + $0x490] sm:$0xff] %v4629
  %5206 = vst [vmem:[#allocation2 + $0x498] sm:$0xff] %v4630
  %5207 = vst [vmem:[#allocation2 + $0x4a0] sm:$0xff] %v4631
  %5208 = vst [vmem:[#allocation2 + $0x4a8] sm:$0xff] %v4632
  %5209 = vst [vmem:[#allocation2 + $0x4b8] sm:$0xff] %v4633
  %5210 = vst [vmem:[#allocation2 + $0x4c0] sm:$0xff] %v4634
  %5211 = vst [vmem:[#allocation2 + $0x4c8] sm:$0xff] %v4635
  %5212 = vst [vmem:[#allocation2 + $0x4d0] sm:$0xff] %v4636
  %5213 = vst [vmem:[#allocation2 + $0x4e0] sm:$0xff] %v4637
  %5214 = vst [vmem:[#allocation2 + $0x4e8] sm:$0xff] %v4638
  %5215 = vst [vmem:[#allocation2 + $0x4f0] sm:$0xff] %v4639
  %5216 = vst [vmem:[#allocation2 + $0x4f8] sm:$0xff] %v4640
  %5217 = vst [vmem:[#allocation2 + $0x508] sm:$0xff] %v4641
  %5218 = vst [vmem:[#allocation2 + $0x510] sm:$0xff] %v4642
  %5219 = vst [vmem:[#allocation2 + $0x518] sm:$0xff] %v4643
  %5220 = vst [vmem:[#allocation2 + $0x520] sm:$0xff] %v4644
  %5221 = vst [vmem:[#allocation2 + $0x530] sm:$0xff] %v4645
  %5222 = vst [vmem:[#allocation2 + $0x538] sm:$0xff] %v4646
  %5223 = vst [vmem:[#allocation2 + $0x540] sm:$0xff] %v4647
  %5224 = vst [vmem:[#allocation2 + $0x548] sm:$0xff] %v4648
  %5225 = vst [vmem:[#allocation2 + $0x558] sm:$0xff] %v4649
  %5226 = vst [vmem:[#allocation2 + $0x560] sm:$0xff] %v4650
  %5227 = vst [vmem:[#allocation2 + $0x568] sm:$0xff] %v4651
  %5228 = vst [vmem:[#allocation2 + $0x570] sm:$0xff] %v4652
  %5229 = vst [vmem:[#allocation2 + $0x580] sm:$0xff] %v4653
  %5230 = vst [vmem:[#allocation2 + $0x588] sm:$0xff] %v4654
  %5231 = vst [vmem:[#allocation2 + $0x590] sm:$0xff] %v4655
  %5232 = vst [vmem:[#allocation2 + $0x598] sm:$0xff] %v4656
  %5233 = vst [vmem:[#allocation2 + $0x5a8] sm:$0xff] %v4657
  %5234 = vst [vmem:[#allocation2 + $0x5b0] sm:$0xff] %v4658
  %5235 = vst [vmem:[#allocation2 + $0x5b8] sm:$0xff] %v4659
  %5236 = vst [vmem:[#allocation2 + $0x5c0] sm:$0xff] %v4660
  %5237 = vst [vmem:[#allocation2 + $0x5d0] sm:$0xff] %v4661
  %5238 = vst [vmem:[#allocation2 + $0x5d8] sm:$0xff] %v4662
  %5239 = vst [vmem:[#allocation2 + $0x5e0] sm:$0xff] %v4663
  %5240 = vst [vmem:[#allocation2 + $0x5e8] sm:$0xff] %v4664
  %5241 = vst [vmem:[#allocation2 + $0x5f8] sm:$0xff] %v4665
  %5242 = vst [vmem:[#allocation2 + $0x600] sm:$0xff] %v4666
  %5243 = vst [vmem:[#allocation2 + $0x608] sm:$0xff] %v4667
  %5244 = vst [vmem:[#allocation2 + $0x610] sm:$0xff] %v4668
  %5245 = vst [vmem:[#allocation2 + $0x620] sm:$0xff] %v4669
  %5246 = vst [vmem:[#allocation2 + $0x628] sm:$0xff] %v4670
  %5247 = vst [vmem:[#allocation2 + $0x630] sm:$0xff] %v4671
  %5248 = vst [vmem:[#allocation2 + $0x638] sm:$0xff] %v4672
  %5249 = vst [vmem:[#allocation2 + $0x648] sm:$0xff] %v4673
  %5250 = vst [vmem:[#allocation2 + $0x650] sm:$0xff] %v4674
  %5251 = vst [vmem:[#allocation2 + $0x658] sm:$0xff] %v4675
  %5252 = vst [vmem:[#allocation2 + $0x660] sm:$0xff] %v4676
  %5253 = vst [vmem:[#allocation2 + $0x670] sm:$0xff] %v4677
  %5254 = vst [vmem:[#allocation2 + $0x678] sm:$0xff] %v4678
  %5255 = vst [vmem:[#allocation2 + $0x680] sm:$0xff] %v4679
  %5256 = vst [vmem:[#allocation2 + $0x688] sm:$0xff] %v4680
  %5257 = vst [vmem:[#allocation2 + $0x698] sm:$0xff] %v4681
  %5258 = vst [vmem:[#allocation2 + $0x6a0] sm:$0xff] %v4682
  %5259 = vst [vmem:[#allocation2 + $0x6a8] sm:$0xff] %v4683
  %5260 = vst [vmem:[#allocation2 + $0x6b0] sm:$0xff] %v4684
  %5261 = vst [vmem:[#allocation2 + $0x6c0] sm:$0xff] %v4685
  %5262 = vst [vmem:[#allocation2 + $0x6c8] sm:$0xff] %v4686
  %5263 = vst [vmem:[#allocation2 + $0x6d0] sm:$0xff] %v4687
  %5264 = vst [vmem:[#allocation2 + $0x6d8] sm:$0xff] %v4688
  %5265 = vst [vmem:[#allocation2 + $0x6e8] sm:$0xff] %v4689
  %5266 = vst [vmem:[#allocation2 + $0x6f0] sm:$0xff] %v4690
  %5267 = vst [vmem:[#allocation2 + $0x6f8] sm:$0xff] %v4691
  %5268 = vst [vmem:[#allocation2 + $0x700] sm:$0xff] %v4692
  %5269 = vst [vmem:[#allocation2 + $0x710] sm:$0xff] %v4693
  %5270 = vst [vmem:[#allocation2 + $0x718] sm:$0xff] %v4694
  %5271 = vst [vmem:[#allocation2 + $0x720] sm:$0xff] %v4695
  %5272 = vst [vmem:[#allocation2 + $0x728] sm:$0xff] %v4696
  %5273 = vst [vmem:[#allocation2 + $0x738] sm:$0xff] %v4697
  %5274 = vst [vmem:[#allocation2 + $0x740] sm:$0xff] %v4698
  %5275 = vst [vmem:[#allocation2 + $0x748] sm:$0xff] %v4699
  %5276 = vst [vmem:[#allocation2 + $0x750] sm:$0xff] %v4700
  %5277 = vst [vmem:[#allocation2 + $0x760] sm:$0xff] %v4701
  %5278 = vst [vmem:[#allocation2 + $0x768] sm:$0xff] %v4702
  %5279 = vst [vmem:[#allocation2 + $0x770] sm:$0xff] %v4703
  %5280 = vst [vmem:[#allocation2 + $0x778] sm:$0xff] %v4704
  %5281 = vst [vmem:[#allocation2 + $0x788] sm:$0xff] %v4705
  %5282 = vst [vmem:[#allocation2 + $0x790] sm:$0xff] %v4706
  %5283 = vst [vmem:[#allocation2 + $0x798] sm:$0xff] %v4707
  %5284 = vst [vmem:[#allocation2 + $0x7a0] sm:$0xff] %v4708
  %5285 = vst [vmem:[#allocation2 + $0x7b0] sm:$0xff] %v4709
  %5286 = vst [vmem:[#allocation2 + $0x7b8] sm:$0xff] %v4710
  %5287 = vst [vmem:[#allocation2 + $0x7c0] sm:$0xff] %v4711
  %5288 = vst [vmem:[#allocation2 + $0x7c8] sm:$0xff] %v4712
  %5289 = vst [vmem:[#allocation2 + $0x7d8] sm:$0xff] %v4713
  %5290 = vst [vmem:[#allocation2 + $0x7e0] sm:$0xff] %v4714
  %5291 = vst [vmem:[#allocation2 + $0x7e8] sm:$0xff] %v4715
  %5292 = vst [vmem:[#allocation2 + $0x7f0] sm:$0xff] %v4716
  %5293 = vst [vmem:[#allocation2 + $0x800] sm:$0xff] %v4717
  %5294 = vst [vmem:[#allocation2 + $0x808] sm:$0xff] %v4718
  %5295 = vst [vmem:[#allocation2 + $0x810] sm:$0xff] %v4719
  %5296 = vst [vmem:[#allocation2 + $0x818] sm:$0xff] %v4720
  %5297 = vst [vmem:[#allocation2 + $0x828] sm:$0xff] %v4721
  %5298 = vst [vmem:[#allocation2 + $0x830] sm:$0xff] %v4722
  %5299 = vst [vmem:[#allocation2 + $0x838] sm:$0xff] %v4723
  %5300 = vst [vmem:[#allocation2 + $0x840] sm:$0xff] %v4724
  %5301 = vst [vmem:[#allocation2 + $0x850] sm:$0xff] %v4725
  %5302 = vst [vmem:[#allocation2 + $0x858] sm:$0xff] %v4726
  %5303 = vst [vmem:[#allocation2 + $0x860] sm:$0xff] %v4727
  %5304 = vst [vmem:[#allocation2 + $0x868] sm:$0xff] %v4728
  %5305 = vst [vmem:[#allocation2 + $0x878] sm:$0xff] %v4729
  %5306 = vst [vmem:[#allocation2 + $0x880] sm:$0xff] %v4730
  %5307 = vst [vmem:[#allocation2 + $0x888] sm:$0xff] %v4731
  %5308 = vst [vmem:[#allocation2 + $0x890] sm:$0xff] %v4732
  %5309 = vst [vmem:[#allocation2 + $0x8a0] sm:$0xff] %v4733
  %5310 = vst [vmem:[#allocation2 + $0x8a8] sm:$0xff] %v4734
  %5311 = vst [vmem:[#allocation2 + $0x8b0] sm:$0xff] %v4735
  %5312 = vst [vmem:[#allocation2 + $0x8b8] sm:$0xff] %v4736
  %5313 = vst [vmem:[#allocation2 + $0x8c8] sm:$0xff] %v4737
  %5314 = vst [vmem:[#allocation2 + $0x8d0] sm:$0xff] %v4738
  %5315 = vst [vmem:[#allocation2 + $0x8d8] sm:$0xff] %v4739
  %5316 = vst [vmem:[#allocation2 + $0x8e0] sm:$0xff] %v4740
  %5317 = vst [vmem:[#allocation2 + $0x8f0] sm:$0xff] %v4741
  %5318 = vst [vmem:[#allocation2 + $0x8f8] sm:$0xff] %v4742
  %5319 = vst [vmem:[#allocation2 + $0x900] sm:$0xff] %v4743
  %5320 = vst [vmem:[#allocation2 + $0x908] sm:$0xff] %v4744
  %5321 = vst [vmem:[#allocation2 + $0x918] sm:$0xff] %v4745
  %5322 = vst [vmem:[#allocation2 + $0x920] sm:$0xff] %v4746
  %5323 = vst [vmem:[#allocation2 + $0x928] sm:$0xff] %v4747
  %5324 = vst [vmem:[#allocation2 + $0x930] sm:$0xff] %v4748
  %5325 = vst [vmem:[#allocation2 + $0x940] sm:$0xff] %v4749
  %5326 = vst [vmem:[#allocation2 + $0x948] sm:$0xff] %v4750
  %5327 = vst [vmem:[#allocation2 + $0x950] sm:$0xff] %v4751
  %5328 = vst [vmem:[#allocation2 + $0x958] sm:$0xff] %v4752
  %5329 = vst [vmem:[#allocation2 + $0x968] sm:$0xff] %v4753
  %5330 = vst [vmem:[#allocation2 + $0x970] sm:$0xff] %v4754
  %5331 = vst [vmem:[#allocation2 + $0x978] sm:$0xff] %v4755
  %5332 = vst [vmem:[#allocation2 + $0x980] sm:$0xff] %v4756
  %5333 = vst [vmem:[#allocation2 + $0x990] sm:$0xff] %v4757
  %5334 = vst [vmem:[#allocation2 + $0x998] sm:$0xff] %v4758
  %5335 = vst [vmem:[#allocation2 + $0x9a0] sm:$0xff] %v4759
  %5336 = vst [vmem:[#allocation2 + $0x9a8] sm:$0xff] %v4760
  %5337 = vst [vmem:[#allocation2 + $0x9b8] sm:$0xff] %v4761
  %5338 = vst [vmem:[#allocation2 + $0x9c0] sm:$0xff] %v4762
  %5339 = vst [vmem:[#allocation2 + $0x9c8] sm:$0xff] %v4763
  %5340 = vst [vmem:[#allocation2 + $0x9d0] sm:$0xff] %v4764
  %5341 = vst [vmem:[#allocation2 + $0x9e0] sm:$0xff] %v4765
  %5342 = vst [vmem:[#allocation2 + $0x9e8] sm:$0xff] %v4766
  %5343 = vst [vmem:[#allocation2 + $0x9f0] sm:$0xff] %v4767
  %5344 = vst [vmem:[#allocation2 + $0x9f8] sm:$0xff] %v4768
  %s5345 = scalar_lea.vmem [#allocation2], 7
  %v5346 = vld [vmem:[%s5345] ss:$2 sm:$0xff]
  %s5347 = scalar_lea.vmem [#allocation2], 23
  %v5348 = vld [vmem:[%s5347] ss:$2 sm:$0xff]
  %s5349 = scalar_lea.vmem [#allocation2], 47
  %v5350 = vld [vmem:[%s5349] ss:$2 sm:$0xff]
  %s5351 = scalar_lea.vmem [#allocation2], 63
  %v5352 = vld [vmem:[%s5351] ss:$2 sm:$0xff]
  %s5353 = scalar_lea.vmem [#allocation2], 87
  %v5354 = vld [vmem:[%s5353] ss:$2 sm:$0xff]
  %s5355 = scalar_lea.vmem [#allocation2], 103
  %v5356 = vld [vmem:[%s5355] ss:$2 sm:$0xff]
  %s5357 = scalar_lea.vmem [#allocation2], 127
  %v5358 = vld [vmem:[%s5357] ss:$2 sm:$0xff]
  %s5359 = scalar_lea.vmem [#allocation2], 143
  %v5360 = vld [vmem:[%s5359] ss:$2 sm:$0xff]
  %s5361 = scalar_lea.vmem [#allocation2], 167
  %v5362 = vld [vmem:[%s5361] ss:$2 sm:$0xff]
  %s5363 = scalar_lea.vmem [#allocation2], 183
  %v5364 = vld [vmem:[%s5363] ss:$2 sm:$0xff]
  %s5365 = scalar_lea.vmem [#allocation2], 207
  %v5366 = vld [vmem:[%s5365] ss:$2 sm:$0xff]
  %s5367 = scalar_lea.vmem [#allocation2], 223
  %v5368 = vld [vmem:[%s5367] ss:$2 sm:$0xff]
  %s5369 = scalar_lea.vmem [#allocation2], 247
  %v5370 = vld [vmem:[%s5369] ss:$2 sm:$0xff]
  %s5371 = scalar_lea.vmem [#allocation2], 263
  %v5372 = vld [vmem:[%s5371] ss:$2 sm:$0xff]
  %s5373 = scalar_lea.vmem [#allocation2], 287
  %v5374 = vld [vmem:[%s5373] ss:$2 sm:$0xff]
  %s5375 = scalar_lea.vmem [#allocation2], 303
  %v5376 = vld [vmem:[%s5375] ss:$2 sm:$0xff]
  %s5377 = scalar_lea.vmem [#allocation2], 327
  %v5378 = vld [vmem:[%s5377] ss:$2 sm:$0xff]
  %s5379 = scalar_lea.vmem [#allocation2], 343
  %v5380 = vld [vmem:[%s5379] ss:$2 sm:$0xff]
  %s5381 = scalar_lea.vmem [#allocation2], 367
  %v5382 = vld [vmem:[%s5381] ss:$2 sm:$0xff]
  %s5383 = scalar_lea.vmem [#allocation2], 383
  %v5384 = vld [vmem:[%s5383] ss:$2 sm:$0xff]
  %s5385 = scalar_lea.vmem [#allocation2], 407
  %v5386 = vld [vmem:[%s5385] ss:$2 sm:$0xff]
  %s5387 = scalar_lea.vmem [#allocation2], 423
  %v5388 = vld [vmem:[%s5387] ss:$2 sm:$0xff]
  %s5389 = scalar_lea.vmem [#allocation2], 447
  %v5390 = vld [vmem:[%s5389] ss:$2 sm:$0xff]
  %s5391 = scalar_lea.vmem [#allocation2], 463
  %v5392 = vld [vmem:[%s5391] ss:$2 sm:$0xff]
  %s5393 = scalar_lea.vmem [#allocation2], 487
  %v5394 = vld [vmem:[%s5393] ss:$2 sm:$0xff]
  %s5395 = scalar_lea.vmem [#allocation2], 503
  %v5396 = vld [vmem:[%s5395] ss:$2 sm:$0xff]
  %s5397 = scalar_lea.vmem [#allocation2], 527
  %v5398 = vld [vmem:[%s5397] ss:$2 sm:$0xff]
  %s5399 = scalar_lea.vmem [#allocation2], 543
  %v5400 = vld [vmem:[%s5399] ss:$2 sm:$0xff]
  %s5401 = scalar_lea.vmem [#allocation2], 567
  %v5402 = vld [vmem:[%s5401] ss:$2 sm:$0xff]
  %s5403 = scalar_lea.vmem [#allocation2], 583
  %v5404 = vld [vmem:[%s5403] ss:$2 sm:$0xff]
  %s5405 = scalar_lea.vmem [#allocation2], 607
  %v5406 = vld [vmem:[%s5405] ss:$2 sm:$0xff]
  %s5407 = scalar_lea.vmem [#allocation2], 623
  %v5408 = vld [vmem:[%s5407] ss:$2 sm:$0xff]
  %s5409 = scalar_lea.vmem [#allocation2], 647
  %v5410 = vld [vmem:[%s5409] ss:$2 sm:$0xff]
  %s5411 = scalar_lea.vmem [#allocation2], 663
  %v5412 = vld [vmem:[%s5411] ss:$2 sm:$0xff]
  %s5413 = scalar_lea.vmem [#allocation2], 687
  %v5414 = vld [vmem:[%s5413] ss:$2 sm:$0xff]
  %s5415 = scalar_lea.vmem [#allocation2], 703
  %v5416 = vld [vmem:[%s5415] ss:$2 sm:$0xff]
  %s5417 = scalar_lea.vmem [#allocation2], 727
  %v5418 = vld [vmem:[%s5417] ss:$2 sm:$0xff]
  %s5419 = scalar_lea.vmem [#allocation2], 743
  %v5420 = vld [vmem:[%s5419] ss:$2 sm:$0xff]
  %s5421 = scalar_lea.vmem [#allocation2], 767
  %v5422 = vld [vmem:[%s5421] ss:$2 sm:$0xff]
  %s5423 = scalar_lea.vmem [#allocation2], 783
  %v5424 = vld [vmem:[%s5423] ss:$2 sm:$0xff]
  %s5425 = scalar_lea.vmem [#allocation2], 807
  %v5426 = vld [vmem:[%s5425] ss:$2 sm:$0xff]
  %s5427 = scalar_lea.vmem [#allocation2], 823
  %v5428 = vld [vmem:[%s5427] ss:$2 sm:$0xff]
  %s5429 = scalar_lea.vmem [#allocation2], 847
  %v5430 = vld [vmem:[%s5429] ss:$2 sm:$0xff]
  %s5431 = scalar_lea.vmem [#allocation2], 863
  %v5432 = vld [vmem:[%s5431] ss:$2 sm:$0xff]
  %s5433 = scalar_lea.vmem [#allocation2], 887
  %v5434 = vld [vmem:[%s5433] ss:$2 sm:$0xff]
  %s5435 = scalar_lea.vmem [#allocation2], 903
  %v5436 = vld [vmem:[%s5435] ss:$2 sm:$0xff]
  %s5437 = scalar_lea.vmem [#allocation2], 927
  %v5438 = vld [vmem:[%s5437] ss:$2 sm:$0xff]
  %s5439 = scalar_lea.vmem [#allocation2], 943
  %v5440 = vld [vmem:[%s5439] ss:$2 sm:$0xff]
  %s5441 = scalar_lea.vmem [#allocation2], 967
  %v5442 = vld [vmem:[%s5441] ss:$2 sm:$0xff]
  %s5443 = scalar_lea.vmem [#allocation2], 983
  %v5444 = vld [vmem:[%s5443] ss:$2 sm:$0xff]
  %s5445 = scalar_lea.vmem [#allocation2], 1007
  %v5446 = vld [vmem:[%s5445] ss:$2 sm:$0xff]
  %s5447 = scalar_lea.vmem [#allocation2], 1023
  %v5448 = vld [vmem:[%s5447] ss:$2 sm:$0xff]
  %s5449 = scalar_lea.vmem [#allocation2], 1047
  %v5450 = vld [vmem:[%s5449] ss:$2 sm:$0xff]
  %s5451 = scalar_lea.vmem [#allocation2], 1063
  %v5452 = vld [vmem:[%s5451] ss:$2 sm:$0xff]
  %s5453 = scalar_lea.vmem [#allocation2], 1087
  %v5454 = vld [vmem:[%s5453] ss:$2 sm:$0xff]
  %s5455 = scalar_lea.vmem [#allocation2], 1103
  %v5456 = vld [vmem:[%s5455] ss:$2 sm:$0xff]
  %s5457 = scalar_lea.vmem [#allocation2], 1127
  %v5458 = vld [vmem:[%s5457] ss:$2 sm:$0xff]
  %s5459 = scalar_lea.vmem [#allocation2], 1143
  %v5460 = vld [vmem:[%s5459] ss:$2 sm:$0xff]
  %s5461 = scalar_lea.vmem [#allocation2], 1167
  %v5462 = vld [vmem:[%s5461] ss:$2 sm:$0xff]
  %s5463 = scalar_lea.vmem [#allocation2], 1183
  %v5464 = vld [vmem:[%s5463] ss:$2 sm:$0xff]
  %s5465 = scalar_lea.vmem [#allocation2], 1207
  %v5466 = vld [vmem:[%s5465] ss:$2 sm:$0xff]
  %s5467 = scalar_lea.vmem [#allocation2], 1223
  %v5468 = vld [vmem:[%s5467] ss:$2 sm:$0xff]
  %s5469 = scalar_lea.vmem [#allocation2], 1247
  %v5470 = vld [vmem:[%s5469] ss:$2 sm:$0xff]
  %s5471 = scalar_lea.vmem [#allocation2], 1263
  %v5472 = vld [vmem:[%s5471] ss:$2 sm:$0xff]
  %s5473 = scalar_lea.vmem [#allocation2], 1287
  %v5474 = vld [vmem:[%s5473] ss:$2 sm:$0xff]
  %s5475 = scalar_lea.vmem [#allocation2], 1303
  %v5476 = vld [vmem:[%s5475] ss:$2 sm:$0xff]
  %s5477 = scalar_lea.vmem [#allocation2], 1327
  %v5478 = vld [vmem:[%s5477] ss:$2 sm:$0xff]
  %s5479 = scalar_lea.vmem [#allocation2], 1343
  %v5480 = vld [vmem:[%s5479] ss:$2 sm:$0xff]
  %s5481 = scalar_lea.vmem [#allocation2], 1367
  %v5482 = vld [vmem:[%s5481] ss:$2 sm:$0xff]
  %s5483 = scalar_lea.vmem [#allocation2], 1383
  %v5484 = vld [vmem:[%s5483] ss:$2 sm:$0xff]
  %s5485 = scalar_lea.vmem [#allocation2], 1407
  %v5486 = vld [vmem:[%s5485] ss:$2 sm:$0xff]
  %s5487 = scalar_lea.vmem [#allocation2], 1423
  %v5488 = vld [vmem:[%s5487] ss:$2 sm:$0xff]
  %s5489 = scalar_lea.vmem [#allocation2], 1447
  %v5490 = vld [vmem:[%s5489] ss:$2 sm:$0xff]
  %s5491 = scalar_lea.vmem [#allocation2], 1463
  %v5492 = vld [vmem:[%s5491] ss:$2 sm:$0xff]
  %s5493 = scalar_lea.vmem [#allocation2], 1487
  %v5494 = vld [vmem:[%s5493] ss:$2 sm:$0xff]
  %s5495 = scalar_lea.vmem [#allocation2], 1503
  %v5496 = vld [vmem:[%s5495] ss:$2 sm:$0xff]
  %s5497 = scalar_lea.vmem [#allocation2], 1527
  %v5498 = vld [vmem:[%s5497] ss:$2 sm:$0xff]
  %s5499 = scalar_lea.vmem [#allocation2], 1543
  %v5500 = vld [vmem:[%s5499] ss:$2 sm:$0xff]
  %s5501 = scalar_lea.vmem [#allocation2], 1567
  %v5502 = vld [vmem:[%s5501] ss:$2 sm:$0xff]
  %s5503 = scalar_lea.vmem [#allocation2], 1583
  %v5504 = vld [vmem:[%s5503] ss:$2 sm:$0xff]
  %s5505 = scalar_lea.vmem [#allocation2], 1607
  %v5506 = vld [vmem:[%s5505] ss:$2 sm:$0xff]
  %s5507 = scalar_lea.vmem [#allocation2], 1623
  %v5508 = vld [vmem:[%s5507] ss:$2 sm:$0xff]
  %s5509 = scalar_lea.vmem [#allocation2], 1647
  %v5510 = vld [vmem:[%s5509] ss:$2 sm:$0xff]
  %s5511 = scalar_lea.vmem [#allocation2], 1663
  %v5512 = vld [vmem:[%s5511] ss:$2 sm:$0xff]
  %s5513 = scalar_lea.vmem [#allocation2], 1687
  %v5514 = vld [vmem:[%s5513] ss:$2 sm:$0xff]
  %s5515 = scalar_lea.vmem [#allocation2], 1703
  %v5516 = vld [vmem:[%s5515] ss:$2 sm:$0xff]
  %s5517 = scalar_lea.vmem [#allocation2], 1727
  %v5518 = vld [vmem:[%s5517] ss:$2 sm:$0xff]
  %s5519 = scalar_lea.vmem [#allocation2], 1743
  %v5520 = vld [vmem:[%s5519] ss:$2 sm:$0xff]
  %s5521 = scalar_lea.vmem [#allocation2], 1767
  %v5522 = vld [vmem:[%s5521] ss:$2 sm:$0xff]
  %s5523 = scalar_lea.vmem [#allocation2], 1783
  %v5524 = vld [vmem:[%s5523] ss:$2 sm:$0xff]
  %s5525 = scalar_lea.vmem [#allocation2], 1807
  %v5526 = vld [vmem:[%s5525] ss:$2 sm:$0xff]
  %s5527 = scalar_lea.vmem [#allocation2], 1823
  %v5528 = vld [vmem:[%s5527] ss:$2 sm:$0xff]
  %s5529 = scalar_lea.vmem [#allocation2], 1847
  %v5530 = vld [vmem:[%s5529] ss:$2 sm:$0xff]
  %s5531 = scalar_lea.vmem [#allocation2], 1863
  %v5532 = vld [vmem:[%s5531] ss:$2 sm:$0xff]
  %s5533 = scalar_lea.vmem [#allocation2], 1887
  %v5534 = vld [vmem:[%s5533] ss:$2 sm:$0xff]
  %s5535 = scalar_lea.vmem [#allocation2], 1903
  %v5536 = vld [vmem:[%s5535] ss:$2 sm:$0xff]
  %s5537 = scalar_lea.vmem [#allocation2], 1927
  %v5538 = vld [vmem:[%s5537] ss:$2 sm:$0xff]
  %s5539 = scalar_lea.vmem [#allocation2], 1943
  %v5540 = vld [vmem:[%s5539] ss:$2 sm:$0xff]
  %s5541 = scalar_lea.vmem [#allocation2], 1967
  %v5542 = vld [vmem:[%s5541] ss:$2 sm:$0xff]
  %s5543 = scalar_lea.vmem [#allocation2], 1983
  %v5544 = vld [vmem:[%s5543] ss:$2 sm:$0xff]
  %s5545 = scalar_lea.vmem [#allocation2], 2007
  %v5546 = vld [vmem:[%s5545] ss:$2 sm:$0xff]
  %s5547 = scalar_lea.vmem [#allocation2], 2023
  %v5548 = vld [vmem:[%s5547] ss:$2 sm:$0xff]
  %s5549 = scalar_lea.vmem [#allocation2], 2047
  %v5550 = vld [vmem:[%s5549] ss:$2 sm:$0xff]
  %s5551 = scalar_lea.vmem [#allocation2], 2063
  %v5552 = vld [vmem:[%s5551] ss:$2 sm:$0xff]
  %s5553 = scalar_lea.vmem [#allocation2], 2087
  %v5554 = vld [vmem:[%s5553] ss:$2 sm:$0xff]
  %s5555 = scalar_lea.vmem [#allocation2], 2103
  %v5556 = vld [vmem:[%s5555] ss:$2 sm:$0xff]
  %s5557 = scalar_lea.vmem [#allocation2], 2127
  %v5558 = vld [vmem:[%s5557] ss:$2 sm:$0xff]
  %s5559 = scalar_lea.vmem [#allocation2], 2143
  %v5560 = vld [vmem:[%s5559] ss:$2 sm:$0xff]
  %s5561 = scalar_lea.vmem [#allocation2], 2167
  %v5562 = vld [vmem:[%s5561] ss:$2 sm:$0xff]
  %s5563 = scalar_lea.vmem [#allocation2], 2183
  %v5564 = vld [vmem:[%s5563] ss:$2 sm:$0xff]
  %s5565 = scalar_lea.vmem [#allocation2], 2207
  %v5566 = vld [vmem:[%s5565] ss:$2 sm:$0xff]
  %s5567 = scalar_lea.vmem [#allocation2], 2223
  %v5568 = vld [vmem:[%s5567] ss:$2 sm:$0xff]
  %s5569 = scalar_lea.vmem [#allocation2], 2247
  %v5570 = vld [vmem:[%s5569] ss:$2 sm:$0xff]
  %s5571 = scalar_lea.vmem [#allocation2], 2263
  %v5572 = vld [vmem:[%s5571] ss:$2 sm:$0xff]
  %s5573 = scalar_lea.vmem [#allocation2], 2287
  %v5574 = vld [vmem:[%s5573] ss:$2 sm:$0xff]
  %s5575 = scalar_lea.vmem [#allocation2], 2303
  %v5576 = vld [vmem:[%s5575] ss:$2 sm:$0xff]
  %s5577 = scalar_lea.vmem [#allocation2], 2327
  %v5578 = vld [vmem:[%s5577] ss:$2 sm:$0xff]
  %s5579 = scalar_lea.vmem [#allocation2], 2343
  %v5580 = vld [vmem:[%s5579] ss:$2 sm:$0xff]
  %s5581 = scalar_lea.vmem [#allocation2], 2367
  %v5582 = vld [vmem:[%s5581] ss:$2 sm:$0xff]
  %s5583 = scalar_lea.vmem [#allocation2], 2383
  %v5584 = vld [vmem:[%s5583] ss:$2 sm:$0xff]
  %s5585 = scalar_lea.vmem [#allocation2], 2407
  %v5586 = vld [vmem:[%s5585] ss:$2 sm:$0xff]
  %s5587 = scalar_lea.vmem [#allocation2], 2423
  %v5588 = vld [vmem:[%s5587] ss:$2 sm:$0xff]
  %s5589 = scalar_lea.vmem [#allocation2], 2447
  %v5590 = vld [vmem:[%s5589] ss:$2 sm:$0xff]
  %s5591 = scalar_lea.vmem [#allocation2], 2463
  %v5592 = vld [vmem:[%s5591] ss:$2 sm:$0xff]
  %s5593 = scalar_lea.vmem [#allocation2], 2487
  %v5594 = vld [vmem:[%s5593] ss:$2 sm:$0xff]
  %s5595 = scalar_lea.vmem [#allocation2], 2503
  %v5596 = vld [vmem:[%s5595] ss:$2 sm:$0xff]
  %s5597 = scalar_lea.vmem [#allocation2], 2527
  %v5598 = vld [vmem:[%s5597] ss:$2 sm:$0xff]
  %s5599 = scalar_lea.vmem [#allocation2], 2543
  %v5600 = vld [vmem:[%s5599] ss:$2 sm:$0xff]
  %s5601 = scalar_lea.vmem [#allocation2], 8
  %v5602 = vld [vmem:[%s5601] ss:$2 sm:$0xff]
  %s5603 = scalar_lea.vmem [#allocation2], 24
  %v5604 = vld [vmem:[%s5603] ss:$2 sm:$0xff]
  %s5605 = scalar_lea.vmem [#allocation2], 48
  %v5606 = vld [vmem:[%s5605] ss:$2 sm:$0xff]
  %s5607 = scalar_lea.vmem [#allocation2], 64
  %v5608 = vld [vmem:[%s5607] ss:$2 sm:$0xff]
  %s5609 = scalar_lea.vmem [#allocation2], 88
  %v5610 = vld [vmem:[%s5609] ss:$2 sm:$0xff]
  %s5611 = scalar_lea.vmem [#allocation2], 104
  %v5612 = vld [vmem:[%s5611] ss:$2 sm:$0xff]
  %s5613 = scalar_lea.vmem [#allocation2], 128
  %v5614 = vld [vmem:[%s5613] ss:$2 sm:$0xff]
  %s5615 = scalar_lea.vmem [#allocation2], 144
  %v5616 = vld [vmem:[%s5615] ss:$2 sm:$0xff]
  %s5617 = scalar_lea.vmem [#allocation2], 168
  %v5618 = vld [vmem:[%s5617] ss:$2 sm:$0xff]
  %s5619 = scalar_lea.vmem [#allocation2], 184
  %v5620 = vld [vmem:[%s5619] ss:$2 sm:$0xff]
  %s5621 = scalar_lea.vmem [#allocation2], 208
  %v5622 = vld [vmem:[%s5621] ss:$2 sm:$0xff]
  %s5623 = scalar_lea.vmem [#allocation2], 224
  %v5624 = vld [vmem:[%s5623] ss:$2 sm:$0xff]
  %s5625 = scalar_lea.vmem [#allocation2], 248
  %v5626 = vld [vmem:[%s5625] ss:$2 sm:$0xff]
  %s5627 = scalar_lea.vmem [#allocation2], 264
  %v5628 = vld [vmem:[%s5627] ss:$2 sm:$0xff]
  %s5629 = scalar_lea.vmem [#allocation2], 288
  %v5630 = vld [vmem:[%s5629] ss:$2 sm:$0xff]
  %s5631 = scalar_lea.vmem [#allocation2], 304
  %v5632 = vld [vmem:[%s5631] ss:$2 sm:$0xff]
  %s5633 = scalar_lea.vmem [#allocation2], 328
  %v5634 = vld [vmem:[%s5633] ss:$2 sm:$0xff]
  %s5635 = scalar_lea.vmem [#allocation2], 344
  %v5636 = vld [vmem:[%s5635] ss:$2 sm:$0xff]
  %s5637 = scalar_lea.vmem [#allocation2], 368
  %v5638 = vld [vmem:[%s5637] ss:$2 sm:$0xff]
  %s5639 = scalar_lea.vmem [#allocation2], 384
  %v5640 = vld [vmem:[%s5639] ss:$2 sm:$0xff]
  %s5641 = scalar_lea.vmem [#allocation2], 408
  %v5642 = vld [vmem:[%s5641] ss:$2 sm:$0xff]
  %s5643 = scalar_lea.vmem [#allocation2], 424
  %v5644 = vld [vmem:[%s5643] ss:$2 sm:$0xff]
  %s5645 = scalar_lea.vmem [#allocation2], 448
  %v5646 = vld [vmem:[%s5645] ss:$2 sm:$0xff]
  %s5647 = scalar_lea.vmem [#allocation2], 464
  %v5648 = vld [vmem:[%s5647] ss:$2 sm:$0xff]
  %s5649 = scalar_lea.vmem [#allocation2], 488
  %v5650 = vld [vmem:[%s5649] ss:$2 sm:$0xff]
  %s5651 = scalar_lea.vmem [#allocation2], 504
  %v5652 = vld [vmem:[%s5651] ss:$2 sm:$0xff]
  %s5653 = scalar_lea.vmem [#allocation2], 528
  %v5654 = vld [vmem:[%s5653] ss:$2 sm:$0xff]
  %s5655 = scalar_lea.vmem [#allocation2], 544
  %v5656 = vld [vmem:[%s5655] ss:$2 sm:$0xff]
  %s5657 = scalar_lea.vmem [#allocation2], 568
  %v5658 = vld [vmem:[%s5657] ss:$2 sm:$0xff]
  %s5659 = scalar_lea.vmem [#allocation2], 584
  %v5660 = vld [vmem:[%s5659] ss:$2 sm:$0xff]
  %s5661 = scalar_lea.vmem [#allocation2], 608
  %v5662 = vld [vmem:[%s5661] ss:$2 sm:$0xff]
  %s5663 = scalar_lea.vmem [#allocation2], 624
  %v5664 = vld [vmem:[%s5663] ss:$2 sm:$0xff]
  %s5665 = scalar_lea.vmem [#allocation2], 648
  %v5666 = vld [vmem:[%s5665] ss:$2 sm:$0xff]
  %s5667 = scalar_lea.vmem [#allocation2], 664
  %v5668 = vld [vmem:[%s5667] ss:$2 sm:$0xff]
  %s5669 = scalar_lea.vmem [#allocation2], 688
  %v5670 = vld [vmem:[%s5669] ss:$2 sm:$0xff]
  %s5671 = scalar_lea.vmem [#allocation2], 704
  %v5672 = vld [vmem:[%s5671] ss:$2 sm:$0xff]
  %s5673 = scalar_lea.vmem [#allocation2], 728
  %v5674 = vld [vmem:[%s5673] ss:$2 sm:$0xff]
  %s5675 = scalar_lea.vmem [#allocation2], 744
  %v5676 = vld [vmem:[%s5675] ss:$2 sm:$0xff]
  %s5677 = scalar_lea.vmem [#allocation2], 768
  %v5678 = vld [vmem:[%s5677] ss:$2 sm:$0xff]
  %s5679 = scalar_lea.vmem [#allocation2], 784
  %v5680 = vld [vmem:[%s5679] ss:$2 sm:$0xff]
  %s5681 = scalar_lea.vmem [#allocation2], 808
  %v5682 = vld [vmem:[%s5681] ss:$2 sm:$0xff]
  %s5683 = scalar_lea.vmem [#allocation2], 824
  %v5684 = vld [vmem:[%s5683] ss:$2 sm:$0xff]
  %s5685 = scalar_lea.vmem [#allocation2], 848
  %v5686 = vld [vmem:[%s5685] ss:$2 sm:$0xff]
  %s5687 = scalar_lea.vmem [#allocation2], 864
  %v5688 = vld [vmem:[%s5687] ss:$2 sm:$0xff]
  %s5689 = scalar_lea.vmem [#allocation2], 888
  %v5690 = vld [vmem:[%s5689] ss:$2 sm:$0xff]
  %s5691 = scalar_lea.vmem [#allocation2], 904
  %v5692 = vld [vmem:[%s5691] ss:$2 sm:$0xff]
  %s5693 = scalar_lea.vmem [#allocation2], 928
  %v5694 = vld [vmem:[%s5693] ss:$2 sm:$0xff]
  %s5695 = scalar_lea.vmem [#allocation2], 944
  %v5696 = vld [vmem:[%s5695] ss:$2 sm:$0xff]
  %s5697 = scalar_lea.vmem [#allocation2], 968
  %v5698 = vld [vmem:[%s5697] ss:$2 sm:$0xff]
  %s5699 = scalar_lea.vmem [#allocation2], 984
  %v5700 = vld [vmem:[%s5699] ss:$2 sm:$0xff]
  %s5701 = scalar_lea.vmem [#allocation2], 1008
  %v5702 = vld [vmem:[%s5701] ss:$2 sm:$0xff]
  %s5703 = scalar_lea.vmem [#allocation2], 1024
  %v5704 = vld [vmem:[%s5703] ss:$2 sm:$0xff]
  %s5705 = scalar_lea.vmem [#allocation2], 1048
  %v5706 = vld [vmem:[%s5705] ss:$2 sm:$0xff]
  %s5707 = scalar_lea.vmem [#allocation2], 1064
  %v5708 = vld [vmem:[%s5707] ss:$2 sm:$0xff]
  %s5709 = scalar_lea.vmem [#allocation2], 1088
  %v5710 = vld [vmem:[%s5709] ss:$2 sm:$0xff]
  %s5711 = scalar_lea.vmem [#allocation2], 1104
  %v5712 = vld [vmem:[%s5711] ss:$2 sm:$0xff]
  %s5713 = scalar_lea.vmem [#allocation2], 1128
  %v5714 = vld [vmem:[%s5713] ss:$2 sm:$0xff]
  %s5715 = scalar_lea.vmem [#allocation2], 1144
  %v5716 = vld [vmem:[%s5715] ss:$2 sm:$0xff]
  %s5717 = scalar_lea.vmem [#allocation2], 1168
  %v5718 = vld [vmem:[%s5717] ss:$2 sm:$0xff]
  %s5719 = scalar_lea.vmem [#allocation2], 1184
  %v5720 = vld [vmem:[%s5719] ss:$2 sm:$0xff]
  %s5721 = scalar_lea.vmem [#allocation2], 1208
  %v5722 = vld [vmem:[%s5721] ss:$2 sm:$0xff]
  %s5723 = scalar_lea.vmem [#allocation2], 1224
  %v5724 = vld [vmem:[%s5723] ss:$2 sm:$0xff]
  %s5725 = scalar_lea.vmem [#allocation2], 1248
  %v5726 = vld [vmem:[%s5725] ss:$2 sm:$0xff]
  %s5727 = scalar_lea.vmem [#allocation2], 1264
  %v5728 = vld [vmem:[%s5727] ss:$2 sm:$0xff]
  %s5729 = scalar_lea.vmem [#allocation2], 1288
  %v5730 = vld [vmem:[%s5729] ss:$2 sm:$0xff]
  %s5731 = scalar_lea.vmem [#allocation2], 1304
  %v5732 = vld [vmem:[%s5731] ss:$2 sm:$0xff]
  %s5733 = scalar_lea.vmem [#allocation2], 1328
  %v5734 = vld [vmem:[%s5733] ss:$2 sm:$0xff]
  %s5735 = scalar_lea.vmem [#allocation2], 1344
  %v5736 = vld [vmem:[%s5735] ss:$2 sm:$0xff]
  %s5737 = scalar_lea.vmem [#allocation2], 1368
  %v5738 = vld [vmem:[%s5737] ss:$2 sm:$0xff]
  %s5739 = scalar_lea.vmem [#allocation2], 1384
  %v5740 = vld [vmem:[%s5739] ss:$2 sm:$0xff]
  %s5741 = scalar_lea.vmem [#allocation2], 1408
  %v5742 = vld [vmem:[%s5741] ss:$2 sm:$0xff]
  %s5743 = scalar_lea.vmem [#allocation2], 1424
  %v5744 = vld [vmem:[%s5743] ss:$2 sm:$0xff]
  %s5745 = scalar_lea.vmem [#allocation2], 1448
  %v5746 = vld [vmem:[%s5745] ss:$2 sm:$0xff]
  %s5747 = scalar_lea.vmem [#allocation2], 1464
  %v5748 = vld [vmem:[%s5747] ss:$2 sm:$0xff]
  %s5749 = scalar_lea.vmem [#allocation2], 1488
  %v5750 = vld [vmem:[%s5749] ss:$2 sm:$0xff]
  %s5751 = scalar_lea.vmem [#allocation2], 1504
  %v5752 = vld [vmem:[%s5751] ss:$2 sm:$0xff]
  %s5753 = scalar_lea.vmem [#allocation2], 1528
  %v5754 = vld [vmem:[%s5753] ss:$2 sm:$0xff]
  %s5755 = scalar_lea.vmem [#allocation2], 1544
  %v5756 = vld [vmem:[%s5755] ss:$2 sm:$0xff]
  %s5757 = scalar_lea.vmem [#allocation2], 1568
  %v5758 = vld [vmem:[%s5757] ss:$2 sm:$0xff]
  %s5759 = scalar_lea.vmem [#allocation2], 1584
  %v5760 = vld [vmem:[%s5759] ss:$2 sm:$0xff]
  %s5761 = scalar_lea.vmem [#allocation2], 1608
  %v5762 = vld [vmem:[%s5761] ss:$2 sm:$0xff]
  %s5763 = scalar_lea.vmem [#allocation2], 1624
  %v5764 = vld [vmem:[%s5763] ss:$2 sm:$0xff]
  %s5765 = scalar_lea.vmem [#allocation2], 1648
  %v5766 = vld [vmem:[%s5765] ss:$2 sm:$0xff]
  %s5767 = scalar_lea.vmem [#allocation2], 1664
  %v5768 = vld [vmem:[%s5767] ss:$2 sm:$0xff]
  %s5769 = scalar_lea.vmem [#allocation2], 1688
  %v5770 = vld [vmem:[%s5769] ss:$2 sm:$0xff]
  %s5771 = scalar_lea.vmem [#allocation2], 1704
  %v5772 = vld [vmem:[%s5771] ss:$2 sm:$0xff]
  %s5773 = scalar_lea.vmem [#allocation2], 1728
  %v5774 = vld [vmem:[%s5773] ss:$2 sm:$0xff]
  %s5775 = scalar_lea.vmem [#allocation2], 1744
  %v5776 = vld [vmem:[%s5775] ss:$2 sm:$0xff]
  %s5777 = scalar_lea.vmem [#allocation2], 1768
  %v5778 = vld [vmem:[%s5777] ss:$2 sm:$0xff]
  %s5779 = scalar_lea.vmem [#allocation2], 1784
  %v5780 = vld [vmem:[%s5779] ss:$2 sm:$0xff]
  %s5781 = scalar_lea.vmem [#allocation2], 1808
  %v5782 = vld [vmem:[%s5781] ss:$2 sm:$0xff]
  %s5783 = scalar_lea.vmem [#allocation2], 1824
  %v5784 = vld [vmem:[%s5783] ss:$2 sm:$0xff]
  %s5785 = scalar_lea.vmem [#allocation2], 1848
  %v5786 = vld [vmem:[%s5785] ss:$2 sm:$0xff]
  %s5787 = scalar_lea.vmem [#allocation2], 1864
  %v5788 = vld [vmem:[%s5787] ss:$2 sm:$0xff]
  %s5789 = scalar_lea.vmem [#allocation2], 1888
  %v5790 = vld [vmem:[%s5789] ss:$2 sm:$0xff]
  %s5791 = scalar_lea.vmem [#allocation2], 1904
  %v5792 = vld [vmem:[%s5791] ss:$2 sm:$0xff]
  %s5793 = scalar_lea.vmem [#allocation2], 1928
  %v5794 = vld [vmem:[%s5793] ss:$2 sm:$0xff]
  %s5795 = scalar_lea.vmem [#allocation2], 1944
  %v5796 = vld [vmem:[%s5795] ss:$2 sm:$0xff]
  %s5797 = scalar_lea.vmem [#allocation2], 1968
  %v5798 = vld [vmem:[%s5797] ss:$2 sm:$0xff]
  %s5799 = scalar_lea.vmem [#allocation2], 1984
  %v5800 = vld [vmem:[%s5799] ss:$2 sm:$0xff]
  %s5801 = scalar_lea.vmem [#allocation2], 2008
  %v5802 = vld [vmem:[%s5801] ss:$2 sm:$0xff]
  %s5803 = scalar_lea.vmem [#allocation2], 2024
  %v5804 = vld [vmem:[%s5803] ss:$2 sm:$0xff]
  %s5805 = scalar_lea.vmem [#allocation2], 2048
  %v5806 = vld [vmem:[%s5805] ss:$2 sm:$0xff]
  %s5807 = scalar_lea.vmem [#allocation2], 2064
  %v5808 = vld [vmem:[%s5807] ss:$2 sm:$0xff]
  %s5809 = scalar_lea.vmem [#allocation2], 2088
  %v5810 = vld [vmem:[%s5809] ss:$2 sm:$0xff]
  %s5811 = scalar_lea.vmem [#allocation2], 2104
  %v5812 = vld [vmem:[%s5811] ss:$2 sm:$0xff]
  %s5813 = scalar_lea.vmem [#allocation2], 2128
  %v5814 = vld [vmem:[%s5813] ss:$2 sm:$0xff]
  %s5815 = scalar_lea.vmem [#allocation2], 2144
  %v5816 = vld [vmem:[%s5815] ss:$2 sm:$0xff]
  %s5817 = scalar_lea.vmem [#allocation2], 2168
  %v5818 = vld [vmem:[%s5817] ss:$2 sm:$0xff]
  %s5819 = scalar_lea.vmem [#allocation2], 2184
  %v5820 = vld [vmem:[%s5819] ss:$2 sm:$0xff]
  %s5821 = scalar_lea.vmem [#allocation2], 2208
  %v5822 = vld [vmem:[%s5821] ss:$2 sm:$0xff]
  %s5823 = scalar_lea.vmem [#allocation2], 2224
  %v5824 = vld [vmem:[%s5823] ss:$2 sm:$0xff]
  %s5825 = scalar_lea.vmem [#allocation2], 2248
  %v5826 = vld [vmem:[%s5825] ss:$2 sm:$0xff]
  %s5827 = scalar_lea.vmem [#allocation2], 2264
  %v5828 = vld [vmem:[%s5827] ss:$2 sm:$0xff]
  %s5829 = scalar_lea.vmem [#allocation2], 2288
  %v5830 = vld [vmem:[%s5829] ss:$2 sm:$0xff]
  %s5831 = scalar_lea.vmem [#allocation2], 2304
  %v5832 = vld [vmem:[%s5831] ss:$2 sm:$0xff]
  %s5833 = scalar_lea.vmem [#allocation2], 2328
  %v5834 = vld [vmem:[%s5833] ss:$2 sm:$0xff]
  %s5835 = scalar_lea.vmem [#allocation2], 2344
  %v5836 = vld [vmem:[%s5835] ss:$2 sm:$0xff]
  %s5837 = scalar_lea.vmem [#allocation2], 2368
  %v5838 = vld [vmem:[%s5837] ss:$2 sm:$0xff]
  %s5839 = scalar_lea.vmem [#allocation2], 2384
  %v5840 = vld [vmem:[%s5839] ss:$2 sm:$0xff]
  %s5841 = scalar_lea.vmem [#allocation2], 2408
  %v5842 = vld [vmem:[%s5841] ss:$2 sm:$0xff]
  %s5843 = scalar_lea.vmem [#allocation2], 2424
  %v5844 = vld [vmem:[%s5843] ss:$2 sm:$0xff]
  %s5845 = scalar_lea.vmem [#allocation2], 2448
  %v5846 = vld [vmem:[%s5845] ss:$2 sm:$0xff]
  %s5847 = scalar_lea.vmem [#allocation2], 2464
  %v5848 = vld [vmem:[%s5847] ss:$2 sm:$0xff]
  %s5849 = scalar_lea.vmem [#allocation2], 2488
  %v5850 = vld [vmem:[%s5849] ss:$2 sm:$0xff]
  %s5851 = scalar_lea.vmem [#allocation2], 2504
  %v5852 = vld [vmem:[%s5851] ss:$2 sm:$0xff]
  %s5853 = scalar_lea.vmem [#allocation2], 2528
  %v5854 = vld [vmem:[%s5853] ss:$2 sm:$0xff]
  %s5855 = scalar_lea.vmem [#allocation2], 2544
  %v5856 = vld [vmem:[%s5855] ss:$2 sm:$0xff]
  %s5857 = scalar_lea.vmem [#allocation2], 9
  %v5858 = vld [vmem:[%s5857] ss:$2 sm:$0xff]
  %s5859 = scalar_lea.vmem [#allocation2], 25
  %v5860 = vld [vmem:[%s5859] ss:$2 sm:$0xff]
  %s5861 = scalar_lea.vmem [#allocation2], 49
  %v5862 = vld [vmem:[%s5861] ss:$2 sm:$0xff]
  %s5863 = scalar_lea.vmem [#allocation2], 65
  %v5864 = vld [vmem:[%s5863] ss:$2 sm:$0xff]
  %s5865 = scalar_lea.vmem [#allocation2], 89
  %v5866 = vld [vmem:[%s5865] ss:$2 sm:$0xff]
  %s5867 = scalar_lea.vmem [#allocation2], 105
  %v5868 = vld [vmem:[%s5867] ss:$2 sm:$0xff]
  %s5869 = scalar_lea.vmem [#allocation2], 129
  %v5870 = vld [vmem:[%s5869] ss:$2 sm:$0xff]
  %s5871 = scalar_lea.vmem [#allocation2], 145
  %v5872 = vld [vmem:[%s5871] ss:$2 sm:$0xff]
  %s5873 = scalar_lea.vmem [#allocation2], 169
  %v5874 = vld [vmem:[%s5873] ss:$2 sm:$0xff]
  %s5875 = scalar_lea.vmem [#allocation2], 185
  %v5876 = vld [vmem:[%s5875] ss:$2 sm:$0xff]
  %s5877 = scalar_lea.vmem [#allocation2], 209
  %v5878 = vld [vmem:[%s5877] ss:$2 sm:$0xff]
  %s5879 = scalar_lea.vmem [#allocation2], 225
  %v5880 = vld [vmem:[%s5879] ss:$2 sm:$0xff]
  %s5881 = scalar_lea.vmem [#allocation2], 249
  %v5882 = vld [vmem:[%s5881] ss:$2 sm:$0xff]
  %s5883 = scalar_lea.vmem [#allocation2], 265
  %v5884 = vld [vmem:[%s5883] ss:$2 sm:$0xff]
  %s5885 = scalar_lea.vmem [#allocation2], 289
  %v5886 = vld [vmem:[%s5885] ss:$2 sm:$0xff]
  %s5887 = scalar_lea.vmem [#allocation2], 305
  %v5888 = vld [vmem:[%s5887] ss:$2 sm:$0xff]
  %s5889 = scalar_lea.vmem [#allocation2], 329
  %v5890 = vld [vmem:[%s5889] ss:$2 sm:$0xff]
  %s5891 = scalar_lea.vmem [#allocation2], 345
  %v5892 = vld [vmem:[%s5891] ss:$2 sm:$0xff]
  %s5893 = scalar_lea.vmem [#allocation2], 369
  %v5894 = vld [vmem:[%s5893] ss:$2 sm:$0xff]
  %s5895 = scalar_lea.vmem [#allocation2], 385
  %v5896 = vld [vmem:[%s5895] ss:$2 sm:$0xff]
  %s5897 = scalar_lea.vmem [#allocation2], 409
  %v5898 = vld [vmem:[%s5897] ss:$2 sm:$0xff]
  %s5899 = scalar_lea.vmem [#allocation2], 425
  %v5900 = vld [vmem:[%s5899] ss:$2 sm:$0xff]
  %s5901 = scalar_lea.vmem [#allocation2], 449
  %v5902 = vld [vmem:[%s5901] ss:$2 sm:$0xff]
  %s5903 = scalar_lea.vmem [#allocation2], 465
  %v5904 = vld [vmem:[%s5903] ss:$2 sm:$0xff]
  %s5905 = scalar_lea.vmem [#allocation2], 489
  %v5906 = vld [vmem:[%s5905] ss:$2 sm:$0xff]
  %s5907 = scalar_lea.vmem [#allocation2], 505
  %v5908 = vld [vmem:[%s5907] ss:$2 sm:$0xff]
  %s5909 = scalar_lea.vmem [#allocation2], 529
  %v5910 = vld [vmem:[%s5909] ss:$2 sm:$0xff]
  %s5911 = scalar_lea.vmem [#allocation2], 545
  %v5912 = vld [vmem:[%s5911] ss:$2 sm:$0xff]
  %s5913 = scalar_lea.vmem [#allocation2], 569
  %v5914 = vld [vmem:[%s5913] ss:$2 sm:$0xff]
  %s5915 = scalar_lea.vmem [#allocation2], 585
  %v5916 = vld [vmem:[%s5915] ss:$2 sm:$0xff]
  %s5917 = scalar_lea.vmem [#allocation2], 609
  %v5918 = vld [vmem:[%s5917] ss:$2 sm:$0xff]
  %s5919 = scalar_lea.vmem [#allocation2], 625
  %v5920 = vld [vmem:[%s5919] ss:$2 sm:$0xff]
  %s5921 = scalar_lea.vmem [#allocation2], 649
  %v5922 = vld [vmem:[%s5921] ss:$2 sm:$0xff]
  %s5923 = scalar_lea.vmem [#allocation2], 665
  %v5924 = vld [vmem:[%s5923] ss:$2 sm:$0xff]
  %s5925 = scalar_lea.vmem [#allocation2], 689
  %v5926 = vld [vmem:[%s5925] ss:$2 sm:$0xff]
  %s5927 = scalar_lea.vmem [#allocation2], 705
  %v5928 = vld [vmem:[%s5927] ss:$2 sm:$0xff]
  %s5929 = scalar_lea.vmem [#allocation2], 729
  %v5930 = vld [vmem:[%s5929] ss:$2 sm:$0xff]
  %s5931 = scalar_lea.vmem [#allocation2], 745
  %v5932 = vld [vmem:[%s5931] ss:$2 sm:$0xff]
  %s5933 = scalar_lea.vmem [#allocation2], 769
  %v5934 = vld [vmem:[%s5933] ss:$2 sm:$0xff]
  %s5935 = scalar_lea.vmem [#allocation2], 785
  %v5936 = vld [vmem:[%s5935] ss:$2 sm:$0xff]
  %s5937 = scalar_lea.vmem [#allocation2], 809
  %v5938 = vld [vmem:[%s5937] ss:$2 sm:$0xff]
  %s5939 = scalar_lea.vmem [#allocation2], 825
  %v5940 = vld [vmem:[%s5939] ss:$2 sm:$0xff]
  %s5941 = scalar_lea.vmem [#allocation2], 849
  %v5942 = vld [vmem:[%s5941] ss:$2 sm:$0xff]
  %s5943 = scalar_lea.vmem [#allocation2], 865
  %v5944 = vld [vmem:[%s5943] ss:$2 sm:$0xff]
  %s5945 = scalar_lea.vmem [#allocation2], 889
  %v5946 = vld [vmem:[%s5945] ss:$2 sm:$0xff]
  %s5947 = scalar_lea.vmem [#allocation2], 905
  %v5948 = vld [vmem:[%s5947] ss:$2 sm:$0xff]
  %s5949 = scalar_lea.vmem [#allocation2], 929
  %v5950 = vld [vmem:[%s5949] ss:$2 sm:$0xff]
  %s5951 = scalar_lea.vmem [#allocation2], 945
  %v5952 = vld [vmem:[%s5951] ss:$2 sm:$0xff]
  %s5953 = scalar_lea.vmem [#allocation2], 969
  %v5954 = vld [vmem:[%s5953] ss:$2 sm:$0xff]
  %s5955 = scalar_lea.vmem [#allocation2], 985
  %v5956 = vld [vmem:[%s5955] ss:$2 sm:$0xff]
  %s5957 = scalar_lea.vmem [#allocation2], 1009
  %v5958 = vld [vmem:[%s5957] ss:$2 sm:$0xff]
  %s5959 = scalar_lea.vmem [#allocation2], 1025
  %v5960 = vld [vmem:[%s5959] ss:$2 sm:$0xff]
  %s5961 = scalar_lea.vmem [#allocation2], 1049
  %v5962 = vld [vmem:[%s5961] ss:$2 sm:$0xff]
  %s5963 = scalar_lea.vmem [#allocation2], 1065
  %v5964 = vld [vmem:[%s5963] ss:$2 sm:$0xff]
  %s5965 = scalar_lea.vmem [#allocation2], 1089
  %v5966 = vld [vmem:[%s5965] ss:$2 sm:$0xff]
  %s5967 = scalar_lea.vmem [#allocation2], 1105
  %v5968 = vld [vmem:[%s5967] ss:$2 sm:$0xff]
  %s5969 = scalar_lea.vmem [#allocation2], 1129
  %v5970 = vld [vmem:[%s5969] ss:$2 sm:$0xff]
  %s5971 = scalar_lea.vmem [#allocation2], 1145
  %v5972 = vld [vmem:[%s5971] ss:$2 sm:$0xff]
  %s5973 = scalar_lea.vmem [#allocation2], 1169
  %v5974 = vld [vmem:[%s5973] ss:$2 sm:$0xff]
  %s5975 = scalar_lea.vmem [#allocation2], 1185
  %v5976 = vld [vmem:[%s5975] ss:$2 sm:$0xff]
  %s5977 = scalar_lea.vmem [#allocation2], 1209
  %v5978 = vld [vmem:[%s5977] ss:$2 sm:$0xff]
  %s5979 = scalar_lea.vmem [#allocation2], 1225
  %v5980 = vld [vmem:[%s5979] ss:$2 sm:$0xff]
  %s5981 = scalar_lea.vmem [#allocation2], 1249
  %v5982 = vld [vmem:[%s5981] ss:$2 sm:$0xff]
  %s5983 = scalar_lea.vmem [#allocation2], 1265
  %v5984 = vld [vmem:[%s5983] ss:$2 sm:$0xff]
  %s5985 = scalar_lea.vmem [#allocation2], 1289
  %v5986 = vld [vmem:[%s5985] ss:$2 sm:$0xff]
  %s5987 = scalar_lea.vmem [#allocation2], 1305
  %v5988 = vld [vmem:[%s5987] ss:$2 sm:$0xff]
  %s5989 = scalar_lea.vmem [#allocation2], 1329
  %v5990 = vld [vmem:[%s5989] ss:$2 sm:$0xff]
  %s5991 = scalar_lea.vmem [#allocation2], 1345
  %v5992 = vld [vmem:[%s5991] ss:$2 sm:$0xff]
  %s5993 = scalar_lea.vmem [#allocation2], 1369
  %v5994 = vld [vmem:[%s5993] ss:$2 sm:$0xff]
  %s5995 = scalar_lea.vmem [#allocation2], 1385
  %v5996 = vld [vmem:[%s5995] ss:$2 sm:$0xff]
  %s5997 = scalar_lea.vmem [#allocation2], 1409
  %v5998 = vld [vmem:[%s5997] ss:$2 sm:$0xff]
  %s5999 = scalar_lea.vmem [#allocation2], 1425
  %v6000 = vld [vmem:[%s5999] ss:$2 sm:$0xff]
  %s6001 = scalar_lea.vmem [#allocation2], 1449
  %v6002 = vld [vmem:[%s6001] ss:$2 sm:$0xff]
  %s6003 = scalar_lea.vmem [#allocation2], 1465
  %v6004 = vld [vmem:[%s6003] ss:$2 sm:$0xff]
  %s6005 = scalar_lea.vmem [#allocation2], 1489
  %v6006 = vld [vmem:[%s6005] ss:$2 sm:$0xff]
  %s6007 = scalar_lea.vmem [#allocation2], 1505
  %v6008 = vld [vmem:[%s6007] ss:$2 sm:$0xff]
  %s6009 = scalar_lea.vmem [#allocation2], 1529
  %v6010 = vld [vmem:[%s6009] ss:$2 sm:$0xff]
  %s6011 = scalar_lea.vmem [#allocation2], 1545
  %v6012 = vld [vmem:[%s6011] ss:$2 sm:$0xff]
  %s6013 = scalar_lea.vmem [#allocation2], 1569
  %v6014 = vld [vmem:[%s6013] ss:$2 sm:$0xff]
  %s6015 = scalar_lea.vmem [#allocation2], 1585
  %v6016 = vld [vmem:[%s6015] ss:$2 sm:$0xff]
  %s6017 = scalar_lea.vmem [#allocation2], 1609
  %v6018 = vld [vmem:[%s6017] ss:$2 sm:$0xff]
  %s6019 = scalar_lea.vmem [#allocation2], 1625
  %v6020 = vld [vmem:[%s6019] ss:$2 sm:$0xff]
  %s6021 = scalar_lea.vmem [#allocation2], 1649
  %v6022 = vld [vmem:[%s6021] ss:$2 sm:$0xff]
  %s6023 = scalar_lea.vmem [#allocation2], 1665
  %v6024 = vld [vmem:[%s6023] ss:$2 sm:$0xff]
  %s6025 = scalar_lea.vmem [#allocation2], 1689
  %v6026 = vld [vmem:[%s6025] ss:$2 sm:$0xff]
  %s6027 = scalar_lea.vmem [#allocation2], 1705
  %v6028 = vld [vmem:[%s6027] ss:$2 sm:$0xff]
  %s6029 = scalar_lea.vmem [#allocation2], 1729
  %v6030 = vld [vmem:[%s6029] ss:$2 sm:$0xff]
  %s6031 = scalar_lea.vmem [#allocation2], 1745
  %v6032 = vld [vmem:[%s6031] ss:$2 sm:$0xff]
  %s6033 = scalar_lea.vmem [#allocation2], 1769
  %v6034 = vld [vmem:[%s6033] ss:$2 sm:$0xff]
  %s6035 = scalar_lea.vmem [#allocation2], 1785
  %v6036 = vld [vmem:[%s6035] ss:$2 sm:$0xff]
  %s6037 = scalar_lea.vmem [#allocation2], 1809
  %v6038 = vld [vmem:[%s6037] ss:$2 sm:$0xff]
  %s6039 = scalar_lea.vmem [#allocation2], 1825
  %v6040 = vld [vmem:[%s6039] ss:$2 sm:$0xff]
  %s6041 = scalar_lea.vmem [#allocation2], 1849
  %v6042 = vld [vmem:[%s6041] ss:$2 sm:$0xff]
  %s6043 = scalar_lea.vmem [#allocation2], 1865
  %v6044 = vld [vmem:[%s6043] ss:$2 sm:$0xff]
  %s6045 = scalar_lea.vmem [#allocation2], 1889
  %v6046 = vld [vmem:[%s6045] ss:$2 sm:$0xff]
  %s6047 = scalar_lea.vmem [#allocation2], 1905
  %v6048 = vld [vmem:[%s6047] ss:$2 sm:$0xff]
  %s6049 = scalar_lea.vmem [#allocation2], 1929
  %v6050 = vld [vmem:[%s6049] ss:$2 sm:$0xff]
  %s6051 = scalar_lea.vmem [#allocation2], 1945
  %v6052 = vld [vmem:[%s6051] ss:$2 sm:$0xff]
  %s6053 = scalar_lea.vmem [#allocation2], 1969
  %v6054 = vld [vmem:[%s6053] ss:$2 sm:$0xff]
  %s6055 = scalar_lea.vmem [#allocation2], 1985
  %v6056 = vld [vmem:[%s6055] ss:$2 sm:$0xff]
  %s6057 = scalar_lea.vmem [#allocation2], 2009
  %v6058 = vld [vmem:[%s6057] ss:$2 sm:$0xff]
  %s6059 = scalar_lea.vmem [#allocation2], 2025
  %v6060 = vld [vmem:[%s6059] ss:$2 sm:$0xff]
  %s6061 = scalar_lea.vmem [#allocation2], 2049
  %v6062 = vld [vmem:[%s6061] ss:$2 sm:$0xff]
  %s6063 = scalar_lea.vmem [#allocation2], 2065
  %v6064 = vld [vmem:[%s6063] ss:$2 sm:$0xff]
  %s6065 = scalar_lea.vmem [#allocation2], 2089
  %v6066 = vld [vmem:[%s6065] ss:$2 sm:$0xff]
  %s6067 = scalar_lea.vmem [#allocation2], 2105
  %v6068 = vld [vmem:[%s6067] ss:$2 sm:$0xff]
  %s6069 = scalar_lea.vmem [#allocation2], 2129
  %v6070 = vld [vmem:[%s6069] ss:$2 sm:$0xff]
  %s6071 = scalar_lea.vmem [#allocation2], 2145
  %v6072 = vld [vmem:[%s6071] ss:$2 sm:$0xff]
  %s6073 = scalar_lea.vmem [#allocation2], 2169
  %v6074 = vld [vmem:[%s6073] ss:$2 sm:$0xff]
  %s6075 = scalar_lea.vmem [#allocation2], 2185
  %v6076 = vld [vmem:[%s6075] ss:$2 sm:$0xff]
  %s6077 = scalar_lea.vmem [#allocation2], 2209
  %v6078 = vld [vmem:[%s6077] ss:$2 sm:$0xff]
  %s6079 = scalar_lea.vmem [#allocation2], 2225
  %v6080 = vld [vmem:[%s6079] ss:$2 sm:$0xff]
  %s6081 = scalar_lea.vmem [#allocation2], 2249
  %v6082 = vld [vmem:[%s6081] ss:$2 sm:$0xff]
  %s6083 = scalar_lea.vmem [#allocation2], 2265
  %v6084 = vld [vmem:[%s6083] ss:$2 sm:$0xff]
  %s6085 = scalar_lea.vmem [#allocation2], 2289
  %v6086 = vld [vmem:[%s6085] ss:$2 sm:$0xff]
  %s6087 = scalar_lea.vmem [#allocation2], 2305
  %v6088 = vld [vmem:[%s6087] ss:$2 sm:$0xff]
  %s6089 = scalar_lea.vmem [#allocation2], 2329
  %v6090 = vld [vmem:[%s6089] ss:$2 sm:$0xff]
  %s6091 = scalar_lea.vmem [#allocation2], 2345
  %v6092 = vld [vmem:[%s6091] ss:$2 sm:$0xff]
  %s6093 = scalar_lea.vmem [#allocation2], 2369
  %v6094 = vld [vmem:[%s6093] ss:$2 sm:$0xff]
  %s6095 = scalar_lea.vmem [#allocation2], 2385
  %v6096 = vld [vmem:[%s6095] ss:$2 sm:$0xff]
  %s6097 = scalar_lea.vmem [#allocation2], 2409
  %v6098 = vld [vmem:[%s6097] ss:$2 sm:$0xff]
  %s6099 = scalar_lea.vmem [#allocation2], 2425
  %v6100 = vld [vmem:[%s6099] ss:$2 sm:$0xff]
  %s6101 = scalar_lea.vmem [#allocation2], 2449
  %v6102 = vld [vmem:[%s6101] ss:$2 sm:$0xff]
  %s6103 = scalar_lea.vmem [#allocation2], 2465
  %v6104 = vld [vmem:[%s6103] ss:$2 sm:$0xff]
  %s6105 = scalar_lea.vmem [#allocation2], 2489
  %v6106 = vld [vmem:[%s6105] ss:$2 sm:$0xff]
  %s6107 = scalar_lea.vmem [#allocation2], 2505
  %v6108 = vld [vmem:[%s6107] ss:$2 sm:$0xff]
  %s6109 = scalar_lea.vmem [#allocation2], 2529
  %v6110 = vld [vmem:[%s6109] ss:$2 sm:$0xff]
  %s6111 = scalar_lea.vmem [#allocation2], 2545
  %v6112 = vld [vmem:[%s6111] ss:$2 sm:$0xff]
  %v6113 = vmax.f32 %v5346, %v5602
  %v6114 = vmax.f32 %v5348, %v5604
  %v6115 = vmax.f32 %v5350, %v5606
  %v6116 = vmax.f32 %v5352, %v5608
  %v6117 = vmax.f32 %v5354, %v5610
  %v6118 = vmax.f32 %v5356, %v5612
  %v6119 = vmax.f32 %v5358, %v5614
  %v6120 = vmax.f32 %v5360, %v5616
  %v6121 = vmax.f32 %v5362, %v5618
  %v6122 = vmax.f32 %v5364, %v5620
  %v6123 = vmax.f32 %v5366, %v5622
  %v6124 = vmax.f32 %v5368, %v5624
  %v6125 = vmax.f32 %v5370, %v5626
  %v6126 = vmax.f32 %v5372, %v5628
  %v6127 = vmax.f32 %v5374, %v5630
  %v6128 = vmax.f32 %v5376, %v5632
  %v6129 = vmax.f32 %v5378, %v5634
  %v6130 = vmax.f32 %v5380, %v5636
  %v6131 = vmax.f32 %v5382, %v5638
  %v6132 = vmax.f32 %v5384, %v5640
  %v6133 = vmax.f32 %v5386, %v5642
  %v6134 = vmax.f32 %v5388, %v5644
  %v6135 = vmax.f32 %v5390, %v5646
  %v6136 = vmax.f32 %v5392, %v5648
  %v6137 = vmax.f32 %v5394, %v5650
  %v6138 = vmax.f32 %v5396, %v5652
  %v6139 = vmax.f32 %v5398, %v5654
  %v6140 = vmax.f32 %v5400, %v5656
  %v6141 = vmax.f32 %v5402, %v5658
  %v6142 = vmax.f32 %v5404, %v5660
  %v6143 = vmax.f32 %v5406, %v5662
  %v6144 = vmax.f32 %v5408, %v5664
  %v6145 = vmax.f32 %v5410, %v5666
  %v6146 = vmax.f32 %v5412, %v5668
  %v6147 = vmax.f32 %v5414, %v5670
  %v6148 = vmax.f32 %v5416, %v5672
  %v6149 = vmax.f32 %v5418, %v5674
  %v6150 = vmax.f32 %v5420, %v5676
  %v6151 = vmax.f32 %v5422, %v5678
  %v6152 = vmax.f32 %v5424, %v5680
  %v6153 = vmax.f32 %v5426, %v5682
  %v6154 = vmax.f32 %v5428, %v5684
  %v6155 = vmax.f32 %v5430, %v5686
  %v6156 = vmax.f32 %v5432, %v5688
  %v6157 = vmax.f32 %v5434, %v5690
  %v6158 = vmax.f32 %v5436, %v5692
  %v6159 = vmax.f32 %v5438, %v5694
  %v6160 = vmax.f32 %v5440, %v5696
  %v6161 = vmax.f32 %v5442, %v5698
  %v6162 = vmax.f32 %v5444, %v5700
  %v6163 = vmax.f32 %v5446, %v5702
  %v6164 = vmax.f32 %v5448, %v5704
  %v6165 = vmax.f32 %v5450, %v5706
  %v6166 = vmax.f32 %v5452, %v5708
  %v6167 = vmax.f32 %v5454, %v5710
  %v6168 = vmax.f32 %v5456, %v5712
  %v6169 = vmax.f32 %v5458, %v5714
  %v6170 = vmax.f32 %v5460, %v5716
  %v6171 = vmax.f32 %v5462, %v5718
  %v6172 = vmax.f32 %v5464, %v5720
  %v6173 = vmax.f32 %v5466, %v5722
  %v6174 = vmax.f32 %v5468, %v5724
  %v6175 = vmax.f32 %v5470, %v5726
  %v6176 = vmax.f32 %v5472, %v5728
  %v6177 = vmax.f32 %v5474, %v5730
  %v6178 = vmax.f32 %v5476, %v5732
  %v6179 = vmax.f32 %v5478, %v5734
  %v6180 = vmax.f32 %v5480, %v5736
  %v6181 = vmax.f32 %v5482, %v5738
  %v6182 = vmax.f32 %v5484, %v5740
  %v6183 = vmax.f32 %v5486, %v5742
  %v6184 = vmax.f32 %v5488, %v5744
  %v6185 = vmax.f32 %v5490, %v5746
  %v6186 = vmax.f32 %v5492, %v5748
  %v6187 = vmax.f32 %v5494, %v5750
  %v6188 = vmax.f32 %v5496, %v5752
  %v6189 = vmax.f32 %v5498, %v5754
  %v6190 = vmax.f32 %v5500, %v5756
  %v6191 = vmax.f32 %v5502, %v5758
  %v6192 = vmax.f32 %v5504, %v5760
  %v6193 = vmax.f32 %v5506, %v5762
  %v6194 = vmax.f32 %v5508, %v5764
  %v6195 = vmax.f32 %v5510, %v5766
  %v6196 = vmax.f32 %v5512, %v5768
  %v6197 = vmax.f32 %v5514, %v5770
  %v6198 = vmax.f32 %v5516, %v5772
  %v6199 = vmax.f32 %v5518, %v5774
  %v6200 = vmax.f32 %v5520, %v5776
  %v6201 = vmax.f32 %v5522, %v5778
  %v6202 = vmax.f32 %v5524, %v5780
  %v6203 = vmax.f32 %v5526, %v5782
  %v6204 = vmax.f32 %v5528, %v5784
  %v6205 = vmax.f32 %v5530, %v5786
  %v6206 = vmax.f32 %v5532, %v5788
  %v6207 = vmax.f32 %v5534, %v5790
  %v6208 = vmax.f32 %v5536, %v5792
  %v6209 = vmax.f32 %v5538, %v5794
  %v6210 = vmax.f32 %v5540, %v5796
  %v6211 = vmax.f32 %v5542, %v5798
  %v6212 = vmax.f32 %v5544, %v5800
  %v6213 = vmax.f32 %v5546, %v5802
  %v6214 = vmax.f32 %v5548, %v5804
  %v6215 = vmax.f32 %v5550, %v5806
  %v6216 = vmax.f32 %v5552, %v5808
  %v6217 = vmax.f32 %v5554, %v5810
  %v6218 = vmax.f32 %v5556, %v5812
  %v6219 = vmax.f32 %v5558, %v5814
  %v6220 = vmax.f32 %v5560, %v5816
  %v6221 = vmax.f32 %v5562, %v5818
  %v6222 = vmax.f32 %v5564, %v5820
  %v6223 = vmax.f32 %v5566, %v5822
  %v6224 = vmax.f32 %v5568, %v5824
  %v6225 = vmax.f32 %v5570, %v5826
  %v6226 = vmax.f32 %v5572, %v5828
  %v6227 = vmax.f32 %v5574, %v5830
  %v6228 = vmax.f32 %v5576, %v5832
  %v6229 = vmax.f32 %v5578, %v5834
  %v6230 = vmax.f32 %v5580, %v5836
  %v6231 = vmax.f32 %v5582, %v5838
  %v6232 = vmax.f32 %v5584, %v5840
  %v6233 = vmax.f32 %v5586, %v5842
  %v6234 = vmax.f32 %v5588, %v5844
  %v6235 = vmax.f32 %v5590, %v5846
  %v6236 = vmax.f32 %v5592, %v5848
  %v6237 = vmax.f32 %v5594, %v5850
  %v6238 = vmax.f32 %v5596, %v5852
  %v6239 = vmax.f32 %v5598, %v5854
  %v6240 = vmax.f32 %v5600, %v5856
  %v6241 = vmax.f32 %v6113, %v5858
  %v6242 = vmax.f32 %v6114, %v5860
  %v6243 = vmax.f32 %v6115, %v5862
  %v6244 = vmax.f32 %v6116, %v5864
  %v6245 = vmax.f32 %v6117, %v5866
  %v6246 = vmax.f32 %v6118, %v5868
  %v6247 = vmax.f32 %v6119, %v5870
  %v6248 = vmax.f32 %v6120, %v5872
  %v6249 = vmax.f32 %v6121, %v5874
  %v6250 = vmax.f32 %v6122, %v5876
  %v6251 = vmax.f32 %v6123, %v5878
  %v6252 = vmax.f32 %v6124, %v5880
  %v6253 = vmax.f32 %v6125, %v5882
  %v6254 = vmax.f32 %v6126, %v5884
  %v6255 = vmax.f32 %v6127, %v5886
  %v6256 = vmax.f32 %v6128, %v5888
  %v6257 = vmax.f32 %v6129, %v5890
  %v6258 = vmax.f32 %v6130, %v5892
  %v6259 = vmax.f32 %v6131, %v5894
  %v6260 = vmax.f32 %v6132, %v5896
  %v6261 = vmax.f32 %v6133, %v5898
  %v6262 = vmax.f32 %v6134, %v5900
  %v6263 = vmax.f32 %v6135, %v5902
  %v6264 = vmax.f32 %v6136, %v5904
  %v6265 = vmax.f32 %v6137, %v5906
  %v6266 = vmax.f32 %v6138, %v5908
  %v6267 = vmax.f32 %v6139, %v5910
  %v6268 = vmax.f32 %v6140, %v5912
  %v6269 = vmax.f32 %v6141, %v5914
  %v6270 = vmax.f32 %v6142, %v5916
  %v6271 = vmax.f32 %v6143, %v5918
  %v6272 = vmax.f32 %v6144, %v5920
  %v6273 = vmax.f32 %v6145, %v5922
  %v6274 = vmax.f32 %v6146, %v5924
  %v6275 = vmax.f32 %v6147, %v5926
  %v6276 = vmax.f32 %v6148, %v5928
  %v6277 = vmax.f32 %v6149, %v5930
  %v6278 = vmax.f32 %v6150, %v5932
  %v6279 = vmax.f32 %v6151, %v5934
  %v6280 = vmax.f32 %v6152, %v5936
  %v6281 = vmax.f32 %v6153, %v5938
  %v6282 = vmax.f32 %v6154, %v5940
  %v6283 = vmax.f32 %v6155, %v5942
  %v6284 = vmax.f32 %v6156, %v5944
  %v6285 = vmax.f32 %v6157, %v5946
  %v6286 = vmax.f32 %v6158, %v5948
  %v6287 = vmax.f32 %v6159, %v5950
  %v6288 = vmax.f32 %v6160, %v5952
  %v6289 = vmax.f32 %v6161, %v5954
  %v6290 = vmax.f32 %v6162, %v5956
  %v6291 = vmax.f32 %v6163, %v5958
  %v6292 = vmax.f32 %v6164, %v5960
  %v6293 = vmax.f32 %v6165, %v5962
  %v6294 = vmax.f32 %v6166, %v5964
  %v6295 = vmax.f32 %v6167, %v5966
  %v6296 = vmax.f32 %v6168, %v5968
  %v6297 = vmax.f32 %v6169, %v5970
  %v6298 = vmax.f32 %v6170, %v5972
  %v6299 = vmax.f32 %v6171, %v5974
  %v6300 = vmax.f32 %v6172, %v5976
  %v6301 = vmax.f32 %v6173, %v5978
  %v6302 = vmax.f32 %v6174, %v5980
  %v6303 = vmax.f32 %v6175, %v5982
  %v6304 = vmax.f32 %v6176, %v5984
  %v6305 = vmax.f32 %v6177, %v5986
  %v6306 = vmax.f32 %v6178, %v5988
  %v6307 = vmax.f32 %v6179, %v5990
  %v6308 = vmax.f32 %v6180, %v5992
  %v6309 = vmax.f32 %v6181, %v5994
  %v6310 = vmax.f32 %v6182, %v5996
  %v6311 = vmax.f32 %v6183, %v5998
  %v6312 = vmax.f32 %v6184, %v6000
  %v6313 = vmax.f32 %v6185, %v6002
  %v6314 = vmax.f32 %v6186, %v6004
  %v6315 = vmax.f32 %v6187, %v6006
  %v6316 = vmax.f32 %v6188, %v6008
  %v6317 = vmax.f32 %v6189, %v6010
  %v6318 = vmax.f32 %v6190, %v6012
  %v6319 = vmax.f32 %v6191, %v6014
  %v6320 = vmax.f32 %v6192, %v6016
  %v6321 = vmax.f32 %v6193, %v6018
  %v6322 = vmax.f32 %v6194, %v6020
  %v6323 = vmax.f32 %v6195, %v6022
  %v6324 = vmax.f32 %v6196, %v6024
  %v6325 = vmax.f32 %v6197, %v6026
  %v6326 = vmax.f32 %v6198, %v6028
  %v6327 = vmax.f32 %v6199, %v6030
  %v6328 = vmax.f32 %v6200, %v6032
  %v6329 = vmax.f32 %v6201, %v6034
  %v6330 = vmax.f32 %v6202, %v6036
  %v6331 = vmax.f32 %v6203, %v6038
  %v6332 = vmax.f32 %v6204, %v6040
  %v6333 = vmax.f32 %v6205, %v6042
  %v6334 = vmax.f32 %v6206, %v6044
  %v6335 = vmax.f32 %v6207, %v6046
  %v6336 = vmax.f32 %v6208, %v6048
  %v6337 = vmax.f32 %v6209, %v6050
  %v6338 = vmax.f32 %v6210, %v6052
  %v6339 = vmax.f32 %v6211, %v6054
  %v6340 = vmax.f32 %v6212, %v6056
  %v6341 = vmax.f32 %v6213, %v6058
  %v6342 = vmax.f32 %v6214, %v6060
  %v6343 = vmax.f32 %v6215, %v6062
  %v6344 = vmax.f32 %v6216, %v6064
  %v6345 = vmax.f32 %v6217, %v6066
  %v6346 = vmax.f32 %v6218, %v6068
  %v6347 = vmax.f32 %v6219, %v6070
  %v6348 = vmax.f32 %v6220, %v6072
  %v6349 = vmax.f32 %v6221, %v6074
  %v6350 = vmax.f32 %v6222, %v6076
  %v6351 = vmax.f32 %v6223, %v6078
  %v6352 = vmax.f32 %v6224, %v6080
  %v6353 = vmax.f32 %v6225, %v6082
  %v6354 = vmax.f32 %v6226, %v6084
  %v6355 = vmax.f32 %v6227, %v6086
  %v6356 = vmax.f32 %v6228, %v6088
  %v6357 = vmax.f32 %v6229, %v6090
  %v6358 = vmax.f32 %v6230, %v6092
  %v6359 = vmax.f32 %v6231, %v6094
  %v6360 = vmax.f32 %v6232, %v6096
  %v6361 = vmax.f32 %v6233, %v6098
  %v6362 = vmax.f32 %v6234, %v6100
  %v6363 = vmax.f32 %v6235, %v6102
  %v6364 = vmax.f32 %v6236, %v6104
  %v6365 = vmax.f32 %v6237, %v6106
  %v6366 = vmax.f32 %v6238, %v6108
  %v6367 = vmax.f32 %v6239, %v6110
  %v6368 = vmax.f32 %v6240, %v6112
  %v6369 = vmax.f32 %v6241, %v6243
  %v6370 = vmax.f32 %v6242, %v6244
  %v6371 = vmax.f32 %v6305, %v6307
  %v6372 = vmax.f32 %v6306, %v6308
  %v6373 = vmax.f32 %v6243, %v6245
  %v6374 = vmax.f32 %v6244, %v6246
  %v6375 = vmax.f32 %v6307, %v6309
  %v6376 = vmax.f32 %v6308, %v6310
  %v6377 = vmax.f32 %v6373, %v6247
  %v6378 = vmax.f32 %v6374, %v6248
  %v6379 = vmax.f32 %v6375, %v6311
  %v6380 = vmax.f32 %v6376, %v6312
  %v6381 = vmax.f32 %v6247, %v6249
  %v6382 = vmax.f32 %v6248, %v6250
  %v6383 = vmax.f32 %v6311, %v6313
  %v6384 = vmax.f32 %v6312, %v6314
  %v6385 = vmax.f32 %v6381, %v6251
  %v6386 = vmax.f32 %v6382, %v6252
  %v6387 = vmax.f32 %v6383, %v6315
  %v6388 = vmax.f32 %v6384, %v6316
  %v6389 = vmax.f32 %v6251, %v6253
  %v6390 = vmax.f32 %v6252, %v6254
  %v6391 = vmax.f32 %v6315, %v6317
  %v6392 = vmax.f32 %v6316, %v6318
  %v6393 = vmax.f32 %v6389, %v6255
  %v6394 = vmax.f32 %v6390, %v6256
  %v6395 = vmax.f32 %v6391, %v6319
  %v6396 = vmax.f32 %v6392, %v6320
  %v6397 = vmax.f32 %v6255, %v6257
  %v6398 = vmax.f32 %v6256, %v6258
  %v6399 = vmax.f32 %v6319, %v6321
  %v6400 = vmax.f32 %v6320, %v6322
  %v6401 = vmax.f32 %v6397, %v6259
  %v6402 = vmax.f32 %v6398, %v6260
  %v6403 = vmax.f32 %v6399, %v6323
  %v6404 = vmax.f32 %v6400, %v6324
  %v6405 = vmax.f32 %v6259, %v6261
  %v6406 = vmax.f32 %v6260, %v6262
  %v6407 = vmax.f32 %v6323, %v6325
  %v6408 = vmax.f32 %v6324, %v6326
  %v6409 = vmax.f32 %v6405, %v6263
  %v6410 = vmax.f32 %v6406, %v6264
  %v6411 = vmax.f32 %v6407, %v6327
  %v6412 = vmax.f32 %v6408, %v6328
  %v6413 = vmax.f32 %v6263, %v6265
  %v6414 = vmax.f32 %v6264, %v6266
  %v6415 = vmax.f32 %v6327, %v6329
  %v6416 = vmax.f32 %v6328, %v6330
  %v6417 = vmax.f32 %v6413, %v6267
  %v6418 = vmax.f32 %v6414, %v6268
  %v6419 = vmax.f32 %v6415, %v6331
  %v6420 = vmax.f32 %v6416, %v6332
  %v6421 = vmax.f32 %v6267, %v6269
  %v6422 = vmax.f32 %v6268, %v6270
  %v6423 = vmax.f32 %v6331, %v6333
  %v6424 = vmax.f32 %v6332, %v6334
  %v6425 = vmax.f32 %v6421, %v6271
  %v6426 = vmax.f32 %v6422, %v6272
  %v6427 = vmax.f32 %v6423, %v6335
  %v6428 = vmax.f32 %v6424, %v6336
  %v6429 = vmax.f32 %v6271, %v6273
  %v6430 = vmax.f32 %v6272, %v6274
  %v6431 = vmax.f32 %v6335, %v6337
  %v6432 = vmax.f32 %v6336, %v6338
  %v6433 = vmax.f32 %v6429, %v6275
  %v6434 = vmax.f32 %v6430, %v6276
  %v6435 = vmax.f32 %v6431, %v6339
  %v6436 = vmax.f32 %v6432, %v6340
  %v6437 = vmax.f32 %v6275, %v6277
  %v6438 = vmax.f32 %v6276, %v6278
  %v6439 = vmax.f32 %v6339, %v6341
  %v6440 = vmax.f32 %v6340, %v6342
  %v6441 = vmax.f32 %v6437, %v6279
  %v6442 = vmax.f32 %v6438, %v6280
  %v6443 = vmax.f32 %v6439, %v6343
  %v6444 = vmax.f32 %v6440, %v6344
  %v6445 = vmax.f32 %v6279, %v6281
  %v6446 = vmax.f32 %v6280, %v6282
  %v6447 = vmax.f32 %v6343, %v6345
  %v6448 = vmax.f32 %v6344, %v6346
  %v6449 = vmax.f32 %v6445, %v6283
  %v6450 = vmax.f32 %v6446, %v6284
  %v6451 = vmax.f32 %v6447, %v6347
  %v6452 = vmax.f32 %v6448, %v6348
  %v6453 = vmax.f32 %v6283, %v6285
  %v6454 = vmax.f32 %v6284, %v6286
  %v6455 = vmax.f32 %v6347, %v6349
  %v6456 = vmax.f32 %v6348, %v6350
  %v6457 = vmax.f32 %v6453, %v6287
  %v6458 = vmax.f32 %v6454, %v6288
  %v6459 = vmax.f32 %v6455, %v6351
  %v6460 = vmax.f32 %v6456, %v6352
  %v6461 = vmax.f32 %v6287, %v6289
  %v6462 = vmax.f32 %v6288, %v6290
  %v6463 = vmax.f32 %v6351, %v6353
  %v6464 = vmax.f32 %v6352, %v6354
  %v6465 = vmax.f32 %v6461, %v6291
  %v6466 = vmax.f32 %v6462, %v6292
  %v6467 = vmax.f32 %v6463, %v6355
  %v6468 = vmax.f32 %v6464, %v6356
  %v6469 = vmax.f32 %v6291, %v6293
  %v6470 = vmax.f32 %v6292, %v6294
  %v6471 = vmax.f32 %v6355, %v6357
  %v6472 = vmax.f32 %v6356, %v6358
  %v6473 = vmax.f32 %v6469, %v6295
  %v6474 = vmax.f32 %v6470, %v6296
  %v6475 = vmax.f32 %v6471, %v6359
  %v6476 = vmax.f32 %v6472, %v6360
  %v6477 = vmax.f32 %v6295, %v6297
  %v6478 = vmax.f32 %v6296, %v6298
  %v6479 = vmax.f32 %v6359, %v6361
  %v6480 = vmax.f32 %v6360, %v6362
  %v6481 = vmax.f32 %v6477, %v6299
  %v6482 = vmax.f32 %v6478, %v6300
  %v6483 = vmax.f32 %v6479, %v6363
  %v6484 = vmax.f32 %v6480, %v6364
  %v6485 = vmax.f32 %v6299, %v6301
  %v6486 = vmax.f32 %v6300, %v6302
  %v6487 = vmax.f32 %v6363, %v6365
  %v6488 = vmax.f32 %v6364, %v6366
  %v6489 = vmax.f32 %v6485, %v6303
  %v6490 = vmax.f32 %v6486, %v6304
  %v6491 = vmax.f32 %v6487, %v6367
  %v6492 = vmax.f32 %v6488, %v6368
  %v6493 = vpack.c.bf16 %v6370, %v6369
  %v6494 = vpack.c.bf16 %v6378, %v6377
  %v6495 = vpack.c.bf16 %v6386, %v6385
  %v6496 = vpack.c.bf16 %v6394, %v6393
  %v6497 = vpack.c.bf16 %v6402, %v6401
  %v6498 = vpack.c.bf16 %v6410, %v6409
  %v6499 = vpack.c.bf16 %v6418, %v6417
  %v6500 = vpack.c.bf16 %v6426, %v6425
  %v6501 = vpack.c.bf16 %v6434, %v6433
  %v6502 = vpack.c.bf16 %v6442, %v6441
  %v6503 = vpack.c.bf16 %v6450, %v6449
  %v6504 = vpack.c.bf16 %v6458, %v6457
  %v6505 = vpack.c.bf16 %v6466, %v6465
  %v6506 = vpack.c.bf16 %v6474, %v6473
  %v6507 = vpack.c.bf16 %v6482, %v6481
  %v6508 = vpack.c.bf16 %v6490, %v6489
  %v6509 = vpack.c.bf16 %v6372, %v6371
  %v6510 = vpack.c.bf16 %v6380, %v6379
  %v6511 = vpack.c.bf16 %v6388, %v6387
  %v6512 = vpack.c.bf16 %v6396, %v6395
  %v6513 = vpack.c.bf16 %v6404, %v6403
  %v6514 = vpack.c.bf16 %v6412, %v6411
  %v6515 = vpack.c.bf16 %v6420, %v6419
  %v6516 = vpack.c.bf16 %v6428, %v6427
  %v6517 = vpack.c.bf16 %v6436, %v6435
  %v6518 = vpack.c.bf16 %v6444, %v6443
  %v6519 = vpack.c.bf16 %v6452, %v6451
  %v6520 = vpack.c.bf16 %v6460, %v6459
  %v6521 = vpack.c.bf16 %v6468, %v6467
  %v6522 = vpack.c.bf16 %v6476, %v6475
  %v6523 = vpack.c.bf16 %v6484, %v6483
  %v6524 = vpack.c.bf16 %v6492, %v6491
  %v6557 = vunpack.c.l.b16 %v6493
  %v6558 = vunpack.c.h.b16 %v6493
  %v6559 = vunpack.c.l.b16 %v6494
  %v6560 = vunpack.c.h.b16 %v6494
  %v6561 = vunpack.c.l.b16 %v6495
  %v6562 = vunpack.c.h.b16 %v6495
  %v6563 = vunpack.c.l.b16 %v6496
  %v6564 = vunpack.c.h.b16 %v6496
  %v6565 = vunpack.c.l.b16 %v6497
  %v6566 = vunpack.c.h.b16 %v6497
  %v6567 = vunpack.c.l.b16 %v6498
  %v6568 = vunpack.c.h.b16 %v6498
  %v6569 = vunpack.c.l.b16 %v6499
  %v6570 = vunpack.c.h.b16 %v6499
  %v6571 = vunpack.c.l.b16 %v6500
  %v6572 = vunpack.c.h.b16 %v6500
  %v6573 = vunpack.c.l.b16 %v6501
  %v6574 = vunpack.c.h.b16 %v6501
  %v6575 = vunpack.c.l.b16 %v6502
  %v6576 = vunpack.c.h.b16 %v6502
  %v6577 = vunpack.c.l.b16 %v6503
  %v6578 = vunpack.c.h.b16 %v6503
  %v6579 = vunpack.c.l.b16 %v6504
  %v6580 = vunpack.c.h.b16 %v6504
  %v6581 = vunpack.c.l.b16 %v6505
  %v6582 = vunpack.c.h.b16 %v6505
  %v6583 = vunpack.c.l.b16 %v6506
  %v6584 = vunpack.c.h.b16 %v6506
  %v6585 = vunpack.c.l.b16 %v6507
  %v6586 = vunpack.c.h.b16 %v6507
  %v6587 = vunpack.c.l.b16 %v6508
  %v6588 = vunpack.c.h.b16 %v6508
  %v6589 = vunpack.c.l.b16 %v6509
  %v6590 = vunpack.c.h.b16 %v6509
  %v6591 = vunpack.c.l.b16 %v6510
  %v6592 = vunpack.c.h.b16 %v6510
  %v6593 = vunpack.c.l.b16 %v6511
  %v6594 = vunpack.c.h.b16 %v6511
  %v6595 = vunpack.c.l.b16 %v6512
  %v6596 = vunpack.c.h.b16 %v6512
  %v6597 = vunpack.c.l.b16 %v6513
  %v6598 = vunpack.c.h.b16 %v6513
  %v6599 = vunpack.c.l.b16 %v6514
  %v6600 = vunpack.c.h.b16 %v6514
  %v6601 = vunpack.c.l.b16 %v6515
  %v6602 = vunpack.c.h.b16 %v6515
  %v6603 = vunpack.c.l.b16 %v6516
  %v6604 = vunpack.c.h.b16 %v6516
  %v6605 = vunpack.c.l.b16 %v6517
  %v6606 = vunpack.c.h.b16 %v6517
  %v6607 = vunpack.c.l.b16 %v6518
  %v6608 = vunpack.c.h.b16 %v6518
  %v6609 = vunpack.c.l.b16 %v6519
  %v6610 = vunpack.c.h.b16 %v6519
  %v6611 = vunpack.c.l.b16 %v6520
  %v6612 = vunpack.c.h.b16 %v6520
  %v6613 = vunpack.c.l.b16 %v6521
  %v6614 = vunpack.c.h.b16 %v6521
  %v6615 = vunpack.c.l.b16 %v6522
  %v6616 = vunpack.c.h.b16 %v6522
  %v6617 = vunpack.c.l.b16 %v6523
  %v6618 = vunpack.c.h.b16 %v6523
  %v6619 = vunpack.c.l.b16 %v6524
  %v6620 = vunpack.c.h.b16 %v6524
  %v6621 = vpack.c.b16 %v6557, %v6557
  %v6622 = vpack.c.b16 %v6558, %v6558
  %v6623 = vpack.c.b16 %v6559, %v6559
  %v6624 = vpack.c.b16 %v6560, %v6560
  %v6625 = vpack.c.b16 %v6561, %v6561
  %v6626 = vpack.c.b16 %v6562, %v6562
  %v6627 = vpack.c.b16 %v6563, %v6563
  %v6628 = vpack.c.b16 %v6564, %v6564
  %v6629 = vpack.c.b16 %v6565, %v6565
  %v6630 = vpack.c.b16 %v6566, %v6566
  %v6631 = vpack.c.b16 %v6567, %v6567
  %v6632 = vpack.c.b16 %v6568, %v6568
  %v6633 = vpack.c.b16 %v6569, %v6569
  %v6634 = vpack.c.b16 %v6570, %v6570
  %v6635 = vpack.c.b16 %v6571, %v6571
  %v6636 = vpack.c.b16 %v6572, %v6572
  %v6637 = vpack.c.b16 %v6573, %v6573
  %v6638 = vpack.c.b16 %v6574, %v6574
  %v6639 = vpack.c.b16 %v6575, %v6575
  %v6640 = vpack.c.b16 %v6576, %v6576
  %v6641 = vpack.c.b16 %v6577, %v6577
  %v6642 = vpack.c.b16 %v6578, %v6578
  %v6643 = vpack.c.b16 %v6579, %v6579
  %v6644 = vpack.c.b16 %v6580, %v6580
  %v6645 = vpack.c.b16 %v6581, %v6581
  %v6646 = vpack.c.b16 %v6582, %v6582
  %v6647 = vpack.c.b16 %v6583, %v6583
  %v6648 = vpack.c.b16 %v6584, %v6584
  %v6649 = vpack.c.b16 %v6585, %v6585
  %v6650 = vpack.c.b16 %v6586, %v6586
  %v6651 = vpack.c.b16 %v6587, %v6587
  %v6652 = vpack.c.b16 %v6588, %v6588
  %v6653 = vpack.c.b16 %v6589, %v6589
  %v6654 = vpack.c.b16 %v6590, %v6590
  %v6655 = vpack.c.b16 %v6591, %v6591
  %v6656 = vpack.c.b16 %v6592, %v6592
  %v6657 = vpack.c.b16 %v6593, %v6593
  %v6658 = vpack.c.b16 %v6594, %v6594
  %v6659 = vpack.c.b16 %v6595, %v6595
  %v6660 = vpack.c.b16 %v6596, %v6596
  %v6661 = vpack.c.b16 %v6597, %v6597
  %v6662 = vpack.c.b16 %v6598, %v6598
  %v6663 = vpack.c.b16 %v6599, %v6599
  %v6664 = vpack.c.b16 %v6600, %v6600
  %v6665 = vpack.c.b16 %v6601, %v6601
  %v6666 = vpack.c.b16 %v6602, %v6602
  %v6667 = vpack.c.b16 %v6603, %v6603
  %v6668 = vpack.c.b16 %v6604, %v6604
  %v6669 = vpack.c.b16 %v6605, %v6605
  %v6670 = vpack.c.b16 %v6606, %v6606
  %v6671 = vpack.c.b16 %v6607, %v6607
  %v6672 = vpack.c.b16 %v6608, %v6608
  %v6673 = vpack.c.b16 %v6609, %v6609
  %v6674 = vpack.c.b16 %v6610, %v6610
  %v6675 = vpack.c.b16 %v6611, %v6611
  %v6676 = vpack.c.b16 %v6612, %v6612
  %v6677 = vpack.c.b16 %v6613, %v6613
  %v6678 = vpack.c.b16 %v6614, %v6614
  %v6679 = vpack.c.b16 %v6615, %v6615
  %v6680 = vpack.c.b16 %v6616, %v6616
  %v6681 = vpack.c.b16 %v6617, %v6617
  %v6682 = vpack.c.b16 %v6618, %v6618
  %v6683 = vpack.c.b16 %v6619, %v6619
  %v6684 = vpack.c.b16 %v6620, %v6620
  %6749 = vst [vmem:[%s4] sm:$0xf] %v6621
  %6750 = vst [vmem:[%s4 + $0x4] sm:$0xf] %v6622
  %6751 = vst [vmem:[%s4 + $0x8] sm:$0xf] %v6623
  %6752 = vst [vmem:[%s4 + $0xc] sm:$0xf] %v6624
  %6753 = vst [vmem:[%s4 + $0x10] sm:$0xf] %v6625
  %6754 = vst [vmem:[%s4 + $0x14] sm:$0xf] %v6626
  %6755 = vst [vmem:[%s4 + $0x18] sm:$0xf] %v6627
  %6756 = vst [vmem:[%s4 + $0x1c] sm:$0xf] %v6628
  %6757 = vst [vmem:[%s4 + $0x20] sm:$0xf] %v6629
  %6758 = vst [vmem:[%s4 + $0x24] sm:$0xf] %v6630
  %6759 = vst [vmem:[%s4 + $0x28] sm:$0xf] %v6631
  %6760 = vst [vmem:[%s4 + $0x2c] sm:$0xf] %v6632
  %6761 = vst [vmem:[%s4 + $0x30] sm:$0xf] %v6633
  %6762 = vst [vmem:[%s4 + $0x34] sm:$0xf] %v6634
  %6763 = vst [vmem:[%s4 + $0x38] sm:$0xf] %v6635
  %6764 = vst [vmem:[%s4 + $0x3c] sm:$0xf] %v6636
  %6765 = vst [vmem:[%s4 + $0x40] sm:$0xf] %v6637
  %6766 = vst [vmem:[%s4 + $0x44] sm:$0xf] %v6638
  %6767 = vst [vmem:[%s4 + $0x48] sm:$0xf] %v6639
  %6768 = vst [vmem:[%s4 + $0x4c] sm:$0xf] %v6640
  %6769 = vst [vmem:[%s4 + $0x50] sm:$0xf] %v6641
  %6770 = vst [vmem:[%s4 + $0x54] sm:$0xf] %v6642
  %6771 = vst [vmem:[%s4 + $0x58] sm:$0xf] %v6643
  %6772 = vst [vmem:[%s4 + $0x5c] sm:$0xf] %v6644
  %6773 = vst [vmem:[%s4 + $0x60] sm:$0xf] %v6645
  %6774 = vst [vmem:[%s4 + $0x64] sm:$0xf] %v6646
  %6775 = vst [vmem:[%s4 + $0x68] sm:$0xf] %v6647
  %6776 = vst [vmem:[%s4 + $0x6c] sm:$0xf] %v6648
  %6777 = vst [vmem:[%s4 + $0x70] sm:$0xf] %v6649
  %6778 = vst [vmem:[%s4 + $0x74] sm:$0xf] %v6650
  %6779 = vst [vmem:[%s4 + $0x78] sm:$0xf] %v6651
  %6780 = vst [vmem:[%s4 + $0x7c] sm:$0xf] %v6652
  %6781 = vst [vmem:[%s4 + $0x80] sm:$0xf] %v6653
  %6782 = vst [vmem:[%s4 + $0x84] sm:$0xf] %v6654
  %6783 = vst [vmem:[%s4 + $0x88] sm:$0xf] %v6655
  %6784 = vst [vmem:[%s4 + $0x8c] sm:$0xf] %v6656
  %6785 = vst [vmem:[%s4 + $0x90] sm:$0xf] %v6657
  %6786 = vst [vmem:[%s4 + $0x94] sm:$0xf] %v6658
  %6787 = vst [vmem:[%s4 + $0x98] sm:$0xf] %v6659
  %6788 = vst [vmem:[%s4 + $0x9c] sm:$0xf] %v6660
  %6789 = vst [vmem:[%s4 + $0xa0] sm:$0xf] %v6661
  %6790 = vst [vmem:[%s4 + $0xa4] sm:$0xf] %v6662
  %6791 = vst [vmem:[%s4 + $0xa8] sm:$0xf] %v6663
  %6792 = vst [vmem:[%s4 + $0xac] sm:$0xf] %v6664
  %6793 = vst [vmem:[%s4 + $0xb0] sm:$0xf] %v6665
  %6794 = vst [vmem:[%s4 + $0xb4] sm:$0xf] %v6666
  %6795 = vst [vmem:[%s4 + $0xb8] sm:$0xf] %v6667
  %6796 = vst [vmem:[%s4 + $0xbc] sm:$0xf] %v6668
  %6797 = vst [vmem:[%s4 + $0xc0] sm:$0xf] %v6669
  %6798 = vst [vmem:[%s4 + $0xc4] sm:$0xf] %v6670
  %6799 = vst [vmem:[%s4 + $0xc8] sm:$0xf] %v6671
  %6800 = vst [vmem:[%s4 + $0xcc] sm:$0xf] %v6672
  %6801 = vst [vmem:[%s4 + $0xd0] sm:$0xf] %v6673
  %6802 = vst [vmem:[%s4 + $0xd4] sm:$0xf] %v6674
  %6803 = vst [vmem:[%s4 + $0xd8] sm:$0xf] %v6675
  %6804 = vst [vmem:[%s4 + $0xdc] sm:$0xf] %v6676
  %6805 = vst [vmem:[%s4 + $0xe0] sm:$0xf] %v6677
  %6806 = vst [vmem:[%s4 + $0xe4] sm:$0xf] %v6678
  %6807 = vst [vmem:[%s4 + $0xe8] sm:$0xf] %v6679
  %6808 = vst [vmem:[%s4 + $0xec] sm:$0xf] %v6680
  %6809 = vst [vmem:[%s4 + $0xf0] sm:$0xf] %v6681
  %6810 = vst [vmem:[%s4 + $0xf4] sm:$0xf] %v6682
  %6811 = vst [vmem:[%s4 + $0xf8] sm:$0xf] %v6683
  %6812 = vst [vmem:[%s4 + $0xfc] sm:$0xf] %v6684
  // Predicated region
  $region18: #{cnn_classifier_forward.8} parent=0 // pred_check
    _
  $region19: #{cnn_classifier_forward.8} parent=0 // pred_check_branch
    %6814 = sbr.rel (0) target = $region21
  $region20: #{cnn_classifier_forward.8} parent=0 // pred_region
    _
  $region21: #{cnn_classifier_forward.8} parent=0 // pred_fallthru
    _
  // Predicated region
  $region22: #{cnn_classifier_forward.8} parent=0 // pred_check
    _
  $region23: #{cnn_classifier_forward.8} parent=0 // pred_check_branch
    %6816 = sbr.rel (0) target = $region25
  $region24: #{cnn_classifier_forward.8} parent=0 // pred_region
    _
  $region25: #{cnn_classifier_forward.8} parent=0 // pred_fallthru
    _

// kernel: cnn_classifier_forward.11
$region0: #{cnn_classifier_forward.11}
  #allocation0 [shape = 'u32[]', space=smem, size = 0x4, offset = 0x4, fixed_abs, tag = 'smem constant byte address 0x4 - core index']
  #allocation1 [shape = 'u32[144,128]{1,0:T(1,128)}', space=vmem, size = 0x12000, scoped, tag = 'internal scratch']
  %s0 = inlined_call_operand.vmem [shape: bf16[32,288], index: 0, kind: input, shape index: {}]
  %s1 = inlined_call_operand.vmem [shape: bf16[288,256], index: 1, kind: input, shape index: {}]
  %s2 = inlined_call_operand.vmem [shape: f32[1,256], index: 2, kind: input, shape index: {}]
  %s3 = inlined_call_operand.vmem [shape: f32[1,256], index: 3, kind: input, shape index: {}]
  %s4 = inlined_call_operand.vmem [shape: bf16[32,256], index: 4, kind: output, shape index: {}]
  %s5 = sld [smem:[#allocation0]]
  $region26: #{cnn_classifier_forward.11} parent=0
    _
  %s7 = ssub.s32 1, %s5
  %s8 = scalar_select 0, %s7, %s5
  // Predicated region
  $region2: #{cnn_classifier_forward.11} parent=0 // pred_check
    _
  $region3: #{cnn_classifier_forward.11} parent=0 // pred_check_branch
    %10 = sbr.rel (0) target = $region5
  $region4: #{cnn_classifier_forward.11} parent=0 // pred_region
    _
  $region5: #{cnn_classifier_forward.11} parent=0 // pred_fallthru
    _
  // Predicated region
  $region6: #{cnn_classifier_forward.11} parent=0 // pred_check
    _
  $region7: #{cnn_classifier_forward.11} parent=0 // pred_check_branch
    %12 = sbr.rel (0) target = $region9
  $region8: #{cnn_classifier_forward.11} parent=0 // pred_region
    _
  $region9: #{cnn_classifier_forward.11} parent=0 // pred_fallthru
    _
  // Predicated region
  $region10: #{cnn_classifier_forward.11} parent=0 // pred_check
    _
  $region11: #{cnn_classifier_forward.11} parent=0 // pred_check_branch
    %14 = sbr.rel (0) target = $region13
  $region12: #{cnn_classifier_forward.11} parent=0 // pred_region
    _
  $region13: #{cnn_classifier_forward.11} parent=0 // pred_fallthru
    _
  // Predicated region
  $region14: #{cnn_classifier_forward.11} parent=0 // pred_check
    _
  $region15: #{cnn_classifier_forward.11} parent=0 // pred_check_branch
    %16 = sbr.rel (0) target = $region17
  $region16: #{cnn_classifier_forward.11} parent=0 // pred_region
    _
  $region17: #{cnn_classifier_forward.11} parent=0 // pred_fallthru
    _
  %v18 = vld [vmem:[%s0] sm:$0xff]
  %v19 = vld [vmem:[%s0 + $0x8] sm:$0xf]
  %v20 = vld [vmem:[%s0 + $0xc] sm:$0xff]
  %v21 = vld [vmem:[%s0 + $0x14] sm:$0xf]
  %v22 = vld [vmem:[%s0 + $0x18] sm:$0xff]
  %v23 = vld [vmem:[%s0 + $0x20] sm:$0xf]
  %v24 = vld [vmem:[%s0 + $0x24] sm:$0xff]
  %v25 = vld [vmem:[%s0 + $0x2c] sm:$0xf]
  %v26 = vld [vmem:[%s1] sm:$0xff]
  %v27 = vld [vmem:[%s1 + $0x8] sm:$0xff]
  %v28 = vld [vmem:[%s1 + $0x10] sm:$0xff]
  %v29 = vld [vmem:[%s1 + $0x18] sm:$0xff]
  %v30 = vld [vmem:[%s1 + $0x20] sm:$0xff]
  %v31 = vld [vmem:[%s1 + $0x28] sm:$0xff]
  %v32 = vld [vmem:[%s1 + $0x30] sm:$0xff]
  %v33 = vld [vmem:[%s1 + $0x38] sm:$0xff]
  %v34 = vld [vmem:[%s1 + $0x40] sm:$0xff]
  %v35 = vld [vmem:[%s1 + $0x48] sm:$0xff]
  %v36 = vld [vmem:[%s1 + $0x50] sm:$0xff]
  %v37 = vld [vmem:[%s1 + $0x58] sm:$0xff]
  %v38 = vld [vmem:[%s1 + $0x60] sm:$0xff]
  %v39 = vld [vmem:[%s1 + $0x68] sm:$0xff]
  %v40 = vld [vmem:[%s1 + $0x70] sm:$0xff]
  %v41 = vld [vmem:[%s1 + $0x78] sm:$0xff]
  %v42 = vld [vmem:[%s1 + $0x80] sm:$0xff]
  %v43 = vld [vmem:[%s1 + $0x88] sm:$0xff]
  %v44 = vld [vmem:[%s1 + $0x90] sm:$0xff]
  %v45 = vld [vmem:[%s1 + $0x98] sm:$0xff]
  %v46 = vld [vmem:[%s1 + $0xa0] sm:$0xff]
  %v47 = vld [vmem:[%s1 + $0xa8] sm:$0xff]
  %v48 = vld [vmem:[%s1 + $0xb0] sm:$0xff]
  %v49 = vld [vmem:[%s1 + $0xb8] sm:$0xff]
  %v50 = vld [vmem:[%s1 + $0xc0] sm:$0xff]
  %v51 = vld [vmem:[%s1 + $0xc8] sm:$0xff]
  %v52 = vld [vmem:[%s1 + $0xd0] sm:$0xff]
  %v53 = vld [vmem:[%s1 + $0xd8] sm:$0xff]
  %v54 = vld [vmem:[%s1 + $0xe0] sm:$0xff]
  %v55 = vld [vmem:[%s1 + $0xe8] sm:$0xff]
  %v56 = vld [vmem:[%s1 + $0xf0] sm:$0xff]
  %v57 = vld [vmem:[%s1 + $0xf8] sm:$0xff]
  %v58 = vld [vmem:[%s1 + $0x100] sm:$0xff]
  %v59 = vld [vmem:[%s1 + $0x108] sm:$0xff]
  %v60 = vld [vmem:[%s1 + $0x110] sm:$0xff]
  %v61 = vld [vmem:[%s1 + $0x118] sm:$0xff]
  %v70 = vunpack.c.l.b16 %v18
  %v71 = vunpack.c.h.b16 %v18
  %v72 = vunpack.c.l.b16 %v19
  %v73 = vunpack.c.l.b16 %v20
  %v74 = vunpack.c.h.b16 %v20
  %v75 = vunpack.c.l.b16 %v21
  %v76 = vunpack.c.l.b16 %v22
  %v77 = vunpack.c.h.b16 %v22
  %v78 = vunpack.c.l.b16 %v23
  %v79 = vunpack.c.l.b16 %v24
  %v80 = vunpack.c.h.b16 %v24
  %v81 = vunpack.c.l.b16 %v25
  %v82 = vpack.c.b16 %v73, %v70
  %v83 = vpack.c.b16 %v74, %v71
  %v84 = vpack.c.b16 %v75, %v72
  %v85 = vpack.c.b16 %v79, %v76
  %v86 = vpack.c.b16 %v80, %v77
  %v87 = vpack.c.b16 %v81, %v78
  %v128 = vunpack.c.l.b16 %v26
  %v129 = vunpack.c.h.b16 %v26
  %v130 = vunpack.c.l.b16 %v27
  %v131 = vunpack.c.h.b16 %v27
  %v132 = vunpack.c.l.b16 %v28
  %v133 = vunpack.c.h.b16 %v28
  %v134 = vunpack.c.l.b16 %v29
  %v135 = vunpack.c.h.b16 %v29
  %v136 = vunpack.c.l.b16 %v30
  %v137 = vunpack.c.h.b16 %v30
  %v138 = vunpack.c.l.b16 %v31
  %v139 = vunpack.c.h.b16 %v31
  %v140 = vunpack.c.l.b16 %v32
  %v141 = vunpack.c.h.b16 %v32
  %v142 = vunpack.c.l.b16 %v33
  %v143 = vunpack.c.h.b16 %v33
  %v144 = vunpack.c.l.b16 %v34
  %v145 = vunpack.c.h.b16 %v34
  %v146 = vunpack.c.l.b16 %v35
  %v147 = vunpack.c.h.b16 %v35
  %v148 = vunpack.c.l.b16 %v36
  %v149 = vunpack.c.h.b16 %v36
  %v150 = vunpack.c.l.b16 %v37
  %v151 = vunpack.c.h.b16 %v37
  %v152 = vunpack.c.l.b16 %v38
  %v153 = vunpack.c.h.b16 %v38
  %v154 = vunpack.c.l.b16 %v39
  %v155 = vunpack.c.h.b16 %v39
  %v156 = vunpack.c.l.b16 %v40
  %v157 = vunpack.c.h.b16 %v40
  %v158 = vunpack.c.l.b16 %v41
  %v159 = vunpack.c.h.b16 %v41
  %v160 = vunpack.c.l.b16 %v42
  %v161 = vunpack.c.h.b16 %v42
  %v162 = vunpack.c.l.b16 %v43
  %v163 = vunpack.c.h.b16 %v43
  %v164 = vunpack.c.l.b16 %v44
  %v165 = vunpack.c.h.b16 %v44
  %v166 = vunpack.c.l.b16 %v45
  %v167 = vunpack.c.h.b16 %v45
  %v168 = vunpack.c.l.b16 %v46
  %v169 = vunpack.c.h.b16 %v46
  %v170 = vunpack.c.l.b16 %v47
  %v171 = vunpack.c.h.b16 %v47
  %v172 = vunpack.c.l.b16 %v48
  %v173 = vunpack.c.h.b16 %v48
  %v174 = vunpack.c.l.b16 %v49
  %v175 = vunpack.c.h.b16 %v49
  %v176 = vunpack.c.l.b16 %v50
  %v177 = vunpack.c.h.b16 %v50
  %v178 = vunpack.c.l.b16 %v51
  %v179 = vunpack.c.h.b16 %v51
  %v180 = vunpack.c.l.b16 %v52
  %v181 = vunpack.c.h.b16 %v52
  %v182 = vunpack.c.l.b16 %v53
  %v183 = vunpack.c.h.b16 %v53
  %v184 = vunpack.c.l.b16 %v54
  %v185 = vunpack.c.h.b16 %v54
  %v186 = vunpack.c.l.b16 %v55
  %v187 = vunpack.c.h.b16 %v55
  %v188 = vunpack.c.l.b16 %v56
  %v189 = vunpack.c.h.b16 %v56
  %v190 = vunpack.c.l.b16 %v57
  %v191 = vunpack.c.h.b16 %v57
  %v192 = vunpack.c.l.b16 %v58
  %v193 = vunpack.c.h.b16 %v58
  %v194 = vunpack.c.l.b16 %v59
  %v195 = vunpack.c.h.b16 %v59
  %v196 = vunpack.c.l.b16 %v60
  %v197 = vunpack.c.h.b16 %v60
  %v198 = vunpack.c.l.b16 %v61
  %v199 = vunpack.c.h.b16 %v61
  %v200 = vpack.c.b16 %v130, %v128
  %v201 = vpack.c.b16 %v131, %v129
  %v202 = vpack.c.b16 %v134, %v132
  %v203 = vpack.c.b16 %v135, %v133
  %v204 = vpack.c.b16 %v138, %v136
  %v205 = vpack.c.b16 %v139, %v137
  %v206 = vpack.c.b16 %v142, %v140
  %v207 = vpack.c.b16 %v143, %v141
  %v208 = vpack.c.b16 %v146, %v144
  %v209 = vpack.c.b16 %v147, %v145
  %v210 = vpack.c.b16 %v150, %v148
  %v211 = vpack.c.b16 %v151, %v149
  %v212 = vpack.c.b16 %v154, %v152
  %v213 = vpack.c.b16 %v155, %v153
  %v214 = vpack.c.b16 %v158, %v156
  %v215 = vpack.c.b16 %v159, %v157
  %v216 = vpack.c.b16 %v162, %v160
  %v217 = vpack.c.b16 %v163, %v161
  %v218 = vpack.c.b16 %v166, %v164
  %v219 = vpack.c.b16 %v167, %v165
  %v220 = vpack.c.b16 %v170, %v168
  %v221 = vpack.c.b16 %v171, %v169
  %v222 = vpack.c.b16 %v174, %v172
  %v223 = vpack.c.b16 %v175, %v173
  %v224 = vpack.c.b16 %v178, %v176
  %v225 = vpack.c.b16 %v179, %v177
  %v226 = vpack.c.b16 %v182, %v180
  %v227 = vpack.c.b16 %v183, %v181
  %v228 = vpack.c.b16 %v186, %v184
  %v229 = vpack.c.b16 %v187, %v185
  %v230 = vpack.c.b16 %v190, %v188
  %v231 = vpack.c.b16 %v191, %v189
  %v232 = vpack.c.b16 %v194, %v192
  %v233 = vpack.c.b16 %v195, %v193
  %v234 = vpack.c.b16 %v198, %v196
  %v235 = vpack.c.b16 %v199, %v197
  %vm272 = vcmask 261120
  %v274 = vsel %vm272, %v84, 0
  %v277 = vsel %vm272, %v87, 0
  %279 = vmatprep.subr.bf16.mxu0 %v215
  %280 = vmatpush1.bf16.msra.mxu0 %v214
  %281 = vmatprep.subr.bf16.mxu0 %v213
  %282 = vmatpush1.bf16.msra.mxu0 %v212
  %283 = vmatprep.subr.bf16.mxu0 %v211
  %284 = vmatpush1.bf16.msra.mxu0 %v210
  %285 = vmatprep.subr.bf16.mxu0 %v209
  %286 = vmatpush1.bf16.msra.mxu0 %v208
  %287 = vmatprep.subr.bf16.mxu0 %v207
  %288 = vmatpush1.bf16.msra.mxu0 %v206
  %289 = vmatprep.subr.bf16.mxu0 %v205
  %290 = vmatpush1.bf16.msra.mxu0 %v204
  %291 = vmatprep.subr.bf16.mxu0 %v203
  %292 = vmatpush1.bf16.msra.mxu0 %v202
  %293 = vmatprep.subr.bf16.mxu0 %v201
  %294 = vmatpush1.bf16.msra.mxu0 %v200
  %295 = vmatprep.subr.bf16.mxu0 %v231
  %296 = vmatpush2.bf16.msra.mxu0 %v230
  %297 = vmatprep.subr.bf16.mxu0 %v229
  %298 = vmatpush2.bf16.msra.mxu0 %v228
  %299 = vmatprep.subr.bf16.mxu0 %v227
  %300 = vmatpush2.bf16.msra.mxu0 %v226
  %301 = vmatprep.subr.bf16.mxu0 %v225
  %302 = vmatpush2.bf16.msra.mxu0 %v224
  %303 = vmatprep.subr.bf16.mxu0 %v223
  %304 = vmatpush2.bf16.msra.mxu0 %v222
  %305 = vmatprep.subr.bf16.mxu0 %v221
  %306 = vmatpush2.bf16.msra.mxu0 %v220
  %307 = vmatprep.subr.bf16.mxu0 %v219
  %308 = vmatpush2.bf16.msra.mxu0 %v218
  %309 = vmatprep.subr.bf16.mxu0 %v217
  %310 = vmatpush2.bf16.msra.mxu0 %v216
  %311 = vmatprep.mubr.bf16.mxu0 %v83
  %312 = vmatmul.mubr.bf16.gmra.mxu0 %v82
  %v313 = vpop.f32.mrf.mxu0
  %v314 = vadd.f32 0.0, %v313
  %v315 = vpop.f32.mrf.mxu0
  %v316 = vadd.f32 0.0, %v315
  %v317 = vpop.f32.mrf.mxu0
  %v318 = vadd.f32 0.0, %v317
  %v319 = vpop.f32.mrf.mxu0
  %v320 = vadd.f32 0.0, %v319
  %321 = vmatprep.mubr.bf16.mxu0 %v86
  %322 = vmatmul.mubr.bf16.gmra.mxu0 %v85
  %v323 = vpop.f32.mrf.mxu0
  %v324 = vadd.f32 0.0, %v323
  %v325 = vpop.f32.mrf.mxu0
  %v326 = vadd.f32 0.0, %v325
  %v327 = vpop.f32.mrf.mxu0
  %v328 = vadd.f32 0.0, %v327
  %v329 = vpop.f32.mrf.mxu0
  %v330 = vadd.f32 0.0, %v329
  %331 = vdwg.mxu0
  %332 = vmatprep.subr.bf16.mxu0 0
  %333 = vmatpush1.bf16.msra.mxu0 0
  %334 = vmatprep.subr.bf16.mxu0 0
  %335 = vmatpush1.bf16.msra.mxu0 0
  %336 = vmatprep.subr.bf16.mxu0 0
  %337 = vmatpush1.bf16.msra.mxu0 0
  %338 = vmatprep.subr.bf16.mxu0 0
  %339 = vmatpush1.bf16.msra.mxu0 0
  %340 = vmatprep.subr.bf16.mxu0 0
  %341 = vmatpush1.bf16.msra.mxu0 0
  %342 = vmatprep.subr.bf16.mxu0 0
  %343 = vmatpush1.bf16.msra.mxu0 0
  %344 = vmatprep.subr.bf16.mxu0 %v235
  %345 = vmatpush1.bf16.msra.mxu0 %v234
  %346 = vmatprep.subr.bf16.mxu0 %v233
  %347 = vmatpush1.bf16.msra.mxu0 %v232
  %348 = vmatprep.subr.bf16.mxu0 0
  %349 = vmatpush2.bf16.msra.mxu0 0
  %350 = vmatprep.subr.bf16.mxu0 0
  %351 = vmatpush2.bf16.msra.mxu0 0
  %352 = vmatprep.subr.bf16.mxu0 0
  %353 = vmatpush2.bf16.msra.mxu0 0
  %354 = vmatprep.subr.bf16.mxu0 0
  %355 = vmatpush2.bf16.msra.mxu0 0
  %356 = vmatprep.subr.bf16.mxu0 0
  %357 = vmatpush2.bf16.msra.mxu0 0
  %358 = vmatprep.subr.bf16.mxu0 0
  %359 = vmatpush2.bf16.msra.mxu0 0
  %360 = vmatprep.subr.bf16.mxu0 0
  %361 = vmatpush2.bf16.msra.mxu0 0
  %362 = vmatprep.subr.bf16.mxu0 0
  %363 = vmatpush2.bf16.msra.mxu0 0
  %364 = vmatprep.mubr.bf16.mxu0 0
  %365 = vmatmul.mubr.bf16.gmra.mxu0 %v274
  %v366 = vpop.f32.mrf.mxu0
  %v367 = vadd.f32 %v314, %v366
  %v368 = vpop.f32.mrf.mxu0
  %v369 = vadd.f32 %v316, %v368
  %v370 = vpop.f32.mrf.mxu0
  %v371 = vadd.f32 %v318, %v370
  %v372 = vpop.f32.mrf.mxu0
  %v373 = vadd.f32 %v320, %v372
  %374 = vmatprep.mubr.bf16.mxu0 0
  %375 = vmatmul.mubr.bf16.gmra.mxu0 %v277
  %v376 = vpop.f32.mrf.mxu0
  %v377 = vadd.f32 %v324, %v376
  %v378 = vpop.f32.mrf.mxu0
  %v379 = vadd.f32 %v326, %v378
  %v380 = vpop.f32.mrf.mxu0
  %v381 = vadd.f32 %v328, %v380
  %v382 = vpop.f32.mrf.mxu0
  %v383 = vadd.f32 %v330, %v382
  %384 = vdwg.mxu0
  %v385 = vadd.f32 %v367, %v371
  %v386 = vadd.f32 %v385, %v377
  %v387 = vadd.f32 %v386, %v381
  %v388 = vrot.slane %v387, 4
  %v389 = vadd.f32 %v387, %v388
  %v390 = vrot.slane %v389, 2
  %v391 = vadd.f32 %v389, %v390
  %v392 = vrot.slane %v391, 1
  %v393 = vadd.f32 %v391, %v392
  %v394 = vadd.f32 %v369, %v373
  %v395 = vadd.f32 %v394, %v379
  %v396 = vadd.f32 %v395, %v383
  %v397 = vrot.slane %v396, 4
  %v398 = vadd.f32 %v396, %v397
  %v399 = vrot.slane %v398, 2
  %v400 = vadd.f32 %v398, %v399
  %v401 = vrot.slane %v400, 1
  %v402 = vadd.f32 %v400, %v401
  %v403 = vmul.f32 %v393, 0.03125
  %v404 = vmul.f32 %v402, 0.03125
  %v405 = vsub.f32 %v367, %v403
  %v406 = vsub.f32 %v369, %v404
  %v407 = vsub.f32 %v371, %v403
  %v408 = vsub.f32 %v373, %v404
  %v409 = vsub.f32 %v377, %v403
  %v410 = vsub.f32 %v379, %v404
  %v411 = vsub.f32 %v381, %v403
  %v412 = vsub.f32 %v383, %v404
  %v413 = vmul.f32 %v405, %v405
  %v414 = vmul.f32 %v406, %v406
  %v415 = vmul.f32 %v407, %v407
  %v416 = vmul.f32 %v408, %v408
  %v417 = vmul.f32 %v409, %v409
  %v418 = vmul.f32 %v410, %v410
  %v419 = vmul.f32 %v411, %v411
  %v420 = vmul.f32 %v412, %v412
  %v421 = vadd.f32 %v413, %v415
  %v422 = vadd.f32 %v421, %v417
  %v423 = vadd.f32 %v422, %v419
  %v424 = vrot.slane %v423, 4
  %v425 = vadd.f32 %v423, %v424
  %v426 = vrot.slane %v425, 2
  %v427 = vadd.f32 %v425, %v426
  %v428 = vrot.slane %v427, 1
  %v429 = vadd.f32 %v427, %v428
  %v430 = vadd.f32 %v414, %v416
  %v431 = vadd.f32 %v430, %v418
  %v432 = vadd.f32 %v431, %v420
  %v433 = vrot.slane %v432, 4
  %v434 = vadd.f32 %v432, %v433
  %v435 = vrot.slane %v434, 2
  %v436 = vadd.f32 %v434, %v435
  %v437 = vrot.slane %v436, 1
  %v438 = vadd.f32 %v436, %v437
  %v439 = vmul.f32 %v429, 0.03125
  %v440 = vmul.f32 %v438, 0.03125
  %v441 = vld [vmem:[%s2] sm:$0x3]
  %v442 = vadd.f32 %v439, 1e-05
  %v443 = vadd.f32 %v440, 1e-05
  %v444 = vrsqrt.pop %v442
  %v445 = vrsqrt.pop %v443
  %v448 = vcombine.low %v444, %v445
  %v450 = vunpack.c.l.s4 1966171168
  %v451 = vunpack.c.0.s8 %v450
  %v452 = vlaneseq
  %v453 = vshrl.u32 %v452, 7
  %v454 = vsub.s32 %v451, %v453
  %v455 = vrot.slane %v448, %v454
  %v457 = vunpack.c.l.s4 1966171168
  %v458 = vunpack.c.0.s8 %v457
  %v459 = vlaneseq
  %v460 = vshrl.u32 %v459, 7
  %v461 = vsub.s32 %v458, %v460
  %v462 = vrot.slane %v455, %v461
  %v464 = vmul.f32 %v441, %v462
  %v466 = vlaneseq
  %v467 = vshrl.u32 %v466, 7
  %v468 = vsub.s32 0, %v467
  %v469 = vrot.slane %v464, %v468
  %v470 = vlaneseq
  %v471 = vshrl.u32 %v470, 7
  %v472 = vsub.s32 1, %v471
  %v473 = vrot.slane %v464, %v472
  %v476 = vmul.f32 %v405, %v469
  %v477 = vmul.f32 %v406, %v473
  %v478 = vmul.f32 %v407, %v469
  %v479 = vmul.f32 %v408, %v473
  %v480 = vmul.f32 %v409, %v469
  %v481 = vmul.f32 %v410, %v473
  %v482 = vmul.f32 %v411, %v469
  %v483 = vmul.f32 %v412, %v473
  %v484 = vld [vmem:[%s3] sm:$0x3]
  %v486 = vlaneseq
  %v487 = vshrl.u32 %v486, 7
  %v488 = vsub.s32 0, %v487
  %v489 = vrot.slane %v484, %v488
  %v490 = vlaneseq
  %v491 = vshrl.u32 %v490, 7
  %v492 = vsub.s32 1, %v491
  %v493 = vrot.slane %v484, %v492
  %v496 = vadd.f32 %v476, %v489
  %v497 = vadd.f32 %v477, %v493
  %v498 = vadd.f32 %v478, %v489
  %v499 = vadd.f32 %v479, %v493
  %v500 = vadd.f32 %v480, %v489
  %v501 = vadd.f32 %v481, %v493
  %v502 = vadd.f32 %v482, %v489
  %v503 = vadd.f32 %v483, %v493
  %v504 = vlaneseq
  %v505 = vand.u32 %v504, 127
  %v506 = vadd.s32 %v505, 128
  %vm507 = vcmp.lt.s32.totalorder %v505, 128
  %vm508 = vcmp.lt.s32.totalorder %v506, 128
  %v509 = vmax.f32 %v496, 0.0
  %v510 = vmax.f32 %v497, 0.0
  %v511 = vmax.f32 %v498, 0.0
  %v512 = vmax.f32 %v499, 0.0
  %v513 = vmax.f32 %v500, 0.0
  %v514 = vmax.f32 %v501, 0.0
  %v515 = vmax.f32 %v502, 0.0
  %v516 = vmax.f32 %v503, 0.0
  %v517 = vsel %vm507, %v509, %v496
  %v518 = vsel %vm508, %v510, %v497
  %v519 = vsel %vm507, %v511, %v498
  %v520 = vsel %vm508, %v512, %v499
  %v521 = vsel %vm507, %v513, %v500
  %v522 = vsel %vm508, %v514, %v501
  %v523 = vsel %vm507, %v515, %v502
  %v524 = vsel %vm508, %v516, %v503
  %v525 = vpack.c.bf16 %v519, %v517
  %v526 = vpack.c.bf16 %v520, %v518
  %v527 = vpack.c.bf16 %v523, %v521
  %v528 = vpack.c.bf16 %v524, %v522
  %v533 = vunpack.c.l.b16 %v525
  %v534 = vunpack.c.l.b16 %v526
  %v535 = vunpack.c.h.b16 %v525
  %v536 = vunpack.c.h.b16 %v526
  %v537 = vunpack.c.l.b16 %v527
  %v538 = vunpack.c.l.b16 %v528
  %v539 = vunpack.c.h.b16 %v527
  %v540 = vunpack.c.h.b16 %v528
  %v541 = vpack.c.b16 %v534, %v533
  %v542 = vpack.c.b16 %v536, %v535
  %v543 = vpack.c.b16 %v538, %v537
  %v544 = vpack.c.b16 %v540, %v539
  %549 = vst [vmem:[%s4] sm:$0xff] %v541
  %550 = vst [vmem:[%s4 + $0x8] sm:$0xff] %v542
  %551 = vst [vmem:[%s4 + $0x10] sm:$0xff] %v543
  %552 = vst [vmem:[%s4 + $0x18] sm:$0xff] %v544
  // Predicated region
  $region18: #{cnn_classifier_forward.11} parent=0 // pred_check
    _
  $region19: #{cnn_classifier_forward.11} parent=0 // pred_check_branch
    %554 = sbr.rel (0) target = $region21
  $region20: #{cnn_classifier_forward.11} parent=0 // pred_region
    _
  $region21: #{cnn_classifier_forward.11} parent=0 // pred_fallthru
    _
  // Predicated region
  $region22: #{cnn_classifier_forward.11} parent=0 // pred_check
    _
  $region23: #{cnn_classifier_forward.11} parent=0 // pred_check_branch
    %556 = sbr.rel (0) target = $region25
  $region24: #{cnn_classifier_forward.11} parent=0 // pred_region
    _
  $region25: #{cnn_classifier_forward.11} parent=0 // pred_fallthru
    _

// kernel: cnn_classifier_forward.12
$region0: #{cnn_classifier_forward.12}
  #allocation0 [shape = 'u32[]', space=smem, size = 0x4, offset = 0x4, fixed_abs, tag = 'smem constant byte address 0x4 - core index']
  #allocation1 [shape = 'u32[144,128]{1,0:T(1,128)}', space=vmem, size = 0x12000, scoped, tag = 'internal scratch']
  %s0 = inlined_call_operand.vmem [shape: bf16[32,576], index: 0, kind: input, shape index: {}]
  %s1 = inlined_call_operand.vmem [shape: bf16[576,128], index: 1, kind: input, shape index: {}]
  %s2 = inlined_call_operand.vmem [shape: f32[1,128], index: 2, kind: input, shape index: {}]
  %s3 = inlined_call_operand.vmem [shape: f32[1,128], index: 3, kind: input, shape index: {}]
  %s4 = inlined_call_operand.vmem [shape: bf16[32,128], index: 4, kind: input, shape index: {}]
  %s5 = inlined_call_operand.vmem [shape: bf16[32,128], index: 5, kind: output, shape index: {}]
  %s6 = sld [smem:[#allocation0]]
  $region30: #{cnn_classifier_forward.12} parent=0
    _
  %s8 = ssub.s32 1, %s6
  %s9 = scalar_select 0, %s8, %s6
  // Predicated region
  $region2: #{cnn_classifier_forward.12} parent=0 // pred_check
    _
  $region3: #{cnn_classifier_forward.12} parent=0 // pred_check_branch
    %11 = sbr.rel (0) target = $region5
  $region4: #{cnn_classifier_forward.12} parent=0 // pred_region
    _
  $region5: #{cnn_classifier_forward.12} parent=0 // pred_fallthru
    _
  // Predicated region
  $region6: #{cnn_classifier_forward.12} parent=0 // pred_check
    _
  $region7: #{cnn_classifier_forward.12} parent=0 // pred_check_branch
    %13 = sbr.rel (0) target = $region9
  $region8: #{cnn_classifier_forward.12} parent=0 // pred_region
    _
  $region9: #{cnn_classifier_forward.12} parent=0 // pred_fallthru
    _
  // Predicated region
  $region10: #{cnn_classifier_forward.12} parent=0 // pred_check
    _
  $region11: #{cnn_classifier_forward.12} parent=0 // pred_check_branch
    %15 = sbr.rel (0) target = $region13
  $region12: #{cnn_classifier_forward.12} parent=0 // pred_region
    _
  $region13: #{cnn_classifier_forward.12} parent=0 // pred_fallthru
    _
  // Predicated region
  $region14: #{cnn_classifier_forward.12} parent=0 // pred_check
    _
  $region15: #{cnn_classifier_forward.12} parent=0 // pred_check_branch
    %17 = sbr.rel (0) target = $region17
  $region16: #{cnn_classifier_forward.12} parent=0 // pred_region
    _
  $region17: #{cnn_classifier_forward.12} parent=0 // pred_fallthru
    _
  // Predicated region
  $region18: #{cnn_classifier_forward.12} parent=0 // pred_check
    _
  $region19: #{cnn_classifier_forward.12} parent=0 // pred_check_branch
    %19 = sbr.rel (0) target = $region21
  $region20: #{cnn_classifier_forward.12} parent=0 // pred_region
    _
  $region21: #{cnn_classifier_forward.12} parent=0 // pred_fallthru
    _
  %v21 = vld [vmem:[%s0] sm:$0xff]
  %v22 = vld [vmem:[%s0 + $0x8] sm:$0xff]
  %v23 = vld [vmem:[%s0 + $0x10] sm:$0xf]
  %v24 = vld [vmem:[%s0 + $0x14] sm:$0xff]
  %v25 = vld [vmem:[%s0 + $0x1c] sm:$0xff]
  %v26 = vld [vmem:[%s0 + $0x24] sm:$0xf]
  %v27 = vld [vmem:[%s0 + $0x28] sm:$0xff]
  %v28 = vld [vmem:[%s0 + $0x30] sm:$0xff]
  %v29 = vld [vmem:[%s0 + $0x38] sm:$0xf]
  %v30 = vld [vmem:[%s0 + $0x3c] sm:$0xff]
  %v31 = vld [vmem:[%s0 + $0x44] sm:$0xff]
  %v32 = vld [vmem:[%s0 + $0x4c] sm:$0xf]
  %v33 = vld [vmem:[%s1] sm:$0xf]
  %v34 = vld [vmem:[%s1 + $0x4] sm:$0xf]
  %v35 = vld [vmem:[%s1 + $0x8] sm:$0xf]
  %v36 = vld [vmem:[%s1 + $0xc] sm:$0xf]
  %v37 = vld [vmem:[%s1 + $0x10] sm:$0xf]
  %v38 = vld [vmem:[%s1 + $0x14] sm:$0xf]
  %v39 = vld [vmem:[%s1 + $0x18] sm:$0xf]
  %v40 = vld [vmem:[%s1 + $0x1c] sm:$0xf]
  %v41 = vld [vmem:[%s1 + $0x20] sm:$0xf]
  %v42 = vld [vmem:[%s1 + $0x24] sm:$0xf]
  %v43 = vld [vmem:[%s1 + $0x28] sm:$0xf]
  %v44 = vld [vmem:[%s1 + $0x2c] sm:$0xf]
  %v45 = vld [vmem:[%s1 + $0x30] sm:$0xf]
  %v46 = vld [vmem:[%s1 + $0x34] sm:$0xf]
  %v47 = vld [vmem:[%s1 + $0x38] sm:$0xf]
  %v48 = vld [vmem:[%s1 + $0x3c] sm:$0xf]
  %v49 = vld [vmem:[%s1 + $0x40] sm:$0xf]
  %v50 = vld [vmem:[%s1 + $0x44] sm:$0xf]
  %v51 = vld [vmem:[%s1 + $0x48] sm:$0xf]
  %v52 = vld [vmem:[%s1 + $0x4c] sm:$0xf]
  %v53 = vld [vmem:[%s1 + $0x50] sm:$0xf]
  %v54 = vld [vmem:[%s1 + $0x54] sm:$0xf]
  %v55 = vld [vmem:[%s1 + $0x58] sm:$0xf]
  %v56 = vld [vmem:[%s1 + $0x5c] sm:$0xf]
  %v57 = vld [vmem:[%s1 + $0x60] sm:$0xf]
  %v58 = vld [vmem:[%s1 + $0x64] sm:$0xf]
  %v59 = vld [vmem:[%s1 + $0x68] sm:$0xf]
  %v60 = vld [vmem:[%s1 + $0x6c] sm:$0xf]
  %v61 = vld [vmem:[%s1 + $0x70] sm:$0xf]
  %v62 = vld [vmem:[%s1 + $0x74] sm:$0xf]
  %v63 = vld [vmem:[%s1 + $0x78] sm:$0xf]
  %v64 = vld [vmem:[%s1 + $0x7c] sm:$0xf]
  %v65 = vld [vmem:[%s1 + $0x80] sm:$0xf]
  %v66 = vld [vmem:[%s1 + $0x84] sm:$0xf]
  %v67 = vld [vmem:[%s1 + $0x88] sm:$0xf]
  %v68 = vld [vmem:[%s1 + $0x8c] sm:$0xf]
  %v69 = vld [vmem:[%s1 + $0x90] sm:$0xf]
  %v70 = vld [vmem:[%s1 + $0x94] sm:$0xf]
  %v71 = vld [vmem:[%s1 + $0x98] sm:$0xf]
  %v72 = vld [vmem:[%s1 + $0x9c] sm:$0xf]
  %v73 = vld [vmem:[%s1 + $0xa0] sm:$0xf]
  %v74 = vld [vmem:[%s1 + $0xa4] sm:$0xf]
  %v75 = vld [vmem:[%s1 + $0xa8] sm:$0xf]
  %v76 = vld [vmem:[%s1 + $0xac] sm:$0xf]
  %v77 = vld [vmem:[%s1 + $0xb0] sm:$0xf]
  %v78 = vld [vmem:[%s1 + $0xb4] sm:$0xf]
  %v79 = vld [vmem:[%s1 + $0xb8] sm:$0xf]
  %v80 = vld [vmem:[%s1 + $0xbc] sm:$0xf]
  %v81 = vld [vmem:[%s1 + $0xc0] sm:$0xf]
  %v82 = vld [vmem:[%s1 + $0xc4] sm:$0xf]
  %v83 = vld [vmem:[%s1 + $0xc8] sm:$0xf]
  %v84 = vld [vmem:[%s1 + $0xcc] sm:$0xf]
  %v85 = vld [vmem:[%s1 + $0xd0] sm:$0xf]
  %v86 = vld [vmem:[%s1 + $0xd4] sm:$0xf]
  %v87 = vld [vmem:[%s1 + $0xd8] sm:$0xf]
  %v88 = vld [vmem:[%s1 + $0xdc] sm:$0xf]
  %v89 = vld [vmem:[%s1 + $0xe0] sm:$0xf]
  %v90 = vld [vmem:[%s1 + $0xe4] sm:$0xf]
  %v91 = vld [vmem:[%s1 + $0xe8] sm:$0xf]
  %v92 = vld [vmem:[%s1 + $0xec] sm:$0xf]
  %v93 = vld [vmem:[%s1 + $0xf0] sm:$0xf]
  %v94 = vld [vmem:[%s1 + $0xf4] sm:$0xf]
  %v95 = vld [vmem:[%s1 + $0xf8] sm:$0xf]
  %v96 = vld [vmem:[%s1 + $0xfc] sm:$0xf]
  %v97 = vld [vmem:[%s1 + $0x100] sm:$0xf]
  %v98 = vld [vmem:[%s1 + $0x104] sm:$0xf]
  %v99 = vld [vmem:[%s1 + $0x108] sm:$0xf]
  %v100 = vld [vmem:[%s1 + $0x10c] sm:$0xf]
  %v101 = vld [vmem:[%s1 + $0x110] sm:$0xf]
  %v102 = vld [vmem:[%s1 + $0x114] sm:$0xf]
  %v103 = vld [vmem:[%s1 + $0x118] sm:$0xf]
  %v104 = vld [vmem:[%s1 + $0x11c] sm:$0xf]
  %v117 = vunpack.c.l.b16 %v21
  %v118 = vunpack.c.h.b16 %v21
  %v119 = vunpack.c.l.b16 %v22
  %v120 = vunpack.c.h.b16 %v22
  %v121 = vunpack.c.l.b16 %v23
  %v122 = vunpack.c.l.b16 %v24
  %v123 = vunpack.c.h.b16 %v24
  %v124 = vunpack.c.l.b16 %v25
  %v125 = vunpack.c.h.b16 %v25
  %v126 = vunpack.c.l.b16 %v26
  %v127 = vunpack.c.l.b16 %v27
  %v128 = vunpack.c.h.b16 %v27
  %v129 = vunpack.c.l.b16 %v28
  %v130 = vunpack.c.h.b16 %v28
  %v131 = vunpack.c.l.b16 %v29
  %v132 = vunpack.c.l.b16 %v30
  %v133 = vunpack.c.h.b16 %v30
  %v134 = vunpack.c.l.b16 %v31
  %v135 = vunpack.c.h.b16 %v31
  %v136 = vunpack.c.l.b16 %v32
  %v137 = vpack.c.b16 %v122, %v117
  %v138 = vpack.c.b16 %v123, %v118
  %v139 = vpack.c.b16 %v124, %v119
  %v140 = vpack.c.b16 %v125, %v120
  %v141 = vpack.c.b16 %v126, %v121
  %v142 = vpack.c.b16 %v132, %v127
  %v143 = vpack.c.b16 %v133, %v128
  %v144 = vpack.c.b16 %v134, %v129
  %v145 = vpack.c.b16 %v135, %v130
  %v146 = vpack.c.b16 %v136, %v131
  %v227 = vunpack.c.l.b16 %v33
  %v228 = vunpack.c.l.b16 %v34
  %v229 = vunpack.c.l.b16 %v35
  %v230 = vunpack.c.l.b16 %v36
  %v231 = vunpack.c.l.b16 %v37
  %v232 = vunpack.c.l.b16 %v38
  %v233 = vunpack.c.l.b16 %v39
  %v234 = vunpack.c.l.b16 %v40
  %v235 = vunpack.c.l.b16 %v41
  %v236 = vunpack.c.l.b16 %v42
  %v237 = vunpack.c.l.b16 %v43
  %v238 = vunpack.c.l.b16 %v44
  %v239 = vunpack.c.l.b16 %v45
  %v240 = vunpack.c.l.b16 %v46
  %v241 = vunpack.c.l.b16 %v47
  %v242 = vunpack.c.l.b16 %v48
  %v243 = vunpack.c.l.b16 %v49
  %v244 = vunpack.c.l.b16 %v50
  %v245 = vunpack.c.l.b16 %v51
  %v246 = vunpack.c.l.b16 %v52
  %v247 = vunpack.c.l.b16 %v53
  %v248 = vunpack.c.l.b16 %v54
  %v249 = vunpack.c.l.b16 %v55
  %v250 = vunpack.c.l.b16 %v56
  %v251 = vunpack.c.l.b16 %v57
  %v252 = vunpack.c.l.b16 %v58
  %v253 = vunpack.c.l.b16 %v59
  %v254 = vunpack.c.l.b16 %v60
  %v255 = vunpack.c.l.b16 %v61
  %v256 = vunpack.c.l.b16 %v62
  %v257 = vunpack.c.l.b16 %v63
  %v258 = vunpack.c.l.b16 %v64
  %v259 = vunpack.c.l.b16 %v65
  %v260 = vunpack.c.l.b16 %v66
  %v261 = vunpack.c.l.b16 %v67
  %v262 = vunpack.c.l.b16 %v68
  %v263 = vunpack.c.l.b16 %v69
  %v264 = vunpack.c.l.b16 %v70
  %v265 = vunpack.c.l.b16 %v71
  %v266 = vunpack.c.l.b16 %v72
  %v267 = vunpack.c.l.b16 %v73
  %v268 = vunpack.c.l.b16 %v74
  %v269 = vunpack.c.l.b16 %v75
  %v270 = vunpack.c.l.b16 %v76
  %v271 = vunpack.c.l.b16 %v77
  %v272 = vunpack.c.l.b16 %v78
  %v273 = vunpack.c.l.b16 %v79
  %v274 = vunpack.c.l.b16 %v80
  %v275 = vunpack.c.l.b16 %v81
  %v276 = vunpack.c.l.b16 %v82
  %v277 = vunpack.c.l.b16 %v83
  %v278 = vunpack.c.l.b16 %v84
  %v279 = vunpack.c.l.b16 %v85
  %v280 = vunpack.c.l.b16 %v86
  %v281 = vunpack.c.l.b16 %v87
  %v282 = vunpack.c.l.b16 %v88
  %v283 = vunpack.c.l.b16 %v89
  %v284 = vunpack.c.l.b16 %v90
  %v285 = vunpack.c.l.b16 %v91
  %v286 = vunpack.c.l.b16 %v92
  %v287 = vunpack.c.l.b16 %v93
  %v288 = vunpack.c.l.b16 %v94
  %v289 = vunpack.c.l.b16 %v95
  %v290 = vunpack.c.l.b16 %v96
  %v291 = vunpack.c.l.b16 %v97
  %v292 = vunpack.c.l.b16 %v98
  %v293 = vunpack.c.l.b16 %v99
  %v294 = vunpack.c.l.b16 %v100
  %v295 = vunpack.c.l.b16 %v101
  %v296 = vunpack.c.l.b16 %v102
  %v297 = vunpack.c.l.b16 %v103
  %v298 = vunpack.c.l.b16 %v104
  %v299 = vpack.c.b16 %v228, %v227
  %v300 = vpack.c.b16 %v230, %v229
  %v301 = vpack.c.b16 %v232, %v231
  %v302 = vpack.c.b16 %v234, %v233
  %v303 = vpack.c.b16 %v236, %v235
  %v304 = vpack.c.b16 %v238, %v237
  %v305 = vpack.c.b16 %v240, %v239
  %v306 = vpack.c.b16 %v242, %v241
  %v307 = vpack.c.b16 %v244, %v243
  %v308 = vpack.c.b16 %v246, %v245
  %v309 = vpack.c.b16 %v248, %v247
  %v310 = vpack.c.b16 %v250, %v249
  %v311 = vpack.c.b16 %v252, %v251
  %v312 = vpack.c.b16 %v254, %v253
  %v313 = vpack.c.b16 %v256, %v255
  %v314 = vpack.c.b16 %v258, %v257
  %v315 = vpack.c.b16 %v260, %v259
  %v316 = vpack.c.b16 %v262, %v261
  %v317 = vpack.c.b16 %v264, %v263
  %v318 = vpack.c.b16 %v266, %v265
  %v319 = vpack.c.b16 %v268, %v267
  %v320 = vpack.c.b16 %v270, %v269
  %v321 = vpack.c.b16 %v272, %v271
  %v322 = vpack.c.b16 %v274, %v273
  %v323 = vpack.c.b16 %v276, %v275
  %v324 = vpack.c.b16 %v278, %v277
  %v325 = vpack.c.b16 %v280, %v279
  %v326 = vpack.c.b16 %v282, %v281
  %v327 = vpack.c.b16 %v284, %v283
  %v328 = vpack.c.b16 %v286, %v285
  %v329 = vpack.c.b16 %v288, %v287
  %v330 = vpack.c.b16 %v290, %v289
  %v331 = vpack.c.b16 %v292, %v291
  %v332 = vpack.c.b16 %v294, %v293
  %v333 = vpack.c.b16 %v296, %v295
  %v334 = vpack.c.b16 %v298, %v297
  %vm371 = vcmask 523264
  %v373 = vsel %vm371, %v141, 0
  %v376 = vsel %vm371, %v146, 0
  %378 = vmatprep.subr.bf16.mxu0 0
  %379 = vmatpush1.bf16.msra.mxu0 %v306
  %380 = vmatprep.subr.bf16.mxu0 0
  %381 = vmatpush1.bf16.msra.mxu0 %v305
  %382 = vmatprep.subr.bf16.mxu0 0
  %383 = vmatpush1.bf16.msra.mxu0 %v304
  %384 = vmatprep.subr.bf16.mxu0 0
  %385 = vmatpush1.bf16.msra.mxu0 %v303
  %386 = vmatprep.subr.bf16.mxu0 0
  %387 = vmatpush1.bf16.msra.mxu0 %v302
  %388 = vmatprep.subr.bf16.mxu0 0
  %389 = vmatpush1.bf16.msra.mxu0 %v301
  %390 = vmatprep.subr.bf16.mxu0 0
  %391 = vmatpush1.bf16.msra.mxu0 %v300
  %392 = vmatprep.subr.bf16.mxu0 0
  %393 = vmatpush1.bf16.msra.mxu0 %v299
  %394 = vmatprep.subr.bf16.mxu0 0
  %395 = vmatpush2.bf16.msra.mxu0 %v314
  %396 = vmatprep.subr.bf16.mxu0 0
  %397 = vmatpush2.bf16.msra.mxu0 %v313
  %398 = vmatprep.subr.bf16.mxu0 0
  %399 = vmatpush2.bf16.msra.mxu0 %v312
  %400 = vmatprep.subr.bf16.mxu0 0
  %401 = vmatpush2.bf16.msra.mxu0 %v311
  %402 = vmatprep.subr.bf16.mxu0 0
  %403 = vmatpush2.bf16.msra.mxu0 %v310
  %404 = vmatprep.subr.bf16.mxu0 0
  %405 = vmatpush2.bf16.msra.mxu0 %v309
  %406 = vmatprep.subr.bf16.mxu0 0
  %407 = vmatpush2.bf16.msra.mxu0 %v308
  %408 = vmatprep.subr.bf16.mxu0 0
  %409 = vmatpush2.bf16.msra.mxu0 %v307
  %410 = vmatprep.mubr.bf16.mxu0 %v138
  %411 = vmatmul.mubr.bf16.gmra.mxu0 %v137
  %v412 = vpop.f32.mrf.mxu0
  %v413 = vadd.f32 0.0, %v412
  %v414 = vpop.f32.mrf.mxu0
  %v415 = vpop.f32.mrf.mxu0
  %v416 = vadd.f32 0.0, %v415
  %v417 = vpop.f32.mrf.mxu0
  %418 = vmatprep.mubr.bf16.mxu0 %v143
  %419 = vmatmul.mubr.bf16.gmra.mxu0 %v142
  %v420 = vpop.f32.mrf.mxu0
  %v421 = vadd.f32 0.0, %v420
  %v422 = vpop.f32.mrf.mxu0
  %v423 = vpop.f32.mrf.mxu0
  %v424 = vadd.f32 0.0, %v423
  %v425 = vpop.f32.mrf.mxu0
  %426 = vdwg.mxu0
  %427 = vmatprep.subr.bf16.mxu0 0
  %428 = vmatpush1.bf16.msra.mxu0 %v322
  %429 = vmatprep.subr.bf16.mxu0 0
  %430 = vmatpush1.bf16.msra.mxu0 %v321
  %431 = vmatprep.subr.bf16.mxu0 0
  %432 = vmatpush1.bf16.msra.mxu0 %v320
  %433 = vmatprep.subr.bf16.mxu0 0
  %434 = vmatpush1.bf16.msra.mxu0 %v319
  %435 = vmatprep.subr.bf16.mxu0 0
  %436 = vmatpush1.bf16.msra.mxu0 %v318
  %437 = vmatprep.subr.bf16.mxu0 0
  %438 = vmatpush1.bf16.msra.mxu0 %v317
  %439 = vmatprep.subr.bf16.mxu0 0
  %440 = vmatpush1.bf16.msra.mxu0 %v316
  %441 = vmatprep.subr.bf16.mxu0 0
  %442 = vmatpush1.bf16.msra.mxu0 %v315
  %443 = vmatprep.subr.bf16.mxu0 0
  %444 = vmatpush2.bf16.msra.mxu0 %v330
  %445 = vmatprep.subr.bf16.mxu0 0
  %446 = vmatpush2.bf16.msra.mxu0 %v329
  %447 = vmatprep.subr.bf16.mxu0 0
  %448 = vmatpush2.bf16.msra.mxu0 %v328
  %449 = vmatprep.subr.bf16.mxu0 0
  %450 = vmatpush2.bf16.msra.mxu0 %v327
  %451 = vmatprep.subr.bf16.mxu0 0
  %452 = vmatpush2.bf16.msra.mxu0 %v326
  %453 = vmatprep.subr.bf16.mxu0 0
  %454 = vmatpush2.bf16.msra.mxu0 %v325
  %455 = vmatprep.subr.bf16.mxu0 0
  %456 = vmatpush2.bf16.msra.mxu0 %v324
  %457 = vmatprep.subr.bf16.mxu0 0
  %458 = vmatpush2.bf16.msra.mxu0 %v323
  %459 = vmatprep.mubr.bf16.mxu0 %v140
  %460 = vmatmul.mubr.bf16.gmra.mxu0 %v139
  %v461 = vpop.f32.mrf.mxu0
  %v462 = vadd.f32 %v413, %v461
  %v463 = vpop.f32.mrf.mxu0
  %v464 = vpop.f32.mrf.mxu0
  %v465 = vadd.f32 %v416, %v464
  %v466 = vpop.f32.mrf.mxu0
  %467 = vmatprep.mubr.bf16.mxu0 %v145
  %468 = vmatmul.mubr.bf16.gmra.mxu0 %v144
  %v469 = vpop.f32.mrf.mxu0
  %v470 = vadd.f32 %v421, %v469
  %v471 = vpop.f32.mrf.mxu0
  %v472 = vpop.f32.mrf.mxu0
  %v473 = vadd.f32 %v424, %v472
  %v474 = vpop.f32.mrf.mxu0
  %475 = vdwg.mxu0
  %476 = vmatprep.subr.bf16.mxu0 0
  %477 = vmatpush1.bf16.msra.mxu0 0
  %478 = vmatprep.subr.bf16.mxu0 0
  %479 = vmatpush1.bf16.msra.mxu0 0
  %480 = vmatprep.subr.bf16.mxu0 0
  %481 = vmatpush1.bf16.msra.mxu0 0
  %482 = vmatprep.subr.bf16.mxu0 0
  %483 = vmatpush1.bf16.msra.mxu0 0
  %484 = vmatprep.subr.bf16.mxu0 0
  %485 = vmatpush1.bf16.msra.mxu0 %v334
  %486 = vmatprep.subr.bf16.mxu0 0
  %487 = vmatpush1.bf16.msra.mxu0 %v333
  %488 = vmatprep.subr.bf16.mxu0 0
  %489 = vmatpush1.bf16.msra.mxu0 %v332
  %490 = vmatprep.subr.bf16.mxu0 0
  %491 = vmatpush1.bf16.msra.mxu0 %v331
  %492 = vmatprep.subr.bf16.mxu0 0
  %493 = vmatpush2.bf16.msra.mxu0 0
  %494 = vmatprep.subr.bf16.mxu0 0
  %495 = vmatpush2.bf16.msra.mxu0 0
  %496 = vmatprep.subr.bf16.mxu0 0
  %497 = vmatpush2.bf16.msra.mxu0 0
  %498 = vmatprep.subr.bf16.mxu0 0
  %499 = vmatpush2.bf16.msra.mxu0 0
  %500 = vmatprep.subr.bf16.mxu0 0
  %501 = vmatpush2.bf16.msra.mxu0 0
  %502 = vmatprep.subr.bf16.mxu0 0
  %503 = vmatpush2.bf16.msra.mxu0 0
  %504 = vmatprep.subr.bf16.mxu0 0
  %505 = vmatpush2.bf16.msra.mxu0 0
  %506 = vmatprep.subr.bf16.mxu0 0
  %507 = vmatpush2.bf16.msra.mxu0 0
  %508 = vmatprep.mubr.bf16.mxu0 0
  %509 = vmatmul.mubr.bf16.gmra.mxu0 %v373
  %v510 = vpop.f32.mrf.mxu0
  %v511 = vadd.f32 %v462, %v510
  %v512 = vpop.f32.mrf.mxu0
  %v513 = vpop.f32.mrf.mxu0
  %v514 = vadd.f32 %v465, %v513
  %v515 = vpop.f32.mrf.mxu0
  %516 = vmatprep.mubr.bf16.mxu0 0
  %517 = vmatmul.mubr.bf16.gmra.mxu0 %v376
  %v518 = vpop.f32.mrf.mxu0
  %v519 = vadd.f32 %v470, %v518
  %v520 = vpop.f32.mrf.mxu0
  %v521 = vpop.f32.mrf.mxu0
  %v522 = vadd.f32 %v473, %v521
  %v523 = vpop.f32.mrf.mxu0
  %524 = vdwg.mxu0
  %v525 = vadd.f32 %v511, %v514
  %v526 = vadd.f32 %v525, %v519
  %v527 = vadd.f32 %v526, %v522
  %v528 = vrot.slane %v527, 4
  %v529 = vadd.f32 %v527, %v528
  %v530 = vrot.slane %v529, 2
  %v531 = vadd.f32 %v529, %v530
  %v532 = vrot.slane %v531, 1
  %v533 = vadd.f32 %v531, %v532
  %v534 = vmul.f32 %v533, 0.03125
  %v535 = vsub.f32 %v511, %v534
  %v536 = vsub.f32 %v514, %v534
  %v537 = vsub.f32 %v519, %v534
  %v538 = vsub.f32 %v522, %v534
  %v539 = vmul.f32 %v535, %v535
  %v540 = vmul.f32 %v536, %v536
  %v541 = vmul.f32 %v537, %v537
  %v542 = vmul.f32 %v538, %v538
  %v543 = vadd.f32 %v539, %v540
  %v544 = vadd.f32 %v543, %v541
  %v545 = vadd.f32 %v544, %v542
  %v546 = vrot.slane %v545, 4
  %v547 = vadd.f32 %v545, %v546
  %v548 = vrot.slane %v547, 2
  %v549 = vadd.f32 %v547, %v548
  %v550 = vrot.slane %v549, 1
  %v551 = vadd.f32 %v549, %v550
  %v552 = vmul.f32 %v551, 0.03125
  %v553 = vld [vmem:[%s2] sm:$0x1]
  %v554 = vadd.f32 %v552, 1e-05
  %v555 = vrsqrt.pop %v554
  %v556 = vmul.f32 %v553, %v555
  %v558 = vlaneseq
  %v559 = vshrl.u32 %v558, 7
  %v560 = vsub.s32 0, %v559
  %v561 = vrot.slane %v556, %v560
  %v563 = vmul.f32 %v535, %v561
  %v564 = vmul.f32 %v536, %v561
  %v565 = vmul.f32 %v537, %v561
  %v566 = vmul.f32 %v538, %v561
  %v567 = vld [vmem:[%s3] sm:$0x1]
  %v569 = vlaneseq
  %v570 = vshrl.u32 %v569, 7
  %v571 = vsub.s32 0, %v570
  %v572 = vrot.slane %v567, %v571
  %v574 = vadd.f32 %v563, %v572
  %v575 = vadd.f32 %v564, %v572
  %v576 = vadd.f32 %v565, %v572
  %v577 = vadd.f32 %v566, %v572
  %v578 = vmax.f32 %v574, 0.0
  %v579 = vmax.f32 %v575, 0.0
  %v580 = vmax.f32 %v576, 0.0
  %v581 = vmax.f32 %v577, 0.0
  %v582 = vld [vmem:[%s4] sm:$0xf]
  %v583 = vld [vmem:[%s4 + $0x4] sm:$0xf]
  %v584 = vld [vmem:[%s4 + $0x8] sm:$0xf]
  %v585 = vld [vmem:[%s4 + $0xc] sm:$0xf]
  %v586 = vunpack.c.l.bf16 %v582
  %v587 = vunpack.c.l.bf16 %v583
  %v588 = vunpack.c.l.bf16 %v584
  %v589 = vunpack.c.l.bf16 %v585
  %v590 = vadd.f32 %v578, %v586
  %v591 = vadd.f32 %v579, %v587
  %v592 = vadd.f32 %v580, %v588
  %v593 = vadd.f32 %v581, %v589
  %v594 = vpack.c.bf16 %v591, %v590
  %v595 = vpack.c.bf16 %v593, %v592
  %v598 = vunpack.c.l.b16 %v594
  %v599 = vunpack.c.h.b16 %v594
  %v600 = vunpack.c.l.b16 %v595
  %v601 = vunpack.c.h.b16 %v595
  %v602 = vpack.c.b16 %v598, %v598
  %v603 = vpack.c.b16 %v599, %v599
  %v604 = vpack.c.b16 %v600, %v600
  %v605 = vpack.c.b16 %v601, %v601
  %610 = vst [vmem:[%s5] sm:$0xf] %v602
  %611 = vst [vmem:[%s5 + $0x4] sm:$0xf] %v603
  %612 = vst [vmem:[%s5 + $0x8] sm:$0xf] %v604
  %613 = vst [vmem:[%s5 + $0xc] sm:$0xf] %v605
  // Predicated region
  $region22: #{cnn_classifier_forward.12} parent=0 // pred_check
    _
  $region23: #{cnn_classifier_forward.12} parent=0 // pred_check_branch
    %615 = sbr.rel (0) target = $region25
  $region24: #{cnn_classifier_forward.12} parent=0 // pred_region
    _
  $region25: #{cnn_classifier_forward.12} parent=0 // pred_fallthru
    _
  // Predicated region
  $region26: #{cnn_classifier_forward.12} parent=0 // pred_check
    _
  $region27: #{cnn_classifier_forward.12} parent=0 // pred_check_branch
    %617 = sbr.rel (0) target = $region29
  $region28: #{cnn_classifier_forward.12} parent=0 // pred_region
    _
  $region29: #{cnn_classifier_forward.12} parent=0 // pred_fallthru
    _

// kernel: cnn_classifier_forward.13
$region0: #{cnn_classifier_forward.13}
  #allocation0 [shape = 'u32[]', space=smem, size = 0x4, offset = 0x4, fixed_abs, tag = 'smem constant byte address 0x4 - core index']
  #allocation1 [shape = 'u32[144,128]{1,0:T(1,128)}', space=vmem, size = 0x12000, scoped, tag = 'internal scratch']
  %s0 = inlined_call_operand.vmem [shape: bf16[8,576], index: 0, kind: input, shape index: {}]
  %s1 = inlined_call_operand.vmem [shape: bf16[576,256], index: 1, kind: input, shape index: {}]
  %s2 = inlined_call_operand.vmem [shape: f32[1,256], index: 2, kind: input, shape index: {}]
  %s3 = inlined_call_operand.vmem [shape: f32[1,256], index: 3, kind: input, shape index: {}]
  %s4 = inlined_call_operand.vmem [shape: bf16[8,256], index: 4, kind: output, shape index: {}]
  %s5 = sld [smem:[#allocation0]]
  $region26: #{cnn_classifier_forward.13} parent=0
    _
  %s7 = ssub.s32 1, %s5
  %s8 = scalar_select 0, %s7, %s5
  // Predicated region
  $region2: #{cnn_classifier_forward.13} parent=0 // pred_check
    _
  $region3: #{cnn_classifier_forward.13} parent=0 // pred_check_branch
    %10 = sbr.rel (0) target = $region5
  $region4: #{cnn_classifier_forward.13} parent=0 // pred_region
    _
  $region5: #{cnn_classifier_forward.13} parent=0 // pred_fallthru
    _
  // Predicated region
  $region6: #{cnn_classifier_forward.13} parent=0 // pred_check
    _
  $region7: #{cnn_classifier_forward.13} parent=0 // pred_check_branch
    %12 = sbr.rel (0) target = $region9
  $region8: #{cnn_classifier_forward.13} parent=0 // pred_region
    _
  $region9: #{cnn_classifier_forward.13} parent=0 // pred_fallthru
    _
  // Predicated region
  $region10: #{cnn_classifier_forward.13} parent=0 // pred_check
    _
  $region11: #{cnn_classifier_forward.13} parent=0 // pred_check_branch
    %14 = sbr.rel (0) target = $region13
  $region12: #{cnn_classifier_forward.13} parent=0 // pred_region
    _
  $region13: #{cnn_classifier_forward.13} parent=0 // pred_fallthru
    _
  // Predicated region
  $region14: #{cnn_classifier_forward.13} parent=0 // pred_check
    _
  $region15: #{cnn_classifier_forward.13} parent=0 // pred_check_branch
    %16 = sbr.rel (0) target = $region17
  $region16: #{cnn_classifier_forward.13} parent=0 // pred_region
    _
  $region17: #{cnn_classifier_forward.13} parent=0 // pred_fallthru
    _
  %v18 = vld [vmem:[%s0] sm:$0xff]
  %v19 = vld [vmem:[%s0 + $0x8] sm:$0xff]
  %v20 = vld [vmem:[%s0 + $0x10] sm:$0xf]
  %v21 = vld [vmem:[%s1] sm:$0xff]
  %v22 = vld [vmem:[%s1 + $0x8] sm:$0xff]
  %v23 = vld [vmem:[%s1 + $0x10] sm:$0xff]
  %v24 = vld [vmem:[%s1 + $0x18] sm:$0xff]
  %v25 = vld [vmem:[%s1 + $0x20] sm:$0xff]
  %v26 = vld [vmem:[%s1 + $0x28] sm:$0xff]
  %v27 = vld [vmem:[%s1 + $0x30] sm:$0xff]
  %v28 = vld [vmem:[%s1 + $0x38] sm:$0xff]
  %v29 = vld [vmem:[%s1 + $0x40] sm:$0xff]
  %v30 = vld [vmem:[%s1 + $0x48] sm:$0xff]
  %v31 = vld [vmem:[%s1 + $0x50] sm:$0xff]
  %v32 = vld [vmem:[%s1 + $0x58] sm:$0xff]
  %v33 = vld [vmem:[%s1 + $0x60] sm:$0xff]
  %v34 = vld [vmem:[%s1 + $0x68] sm:$0xff]
  %v35 = vld [vmem:[%s1 + $0x70] sm:$0xff]
  %v36 = vld [vmem:[%s1 + $0x78] sm:$0xff]
  %v37 = vld [vmem:[%s1 + $0x80] sm:$0xff]
  %v38 = vld [vmem:[%s1 + $0x88] sm:$0xff]
  %v39 = vld [vmem:[%s1 + $0x90] sm:$0xff]
  %v40 = vld [vmem:[%s1 + $0x98] sm:$0xff]
  %v41 = vld [vmem:[%s1 + $0xa0] sm:$0xff]
  %v42 = vld [vmem:[%s1 + $0xa8] sm:$0xff]
  %v43 = vld [vmem:[%s1 + $0xb0] sm:$0xff]
  %v44 = vld [vmem:[%s1 + $0xb8] sm:$0xff]
  %v45 = vld [vmem:[%s1 + $0xc0] sm:$0xff]
  %v46 = vld [vmem:[%s1 + $0xc8] sm:$0xff]
  %v47 = vld [vmem:[%s1 + $0xd0] sm:$0xff]
  %v48 = vld [vmem:[%s1 + $0xd8] sm:$0xff]
  %v49 = vld [vmem:[%s1 + $0xe0] sm:$0xff]
  %v50 = vld [vmem:[%s1 + $0xe8] sm:$0xff]
  %v51 = vld [vmem:[%s1 + $0xf0] sm:$0xff]
  %v52 = vld [vmem:[%s1 + $0xf8] sm:$0xff]
  %v53 = vld [vmem:[%s1 + $0x100] sm:$0xff]
  %v54 = vld [vmem:[%s1 + $0x108] sm:$0xff]
  %v55 = vld [vmem:[%s1 + $0x110] sm:$0xff]
  %v56 = vld [vmem:[%s1 + $0x118] sm:$0xff]
  %v57 = vld [vmem:[%s1 + $0x120] sm:$0xff]
  %v58 = vld [vmem:[%s1 + $0x128] sm:$0xff]
  %v59 = vld [vmem:[%s1 + $0x130] sm:$0xff]
  %v60 = vld [vmem:[%s1 + $0x138] sm:$0xff]
  %v61 = vld [vmem:[%s1 + $0x140] sm:$0xff]
  %v62 = vld [vmem:[%s1 + $0x148] sm:$0xff]
  %v63 = vld [vmem:[%s1 + $0x150] sm:$0xff]
  %v64 = vld [vmem:[%s1 + $0x158] sm:$0xff]
  %v65 = vld [vmem:[%s1 + $0x160] sm:$0xff]
  %v66 = vld [vmem:[%s1 + $0x168] sm:$0xff]
  %v67 = vld [vmem:[%s1 + $0x170] sm:$0xff]
  %v68 = vld [vmem:[%s1 + $0x178] sm:$0xff]
  %v69 = vld [vmem:[%s1 + $0x180] sm:$0xff]
  %v70 = vld [vmem:[%s1 + $0x188] sm:$0xff]
  %v71 = vld [vmem:[%s1 + $0x190] sm:$0xff]
  %v72 = vld [vmem:[%s1 + $0x198] sm:$0xff]
  %v73 = vld [vmem:[%s1 + $0x1a0] sm:$0xff]
  %v74 = vld [vmem:[%s1 + $0x1a8] sm:$0xff]
  %v75 = vld [vmem:[%s1 + $0x1b0] sm:$0xff]
  %v76 = vld [vmem:[%s1 + $0x1b8] sm:$0xff]
  %v77 = vld [vmem:[%s1 + $0x1c0] sm:$0xff]
  %v78 = vld [vmem:[%s1 + $0x1c8] sm:$0xff]
  %v79 = vld [vmem:[%s1 + $0x1d0] sm:$0xff]
  %v80 = vld [vmem:[%s1 + $0x1d8] sm:$0xff]
  %v81 = vld [vmem:[%s1 + $0x1e0] sm:$0xff]
  %v82 = vld [vmem:[%s1 + $0x1e8] sm:$0xff]
  %v83 = vld [vmem:[%s1 + $0x1f0] sm:$0xff]
  %v84 = vld [vmem:[%s1 + $0x1f8] sm:$0xff]
  %v85 = vld [vmem:[%s1 + $0x200] sm:$0xff]
  %v86 = vld [vmem:[%s1 + $0x208] sm:$0xff]
  %v87 = vld [vmem:[%s1 + $0x210] sm:$0xff]
  %v88 = vld [vmem:[%s1 + $0x218] sm:$0xff]
  %v89 = vld [vmem:[%s1 + $0x220] sm:$0xff]
  %v90 = vld [vmem:[%s1 + $0x228] sm:$0xff]
  %v91 = vld [vmem:[%s1 + $0x230] sm:$0xff]
  %v92 = vld [vmem:[%s1 + $0x238] sm:$0xff]
  %v96 = vunpack.c.l.b16 %v18
  %v97 = vunpack.c.h.b16 %v18
  %v98 = vunpack.c.l.b16 %v19
  %v99 = vunpack.c.h.b16 %v19
  %v100 = vunpack.c.l.b16 %v20
  %v101 = vpack.c.b16 %v96, %v96
  %v102 = vpack.c.b16 %v97, %v97
  %v103 = vpack.c.b16 %v98, %v98
  %v104 = vpack.c.b16 %v99, %v99
  %v105 = vpack.c.b16 %v100, %v100
  %v182 = vunpack.c.l.b16 %v21
  %v183 = vunpack.c.h.b16 %v21
  %v184 = vunpack.c.l.b16 %v22
  %v185 = vunpack.c.h.b16 %v22
  %v186 = vunpack.c.l.b16 %v23
  %v187 = vunpack.c.h.b16 %v23
  %v188 = vunpack.c.l.b16 %v24
  %v189 = vunpack.c.h.b16 %v24
  %v190 = vunpack.c.l.b16 %v25
  %v191 = vunpack.c.h.b16 %v25
  %v192 = vunpack.c.l.b16 %v26
  %v193 = vunpack.c.h.b16 %v26
  %v194 = vunpack.c.l.b16 %v27
  %v195 = vunpack.c.h.b16 %v27
  %v196 = vunpack.c.l.b16 %v28
  %v197 = vunpack.c.h.b16 %v28
  %v198 = vunpack.c.l.b16 %v29
  %v199 = vunpack.c.h.b16 %v29
  %v200 = vunpack.c.l.b16 %v30
  %v201 = vunpack.c.h.b16 %v30
  %v202 = vunpack.c.l.b16 %v31
  %v203 = vunpack.c.h.b16 %v31
  %v204 = vunpack.c.l.b16 %v32
  %v205 = vunpack.c.h.b16 %v32
  %v206 = vunpack.c.l.b16 %v33
  %v207 = vunpack.c.h.b16 %v33
  %v208 = vunpack.c.l.b16 %v34
  %v209 = vunpack.c.h.b16 %v34
  %v210 = vunpack.c.l.b16 %v35
  %v211 = vunpack.c.h.b16 %v35
  %v212 = vunpack.c.l.b16 %v36
  %v213 = vunpack.c.h.b16 %v36
  %v214 = vunpack.c.l.b16 %v37
  %v215 = vunpack.c.h.b16 %v37
  %v216 = vunpack.c.l.b16 %v38
  %v217 = vunpack.c.h.b16 %v38
  %v218 = vunpack.c.l.b16 %v39
  %v219 = vunpack.c.h.b16 %v39
  %v220 = vunpack.c.l.b16 %v40
  %v221 = vunpack.c.h.b16 %v40
  %v222 = vunpack.c.l.b16 %v41
  %v223 = vunpack.c.h.b16 %v41
  %v224 = vunpack.c.l.b16 %v42
  %v225 = vunpack.c.h.b16 %v42
  %v226 = vunpack.c.l.b16 %v43
  %v227 = vunpack.c.h.b16 %v43
  %v228 = vunpack.c.l.b16 %v44
  %v229 = vunpack.c.h.b16 %v44
  %v230 = vunpack.c.l.b16 %v45
  %v231 = vunpack.c.h.b16 %v45
  %v232 = vunpack.c.l.b16 %v46
  %v233 = vunpack.c.h.b16 %v46
  %v234 = vunpack.c.l.b16 %v47
  %v235 = vunpack.c.h.b16 %v47
  %v236 = vunpack.c.l.b16 %v48
  %v237 = vunpack.c.h.b16 %v48
  %v238 = vunpack.c.l.b16 %v49
  %v239 = vunpack.c.h.b16 %v49
  %v240 = vunpack.c.l.b16 %v50
  %v241 = vunpack.c.h.b16 %v50
  %v242 = vunpack.c.l.b16 %v51
  %v243 = vunpack.c.h.b16 %v51
  %v244 = vunpack.c.l.b16 %v52
  %v245 = vunpack.c.h.b16 %v52
  %v246 = vunpack.c.l.b16 %v53
  %v247 = vunpack.c.h.b16 %v53
  %v248 = vunpack.c.l.b16 %v54
  %v249 = vunpack.c.h.b16 %v54
  %v250 = vunpack.c.l.b16 %v55
  %v251 = vunpack.c.h.b16 %v55
  %v252 = vunpack.c.l.b16 %v56
  %v253 = vunpack.c.h.b16 %v56
  %v254 = vunpack.c.l.b16 %v57
  %v255 = vunpack.c.h.b16 %v57
  %v256 = vunpack.c.l.b16 %v58
  %v257 = vunpack.c.h.b16 %v58
  %v258 = vunpack.c.l.b16 %v59
  %v259 = vunpack.c.h.b16 %v59
  %v260 = vunpack.c.l.b16 %v60
  %v261 = vunpack.c.h.b16 %v60
  %v262 = vunpack.c.l.b16 %v61
  %v263 = vunpack.c.h.b16 %v61
  %v264 = vunpack.c.l.b16 %v62
  %v265 = vunpack.c.h.b16 %v62
  %v266 = vunpack.c.l.b16 %v63
  %v267 = vunpack.c.h.b16 %v63
  %v268 = vunpack.c.l.b16 %v64
  %v269 = vunpack.c.h.b16 %v64
  %v270 = vunpack.c.l.b16 %v65
  %v271 = vunpack.c.h.b16 %v65
  %v272 = vunpack.c.l.b16 %v66
  %v273 = vunpack.c.h.b16 %v66
  %v274 = vunpack.c.l.b16 %v67
  %v275 = vunpack.c.h.b16 %v67
  %v276 = vunpack.c.l.b16 %v68
  %v277 = vunpack.c.h.b16 %v68
  %v278 = vunpack.c.l.b16 %v69
  %v279 = vunpack.c.h.b16 %v69
  %v280 = vunpack.c.l.b16 %v70
  %v281 = vunpack.c.h.b16 %v70
  %v282 = vunpack.c.l.b16 %v71
  %v283 = vunpack.c.h.b16 %v71
  %v284 = vunpack.c.l.b16 %v72
  %v285 = vunpack.c.h.b16 %v72
  %v286 = vunpack.c.l.b16 %v73
  %v287 = vunpack.c.h.b16 %v73
  %v288 = vunpack.c.l.b16 %v74
  %v289 = vunpack.c.h.b16 %v74
  %v290 = vunpack.c.l.b16 %v75
  %v291 = vunpack.c.h.b16 %v75
  %v292 = vunpack.c.l.b16 %v76
  %v293 = vunpack.c.h.b16 %v76
  %v294 = vunpack.c.l.b16 %v77
  %v295 = vunpack.c.h.b16 %v77
  %v296 = vunpack.c.l.b16 %v78
  %v297 = vunpack.c.h.b16 %v78
  %v298 = vunpack.c.l.b16 %v79
  %v299 = vunpack.c.h.b16 %v79
  %v300 = vunpack.c.l.b16 %v80
  %v301 = vunpack.c.h.b16 %v80
  %v302 = vunpack.c.l.b16 %v81
  %v303 = vunpack.c.h.b16 %v81
  %v304 = vunpack.c.l.b16 %v82
  %v305 = vunpack.c.h.b16 %v82
  %v306 = vunpack.c.l.b16 %v83
  %v307 = vunpack.c.h.b16 %v83
  %v308 = vunpack.c.l.b16 %v84
  %v309 = vunpack.c.h.b16 %v84
  %v310 = vunpack.c.l.b16 %v85
  %v311 = vunpack.c.h.b16 %v85
  %v312 = vunpack.c.l.b16 %v86
  %v313 = vunpack.c.h.b16 %v86
  %v314 = vunpack.c.l.b16 %v87
  %v315 = vunpack.c.h.b16 %v87
  %v316 = vunpack.c.l.b16 %v88
  %v317 = vunpack.c.h.b16 %v88
  %v318 = vunpack.c.l.b16 %v89
  %v319 = vunpack.c.h.b16 %v89
  %v320 = vunpack.c.l.b16 %v90
  %v321 = vunpack.c.h.b16 %v90
  %v322 = vunpack.c.l.b16 %v91
  %v323 = vunpack.c.h.b16 %v91
  %v324 = vunpack.c.l.b16 %v92
  %v325 = vunpack.c.h.b16 %v92
  %v326 = vpack.c.b16 %v184, %v182
  %v327 = vpack.c.b16 %v185, %v183
  %v328 = vpack.c.b16 %v188, %v186
  %v329 = vpack.c.b16 %v189, %v187
  %v330 = vpack.c.b16 %v192, %v190
  %v331 = vpack.c.b16 %v193, %v191
  %v332 = vpack.c.b16 %v196, %v194
  %v333 = vpack.c.b16 %v197, %v195
  %v334 = vpack.c.b16 %v200, %v198
  %v335 = vpack.c.b16 %v201, %v199
  %v336 = vpack.c.b16 %v204, %v202
  %v337 = vpack.c.b16 %v205, %v203
  %v338 = vpack.c.b16 %v208, %v206
  %v339 = vpack.c.b16 %v209, %v207
  %v340 = vpack.c.b16 %v212, %v210
  %v341 = vpack.c.b16 %v213, %v211
  %v342 = vpack.c.b16 %v216, %v214
  %v343 = vpack.c.b16 %v217, %v215
  %v344 = vpack.c.b16 %v220, %v218
  %v345 = vpack.c.b16 %v221, %v219
  %v346 = vpack.c.b16 %v224, %v222
  %v347 = vpack.c.b16 %v225, %v223
  %v348 = vpack.c.b16 %v228, %v226
  %v349 = vpack.c.b16 %v229, %v227
  %v350 = vpack.c.b16 %v232, %v230
  %v351 = vpack.c.b16 %v233, %v231
  %v352 = vpack.c.b16 %v236, %v234
  %v353 = vpack.c.b16 %v237, %v235
  %v354 = vpack.c.b16 %v240, %v238
  %v355 = vpack.c.b16 %v241, %v239
  %v356 = vpack.c.b16 %v244, %v242
  %v357 = vpack.c.b16 %v245, %v243
  %v358 = vpack.c.b16 %v248, %v246
  %v359 = vpack.c.b16 %v249, %v247
  %v360 = vpack.c.b16 %v252, %v250
  %v361 = vpack.c.b16 %v253, %v251
  %v362 = vpack.c.b16 %v256, %v254
  %v363 = vpack.c.b16 %v257, %v255
  %v364 = vpack.c.b16 %v260, %v258
  %v365 = vpack.c.b16 %v261, %v259
  %v366 = vpack.c.b16 %v264, %v262
  %v367 = vpack.c.b16 %v265, %v263
  %v368 = vpack.c.b16 %v268, %v266
  %v369 = vpack.c.b16 %v269, %v267
  %v370 = vpack.c.b16 %v272, %v270
  %v371 = vpack.c.b16 %v273, %v271
  %v372 = vpack.c.b16 %v276, %v274
  %v373 = vpack.c.b16 %v277, %v275
  %v374 = vpack.c.b16 %v280, %v278
  %v375 = vpack.c.b16 %v281, %v279
  %v376 = vpack.c.b16 %v284, %v282
  %v377 = vpack.c.b16 %v285, %v283
  %v378 = vpack.c.b16 %v288, %v286
  %v379 = vpack.c.b16 %v289, %v287
  %v380 = vpack.c.b16 %v292, %v290
  %v381 = vpack.c.b16 %v293, %v291
  %v382 = vpack.c.b16 %v296, %v294
  %v383 = vpack.c.b16 %v297, %v295
  %v384 = vpack.c.b16 %v300, %v298
  %v385 = vpack.c.b16 %v301, %v299
  %v386 = vpack.c.b16 %v304, %v302
  %v387 = vpack.c.b16 %v305, %v303
  %v388 = vpack.c.b16 %v308, %v306
  %v389 = vpack.c.b16 %v309, %v307
  %v390 = vpack.c.b16 %v312, %v310
  %v391 = vpack.c.b16 %v313, %v311
  %v392 = vpack.c.b16 %v316, %v314
  %v393 = vpack.c.b16 %v317, %v315
  %v394 = vpack.c.b16 %v320, %v318
  %v395 = vpack.c.b16 %v321, %v319
  %v396 = vpack.c.b16 %v324, %v322
  %v397 = vpack.c.b16 %v325, %v323
  %vm470 = vcmask 523264
  %v472 = vsel %vm470, %v105, 0
  %474 = vmatprep.subr.bf16.mxu0 %v341
  %475 = vmatpush1.bf16.msra.mxu0 %v340
  %476 = vmatprep.subr.bf16.mxu0 %v339
  %477 = vmatpush1.bf16.msra.mxu0 %v338
  %478 = vmatprep.subr.bf16.mxu0 %v337
  %479 = vmatpush1.bf16.msra.mxu0 %v336
  %480 = vmatprep.subr.bf16.mxu0 %v335
  %481 = vmatpush1.bf16.msra.mxu0 %v334
  %482 = vmatprep.subr.bf16.mxu0 %v333
  %483 = vmatpush1.bf16.msra.mxu0 %v332
  %484 = vmatprep.subr.bf16.mxu0 %v331
  %485 = vmatpush1.bf16.msra.mxu0 %v330
  %486 = vmatprep.subr.bf16.mxu0 %v329
  %487 = vmatpush1.bf16.msra.mxu0 %v328
  %488 = vmatprep.subr.bf16.mxu0 %v327
  %489 = vmatpush1.bf16.msra.mxu0 %v326
  %490 = vmatprep.subr.bf16.mxu0 %v357
  %491 = vmatpush2.bf16.msra.mxu0 %v356
  %492 = vmatprep.subr.bf16.mxu0 %v355
  %493 = vmatpush2.bf16.msra.mxu0 %v354
  %494 = vmatprep.subr.bf16.mxu0 %v353
  %495 = vmatpush2.bf16.msra.mxu0 %v352
  %496 = vmatprep.subr.bf16.mxu0 %v351
  %497 = vmatpush2.bf16.msra.mxu0 %v350
  %498 = vmatprep.subr.bf16.mxu0 %v349
  %499 = vmatpush2.bf16.msra.mxu0 %v348
  %500 = vmatprep.subr.bf16.mxu0 %v347
  %501 = vmatpush2.bf16.msra.mxu0 %v346
  %502 = vmatprep.subr.bf16.mxu0 %v345
  %503 = vmatpush2.bf16.msra.mxu0 %v344
  %504 = vmatprep.subr.bf16.mxu0 %v343
  %505 = vmatpush2.bf16.msra.mxu0 %v342
  %506 = vmatprep.mubr.bf16.mxu0 %v102
  %507 = vmatmul.mubr.bf16.gmra.mxu0 %v101
  %v508 = vpop.f32.mrf.mxu0
  %v509 = vadd.f32 0.0, %v508
  %v510 = vpop.f32.mrf.mxu0
  %v511 = vadd.f32 0.0, %v510
  %v512 = vpop.f32.mrf.mxu0
  %v513 = vpop.f32.mrf.mxu0
  %514 = vdwg.mxu0
  %515 = vmatprep.subr.bf16.mxu0 %v373
  %516 = vmatpush1.bf16.msra.mxu0 %v372
  %517 = vmatprep.subr.bf16.mxu0 %v371
  %518 = vmatpush1.bf16.msra.mxu0 %v370
  %519 = vmatprep.subr.bf16.mxu0 %v369
  %520 = vmatpush1.bf16.msra.mxu0 %v368
  %521 = vmatprep.subr.bf16.mxu0 %v367
  %522 = vmatpush1.bf16.msra.mxu0 %v366
  %523 = vmatprep.subr.bf16.mxu0 %v365
  %524 = vmatpush1.bf16.msra.mxu0 %v364
  %525 = vmatprep.subr.bf16.mxu0 %v363
  %526 = vmatpush1.bf16.msra.mxu0 %v362
  %527 = vmatprep.subr.bf16.mxu0 %v361
  %528 = vmatpush1.bf16.msra.mxu0 %v360
  %529 = vmatprep.subr.bf16.mxu0 %v359
  %530 = vmatpush1.bf16.msra.mxu0 %v358
  %531 = vmatprep.subr.bf16.mxu0 %v389
  %532 = vmatpush2.bf16.msra.mxu0 %v388
  %533 = vmatprep.subr.bf16.mxu0 %v387
  %534 = vmatpush2.bf16.msra.mxu0 %v386
  %535 = vmatprep.subr.bf16.mxu0 %v385
  %536 = vmatpush2.bf16.msra.mxu0 %v384
  %537 = vmatprep.subr.bf16.mxu0 %v383
  %538 = vmatpush2.bf16.msra.mxu0 %v382
  %539 = vmatprep.subr.bf16.mxu0 %v381
  %540 = vmatpush2.bf16.msra.mxu0 %v380
  %541 = vmatprep.subr.bf16.mxu0 %v379
  %542 = vmatpush2.bf16.msra.mxu0 %v378
  %543 = vmatprep.subr.bf16.mxu0 %v377
  %544 = vmatpush2.bf16.msra.mxu0 %v376
  %545 = vmatprep.subr.bf16.mxu0 %v375
  %546 = vmatpush2.bf16.msra.mxu0 %v374
  %547 = vmatprep.mubr.bf16.mxu0 %v104
  %548 = vmatmul.mubr.bf16.gmra.mxu0 %v103
  %v549 = vpop.f32.mrf.mxu0
  %v550 = vadd.f32 %v509, %v549
  %v551 = vpop.f32.mrf.mxu0
  %v552 = vadd.f32 %v511, %v551
  %v553 = vpop.f32.mrf.mxu0
  %v554 = vpop.f32.mrf.mxu0
  %555 = vdwg.mxu0
  %556 = vmatprep.subr.bf16.mxu0 0
  %557 = vmatpush1.bf16.msra.mxu0 0
  %558 = vmatprep.subr.bf16.mxu0 0
  %559 = vmatpush1.bf16.msra.mxu0 0
  %560 = vmatprep.subr.bf16.mxu0 0
  %561 = vmatpush1.bf16.msra.mxu0 0
  %562 = vmatprep.subr.bf16.mxu0 0
  %563 = vmatpush1.bf16.msra.mxu0 0
  %564 = vmatprep.subr.bf16.mxu0 %v397
  %565 = vmatpush1.bf16.msra.mxu0 %v396
  %566 = vmatprep.subr.bf16.mxu0 %v395
  %567 = vmatpush1.bf16.msra.mxu0 %v394
  %568 = vmatprep.subr.bf16.mxu0 %v393
  %569 = vmatpush1.bf16.msra.mxu0 %v392
  %570 = vmatprep.subr.bf16.mxu0 %v391
  %571 = vmatpush1.bf16.msra.mxu0 %v390
  %572 = vmatprep.subr.bf16.mxu0 0
  %573 = vmatpush2.bf16.msra.mxu0 0
  %574 = vmatprep.subr.bf16.mxu0 0
  %575 = vmatpush2.bf16.msra.mxu0 0
  %576 = vmatprep.subr.bf16.mxu0 0
  %577 = vmatpush2.bf16.msra.mxu0 0
  %578 = vmatprep.subr.bf16.mxu0 0
  %579 = vmatpush2.bf16.msra.mxu0 0
  %580 = vmatprep.subr.bf16.mxu0 0
  %581 = vmatpush2.bf16.msra.mxu0 0
  %582 = vmatprep.subr.bf16.mxu0 0
  %583 = vmatpush2.bf16.msra.mxu0 0
  %584 = vmatprep.subr.bf16.mxu0 0
  %585 = vmatpush2.bf16.msra.mxu0 0
  %586 = vmatprep.subr.bf16.mxu0 0
  %587 = vmatpush2.bf16.msra.mxu0 0
  %588 = vmatprep.mubr.bf16.mxu0 0
  %589 = vmatmul.mubr.bf16.gmra.mxu0 %v472
  %v590 = vpop.f32.mrf.mxu0
  %v591 = vadd.f32 %v550, %v590
  %v592 = vpop.f32.mrf.mxu0
  %v593 = vadd.f32 %v552, %v592
  %v594 = vpop.f32.mrf.mxu0
  %v595 = vpop.f32.mrf.mxu0
  %596 = vdwg.mxu0
  %v597 = vrot.slane %v591, 4
  %v598 = vadd.f32 %v591, %v597
  %v599 = vrot.slane %v598, 2
  %v600 = vadd.f32 %v598, %v599
  %v601 = vrot.slane %v600, 1
  %v602 = vadd.f32 %v600, %v601
  %v603 = vrot.slane %v593, 4
  %v604 = vadd.f32 %v593, %v603
  %v605 = vrot.slane %v604, 2
  %v606 = vadd.f32 %v604, %v605
  %v607 = vrot.slane %v606, 1
  %v608 = vadd.f32 %v606, %v607
  %v609 = vmul.f32 %v602, 0.125
  %v610 = vmul.f32 %v608, 0.125
  %v611 = vsub.f32 %v591, %v609
  %v612 = vsub.f32 %v593, %v610
  %v613 = vmul.f32 %v611, %v611
  %v614 = vmul.f32 %v612, %v612
  %v615 = vrot.slane %v613, 4
  %v616 = vadd.f32 %v613, %v615
  %v617 = vrot.slane %v616, 2
  %v618 = vadd.f32 %v616, %v617
  %v619 = vrot.slane %v618, 1
  %v620 = vadd.f32 %v618, %v619
  %v621 = vrot.slane %v614, 4
  %v622 = vadd.f32 %v614, %v621
  %v623 = vrot.slane %v622, 2
  %v624 = vadd.f32 %v622, %v623
  %v625 = vrot.slane %v624, 1
  %v626 = vadd.f32 %v624, %v625
  %v627 = vmul.f32 %v620, 0.125
  %v628 = vmul.f32 %v626, 0.125
  %v629 = vld [vmem:[%s2] sm:$0x3]
  %v630 = vadd.f32 %v627, 1e-05
  %v631 = vadd.f32 %v628, 1e-05
  %v632 = vrsqrt.pop %v630
  %v633 = vrsqrt.pop %v631
  %v636 = vcombine.low %v632, %v633
  %v638 = vunpack.c.l.s4 1966171168
  %v639 = vunpack.c.0.s8 %v638
  %v640 = vlaneseq
  %v641 = vshrl.u32 %v640, 7
  %v642 = vsub.s32 %v639, %v641
  %v643 = vrot.slane %v636, %v642
  %v645 = vunpack.c.l.s4 1966171168
  %v646 = vunpack.c.0.s8 %v645
  %v647 = vlaneseq
  %v648 = vshrl.u32 %v647, 7
  %v649 = vsub.s32 %v646, %v648
  %v650 = vrot.slane %v643, %v649
  %v652 = vmul.f32 %v629, %v650
  %v654 = vlaneseq
  %v655 = vshrl.u32 %v654, 7
  %v656 = vsub.s32 0, %v655
  %v657 = vrot.slane %v652, %v656
  %v658 = vlaneseq
  %v659 = vshrl.u32 %v658, 7
  %v660 = vsub.s32 1, %v659
  %v661 = vrot.slane %v652, %v660
  %v664 = vmul.f32 %v611, %v657
  %v665 = vmul.f32 %v612, %v661
  %v666 = vld [vmem:[%s3] sm:$0x3]
  %v668 = vlaneseq
  %v669 = vshrl.u32 %v668, 7
  %v670 = vsub.s32 0, %v669
  %v671 = vrot.slane %v666, %v670
  %v672 = vlaneseq
  %v673 = vshrl.u32 %v672, 7
  %v674 = vsub.s32 1, %v673
  %v675 = vrot.slane %v666, %v674
  %v678 = vadd.f32 %v664, %v671
  %v679 = vadd.f32 %v665, %v675
  %v680 = vlaneseq
  %v681 = vand.u32 %v680, 127
  %v682 = vadd.s32 %v681, 128
  %vm683 = vcmp.lt.s32.totalorder %v681, 128
  %vm684 = vcmp.lt.s32.totalorder %v682, 128
  %v685 = vmax.f32 %v678, 0.0
  %v686 = vmax.f32 %v679, 0.0
  %v687 = vsel %vm683, %v685, %v678
  %v688 = vsel %vm684, %v686, %v679
  %v689 = vpack.c.bf16 %v687, %v687
  %v690 = vpack.c.bf16 %v688, %v688
  %v693 = vunpack.c.l.b16 %v689
  %v694 = vunpack.c.l.b16 %v690
  %v695 = vpack.c.b16 %v694, %v693
  %697 = vst [vmem:[%s4] sm:$0xff] %v695
  // Predicated region
  $region18: #{cnn_classifier_forward.13} parent=0 // pred_check
    _
  $region19: #{cnn_classifier_forward.13} parent=0 // pred_check_branch
    %699 = sbr.rel (0) target = $region21
  $region20: #{cnn_classifier_forward.13} parent=0 // pred_region
    _
  $region21: #{cnn_classifier_forward.13} parent=0 // pred_fallthru
    _
  // Predicated region
  $region22: #{cnn_classifier_forward.13} parent=0 // pred_check
    _
  $region23: #{cnn_classifier_forward.13} parent=0 // pred_check_branch
    %701 = sbr.rel (0) target = $region25
  $region24: #{cnn_classifier_forward.13} parent=0 // pred_region
    _
  $region25: #{cnn_classifier_forward.13} parent=0 // pred_fallthru
    _

// kernel: cnn_classifier_forward.15
$region0: #{cnn_classifier_forward.15}
  #allocation0 [shape = 'u32[]', space=smem, size = 0x4, offset = 0x4, fixed_abs, tag = 'smem constant byte address 0x4 - core index']
  #allocation1 [shape = 'u32[144,128]{1,0:T(1,128)}', space=vmem, size = 0x12000, scoped, tag = 'internal scratch']
  %s0 = inlined_call_operand.vmem [shape: bf16[2,4,128], index: 0, kind: input, shape index: {}]
  %s1 = inlined_call_operand.vmem [shape: bf16[128,128], index: 1, kind: input, shape index: {}]
  %s2 = inlined_call_operand.vmem [shape: f32[1,128], index: 2, kind: input, shape index: {}]
  %s3 = inlined_call_operand.hbm [shape: f32[2,128], index: 3, kind: output, shape index: {}]
  %s4 = sld [smem:[#allocation0]]
  $region22: #{cnn_classifier_forward.15} parent=0
    _
  %s6 = ssub.s32 1, %s4
  %s7 = scalar_select 0, %s6, %s4
  $region1: #{cnn_classifier_forward.15} parent=0
    #allocation2 [shape = 'u8[1024]{0}', space=vmem, size = 0x400, scoped, tag = 'output window, operand 0, single buffered']
    #allocation3 [shape = 's32[1]{0}', space=sflag, size = 0x4, scoped, tag = 'scoped memory for cnn_classifier_forward.15']
    %8 = vsyncpa [#allocation3], 0
    // Predicated region
    $region2: #{cnn_classifier_forward.15} parent=1 // pred_check
      _
    $region3: #{cnn_classifier_forward.15} parent=1 // pred_check_branch
      %10 = sbr.rel (0) target = $region5
    $region4: #{cnn_classifier_forward.15} parent=1 // pred_region
      _
    $region5: #{cnn_classifier_forward.15} parent=1 // pred_fallthru
      _
    // Predicated region
    $region6: #{cnn_classifier_forward.15} parent=1 // pred_check
      _
    $region7: #{cnn_classifier_forward.15} parent=1 // pred_check_branch
      %12 = sbr.rel (0) target = $region9
    $region8: #{cnn_classifier_forward.15} parent=1 // pred_region
      _
    $region9: #{cnn_classifier_forward.15} parent=1 // pred_fallthru
      _
    // Predicated region
    $region10: #{cnn_classifier_forward.15} parent=1 // pred_check
      _
    $region11: #{cnn_classifier_forward.15} parent=1 // pred_check_branch
      %14 = sbr.rel (0) target = $region13
    $region12: #{cnn_classifier_forward.15} parent=1 // pred_region
      _
    $region13: #{cnn_classifier_forward.15} parent=1 // pred_fallthru
      _
    %v16 = vld [vmem:[%s0] sm:$0x3]
    %v17 = vld [vmem:[%s0 + $0x2] sm:$0x3]
    %v18 = vunpack.c.l.bf16 %v16
    %v19 = vunpack.c.l.bf16 %v17
    %vm20 = vcmask 1043456
    %v21 = vsel %vm20, %v18, 0.0
    %v22 = vrot.slane %v21, 4
    %v23 = vadd.f32 %v21, %v22
    %v24 = vrot.slane %v23, 2
    %v25 = vadd.f32 %v23, %v24
    %v26 = vrot.slane %v25, 1
    %v27 = vadd.f32 %v25, %v26
    %v28 = vsel %vm20, %v19, 0.0
    %v29 = vrot.slane %v28, 4
    %v30 = vadd.f32 %v28, %v29
    %v31 = vrot.slane %v30, 2
    %v32 = vadd.f32 %v30, %v31
    %v33 = vrot.slane %v32, 1
    %v34 = vadd.f32 %v32, %v33
    %v35 = vrcp.pop 4.0
    %v36 = vmul.f32 %v27, %v35
    %v37 = vmul.f32 %v34, %v35
    %v38 = vpack.c.bf16 %v36, %v36
    %v39 = vpack.c.bf16 %v37, %v37
    %v40 = vld [vmem:[%s1] sm:$0xf]
    %v41 = vld [vmem:[%s1 + $0x4] sm:$0xf]
    %v42 = vld [vmem:[%s1 + $0x8] sm:$0xf]
    %v43 = vld [vmem:[%s1 + $0xc] sm:$0xf]
    %v44 = vld [vmem:[%s1 + $0x10] sm:$0xf]
    %v45 = vld [vmem:[%s1 + $0x14] sm:$0xf]
    %v46 = vld [vmem:[%s1 + $0x18] sm:$0xf]
    %v47 = vld [vmem:[%s1 + $0x1c] sm:$0xf]
    %v48 = vld [vmem:[%s1 + $0x20] sm:$0xf]
    %v49 = vld [vmem:[%s1 + $0x24] sm:$0xf]
    %v50 = vld [vmem:[%s1 + $0x28] sm:$0xf]
    %v51 = vld [vmem:[%s1 + $0x2c] sm:$0xf]
    %v52 = vld [vmem:[%s1 + $0x30] sm:$0xf]
    %v53 = vld [vmem:[%s1 + $0x34] sm:$0xf]
    %v54 = vld [vmem:[%s1 + $0x38] sm:$0xf]
    %v55 = vld [vmem:[%s1 + $0x3c] sm:$0xf]
    %v56 = vld [vmem:[%s2] sm:$0x1]
    %v58 = vlaneseq
    %v59 = vshrl.u32 %v58, 7
    %v60 = vsub.s32 0, %v59
    %v61 = vrot.slane %v56, %v60
    %v65 = vunpack.c.l.b16 %v38
    %v66 = vunpack.c.l.b16 %v39
    %vm67 = vcmask 1041409
    %v68 = vsel %vm67, %v66, %v65
    %v69 = vpack.c.b16 %v68, %v68
    %v87 = vunpack.c.l.b16 %v40
    %v88 = vunpack.c.l.b16 %v41
    %v89 = vunpack.c.l.b16 %v42
    %v90 = vunpack.c.l.b16 %v43
    %v91 = vunpack.c.l.b16 %v44
    %v92 = vunpack.c.l.b16 %v45
    %v93 = vunpack.c.l.b16 %v46
    %v94 = vunpack.c.l.b16 %v47
    %v95 = vunpack.c.l.b16 %v48
    %v96 = vunpack.c.l.b16 %v49
    %v97 = vunpack.c.l.b16 %v50
    %v98 = vunpack.c.l.b16 %v51
    %v99 = vunpack.c.l.b16 %v52
    %v100 = vunpack.c.l.b16 %v53
    %v101 = vunpack.c.l.b16 %v54
    %v102 = vunpack.c.l.b16 %v55
    %v103 = vpack.c.b16 %v88, %v87
    %v104 = vpack.c.b16 %v90, %v89
    %v105 = vpack.c.b16 %v92, %v91
    %v106 = vpack.c.b16 %v94, %v93
    %v107 = vpack.c.b16 %v96, %v95
    %v108 = vpack.c.b16 %v98, %v97
    %v109 = vpack.c.b16 %v100, %v99
    %v110 = vpack.c.b16 %v102, %v101
    %119 = vmatprep.subr.bf16.mxu0 0
    %120 = vmatpush1.bf16.msra.mxu0 %v110
    %121 = vmatprep.subr.bf16.mxu0 0
    %122 = vmatpush1.bf16.msra.mxu0 %v109
    %123 = vmatprep.subr.bf16.mxu0 0
    %124 = vmatpush1.bf16.msra.mxu0 %v108
    %125 = vmatprep.subr.bf16.mxu0 0
    %126 = vmatpush1.bf16.msra.mxu0 %v107
    %127 = vmatprep.subr.bf16.mxu0 0
    %128 = vmatpush1.bf16.msra.mxu0 %v106
    %129 = vmatprep.subr.bf16.mxu0 0
    %130 = vmatpush1.bf16.msra.mxu0 %v105
    %131 = vmatprep.subr.bf16.mxu0 0
    %132 = vmatpush1.bf16.msra.mxu0 %v104
    %133 = vmatprep.subr.bf16.mxu0 0
    %134 = vmatpush1.bf16.msra.mxu0 %v103
    %135 = vmatprep.subr.bf16.mxu0 0
    %136 = vmatpush2.bf16.msra.mxu0 0
    %137 = vmatprep.subr.bf16.mxu0 0
    %138 = vmatpush2.bf16.msra.mxu0 0
    %139 = vmatprep.subr.bf16.mxu0 0
    %140 = vmatpush2.bf16.msra.mxu0 0
    %141 = vmatprep.subr.bf16.mxu0 0
    %142 = vmatpush2.bf16.msra.mxu0 0
    %143 = vmatprep.subr.bf16.mxu0 0
    %144 = vmatpush2.bf16.msra.mxu0 0
    %145 = vmatprep.subr.bf16.mxu0 0
    %146 = vmatpush2.bf16.msra.mxu0 0
    %147 = vmatprep.subr.bf16.mxu0 0
    %148 = vmatpush2.bf16.msra.mxu0 0
    %149 = vmatprep.subr.bf16.mxu0 0
    %150 = vmatpush2.bf16.msra.mxu0 0
    %151 = vmatprep.mubr.bf16.mxu0 0
    %152 = vmatmul.mubr.bf16.gmra.mxu0 %v69
    %v153 = vpop.f32.mrf.mxu0
    %v154 = vadd.f32 %v61, %v153
    %v155 = vpop.f32.mrf.mxu0
    %v156 = vpop.f32.mrf.mxu0
    %v157 = vpop.f32.mrf.mxu0
    %158 = vdwg.mxu0
    %159 = vst [vmem:[#allocation2] sm:$0x3] %v154
    // Predicated region
    $region14: #{cnn_classifier_forward.15} parent=1 // pred_check
      _
    $region15: #{cnn_classifier_forward.15} parent=1 // pred_check_branch
      %161 = sbr.rel (0) target = $region17
    $region16: #{cnn_classifier_forward.15} parent=1 // pred_region
      %s163 = ssub.s32 32, 32
      %164 = vsyncadd [#allocation3], %s163
      %s166 = sshll.u32 [#allocation2], 4
      %s167 = int_to_ptr.vmem [resolvable:$true] %s166
      %169 = dma.vmem_to_hbm [thread:$0]  %s167, 32, %s3, [#allocation3]
    $region17: #{cnn_classifier_forward.15} parent=1 // pred_fallthru
      _
    // Predicated region
    $region18: #{cnn_classifier_forward.15} parent=1 // pred_check
      _
    $region19: #{cnn_classifier_forward.15} parent=1 // pred_check_branch
      %171 = sbr.rel (0) target = $region21
    $region20: #{cnn_classifier_forward.15} parent=1 // pred_region
      %172 = dma.done [#allocation3], 32
    $region21: #{cnn_classifier_forward.15} parent=1 // pred_fallthru
      _
    %173 = vsyncpa [#allocation3], 1

// kernel: cnn_classifier_forward.14
$region0: #{cnn_classifier_forward.14}
  #allocation0 [shape = 'u32[]', space=smem, size = 0x4, offset = 0x4, fixed_abs, tag = 'smem constant byte address 0x4 - core index']
  #allocation1 [shape = 'u32[144,128]{1,0:T(1,128)}', space=vmem, size = 0x12000, scoped, tag = 'internal scratch']
  %s0 = inlined_call_operand.vmem [shape: bf16[8,1152], index: 0, kind: input, shape index: {}]
  %s1 = inlined_call_operand.vmem [shape: bf16[1152,128], index: 1, kind: input, shape index: {}]
  %s2 = inlined_call_operand.vmem [shape: f32[1,128], index: 2, kind: input, shape index: {}]
  %s3 = inlined_call_operand.vmem [shape: f32[1,128], index: 3, kind: input, shape index: {}]
  %s4 = inlined_call_operand.vmem [shape: bf16[8,128], index: 4, kind: input, shape index: {}]
  %s5 = inlined_call_operand.vmem [shape: bf16[8,128], index: 5, kind: output, shape index: {}]
  %s6 = sld [smem:[#allocation0]]
  $region30: #{cnn_classifier_forward.14} parent=0
    _
  %s8 = ssub.s32 1, %s6
  %s9 = scalar_select 0, %s8, %s6
  // Predicated region
  $region2: #{cnn_classifier_forward.14} parent=0 // pred_check
    _
  $region3: #{cnn_classifier_forward.14} parent=0 // pred_check_branch
    %11 = sbr.rel (0) target = $region5
  $region4: #{cnn_classifier_forward.14} parent=0 // pred_region
    _
  $region5: #{cnn_classifier_forward.14} parent=0 // pred_fallthru
    _
  // Predicated region
  $region6: #{cnn_classifier_forward.14} parent=0 // pred_check
    _
  $region7: #{cnn_classifier_forward.14} parent=0 // pred_check_branch
    %13 = sbr.rel (0) target = $region9
  $region8: #{cnn_classifier_forward.14} parent=0 // pred_region
    _
  $region9: #{cnn_classifier_forward.14} parent=0 // pred_fallthru
    _
  // Predicated region
  $region10: #{cnn_classifier_forward.14} parent=0 // pred_check
    _
  $region11: #{cnn_classifier_forward.14} parent=0 // pred_check_branch
    %15 = sbr.rel (0) target = $region13
  $region12: #{cnn_classifier_forward.14} parent=0 // pred_region
    _
  $region13: #{cnn_classifier_forward.14} parent=0 // pred_fallthru
    _
  // Predicated region
  $region14: #{cnn_classifier_forward.14} parent=0 // pred_check
    _
  $region15: #{cnn_classifier_forward.14} parent=0 // pred_check_branch
    %17 = sbr.rel (0) target = $region17
  $region16: #{cnn_classifier_forward.14} parent=0 // pred_region
    _
  $region17: #{cnn_classifier_forward.14} parent=0 // pred_fallthru
    _
  // Predicated region
  $region18: #{cnn_classifier_forward.14} parent=0 // pred_check
    _
  $region19: #{cnn_classifier_forward.14} parent=0 // pred_check_branch
    %19 = sbr.rel (0) target = $region21
  $region20: #{cnn_classifier_forward.14} parent=0 // pred_region
    _
  $region21: #{cnn_classifier_forward.14} parent=0 // pred_fallthru
    _
  %v21 = vld [vmem:[%s0] sm:$0xff]
  %v22 = vld [vmem:[%s0 + $0x8] sm:$0xff]
  %v23 = vld [vmem:[%s0 + $0x10] sm:$0xff]
  %v24 = vld [vmem:[%s0 + $0x18] sm:$0xff]
  %v25 = vld [vmem:[%s0 + $0x20] sm:$0xf]
  %v26 = vld [vmem:[%s1] sm:$0xf]
  %v27 = vld [vmem:[%s1 + $0x4] sm:$0xf]
  %v28 = vld [vmem:[%s1 + $0x8] sm:$0xf]
  %v29 = vld [vmem:[%s1 + $0xc] sm:$0xf]
  %v30 = vld [vmem:[%s1 + $0x10] sm:$0xf]
  %v31 = vld [vmem:[%s1 + $0x14] sm:$0xf]
  %v32 = vld [vmem:[%s1 + $0x18] sm:$0xf]
  %v33 = vld [vmem:[%s1 + $0x1c] sm:$0xf]
  %v34 = vld [vmem:[%s1 + $0x20] sm:$0xf]
  %v35 = vld [vmem:[%s1 + $0x24] sm:$0xf]
  %v36 = vld [vmem:[%s1 + $0x28] sm:$0xf]
  %v37 = vld [vmem:[%s1 + $0x2c] sm:$0xf]
  %v38 = vld [vmem:[%s1 + $0x30] sm:$0xf]
  %v39 = vld [vmem:[%s1 + $0x34] sm:$0xf]
  %v40 = vld [vmem:[%s1 + $0x38] sm:$0xf]
  %v41 = vld [vmem:[%s1 + $0x3c] sm:$0xf]
  %v42 = vld [vmem:[%s1 + $0x40] sm:$0xf]
  %v43 = vld [vmem:[%s1 + $0x44] sm:$0xf]
  %v44 = vld [vmem:[%s1 + $0x48] sm:$0xf]
  %v45 = vld [vmem:[%s1 + $0x4c] sm:$0xf]
  %v46 = vld [vmem:[%s1 + $0x50] sm:$0xf]
  %v47 = vld [vmem:[%s1 + $0x54] sm:$0xf]
  %v48 = vld [vmem:[%s1 + $0x58] sm:$0xf]
  %v49 = vld [vmem:[%s1 + $0x5c] sm:$0xf]
  %v50 = vld [vmem:[%s1 + $0x60] sm:$0xf]
  %v51 = vld [vmem:[%s1 + $0x64] sm:$0xf]
  %v52 = vld [vmem:[%s1 + $0x68] sm:$0xf]
  %v53 = vld [vmem:[%s1 + $0x6c] sm:$0xf]
  %v54 = vld [vmem:[%s1 + $0x70] sm:$0xf]
  %v55 = vld [vmem:[%s1 + $0x74] sm:$0xf]
  %v56 = vld [vmem:[%s1 + $0x78] sm:$0xf]
  %v57 = vld [vmem:[%s1 + $0x7c] sm:$0xf]
  %v58 = vld [vmem:[%s1 + $0x80] sm:$0xf]
  %v59 = vld [vmem:[%s1 + $0x84] sm:$0xf]
  %v60 = vld [vmem:[%s1 + $0x88] sm:$0xf]
  %v61 = vld [vmem:[%s1 + $0x8c] sm:$0xf]
  %v62 = vld [vmem:[%s1 + $0x90] sm:$0xf]
  %v63 = vld [vmem:[%s1 + $0x94] sm:$0xf]
  %v64 = vld [vmem:[%s1 + $0x98] sm:$0xf]
  %v65 = vld [vmem:[%s1 + $0x9c] sm:$0xf]
  %v66 = vld [vmem:[%s1 + $0xa0] sm:$0xf]
  %v67 = vld [vmem:[%s1 + $0xa4] sm:$0xf]
  %v68 = vld [vmem:[%s1 + $0xa8] sm:$0xf]
  %v69 = vld [vmem:[%s1 + $0xac] sm:$0xf]
  %v70 = vld [vmem:[%s1 + $0xb0] sm:$0xf]
  %v71 = vld [vmem:[%s1 + $0xb4] sm:$0xf]
  %v72 = vld [vmem:[%s1 + $0xb8] sm:$0xf]
  %v73 = vld [vmem:[%s1 + $0xbc] sm:$0xf]
  %v74 = vld [vmem:[%s1 + $0xc0] sm:$0xf]
  %v75 = vld [vmem:[%s1 + $0xc4] sm:$0xf]
  %v76 = vld [vmem:[%s1 + $0xc8] sm:$0xf]
  %v77 = vld [vmem:[%s1 + $0xcc] sm:$0xf]
  %v78 = vld [vmem:[%s1 + $0xd0] sm:$0xf]
  %v79 = vld [vmem:[%s1 + $0xd4] sm:$0xf]
  %v80 = vld [vmem:[%s1 + $0xd8] sm:$0xf]
  %v81 = vld [vmem:[%s1 + $0xdc] sm:$0xf]
  %v82 = vld [vmem:[%s1 + $0xe0] sm:$0xf]
  %v83 = vld [vmem:[%s1 + $0xe4] sm:$0xf]
  %v84 = vld [vmem:[%s1 + $0xe8] sm:$0xf]
  %v85 = vld [vmem:[%s1 + $0xec] sm:$0xf]
  %v86 = vld [vmem:[%s1 + $0xf0] sm:$0xf]
  %v87 = vld [vmem:[%s1 + $0xf4] sm:$0xf]
  %v88 = vld [vmem:[%s1 + $0xf8] sm:$0xf]
  %v89 = vld [vmem:[%s1 + $0xfc] sm:$0xf]
  %v90 = vld [vmem:[%s1 + $0x100] sm:$0xf]
  %v91 = vld [vmem:[%s1 + $0x104] sm:$0xf]
  %v92 = vld [vmem:[%s1 + $0x108] sm:$0xf]
  %v93 = vld [vmem:[%s1 + $0x10c] sm:$0xf]
  %v94 = vld [vmem:[%s1 + $0x110] sm:$0xf]
  %v95 = vld [vmem:[%s1 + $0x114] sm:$0xf]
  %v96 = vld [vmem:[%s1 + $0x118] sm:$0xf]
  %v97 = vld [vmem:[%s1 + $0x11c] sm:$0xf]
  %v98 = vld [vmem:[%s1 + $0x120] sm:$0xf]
  %v99 = vld [vmem:[%s1 + $0x124] sm:$0xf]
  %v100 = vld [vmem:[%s1 + $0x128] sm:$0xf]
  %v101 = vld [vmem:[%s1 + $0x12c] sm:$0xf]
  %v102 = vld [vmem:[%s1 + $0x130] sm:$0xf]
  %v103 = vld [vmem:[%s1 + $0x134] sm:$0xf]
  %v104 = vld [vmem:[%s1 + $0x138] sm:$0xf]
  %v105 = vld [vmem:[%s1 + $0x13c] sm:$0xf]
  %v106 = vld [vmem:[%s1 + $0x140] sm:$0xf]
  %v107 = vld [vmem:[%s1 + $0x144] sm:$0xf]
  %v108 = vld [vmem:[%s1 + $0x148] sm:$0xf]
  %v109 = vld [vmem:[%s1 + $0x14c] sm:$0xf]
  %v110 = vld [vmem:[%s1 + $0x150] sm:$0xf]
  %v111 = vld [vmem:[%s1 + $0x154] sm:$0xf]
  %v112 = vld [vmem:[%s1 + $0x158] sm:$0xf]
  %v113 = vld [vmem:[%s1 + $0x15c] sm:$0xf]
  %v114 = vld [vmem:[%s1 + $0x160] sm:$0xf]
  %v115 = vld [vmem:[%s1 + $0x164] sm:$0xf]
  %v116 = vld [vmem:[%s1 + $0x168] sm:$0xf]
  %v117 = vld [vmem:[%s1 + $0x16c] sm:$0xf]
  %v118 = vld [vmem:[%s1 + $0x170] sm:$0xf]
  %v119 = vld [vmem:[%s1 + $0x174] sm:$0xf]
  %v120 = vld [vmem:[%s1 + $0x178] sm:$0xf]
  %v121 = vld [vmem:[%s1 + $0x17c] sm:$0xf]
  %v122 = vld [vmem:[%s1 + $0x180] sm:$0xf]
  %v123 = vld [vmem:[%s1 + $0x184] sm:$0xf]
  %v124 = vld [vmem:[%s1 + $0x188] sm:$0xf]
  %v125 = vld [vmem:[%s1 + $0x18c] sm:$0xf]
  %v126 = vld [vmem:[%s1 + $0x190] sm:$0xf]
  %v127 = vld [vmem:[%s1 + $0x194] sm:$0xf]
  %v128 = vld [vmem:[%s1 + $0x198] sm:$0xf]
  %v129 = vld [vmem:[%s1 + $0x19c] sm:$0xf]
  %v130 = vld [vmem:[%s1 + $0x1a0] sm:$0xf]
  %v131 = vld [vmem:[%s1 + $0x1a4] sm:$0xf]
  %v132 = vld [vmem:[%s1 + $0x1a8] sm:$0xf]
  %v133 = vld [vmem:[%s1 + $0x1ac] sm:$0xf]
  %v134 = vld [vmem:[%s1 + $0x1b0] sm:$0xf]
  %v135 = vld [vmem:[%s1 + $0x1b4] sm:$0xf]
  %v136 = vld [vmem:[%s1 + $0x1b8] sm:$0xf]
  %v137 = vld [vmem:[%s1 + $0x1bc] sm:$0xf]
  %v138 = vld [vmem:[%s1 + $0x1c0] sm:$0xf]
  %v139 = vld [vmem:[%s1 + $0x1c4] sm:$0xf]
  %v140 = vld [vmem:[%s1 + $0x1c8] sm:$0xf]
  %v141 = vld [vmem:[%s1 + $0x1cc] sm:$0xf]
  %v142 = vld [vmem:[%s1 + $0x1d0] sm:$0xf]
  %v143 = vld [vmem:[%s1 + $0x1d4] sm:$0xf]
  %v144 = vld [vmem:[%s1 + $0x1d8] sm:$0xf]
  %v145 = vld [vmem:[%s1 + $0x1dc] sm:$0xf]
  %v146 = vld [vmem:[%s1 + $0x1e0] sm:$0xf]
  %v147 = vld [vmem:[%s1 + $0x1e4] sm:$0xf]
  %v148 = vld [vmem:[%s1 + $0x1e8] sm:$0xf]
  %v149 = vld [vmem:[%s1 + $0x1ec] sm:$0xf]
  %v150 = vld [vmem:[%s1 + $0x1f0] sm:$0xf]
  %v151 = vld [vmem:[%s1 + $0x1f4] sm:$0xf]
  %v152 = vld [vmem:[%s1 + $0x1f8] sm:$0xf]
  %v153 = vld [vmem:[%s1 + $0x1fc] sm:$0xf]
  %v154 = vld [vmem:[%s1 + $0x200] sm:$0xf]
  %v155 = vld [vmem:[%s1 + $0x204] sm:$0xf]
  %v156 = vld [vmem:[%s1 + $0x208] sm:$0xf]
  %v157 = vld [vmem:[%s1 + $0x20c] sm:$0xf]
  %v158 = vld [vmem:[%s1 + $0x210] sm:$0xf]
  %v159 = vld [vmem:[%s1 + $0x214] sm:$0xf]
  %v160 = vld [vmem:[%s1 + $0x218] sm:$0xf]
  %v161 = vld [vmem:[%s1 + $0x21c] sm:$0xf]
  %v162 = vld [vmem:[%s1 + $0x220] sm:$0xf]
  %v163 = vld [vmem:[%s1 + $0x224] sm:$0xf]
  %v164 = vld [vmem:[%s1 + $0x228] sm:$0xf]
  %v165 = vld [vmem:[%s1 + $0x22c] sm:$0xf]
  %v166 = vld [vmem:[%s1 + $0x230] sm:$0xf]
  %v167 = vld [vmem:[%s1 + $0x234] sm:$0xf]
  %v168 = vld [vmem:[%s1 + $0x238] sm:$0xf]
  %v169 = vld [vmem:[%s1 + $0x23c] sm:$0xf]
  %v175 = vunpack.c.l.b16 %v21
  %v176 = vunpack.c.h.b16 %v21
  %v177 = vunpack.c.l.b16 %v22
  %v178 = vunpack.c.h.b16 %v22
  %v179 = vunpack.c.l.b16 %v23
  %v180 = vunpack.c.h.b16 %v23
  %v181 = vunpack.c.l.b16 %v24
  %v182 = vunpack.c.h.b16 %v24
  %v183 = vunpack.c.l.b16 %v25
  %v184 = vpack.c.b16 %v175, %v175
  %v185 = vpack.c.b16 %v176, %v176
  %v186 = vpack.c.b16 %v177, %v177
  %v187 = vpack.c.b16 %v178, %v178
  %v188 = vpack.c.b16 %v179, %v179
  %v189 = vpack.c.b16 %v180, %v180
  %v190 = vpack.c.b16 %v181, %v181
  %v191 = vpack.c.b16 %v182, %v182
  %v192 = vpack.c.b16 %v183, %v183
  %v346 = vunpack.c.l.b16 %v26
  %v347 = vunpack.c.l.b16 %v27
  %v348 = vunpack.c.l.b16 %v28
  %v349 = vunpack.c.l.b16 %v29
  %v350 = vunpack.c.l.b16 %v30
  %v351 = vunpack.c.l.b16 %v31
  %v352 = vunpack.c.l.b16 %v32
  %v353 = vunpack.c.l.b16 %v33
  %v354 = vunpack.c.l.b16 %v34
  %v355 = vunpack.c.l.b16 %v35
  %v356 = vunpack.c.l.b16 %v36
  %v357 = vunpack.c.l.b16 %v37
  %v358 = vunpack.c.l.b16 %v38
  %v359 = vunpack.c.l.b16 %v39
  %v360 = vunpack.c.l.b16 %v40
  %v361 = vunpack.c.l.b16 %v41
  %v362 = vunpack.c.l.b16 %v42
  %v363 = vunpack.c.l.b16 %v43
  %v364 = vunpack.c.l.b16 %v44
  %v365 = vunpack.c.l.b16 %v45
  %v366 = vunpack.c.l.b16 %v46
  %v367 = vunpack.c.l.b16 %v47
  %v368 = vunpack.c.l.b16 %v48
  %v369 = vunpack.c.l.b16 %v49
  %v370 = vunpack.c.l.b16 %v50
  %v371 = vunpack.c.l.b16 %v51
  %v372 = vunpack.c.l.b16 %v52
  %v373 = vunpack.c.l.b16 %v53
  %v374 = vunpack.c.l.b16 %v54
  %v375 = vunpack.c.l.b16 %v55
  %v376 = vunpack.c.l.b16 %v56
  %v377 = vunpack.c.l.b16 %v57
  %v378 = vunpack.c.l.b16 %v58
  %v379 = vunpack.c.l.b16 %v59
  %v380 = vunpack.c.l.b16 %v60
  %v381 = vunpack.c.l.b16 %v61
  %v382 = vunpack.c.l.b16 %v62
  %v383 = vunpack.c.l.b16 %v63
  %v384 = vunpack.c.l.b16 %v64
  %v385 = vunpack.c.l.b16 %v65
  %v386 = vunpack.c.l.b16 %v66
  %v387 = vunpack.c.l.b16 %v67
  %v388 = vunpack.c.l.b16 %v68
  %v389 = vunpack.c.l.b16 %v69
  %v390 = vunpack.c.l.b16 %v70
  %v391 = vunpack.c.l.b16 %v71
  %v392 = vunpack.c.l.b16 %v72
  %v393 = vunpack.c.l.b16 %v73
  %v394 = vunpack.c.l.b16 %v74
  %v395 = vunpack.c.l.b16 %v75
  %v396 = vunpack.c.l.b16 %v76
  %v397 = vunpack.c.l.b16 %v77
  %v398 = vunpack.c.l.b16 %v78
  %v399 = vunpack.c.l.b16 %v79
  %v400 = vunpack.c.l.b16 %v80
  %v401 = vunpack.c.l.b16 %v81
  %v402 = vunpack.c.l.b16 %v82
  %v403 = vunpack.c.l.b16 %v83
  %v404 = vunpack.c.l.b16 %v84
  %v405 = vunpack.c.l.b16 %v85
  %v406 = vunpack.c.l.b16 %v86
  %v407 = vunpack.c.l.b16 %v87
  %v408 = vunpack.c.l.b16 %v88
  %v409 = vunpack.c.l.b16 %v89
  %v410 = vunpack.c.l.b16 %v90
  %v411 = vunpack.c.l.b16 %v91
  %v412 = vunpack.c.l.b16 %v92
  %v413 = vunpack.c.l.b16 %v93
  %v414 = vunpack.c.l.b16 %v94
  %v415 = vunpack.c.l.b16 %v95
  %v416 = vunpack.c.l.b16 %v96
  %v417 = vunpack.c.l.b16 %v97
  %v418 = vunpack.c.l.b16 %v98
  %v419 = vunpack.c.l.b16 %v99
  %v420 = vunpack.c.l.b16 %v100
  %v421 = vunpack.c.l.b16 %v101
  %v422 = vunpack.c.l.b16 %v102
  %v423 = vunpack.c.l.b16 %v103
  %v424 = vunpack.c.l.b16 %v104
  %v425 = vunpack.c.l.b16 %v105
  %v426 = vunpack.c.l.b16 %v106
  %v427 = vunpack.c.l.b16 %v107
  %v428 = vunpack.c.l.b16 %v108
  %v429 = vunpack.c.l.b16 %v109
  %v430 = vunpack.c.l.b16 %v110
  %v431 = vunpack.c.l.b16 %v111
  %v432 = vunpack.c.l.b16 %v112
  %v433 = vunpack.c.l.b16 %v113
  %v434 = vunpack.c.l.b16 %v114
  %v435 = vunpack.c.l.b16 %v115
  %v436 = vunpack.c.l.b16 %v116
  %v437 = vunpack.c.l.b16 %v117
  %v438 = vunpack.c.l.b16 %v118
  %v439 = vunpack.c.l.b16 %v119
  %v440 = vunpack.c.l.b16 %v120
  %v441 = vunpack.c.l.b16 %v121
  %v442 = vunpack.c.l.b16 %v122
  %v443 = vunpack.c.l.b16 %v123
  %v444 = vunpack.c.l.b16 %v124
  %v445 = vunpack.c.l.b16 %v125
  %v446 = vunpack.c.l.b16 %v126
  %v447 = vunpack.c.l.b16 %v127
  %v448 = vunpack.c.l.b16 %v128
  %v449 = vunpack.c.l.b16 %v129
  %v450 = vunpack.c.l.b16 %v130
  %v451 = vunpack.c.l.b16 %v131
  %v452 = vunpack.c.l.b16 %v132
  %v453 = vunpack.c.l.b16 %v133
  %v454 = vunpack.c.l.b16 %v134
  %v455 = vunpack.c.l.b16 %v135
  %v456 = vunpack.c.l.b16 %v136
  %v457 = vunpack.c.l.b16 %v137
  %v458 = vunpack.c.l.b16 %v138
  %v459 = vunpack.c.l.b16 %v139
  %v460 = vunpack.c.l.b16 %v140
  %v461 = vunpack.c.l.b16 %v141
  %v462 = vunpack.c.l.b16 %v142
  %v463 = vunpack.c.l.b16 %v143
  %v464 = vunpack.c.l.b16 %v144
  %v465 = vunpack.c.l.b16 %v145
  %v466 = vunpack.c.l.b16 %v146
  %v467 = vunpack.c.l.b16 %v147
  %v468 = vunpack.c.l.b16 %v148
  %v469 = vunpack.c.l.b16 %v149
  %v470 = vunpack.c.l.b16 %v150
  %v471 = vunpack.c.l.b16 %v151
  %v472 = vunpack.c.l.b16 %v152
  %v473 = vunpack.c.l.b16 %v153
  %v474 = vunpack.c.l.b16 %v154
  %v475 = vunpack.c.l.b16 %v155
  %v476 = vunpack.c.l.b16 %v156
  %v477 = vunpack.c.l.b16 %v157
  %v478 = vunpack.c.l.b16 %v158
  %v479 = vunpack.c.l.b16 %v159
  %v480 = vunpack.c.l.b16 %v160
  %v481 = vunpack.c.l.b16 %v161
  %v482 = vunpack.c.l.b16 %v162
  %v483 = vunpack.c.l.b16 %v163
  %v484 = vunpack.c.l.b16 %v164
  %v485 = vunpack.c.l.b16 %v165
  %v486 = vunpack.c.l.b16 %v166
  %v487 = vunpack.c.l.b16 %v167
  %v488 = vunpack.c.l.b16 %v168
  %v489 = vunpack.c.l.b16 %v169
  %v490 = vpack.c.b16 %v347, %v346
  %v491 = vpack.c.b16 %v349, %v348
  %v492 = vpack.c.b16 %v351, %v350
  %v493 = vpack.c.b16 %v353, %v352
  %v494 = vpack.c.b16 %v355, %v354
  %v495 = vpack.c.b16 %v357, %v356
  %v496 = vpack.c.b16 %v359, %v358
  %v497 = vpack.c.b16 %v361, %v360
  %v498 = vpack.c.b16 %v363, %v362
  %v499 = vpack.c.b16 %v365, %v364
  %v500 = vpack.c.b16 %v367, %v366
  %v501 = vpack.c.b16 %v369, %v368
  %v502 = vpack.c.b16 %v371, %v370
  %v503 = vpack.c.b16 %v373, %v372
  %v504 = vpack.c.b16 %v375, %v374
  %v505 = vpack.c.b16 %v377, %v376
  %v506 = vpack.c.b16 %v379, %v378
  %v507 = vpack.c.b16 %v381, %v380
  %v508 = vpack.c.b16 %v383, %v382
  %v509 = vpack.c.b16 %v385, %v384
  %v510 = vpack.c.b16 %v387, %v386
  %v511 = vpack.c.b16 %v389, %v388
  %v512 = vpack.c.b16 %v391, %v390
  %v513 = vpack.c.b16 %v393, %v392
  %v514 = vpack.c.b16 %v395, %v394
  %v515 = vpack.c.b16 %v397, %v396
  %v516 = vpack.c.b16 %v399, %v398
  %v517 = vpack.c.b16 %v401, %v400
  %v518 = vpack.c.b16 %v403, %v402
  %v519 = vpack.c.b16 %v405, %v404
  %v520 = vpack.c.b16 %v407, %v406
  %v521 = vpack.c.b16 %v409, %v408
  %v522 = vpack.c.b16 %v411, %v410
  %v523 = vpack.c.b16 %v413, %v412
  %v524 = vpack.c.b16 %v415, %v414
  %v525 = vpack.c.b16 %v417, %v416
  %v526 = vpack.c.b16 %v419, %v418
  %v527 = vpack.c.b16 %v421, %v420
  %v528 = vpack.c.b16 %v423, %v422
  %v529 = vpack.c.b16 %v425, %v424
  %v530 = vpack.c.b16 %v427, %v426
  %v531 = vpack.c.b16 %v429, %v428
  %v532 = vpack.c.b16 %v431, %v430
  %v533 = vpack.c.b16 %v433, %v432
  %v534 = vpack.c.b16 %v435, %v434
  %v535 = vpack.c.b16 %v437, %v436
  %v536 = vpack.c.b16 %v439, %v438
  %v537 = vpack.c.b16 %v441, %v440
  %v538 = vpack.c.b16 %v443, %v442
  %v539 = vpack.c.b16 %v445, %v444
  %v540 = vpack.c.b16 %v447, %v446
  %v541 = vpack.c.b16 %v449, %v448
  %v542 = vpack.c.b16 %v451, %v450
  %v543 = vpack.c.b16 %v453, %v452
  %v544 = vpack.c.b16 %v455, %v454
  %v545 = vpack.c.b16 %v457, %v456
  %v546 = vpack.c.b16 %v459, %v458
  %v547 = vpack.c.b16 %v461, %v460
  %v548 = vpack.c.b16 %v463, %v462
  %v549 = vpack.c.b16 %v465, %v464
  %v550 = vpack.c.b16 %v467, %v466
  %v551 = vpack.c.b16 %v469, %v468
  %v552 = vpack.c.b16 %v471, %v470
  %v553 = vpack.c.b16 %v473, %v472
  %v554 = vpack.c.b16 %v475, %v474
  %v555 = vpack.c.b16 %v477, %v476
  %v556 = vpack.c.b16 %v479, %v478
  %v557 = vpack.c.b16 %v481, %v480
  %v558 = vpack.c.b16 %v483, %v482
  %v559 = vpack.c.b16 %v485, %v484
  %v560 = vpack.c.b16 %v487, %v486
  %v561 = vpack.c.b16 %v489, %v488
  %634 = vmatprep.subr.bf16.mxu0 0
  %635 = vmatpush1.bf16.msra.mxu0 %v497
  %636 = vmatprep.subr.bf16.mxu0 0
  %637 = vmatpush1.bf16.msra.mxu0 %v496
  %638 = vmatprep.subr.bf16.mxu0 0
  %639 = vmatpush1.bf16.msra.mxu0 %v495
  %640 = vmatprep.subr.bf16.mxu0 0
  %641 = vmatpush1.bf16.msra.mxu0 %v494
  %642 = vmatprep.subr.bf16.mxu0 0
  %643 = vmatpush1.bf16.msra.mxu0 %v493
  %644 = vmatprep.subr.bf16.mxu0 0
  %645 = vmatpush1.bf16.msra.mxu0 %v492
  %646 = vmatprep.subr.bf16.mxu0 0
  %647 = vmatpush1.bf16.msra.mxu0 %v491
  %648 = vmatprep.subr.bf16.mxu0 0
  %649 = vmatpush1.bf16.msra.mxu0 %v490
  %650 = vmatprep.subr.bf16.mxu0 0
  %651 = vmatpush2.bf16.msra.mxu0 %v505
  %652 = vmatprep.subr.bf16.mxu0 0
  %653 = vmatpush2.bf16.msra.mxu0 %v504
  %654 = vmatprep.subr.bf16.mxu0 0
  %655 = vmatpush2.bf16.msra.mxu0 %v503
  %656 = vmatprep.subr.bf16.mxu0 0
  %657 = vmatpush2.bf16.msra.mxu0 %v502
  %658 = vmatprep.subr.bf16.mxu0 0
  %659 = vmatpush2.bf16.msra.mxu0 %v501
  %660 = vmatprep.subr.bf16.mxu0 0
  %661 = vmatpush2.bf16.msra.mxu0 %v500
  %662 = vmatprep.subr.bf16.mxu0 0
  %663 = vmatpush2.bf16.msra.mxu0 %v499
  %664 = vmatprep.subr.bf16.mxu0 0
  %665 = vmatpush2.bf16.msra.mxu0 %v498
  %666 = vmatprep.mubr.bf16.mxu0 %v185
  %667 = vmatmul.mubr.bf16.gmra.mxu0 %v184
  %v668 = vpop.f32.mrf.mxu0
  %v669 = vadd.f32 0.0, %v668
  %v670 = vpop.f32.mrf.mxu0
  %v671 = vpop.f32.mrf.mxu0
  %v672 = vpop.f32.mrf.mxu0
  %673 = vdwg.mxu0
  %674 = vmatprep.subr.bf16.mxu0 0
  %675 = vmatpush1.bf16.msra.mxu0 %v513
  %676 = vmatprep.subr.bf16.mxu0 0
  %677 = vmatpush1.bf16.msra.mxu0 %v512
  %678 = vmatprep.subr.bf16.mxu0 0
  %679 = vmatpush1.bf16.msra.mxu0 %v511
  %680 = vmatprep.subr.bf16.mxu0 0
  %681 = vmatpush1.bf16.msra.mxu0 %v510
  %682 = vmatprep.subr.bf16.mxu0 0
  %683 = vmatpush1.bf16.msra.mxu0 %v509
  %684 = vmatprep.subr.bf16.mxu0 0
  %685 = vmatpush1.bf16.msra.mxu0 %v508
  %686 = vmatprep.subr.bf16.mxu0 0
  %687 = vmatpush1.bf16.msra.mxu0 %v507
  %688 = vmatprep.subr.bf16.mxu0 0
  %689 = vmatpush1.bf16.msra.mxu0 %v506
  %690 = vmatprep.subr.bf16.mxu0 0
  %691 = vmatpush2.bf16.msra.mxu0 %v521
  %692 = vmatprep.subr.bf16.mxu0 0
  %693 = vmatpush2.bf16.msra.mxu0 %v520
  %694 = vmatprep.subr.bf16.mxu0 0
  %695 = vmatpush2.bf16.msra.mxu0 %v519
  %696 = vmatprep.subr.bf16.mxu0 0
  %697 = vmatpush2.bf16.msra.mxu0 %v518
  %698 = vmatprep.subr.bf16.mxu0 0
  %699 = vmatpush2.bf16.msra.mxu0 %v517
  %700 = vmatprep.subr.bf16.mxu0 0
  %701 = vmatpush2.bf16.msra.mxu0 %v516
  %702 = vmatprep.subr.bf16.mxu0 0
  %703 = vmatpush2.bf16.msra.mxu0 %v515
  %704 = vmatprep.subr.bf16.mxu0 0
  %705 = vmatpush2.bf16.msra.mxu0 %v514
  %706 = vmatprep.mubr.bf16.mxu0 %v187
  %707 = vmatmul.mubr.bf16.gmra.mxu0 %v186
  %v708 = vpop.f32.mrf.mxu0
  %v709 = vadd.f32 %v669, %v708
  %v710 = vpop.f32.mrf.mxu0
  %v711 = vpop.f32.mrf.mxu0
  %v712 = vpop.f32.mrf.mxu0
  %713 = vdwg.mxu0
  %714 = vmatprep.subr.bf16.mxu0 0
  %715 = vmatpush1.bf16.msra.mxu0 %v529
  %716 = vmatprep.subr.bf16.mxu0 0
  %717 = vmatpush1.bf16.msra.mxu0 %v528
  %718 = vmatprep.subr.bf16.mxu0 0
  %719 = vmatpush1.bf16.msra.mxu0 %v527
  %720 = vmatprep.subr.bf16.mxu0 0
  %721 = vmatpush1.bf16.msra.mxu0 %v526
  %722 = vmatprep.subr.bf16.mxu0 0
  %723 = vmatpush1.bf16.msra.mxu0 %v525
  %724 = vmatprep.subr.bf16.mxu0 0
  %725 = vmatpush1.bf16.msra.mxu0 %v524
  %726 = vmatprep.subr.bf16.mxu0 0
  %727 = vmatpush1.bf16.msra.mxu0 %v523
  %728 = vmatprep.subr.bf16.mxu0 0
  %729 = vmatpush1.bf16.msra.mxu0 %v522
  %730 = vmatprep.subr.bf16.mxu0 0
  %731 = vmatpush2.bf16.msra.mxu0 %v537
  %732 = vmatprep.subr.bf16.mxu0 0
  %733 = vmatpush2.bf16.msra.mxu0 %v536
  %734 = vmatprep.subr.bf16.mxu0 0
  %735 = vmatpush2.bf16.msra.mxu0 %v535
  %736 = vmatprep.subr.bf16.mxu0 0
  %737 = vmatpush2.bf16.msra.mxu0 %v534
  %738 = vmatprep.subr.bf16.mxu0 0
  %739 = vmatpush2.bf16.msra.mxu0 %v533
  %740 = vmatprep.subr.bf16.mxu0 0
  %741 = vmatpush2.bf16.msra.mxu0 %v532
  %742 = vmatprep.subr.bf16.mxu0 0
  %743 = vmatpush2.bf16.msra.mxu0 %v531
  %744 = vmatprep.subr.bf16.mxu0 0
  %745 = vmatpush2.bf16.msra.mxu0 %v530
  %746 = vmatprep.mubr.bf16.mxu0 %v189
  %747 = vmatmul.mubr.bf16.gmra.mxu0 %v188
  %v748 = vpop.f32.mrf.mxu0
  %v749 = vadd.f32 %v709, %v748
  %v750 = vpop.f32.mrf.mxu0
  %v751 = vpop.f32.mrf.mxu0
  %v752 = vpop.f32.mrf.mxu0
  %753 = vdwg.mxu0
  %754 = vmatprep.subr.bf16.mxu0 0
  %755 = vmatpush1.bf16.msra.mxu0 %v545
  %756 = vmatprep.subr.bf16.mxu0 0
  %757 = vmatpush1.bf16.msra.mxu0 %v544
  %758 = vmatprep.subr.bf16.mxu0 0
  %759 = vmatpush1.bf16.msra.mxu0 %v543
  %760 = vmatprep.subr.bf16.mxu0 0
  %761 = vmatpush1.bf16.msra.mxu0 %v542
  %762 = vmatprep.subr.bf16.mxu0 0
  %763 = vmatpush1.bf16.msra.mxu0 %v541
  %764 = vmatprep.subr.bf16.mxu0 0
  %765 = vmatpush1.bf16.msra.mxu0 %v540
  %766 = vmatprep.subr.bf16.mxu0 0
  %767 = vmatpush1.bf16.msra.mxu0 %v539
  %768 = vmatprep.subr.bf16.mxu0 0
  %769 = vmatpush1.bf16.msra.mxu0 %v538
  %770 = vmatprep.subr.bf16.mxu0 0
  %771 = vmatpush2.bf16.msra.mxu0 %v553
  %772 = vmatprep.subr.bf16.mxu0 0
  %773 = vmatpush2.bf16.msra.mxu0 %v552
  %774 = vmatprep.subr.bf16.mxu0 0
  %775 = vmatpush2.bf16.msra.mxu0 %v551
  %776 = vmatprep.subr.bf16.mxu0 0
  %777 = vmatpush2.bf16.msra.mxu0 %v550
  %778 = vmatprep.subr.bf16.mxu0 0
  %779 = vmatpush2.bf16.msra.mxu0 %v549
  %780 = vmatprep.subr.bf16.mxu0 0
  %781 = vmatpush2.bf16.msra.mxu0 %v548
  %782 = vmatprep.subr.bf16.mxu0 0
  %783 = vmatpush2.bf16.msra.mxu0 %v547
  %784 = vmatprep.subr.bf16.mxu0 0
  %785 = vmatpush2.bf16.msra.mxu0 %v546
  %786 = vmatprep.mubr.bf16.mxu0 %v191
  %787 = vmatmul.mubr.bf16.gmra.mxu0 %v190
  %v788 = vpop.f32.mrf.mxu0
  %v789 = vadd.f32 %v749, %v788
  %v790 = vpop.f32.mrf.mxu0
  %v791 = vpop.f32.mrf.mxu0
  %v792 = vpop.f32.mrf.mxu0
  %793 = vdwg.mxu0
  %794 = vmatprep.subr.bf16.mxu0 0
  %795 = vmatpush1.bf16.msra.mxu0 %v561
  %796 = vmatprep.subr.bf16.mxu0 0
  %797 = vmatpush1.bf16.msra.mxu0 %v560
  %798 = vmatprep.subr.bf16.mxu0 0
  %799 = vmatpush1.bf16.msra.mxu0 %v559
  %800 = vmatprep.subr.bf16.mxu0 0
  %801 = vmatpush1.bf16.msra.mxu0 %v558
  %802 = vmatprep.subr.bf16.mxu0 0
  %803 = vmatpush1.bf16.msra.mxu0 %v557
  %804 = vmatprep.subr.bf16.mxu0 0
  %805 = vmatpush1.bf16.msra.mxu0 %v556
  %806 = vmatprep.subr.bf16.mxu0 0
  %807 = vmatpush1.bf16.msra.mxu0 %v555
  %808 = vmatprep.subr.bf16.mxu0 0
  %809 = vmatpush1.bf16.msra.mxu0 %v554
  %810 = vmatprep.subr.bf16.mxu0 0
  %811 = vmatpush2.bf16.msra.mxu0 0
  %812 = vmatprep.subr.bf16.mxu0 0
  %813 = vmatpush2.bf16.msra.mxu0 0
  %814 = vmatprep.subr.bf16.mxu0 0
  %815 = vmatpush2.bf16.msra.mxu0 0
  %816 = vmatprep.subr.bf16.mxu0 0
  %817 = vmatpush2.bf16.msra.mxu0 0
  %818 = vmatprep.subr.bf16.mxu0 0
  %819 = vmatpush2.bf16.msra.mxu0 0
  %820 = vmatprep.subr.bf16.mxu0 0
  %821 = vmatpush2.bf16.msra.mxu0 0
  %822 = vmatprep.subr.bf16.mxu0 0
  %823 = vmatpush2.bf16.msra.mxu0 0
  %824 = vmatprep.subr.bf16.mxu0 0
  %825 = vmatpush2.bf16.msra.mxu0 0
  %826 = vmatprep.mubr.bf16.mxu0 0
  %827 = vmatmul.mubr.bf16.gmra.mxu0 %v192
  %v828 = vpop.f32.mrf.mxu0
  %v829 = vadd.f32 %v789, %v828
  %v830 = vpop.f32.mrf.mxu0
  %v831 = vpop.f32.mrf.mxu0
  %v832 = vpop.f32.mrf.mxu0
  %833 = vdwg.mxu0
  %v834 = vrot.slane %v829, 4
  %v835 = vadd.f32 %v829, %v834
  %v836 = vrot.slane %v835, 2
  %v837 = vadd.f32 %v835, %v836
  %v838 = vrot.slane %v837, 1
  %v839 = vadd.f32 %v837, %v838
  %v840 = vmul.f32 %v839, 0.125
  %v841 = vsub.f32 %v829, %v840
  %v842 = vmul.f32 %v841, %v841
  %v843 = vrot.slane %v842, 4
  %v844 = vadd.f32 %v842, %v843
  %v845 = vrot.slane %v844, 2
  %v846 = vadd.f32 %v844, %v845
  %v847 = vrot.slane %v846, 1
  %v848 = vadd.f32 %v846, %v847
  %v849 = vmul.f32 %v848, 0.125
  %v850 = vld [vmem:[%s2] sm:$0x1]
  %v851 = vadd.f32 %v849, 1e-05
  %v852 = vrsqrt.pop %v851
  %v853 = vmul.f32 %v850, %v852
  %v855 = vlaneseq
  %v856 = vshrl.u32 %v855, 7
  %v857 = vsub.s32 0, %v856
  %v858 = vrot.slane %v853, %v857
  %v860 = vmul.f32 %v841, %v858
  %v861 = vld [vmem:[%s3] sm:$0x1]
  %v863 = vlaneseq
  %v864 = vshrl.u32 %v863, 7
  %v865 = vsub.s32 0, %v864
  %v866 = vrot.slane %v861, %v865
  %v868 = vadd.f32 %v860, %v866
  %v869 = vmax.f32 %v868, 0.0
  %v870 = vld [vmem:[%s4] sm:$0xf]
  %v871 = vunpack.c.l.bf16 %v870
  %v872 = vadd.f32 %v869, %v871
  %v873 = vpack.c.bf16 %v872, %v872
  %874 = vst [vmem:[%s5] sm:$0xf] %v873
  // Predicated region
  $region22: #{cnn_classifier_forward.14} parent=0 // pred_check
    _
  $region23: #{cnn_classifier_forward.14} parent=0 // pred_check_branch
    %876 = sbr.rel (0) target = $region25
  $region24: #{cnn_classifier_forward.14} parent=0 // pred_region
    _
  $region25: #{cnn_classifier_forward.14} parent=0 // pred_fallthru
    _
  // Predicated region
  $region26: #{cnn_classifier_forward.14} parent=0 // pred_check
    _
  $region27: #{cnn_classifier_forward.14} parent=0 // pred_check_branch
    %878 = sbr.rel (0) target = $region29
  $region28: #{cnn_classifier_forward.14} parent=0 // pred_region
    _
  $region29: #{cnn_classifier_forward.14} parent=0 // pred_fallthru
    _

</llo_original>
